<compile_context>
chip_gen: v7x
topology: tpu7x:2x2x1
jax: 0.10.0
libtpu: 0.0.40
codegen_flags: <defaults>
</compile_context>

<pallas_src>
import functools

import jax
import jax.numpy as jnp
from jax import lax
from jax.experimental import pallas as pl
from jax.experimental.pallas import tpu as pltpu

# ----------------------------- config (small synthetic sizes) ------------------
VIEW = 2          # cfg.viewNum
B3D = 2           # 3D batch size
VB = VIEW * B3D   # stacked 2D "batch" (views * batch), view index varies slowest
Q = 8             # number of queries (n_p == n_c)
D = 32            # cfg.hidden_dim (tr_dim)
CM = 16           # cfg.mask_dim (== 3D out_channels here)
H = W = 8
HW = H * W
NPTS = 16         # points per 3D batch element
CIN2D = 32        # synthetic channel width of 2D features at each decoder level
CIN3D = 32        # synthetic channel width of 3D features at each decoder level
NL = 3            # SAT-modulated decoder levels (p4/out4, p3/out5, p2/out6)
NSEG = NL + 2     # seg heads: class_convfeat + NL levels + cls


# ----------------------------- fused Pallas kernel ------------------------------
def _semaffi_kernel(x_ref, wbd_ref, ball_ref, me_ref, hs_ref,
                    mhw_ref, mhb_ref, mfw_ref, mfb_ref,
                    seg_ref, feat_ref, y_ref, *, G, S):
    """One modality's full SemAffiNet head stack.

    x_ref   : (NSEG*CIN, G*S)   stacked channel-major feature slabs (one per head)
    wbd_ref : (8*CM, NSEG*CIN)  block-diagonal packed class_conv weights; level
                                blocks are stacked [W ; gamma*W] (BN folded in)
    ball_ref: (8*CM, 1)         matching packed biases ([b ; gamma*b+beta])
    me_ref  : (G, Q, CM)        per-view / per-batch mask embeddings
    hs_ref  : (G*Q, 2*NL*D)     SAT transformer features, column blocks
                                [l0_w | l0_b | l1_w | l1_b | l2_w | l2_b]
    mhw/mhb : (4, 2*NL*D, 2*NL*D) / (4, 1, 2*NL*D)  block-diag hidden MLP layers
    mfw/mfb : (2*NL*D, 2*NL*CM) / (1, 2*NL*CM)      block-diag final MLP layer
    seg_ref : (NSEG, Q, G*S)    all seg heads, lane-dense
    feat_ref: (NL, CM, G*S)     SAT-modulated (ReLU'd) level features
    y_ref   : (8*CM, G*S)       VMEM scratch holding the packed class_conv output
    """
    # (1) every 1x1 class_conv (+ folded BN rows) in a single MXU matmul.
    #     row layout: [convfeat | lvl0 p, lvl0 BN(p) | lvl1 ... | lvl2 ... | cls]
    y_ref[...] = (jnp.dot(wbd_ref[...], x_ref[...],
                          preferred_element_type=jnp.float32) + ball_ref[...])

    # (2) all 2*NL SAT MLPs (sat_w*/sat_b*, 5 layers each) as ONE block-diagonal
    #     5-layer MLP: 4x (Linear+ReLU) + Linear.
    h = hs_ref[...]
    for i in range(4):
        h = jnp.maximum(
            jnp.dot(h, mhw_ref[i], preferred_element_type=jnp.float32)
            + mhb_ref[i], 0.0)
    sat_all = (jnp.dot(h, mfw_ref[...], preferred_element_type=jnp.float32)
               + mfb_ref[...])                              # (G*Q, 2*NL*CM)
    # abs() only on the query-weight column blocks (blocks alternate [w | b]).
    col = lax.broadcasted_iota(jnp.int32, sat_all.shape, 1)
    sat_all = jnp.where((col % (2 * CM)) < CM, jnp.abs(sat_all), sat_all)

    me = me_ref[...]                                         # (G, Q, CM)
    p_rows = [0] + [CM * (1 + 2 * l) for l in range(NL)] + [CM * (1 + 2 * NL)]
    inst_rows = [CM * (2 + 2 * l) for l in range(NL)]

    # (3) per seg head: mask-embedding contraction; per SAT level additionally
    #     sigmoid -> stacked [w|b] modulation contraction -> scale/shift -> ReLU.
    for e in range(NSEG):
        r0 = p_rows[e]
        lvl = e - 1
        seg_cols, feat_cols = [], []
        for g in range(G):
            p_g = y_ref[r0:r0 + CM, g * S:(g + 1) * S]                # (CM, S)
            seg_g = jnp.dot(me[g], p_g,
                            preferred_element_type=jnp.float32)       # (Q, S)
            seg_cols.append(seg_g)
            if 0 <= lvl < NL:
                sig = jax.nn.sigmoid(seg_g)                           # (Q, S)
                sat = sat_all[g * Q:(g + 1) * Q,
                              2 * lvl * CM:(2 * lvl + 2) * CM]        # (Q, 2*CM)
                # einsum('qc,qs->cs') for weight & bias in one contraction
                mod = lax.dot_general(sat, sig, (((0,), (0,)), ((), ())),
                                      preferred_element_type=jnp.float32)
                p_inst = y_ref[inst_rows[lvl]:inst_rows[lvl] + CM,
                               g * S:(g + 1) * S]                     # BN(p)
                feat_cols.append(
                    jnp.maximum(p_inst * mod[:CM] + mod[CM:], 0.0))   # SAT + ReLU
        seg_ref[e] = jnp.concatenate(seg_cols, axis=1)        # one lane-dense store
        if 0 <= lvl < NL:
            feat_ref[lvl] = jnp.concatenate(feat_cols, axis=1)


def _semaffi_stack(x_all, w_bd, b_all, me, hs_cat, mhw, mhb, mfw, mfb, *, G, S):
    """Single grid-free pallas_call running one modality's whole head stack."""
    rtot = w_bd.shape[0]
    vmem = pl.BlockSpec(memory_space=pltpu.MemorySpace.VMEM)
    return pl.pallas_call(
        functools.partial(_semaffi_kernel, G=G, S=S),
        out_shape=(jax.ShapeDtypeStruct((NSEG, Q, G * S), jnp.float32),
                   jax.ShapeDtypeStruct((NL, CM, G * S), jnp.float32)),
        in_specs=[vmem] * 9,
        out_specs=(vmem, vmem),
        scratch_shapes=[pltpu.VMEM((rtot, G * S), jnp.float32)],
    )(x_all, w_bd, b_all, me, hs_cat, mhw, mhb, mfw, mfb)


# ----------------------------- operand packing (plain JAX) ----------------------
def _block_diag(blocks):
    rows = sum(b.shape[0] for b in blocks)
    cols = sum(b.shape[1] for b in blocks)
    out = jnp.zeros((rows, cols), jnp.float32)
    r = c = 0
    for b in blocks:
        out = out.at[r:r + b.shape[0], c:c + b.shape[1]].set(b)
        r += b.shape[0]
        c += b.shape[1]
    return out


def _prep_class_conv(xs_cm, cc_params, lvl_params):
    """Pack the 5 class_conv heads into one block-diag matmul; fold BN into levels."""
    (w_f, b_f), (w_c, b_c) = cc_params          # convfeat head, cls head (no BN)
    blocks, biases = [w_f], [b_f]
    for (w, b, gamma, beta) in lvl_params:      # SAT levels: stack [p ; BN(p)] rows
        blocks.append(jnp.concatenate([w, gamma * w], axis=0))
        biases.append(jnp.concatenate([b, gamma * b + beta], axis=0))
    blocks.append(w_c)
    biases.append(b_c)
    x_all = jnp.concatenate(xs_cm, axis=0)      # (NSEG*CIN, G*S)
    w_bd = _block_diag(blocks)                  # (8*CM, NSEG*CIN)
    b_all = jnp.concatenate(biases, axis=0)     # (8*CM, 1)
    return x_all, w_bd, b_all


def _prep_sat_mlps(hs_levels, mlp_w_params, mlp_b_params):
    """Batch the 2*NL SAT MLPs into one block-diagonal 5-layer MLP."""
    hs_blocks = []
    for l in range(NL):
        h = hs_levels[l].reshape(-1, hs_levels[l].shape[-1])   # (G*Q, D)
        hs_blocks += [h, h]                                    # w- and b-MLP share input
    hs_cat = jnp.concatenate(hs_blocks, axis=1)                # (G*Q, 2*NL*D)

    hw, hb = [], []
    for i in range(4):
        ws, bs = [], []
        for l in range(NL):
            for mp in (mlp_w_params[l], mlp_b_params[l]):
                ws.append(mp[i][0])
                bs.append(mp[i][1])
        hw.append(_block_diag(ws))                             # (2*NL*D, 2*NL*D)
        hb.append(jnp.concatenate(bs, axis=1))                 # (1, 2*NL*D)
    mhw = jnp.stack(hw)                                        # (4, 2*NL*D, 2*NL*D)
    mhb = jnp.stack(hb)                                        # (4, 1, 2*NL*D)

    ws, bs = [], []
    for l in range(NL):
        for mp in (mlp_w_params[l], mlp_b_params[l]):
            ws.append(mp[4][0])
            bs.append(mp[4][1])
    mfw = _block_diag(ws)                                      # (2*NL*D, 2*NL*CM)
    mfb = jnp.concatenate(bs, axis=1)                          # (1, 2*NL*CM)
    return hs_cat, mhw, mhb, mfw, mfb


# ----------------------------- forward (glue in plain JAX) ----------------------
def semaffinet_core_forward(feats2d, feats3d, mask_embed_2d, mask_embed,
                            hs_sat_2d, hs_sat, params):
    """feats2d: list of 5 (VB, CIN2D, HW) arrays standing in for x5 / decoder levels / cls input.
       feats3d: list of 5 (B3D, NPTS, CIN3D) arrays standing in for out_b4p16 / decoder levels."""
    # channel-major slabs with views / batches flattened into the lane axis
    xs2d = [jnp.transpose(f, (1, 0, 2)).reshape(CIN2D, VB * HW) for f in feats2d]
    xs3d = [jnp.transpose(f, (2, 0, 1)).reshape(CIN3D, B3D * NPTS) for f in feats3d]

    x2d, wbd2d, ball2d = _prep_class_conv(xs2d, params['cc2d'], params['lvl2d'])
    x3d, wbd3d, ball3d = _prep_class_conv(xs3d, params['cc3d'], params['lvl3d'])

    hs2d_cat, mhw2d, mhb2d, mfw2d, mfb2d = _prep_sat_mlps(
        [hs_sat_2d[l] for l in range(NL)], params['mlp_w2d'], params['mlp_b2d'])
    hs3d_cat, mhw3d, mhb3d, mfw3d, mfb3d = _prep_sat_mlps(
        [hs_sat[l] for l in range(NL)], params['mlp_w3d'], params['mlp_b3d'])

    seg2d, feat2d = _semaffi_stack(x2d, wbd2d, ball2d, mask_embed_2d,
                                   hs2d_cat, mhw2d, mhb2d, mfw2d, mfb2d,
                                   G=VB, S=HW)
    seg3d, feat3d = _semaffi_stack(x3d, wbd3d, ball3d, mask_embed,
                                   hs3d_cat, mhw3d, mhb3d, mfw3d, mfb3d,
                                   G=B3D, S=NPTS)

    # ---- output plumbing back to the PyTorch layouts (pure reshapes) ----
    pred_masks_3d = jnp.transpose(seg3d[NSEG - 1], (1, 0))          # (N_total, Q)
    seg8_2d = seg2d[NSEG - 1].reshape(Q, VIEW, B3D, H, W)
    pred_masks_2d = jnp.transpose(seg8_2d, (2, 0, 3, 4, 1))         # (b, Q, H, W, V)
    aux_2d = [jnp.transpose(seg2d[e].reshape(Q, VB, H, W), (1, 0, 2, 3))
              for e in range(NSEG - 1)]

    predictions = {
        'pred_masks': pred_masks_3d,
        # SAT-modulated 3D level features; consumed by block5/6/7 + Linking in the
        # full model.  TODO(synk): those refinement stages are external backbones.
        'sat_feats': feat3d,
    }
    predictions_2d = {
        'pred_masks': pred_masks_2d,
        'aux_pred': aux_2d,
        # SAT-modulated 2D level features; consumed by delayer4/3/2_2d externally.
        'sat_feats': feat2d,
    }
    return predictions, predictions_2d


# ----------------------------- deterministic parameter init ---------------------
def _normal(key, shape, scale=0.1):
    return scale * jax.random.normal(key, shape, dtype=jnp.float32)


def init_params(key):
    counter = [0]

    def nk():
        counter[0] += 1
        return jax.random.fold_in(key, counter[0])

    params = {}
    params['cc2d'] = [(_normal(nk(), (CM, CIN2D)), _normal(nk(), (CM, 1)))
                      for _ in range(2)]
    params['cc3d'] = [(_normal(nk(), (CM, CIN3D)), _normal(nk(), (CM, 1)))
                      for _ in range(2)]
    # (W, b, gamma, beta) per SAT level; gamma/beta stand for the BatchNorm affine
    # with running statistics already folded in (inference-mode BN).
    params['lvl2d'] = [(_normal(nk(), (CM, CIN2D)), _normal(nk(), (CM, 1)),
                        1.0 + _normal(nk(), (CM, 1)), _normal(nk(), (CM, 1)))
                       for _ in range(NL)]
    params['lvl3d'] = [(_normal(nk(), (CM, CIN3D)), _normal(nk(), (CM, 1)),
                        1.0 + _normal(nk(), (CM, 1)), _normal(nk(), (CM, 1)))
                       for _ in range(NL)]

    def mlp_params():
        dims = [(D, D)] * 4 + [(D, CM)]
        return [(_normal(nk(), (di, do)), _normal(nk(), (1, do))) for di, do in dims]

    for name in ('mlp_w2d', 'mlp_b2d', 'mlp_w3d', 'mlp_b3d'):
        params[name] = [mlp_params() for _ in range(NL)]
    return params


# ----------------------------- main ----------------------------------------------
if __name__ == "__main__":
    key = jax.random.PRNGKey(0)
    params = init_params(jax.random.fold_in(key, 1000))

    def k(i):
        return jax.random.fold_in(key, i)

    # synthetic stand-ins for the (untranslated) backbone / predictor outputs
    feats2d = [jax.random.normal(k(i), (VB, CIN2D, HW), jnp.float32) for i in range(5)]
    feats3d = [jax.random.normal(k(10 + i), (B3D, NPTS, CIN3D), jnp.float32) for i in range(5)]
    mask_embed_2d = jax.random.normal(k(20), (VB, Q, CM), jnp.float32)
    mask_embed = jax.random.normal(k(21), (B3D, Q, CM), jnp.float32)
    hs_sat_2d = jax.random.normal(k(22), (4, VB, Q, D), jnp.float32)
    hs_sat = jax.random.normal(k(23), (4, B3D, Q, D), jnp.float32)

    forward = jax.jit(semaffinet_core_forward)
    predictions, predictions_2d = forward(
        feats2d, feats3d, mask_embed_2d, mask_embed, hs_sat_2d, hs_sat, params)
    jax.block_until_ready((predictions, predictions_2d))

    assert predictions['pred_masks'].shape == (B3D * NPTS, Q)
    assert predictions_2d['pred_masks'].shape == (B3D, Q, H, W, VIEW)
    assert len(predictions_2d['aux_pred']) == NSEG - 1
    for a in predictions_2d['aux_pred']:
        assert a.shape == (VB, Q, H, W)
    assert predictions_2d['sat_feats'].shape == (NL, CM, VB * HW)
    assert predictions['sat_feats'].shape == (NL, CM, B3D * NPTS)
    print("KERNEL_OK")
</pallas_src>

<mosaic_0001>
module attributes {stable_mosaic.version = 11 : i64} {
  func.func @_semaffi_kernel(%arg0: memref<160x32xf32, #tpu.memory_space<vmem>>, %arg1: memref<128x160xf32, #tpu.memory_space<vmem>>, %arg2: memref<128x1xf32, #tpu.memory_space<vmem>>, %arg3: memref<2x8x16xf32, #tpu.memory_space<vmem>>, %arg4: memref<16x192xf32, #tpu.memory_space<vmem>>, %arg5: memref<4x192x192xf32, #tpu.memory_space<vmem>>, %arg6: memref<4x1x192xf32, #tpu.memory_space<vmem>>, %arg7: memref<192x96xf32, #tpu.memory_space<vmem>>, %arg8: memref<1x96xf32, #tpu.memory_space<vmem>>, %arg9: memref<5x8x32xf32, #tpu.memory_space<vmem>>, %arg10: memref<3x16x32xf32, #tpu.memory_space<vmem>>, %arg11: memref<128x32xf32, #tpu.memory_space<vmem>>) attributes {dimension_semantics = [], scalar_prefetch = 0 : i64, scratch_operands = 1 : i64, tpu.core_type = #tpu.core_type<tc>} {
    %c0 = arith.constant 0 : index
    %c0_0 = arith.constant 0 : index
    %0 = vector.load %arg1[%c0, %c0_0] : memref<128x160xf32, #tpu.memory_space<vmem>>, vector<128x160xf32>
    %c0_1 = arith.constant 0 : index
    %c0_2 = arith.constant 0 : index
    %1 = vector.load %arg0[%c0_1, %c0_2] : memref<160x32xf32, #tpu.memory_space<vmem>>, vector<160x32xf32>
    %cst = arith.constant dense<0.000000e+00> : vector<128x32xf32>
    %2 = tpu.matmul %0, %1, %cst {dimension_numbers = #tpu.dot_dimension_numbers<[1], [0], [0], [1], [0, 0, 1, 1], [], []>} : vector<128x160xf32>, vector<160x32xf32>, vector<128x32xf32> -> vector<128x32xf32>
    %c0_3 = arith.constant 0 : index
    %c0_4 = arith.constant 0 : index
    %3 = vector.load %arg2[%c0_3, %c0_4] : memref<128x1xf32, #tpu.memory_space<vmem>>, vector<128x1xf32>
    %4 = vector.broadcast %3 : vector<128x1xf32> to vector<128x32xf32>
    %5 = arith.addf %2, %4 : vector<128x32xf32>
    %c0_5 = arith.constant 0 : index
    %c0_6 = arith.constant 0 : index
    %6 = vector.load %arg11[%c0_5, %c0_6] : memref<128x32xf32, #tpu.memory_space<vmem>>, vector<128x32xf32>
    tpu.vector_store %arg11[%c0_5, %c0_6], %5 {strides = array<i32>} : memref<128x32xf32, #tpu.memory_space<vmem>>, vector<128x32xf32>,
    %c0_7 = arith.constant 0 : index
    %c0_8 = arith.constant 0 : index
    %7 = vector.load %arg4[%c0_7, %c0_8] : memref<16x192xf32, #tpu.memory_space<vmem>>, vector<16x192xf32>
    %c0_9 = arith.constant 0 : index
    %c0_10 = arith.constant 0 : index
    %c0_11 = arith.constant 0 : index
    %8 = vector.load %arg5[%c0_9, %c0_10, %c0_11] : memref<4x192x192xf32, #tpu.memory_space<vmem>>, vector<1x192x192xf32>
    %9 = vector.shape_cast %8 : vector<1x192x192xf32> to vector<192x192xf32>
    %cst_12 = arith.constant dense<0.000000e+00> : vector<16x192xf32>
    %10 = tpu.matmul %7, %9, %cst_12 {dimension_numbers = #tpu.dot_dimension_numbers<[1], [0], [0], [1], [0, 0, 1, 1], [], []>} : vector<16x192xf32>, vector<192x192xf32>, vector<16x192xf32> -> vector<16x192xf32>
    %c0_13 = arith.constant 0 : index
    %c0_14 = arith.constant 0 : index
    %c0_15 = arith.constant 0 : index
    %11 = vector.load %arg6[%c0_13, %c0_14, %c0_15] : memref<4x1x192xf32, #tpu.memory_space<vmem>>, vector<1x1x192xf32>
    %12 = vector.shape_cast %11 : vector<1x1x192xf32> to vector<1x192xf32>
    %13 = vector.broadcast %12 : vector<1x192xf32> to vector<16x192xf32>
    %14 = arith.addf %10, %13 : vector<16x192xf32>
    %cst_16 = arith.constant 0.000000e+00 : f32
    %15 = vector.broadcast %cst_16 : f32 to vector<16x192xf32>
    %16 = arith.maximumf %14, %15 : vector<16x192xf32>
    %c1 = arith.constant 1 : index
    %c0_17 = arith.constant 0 : index
    %c0_18 = arith.constant 0 : index
    %17 = vector.load %arg5[%c1, %c0_17, %c0_18] : memref<4x192x192xf32, #tpu.memory_space<vmem>>, vector<1x192x192xf32>
    %18 = vector.shape_cast %17 : vector<1x192x192xf32> to vector<192x192xf32>
    %cst_19 = arith.constant dense<0.000000e+00> : vector<16x192xf32>
    %19 = tpu.matmul %16, %18, %cst_19 {dimension_numbers = #tpu.dot_dimension_numbers<[1], [0], [0], [1], [0, 0, 1, 1], [], []>} : vector<16x192xf32>, vector<192x192xf32>, vector<16x192xf32> -> vector<16x192xf32>
    %c1_20 = arith.constant 1 : index
    %c0_21 = arith.constant 0 : index
    %c0_22 = arith.constant 0 : index
    %20 = vector.load %arg6[%c1_20, %c0_21, %c0_22] : memref<4x1x192xf32, #tpu.memory_space<vmem>>, vector<1x1x192xf32>
    %21 = vector.shape_cast %20 : vector<1x1x192xf32> to vector<1x192xf32>
    %22 = vector.broadcast %21 : vector<1x192xf32> to vector<16x192xf32>
    %23 = arith.addf %19, %22 : vector<16x192xf32>
    %cst_23 = arith.constant 0.000000e+00 : f32
    %24 = vector.broadcast %cst_23 : f32 to vector<16x192xf32>
    %25 = arith.maximumf %23, %24 : vector<16x192xf32>
    %c2 = arith.constant 2 : index
    %c0_24 = arith.constant 0 : index
    %c0_25 = arith.constant 0 : index
    %26 = vector.load %arg5[%c2, %c0_24, %c0_25] : memref<4x192x192xf32, #tpu.memory_space<vmem>>, vector<1x192x192xf32>
    %27 = vector.shape_cast %26 : vector<1x192x192xf32> to vector<192x192xf32>
    %cst_26 = arith.constant dense<0.000000e+00> : vector<16x192xf32>
    %28 = tpu.matmul %25, %27, %cst_26 {dimension_numbers = #tpu.dot_dimension_numbers<[1], [0], [0], [1], [0, 0, 1, 1], [], []>} : vector<16x192xf32>, vector<192x192xf32>, vector<16x192xf32> -> vector<16x192xf32>
    %c2_27 = arith.constant 2 : index
    %c0_28 = arith.constant 0 : index
    %c0_29 = arith.constant 0 : index
    %29 = vector.load %arg6[%c2_27, %c0_28, %c0_29] : memref<4x1x192xf32, #tpu.memory_space<vmem>>, vector<1x1x192xf32>
    %30 = vector.shape_cast %29 : vector<1x1x192xf32> to vector<1x192xf32>
    %31 = vector.broadcast %30 : vector<1x192xf32> to vector<16x192xf32>
    %32 = arith.addf %28, %31 : vector<16x192xf32>
    %cst_30 = arith.constant 0.000000e+00 : f32
    %33 = vector.broadcast %cst_30 : f32 to vector<16x192xf32>
    %34 = arith.maximumf %32, %33 : vector<16x192xf32>
    %c3 = arith.constant 3 : index
    %c0_31 = arith.constant 0 : index
    %c0_32 = arith.constant 0 : index
    %35 = vector.load %arg5[%c3, %c0_31, %c0_32] : memref<4x192x192xf32, #tpu.memory_space<vmem>>, vector<1x192x192xf32>
    %36 = vector.shape_cast %35 : vector<1x192x192xf32> to vector<192x192xf32>
    %cst_33 = arith.constant dense<0.000000e+00> : vector<16x192xf32>
    %37 = tpu.matmul %34, %36, %cst_33 {dimension_numbers = #tpu.dot_dimension_numbers<[1], [0], [0], [1], [0, 0, 1, 1], [], []>} : vector<16x192xf32>, vector<192x192xf32>, vector<16x192xf32> -> vector<16x192xf32>
    %c3_34 = arith.constant 3 : index
    %c0_35 = arith.constant 0 : index
    %c0_36 = arith.constant 0 : index
    %38 = vector.load %arg6[%c3_34, %c0_35, %c0_36] : memref<4x1x192xf32, #tpu.memory_space<vmem>>, vector<1x1x192xf32>
    %39 = vector.shape_cast %38 : vector<1x1x192xf32> to vector<1x192xf32>
    %40 = vector.broadcast %39 : vector<1x192xf32> to vector<16x192xf32>
    %41 = arith.addf %37, %40 : vector<16x192xf32>
    %cst_37 = arith.constant 0.000000e+00 : f32
    %42 = vector.broadcast %cst_37 : f32 to vector<16x192xf32>
    %43 = arith.maximumf %41, %42 : vector<16x192xf32>
    %c0_38 = arith.constant 0 : index
    %c0_39 = arith.constant 0 : index
    %44 = vector.load %arg7[%c0_38, %c0_39] : memref<192x96xf32, #tpu.memory_space<vmem>>, vector<192x96xf32>
    %cst_40 = arith.constant dense<0.000000e+00> : vector<16x96xf32>
    %45 = tpu.matmul %43, %44, %cst_40 {dimension_numbers = #tpu.dot_dimension_numbers<[1], [0], [0], [1], [0, 0, 1, 1], [], []>} : vector<16x192xf32>, vector<192x96xf32>, vector<16x96xf32> -> vector<16x96xf32>
    %c0_41 = arith.constant 0 : index
    %c0_42 = arith.constant 0 : index
    %46 = vector.load %arg8[%c0_41, %c0_42] : memref<1x96xf32, #tpu.memory_space<vmem>>, vector<1x96xf32>
    %47 = vector.broadcast %46 : vector<1x96xf32> to vector<16x96xf32>
    %48 = arith.addf %45, %47 : vector<16x96xf32>
    %49 = tpu.iota {dimensions = array<i32: 1>} : vector<16x96xi32>
    %c32_i32 = arith.constant 32 : i32
    %c0_i32 = arith.constant 0 : i32
    %50 = arith.cmpi eq, %c32_i32, %c0_i32 : i32
    %c1_i32 = arith.constant 1 : i32
    %51 = arith.select %50, %c1_i32, %c32_i32 : i32
    %52 = vector.broadcast %51 : i32 to vector<16x96xi32>
    %53 = arith.remsi %49, %52 : vector<16x96xi32>
    %c0_i32_43 = arith.constant 0 : i32
    %54 = vector.broadcast %c0_i32_43 : i32 to vector<16x96xi32>
    %55 = arith.cmpi ne, %53, %54 : vector<16x96xi32>
    %c0_i32_44 = arith.constant 0 : i32
    %56 = vector.broadcast %c0_i32_44 : i32 to vector<16x96xi32>
    %57 = arith.cmpi slt, %53, %56 : vector<16x96xi32>
    %c0_i32_45 = arith.constant 0 : i32
    %58 = arith.cmpi slt, %51, %c0_i32_45 : i32
    %59 = vector.broadcast %58 : i1 to vector<16x96xi1>
    %60 = vector.broadcast %59 : vector<16x96xi1> to vector<16x96xi1>
    %61 = arith.xori %57, %60 : vector<16x96xi1>
    %62 = arith.andi %61, %55 : vector<16x96xi1>
    %63 = vector.broadcast %51 : i32 to vector<16x96xi32>
    %64 = arith.addi %53, %63 : vector<16x96xi32>
    %65 = arith.select %62, %64, %53 : vector<16x96xi1>, vector<16x96xi32>
    %c16_i32 = arith.constant 16 : i32
    %66 = vector.broadcast %c16_i32 : i32 to vector<16x96xi32>
    %67 = arith.cmpi slt, %65, %66 : vector<16x96xi32>
    %68 = math.absf %48 : vector<16x96xf32>
    %69 = arith.select %67, %68, %48 : vector<16x96xi1>, vector<16x96xf32>
    %c0_46 = arith.constant 0 : index
    %c0_47 = arith.constant 0 : index
    %c0_48 = arith.constant 0 : index
    %70 = vector.load %arg3[%c0_46, %c0_47, %c0_48] : memref<2x8x16xf32, #tpu.memory_space<vmem>>, vector<2x8x16xf32>
    %c0_49 = arith.constant 0 : index
    %c0_50 = arith.constant 0 : index
    %71 = vector.load %arg11[%c0_49, %c0_50] : memref<128x32xf32, #tpu.memory_space<vmem>>, vector<16x16xf32>
    %72 = vector.extract_strided_slice %70 {offsets = [0, 0, 0], sizes = [1, 8, 16], strides = [1, 1, 1]} : vector<2x8x16xf32> to vector<1x8x16xf32>
    %73 = vector.shape_cast %72 : vector<1x8x16xf32> to vector<8x16xf32>
    %cst_51 = arith.constant dense<0.000000e+00> : vector<8x16xf32>
    %74 = tpu.matmul %73, %71, %cst_51 {dimension_numbers = #tpu.dot_dimension_numbers<[1], [0], [0], [1], [0, 0, 1, 1], [], []>} : vector<8x16xf32>, vector<16x16xf32>, vector<8x16xf32> -> vector<8x16xf32>
    %c0_52 = arith.constant 0 : index
    %c16 = arith.constant 16 : index
    %75 = vector.load %arg11[%c0_52, %c16] : memref<128x32xf32, #tpu.memory_space<vmem>>, vector<16x16xf32>
    %76 = vector.extract_strided_slice %70 {offsets = [1, 0, 0], sizes = [1, 8, 16], strides = [1, 1, 1]} : vector<2x8x16xf32> to vector<1x8x16xf32>
    %77 = vector.shape_cast %76 : vector<1x8x16xf32> to vector<8x16xf32>
    %cst_53 = arith.constant dense<0.000000e+00> : vector<8x16xf32>
    %78 = tpu.matmul %77, %75, %cst_53 {dimension_numbers = #tpu.dot_dimension_numbers<[1], [0], [0], [1], [0, 0, 1, 1], [], []>} : vector<8x16xf32>, vector<16x16xf32>, vector<8x16xf32> -> vector<8x16xf32>
    %79 = tpu.concatenate %74, %78 in 1 : vector<8x16xf32>, vector<8x16xf32> -> vector<8x32xf32>
    %c0_54 = arith.constant 0 : index
    %c0_55 = arith.constant 0 : index
    %c0_56 = arith.constant 0 : index
    %80 = vector.load %arg9[%c0_54, %c0_55, %c0_56] : memref<5x8x32xf32, #tpu.memory_space<vmem>>, vector<1x8x32xf32>
    %81 = vector.shape_cast %80 : vector<1x8x32xf32> to vector<8x32xf32>
    %82 = vector.shape_cast %79 : vector<8x32xf32> to vector<1x8x32xf32>
    tpu.vector_store %arg9[%c0_54, %c0_55, %c0_56], %82 {strides = array<i32>} : memref<5x8x32xf32, #tpu.memory_space<vmem>>, vector<1x8x32xf32>,
    %c16_57 = arith.constant 16 : index
    %c0_58 = arith.constant 0 : index
    %83 = vector.load %arg11[%c16_57, %c0_58] : memref<128x32xf32, #tpu.memory_space<vmem>>, vector<16x16xf32>
    %84 = vector.extract_strided_slice %70 {offsets = [0, 0, 0], sizes = [1, 8, 16], strides = [1, 1, 1]} : vector<2x8x16xf32> to vector<1x8x16xf32>
    %85 = vector.shape_cast %84 : vector<1x8x16xf32> to vector<8x16xf32>
    %cst_59 = arith.constant dense<0.000000e+00> : vector<8x16xf32>
    %86 = tpu.matmul %85, %83, %cst_59 {dimension_numbers = #tpu.dot_dimension_numbers<[1], [0], [0], [1], [0, 0, 1, 1], [], []>} : vector<8x16xf32>, vector<16x16xf32>, vector<8x16xf32> -> vector<8x16xf32>
    %87 = arith.negf %86 : vector<8x16xf32>
    %88 = math.exp %87 : vector<8x16xf32>
    %cst_60 = arith.constant 1.000000e+00 : f32
    %89 = vector.broadcast %cst_60 : f32 to vector<8x16xf32>
    %90 = arith.addf %89, %88 : vector<8x16xf32>
    %91 = arith.divf %89, %90 : vector<8x16xf32>
    %92 = vector.extract_strided_slice %69 {offsets = [0, 0], sizes = [8, 32], strides = [1, 1]} : vector<16x96xf32> to vector<8x32xf32>
    %cst_61 = arith.constant dense<0.000000e+00> : vector<32x16xf32>
    %93 = tpu.matmul %92, %91, %cst_61 {dimension_numbers = #tpu.dot_dimension_numbers<[0], [0], [1], [1], [0, 1, 1, 1], [], []>} : vector<8x32xf32>, vector<8x16xf32>, vector<32x16xf32> -> vector<32x16xf32>
    %c32 = arith.constant 32 : index
    %c0_62 = arith.constant 0 : index
    %94 = vector.load %arg11[%c32, %c0_62] : memref<128x32xf32, #tpu.memory_space<vmem>>, vector<16x16xf32>
    %95 = vector.extract_strided_slice %93 {offsets = [0, 0], sizes = [16, 16], strides = [1, 1]} : vector<32x16xf32> to vector<16x16xf32>
    %96 = arith.mulf %94, %95 : vector<16x16xf32>
    %97 = vector.extract_strided_slice %93 {offsets = [16, 0], sizes = [16, 16], strides = [1, 1]} : vector<32x16xf32> to vector<16x16xf32>
    %98 = arith.addf %96, %97 : vector<16x16xf32>
    %cst_63 = arith.constant 0.000000e+00 : f32
    %99 = vector.broadcast %cst_63 : f32 to vector<16x16xf32>
    %100 = arith.maximumf %98, %99 : vector<16x16xf32>
    %c16_64 = arith.constant 16 : index
    %c16_65 = arith.constant 16 : index
    %101 = vector.load %arg11[%c16_64, %c16_65] : memref<128x32xf32, #tpu.memory_space<vmem>>, vector<16x16xf32>
    %102 = vector.extract_strided_slice %70 {offsets = [1, 0, 0], sizes = [1, 8, 16], strides = [1, 1, 1]} : vector<2x8x16xf32> to vector<1x8x16xf32>
    %103 = vector.shape_cast %102 : vector<1x8x16xf32> to vector<8x16xf32>
    %cst_66 = arith.constant dense<0.000000e+00> : vector<8x16xf32>
    %104 = tpu.matmul %103, %101, %cst_66 {dimension_numbers = #tpu.dot_dimension_numbers<[1], [0], [0], [1], [0, 0, 1, 1], [], []>} : vector<8x16xf32>, vector<16x16xf32>, vector<8x16xf32> -> vector<8x16xf32>
    %105 = arith.negf %104 : vector<8x16xf32>
    %106 = math.exp %105 : vector<8x16xf32>
    %cst_67 = arith.constant 1.000000e+00 : f32
    %107 = vector.broadcast %cst_67 : f32 to vector<8x16xf32>
    %108 = arith.addf %107, %106 : vector<8x16xf32>
    %109 = arith.divf %107, %108 : vector<8x16xf32>
    %110 = vector.extract_strided_slice %69 {offsets = [8, 0], sizes = [8, 32], strides = [1, 1]} : vector<16x96xf32> to vector<8x32xf32>
    %cst_68 = arith.constant dense<0.000000e+00> : vector<32x16xf32>
    %111 = tpu.matmul %110, %109, %cst_68 {dimension_numbers = #tpu.dot_dimension_numbers<[0], [0], [1], [1], [0, 1, 1, 1], [], []>} : vector<8x32xf32>, vector<8x16xf32>, vector<32x16xf32> -> vector<32x16xf32>
    %c32_69 = arith.constant 32 : index
    %c16_70 = arith.constant 16 : index
    %112 = vector.load %arg11[%c32_69, %c16_70] : memref<128x32xf32, #tpu.memory_space<vmem>>, vector<16x16xf32>
    %113 = vector.extract_strided_slice %111 {offsets = [0, 0], sizes = [16, 16], strides = [1, 1]} : vector<32x16xf32> to vector<16x16xf32>
    %114 = arith.mulf %112, %113 : vector<16x16xf32>
    %115 = vector.extract_strided_slice %111 {offsets = [16, 0], sizes = [16, 16], strides = [1, 1]} : vector<32x16xf32> to vector<16x16xf32>
    %116 = arith.addf %114, %115 : vector<16x16xf32>
    %cst_71 = arith.constant 0.000000e+00 : f32
    %117 = vector.broadcast %cst_71 : f32 to vector<16x16xf32>
    %118 = arith.maximumf %116, %117 : vector<16x16xf32>
    %119 = tpu.concatenate %86, %104 in 1 : vector<8x16xf32>, vector<8x16xf32> -> vector<8x32xf32>
    %c1_72 = arith.constant 1 : index
    %c0_73 = arith.constant 0 : index
    %c0_74 = arith.constant 0 : index
    %120 = vector.load %arg9[%c1_72, %c0_73, %c0_74] : memref<5x8x32xf32, #tpu.memory_space<vmem>>, vector<1x8x32xf32>
    %121 = vector.shape_cast %120 : vector<1x8x32xf32> to vector<8x32xf32>
    %122 = vector.shape_cast %119 : vector<8x32xf32> to vector<1x8x32xf32>
    tpu.vector_store %arg9[%c1_72, %c0_73, %c0_74], %122 {strides = array<i32>} : memref<5x8x32xf32, #tpu.memory_space<vmem>>, vector<1x8x32xf32>,
    %123 = tpu.concatenate %100, %118 in 1 : vector<16x16xf32>, vector<16x16xf32> -> vector<16x32xf32>
    %c0_75 = arith.constant 0 : index
    %c0_76 = arith.constant 0 : index
    %c0_77 = arith.constant 0 : index
    %124 = vector.load %arg10[%c0_75, %c0_76, %c0_77] : memref<3x16x32xf32, #tpu.memory_space<vmem>>, vector<1x16x32xf32>
    %125 = vector.shape_cast %124 : vector<1x16x32xf32> to vector<16x32xf32>
    %126 = vector.shape_cast %123 : vector<16x32xf32> to vector<1x16x32xf32>
    tpu.vector_store %arg10[%c0_75, %c0_76, %c0_77], %126 {strides = array<i32>} : memref<3x16x32xf32, #tpu.memory_space<vmem>>, vector<1x16x32xf32>,
    %c48 = arith.constant 48 : index
    %c0_78 = arith.constant 0 : index
    %127 = vector.load %arg11[%c48, %c0_78] : memref<128x32xf32, #tpu.memory_space<vmem>>, vector<16x16xf32>
    %128 = vector.extract_strided_slice %70 {offsets = [0, 0, 0], sizes = [1, 8, 16], strides = [1, 1, 1]} : vector<2x8x16xf32> to vector<1x8x16xf32>
    %129 = vector.shape_cast %128 : vector<1x8x16xf32> to vector<8x16xf32>
    %cst_79 = arith.constant dense<0.000000e+00> : vector<8x16xf32>
    %130 = tpu.matmul %129, %127, %cst_79 {dimension_numbers = #tpu.dot_dimension_numbers<[1], [0], [0], [1], [0, 0, 1, 1], [], []>} : vector<8x16xf32>, vector<16x16xf32>, vector<8x16xf32> -> vector<8x16xf32>
    %131 = arith.negf %130 : vector<8x16xf32>
    %132 = math.exp %131 : vector<8x16xf32>
    %cst_80 = arith.constant 1.000000e+00 : f32
    %133 = vector.broadcast %cst_80 : f32 to vector<8x16xf32>
    %134 = arith.addf %133, %132 : vector<8x16xf32>
    %135 = arith.divf %133, %134 : vector<8x16xf32>
    %136 = vector.extract_strided_slice %69 {offsets = [0, 32], sizes = [8, 32], strides = [1, 1]} : vector<16x96xf32> to vector<8x32xf32>
    %cst_81 = arith.constant dense<0.000000e+00> : vector<32x16xf32>
    %137 = tpu.matmul %136, %135, %cst_81 {dimension_numbers = #tpu.dot_dimension_numbers<[0], [0], [1], [1], [0, 1, 1, 1], [], []>} : vector<8x32xf32>, vector<8x16xf32>, vector<32x16xf32> -> vector<32x16xf32>
    %c64 = arith.constant 64 : index
    %c0_82 = arith.constant 0 : index
    %138 = vector.load %arg11[%c64, %c0_82] : memref<128x32xf32, #tpu.memory_space<vmem>>, vector<16x16xf32>
    %139 = vector.extract_strided_slice %137 {offsets = [0, 0], sizes = [16, 16], strides = [1, 1]} : vector<32x16xf32> to vector<16x16xf32>
    %140 = arith.mulf %138, %139 : vector<16x16xf32>
    %141 = vector.extract_strided_slice %137 {offsets = [16, 0], sizes = [16, 16], strides = [1, 1]} : vector<32x16xf32> to vector<16x16xf32>
    %142 = arith.addf %140, %141 : vector<16x16xf32>
    %cst_83 = arith.constant 0.000000e+00 : f32
    %143 = vector.broadcast %cst_83 : f32 to vector<16x16xf32>
    %144 = arith.maximumf %142, %143 : vector<16x16xf32>
    %c48_84 = arith.constant 48 : index
    %c16_85 = arith.constant 16 : index
    %145 = vector.load %arg11[%c48_84, %c16_85] : memref<128x32xf32, #tpu.memory_space<vmem>>, vector<16x16xf32>
    %146 = vector.extract_strided_slice %70 {offsets = [1, 0, 0], sizes = [1, 8, 16], strides = [1, 1, 1]} : vector<2x8x16xf32> to vector<1x8x16xf32>
    %147 = vector.shape_cast %146 : vector<1x8x16xf32> to vector<8x16xf32>
    %cst_86 = arith.constant dense<0.000000e+00> : vector<8x16xf32>
    %148 = tpu.matmul %147, %145, %cst_86 {dimension_numbers = #tpu.dot_dimension_numbers<[1], [0], [0], [1], [0, 0, 1, 1], [], []>} : vector<8x16xf32>, vector<16x16xf32>, vector<8x16xf32> -> vector<8x16xf32>
    %149 = arith.negf %148 : vector<8x16xf32>
    %150 = math.exp %149 : vector<8x16xf32>
    %cst_87 = arith.constant 1.000000e+00 : f32
    %151 = vector.broadcast %cst_87 : f32 to vector<8x16xf32>
    %152 = arith.addf %151, %150 : vector<8x16xf32>
    %153 = arith.divf %151, %152 : vector<8x16xf32>
    %154 = vector.extract_strided_slice %69 {offsets = [8, 32], sizes = [8, 32], strides = [1, 1]} : vector<16x96xf32> to vector<8x32xf32>
    %cst_88 = arith.constant dense<0.000000e+00> : vector<32x16xf32>
    %155 = tpu.matmul %154, %153, %cst_88 {dimension_numbers = #tpu.dot_dimension_numbers<[0], [0], [1], [1], [0, 1, 1, 1], [], []>} : vector<8x32xf32>, vector<8x16xf32>, vector<32x16xf32> -> vector<32x16xf32>
    %c64_89 = arith.constant 64 : index
    %c16_90 = arith.constant 16 : index
    %156 = vector.load %arg11[%c64_89, %c16_90] : memref<128x32xf32, #tpu.memory_space<vmem>>, vector<16x16xf32>
    %157 = vector.extract_strided_slice %155 {offsets = [0, 0], sizes = [16, 16], strides = [1, 1]} : vector<32x16xf32> to vector<16x16xf32>
    %158 = arith.mulf %156, %157 : vector<16x16xf32>
    %159 = vector.extract_strided_slice %155 {offsets = [16, 0], sizes = [16, 16], strides = [1, 1]} : vector<32x16xf32> to vector<16x16xf32>
    %160 = arith.addf %158, %159 : vector<16x16xf32>
    %cst_91 = arith.constant 0.000000e+00 : f32
    %161 = vector.broadcast %cst_91 : f32 to vector<16x16xf32>
    %162 = arith.maximumf %160, %161 : vector<16x16xf32>
    %163 = tpu.concatenate %130, %148 in 1 : vector<8x16xf32>, vector<8x16xf32> -> vector<8x32xf32>
    %c2_92 = arith.constant 2 : index
    %c0_93 = arith.constant 0 : index
    %c0_94 = arith.constant 0 : index
    %164 = vector.load %arg9[%c2_92, %c0_93, %c0_94] : memref<5x8x32xf32, #tpu.memory_space<vmem>>, vector<1x8x32xf32>
    %165 = vector.shape_cast %164 : vector<1x8x32xf32> to vector<8x32xf32>
    %166 = vector.shape_cast %163 : vector<8x32xf32> to vector<1x8x32xf32>
    tpu.vector_store %arg9[%c2_92, %c0_93, %c0_94], %166 {strides = array<i32>} : memref<5x8x32xf32, #tpu.memory_space<vmem>>, vector<1x8x32xf32>,
    %167 = tpu.concatenate %144, %162 in 1 : vector<16x16xf32>, vector<16x16xf32> -> vector<16x32xf32>
    %c1_95 = arith.constant 1 : index
    %c0_96 = arith.constant 0 : index
    %c0_97 = arith.constant 0 : index
    %168 = vector.load %arg10[%c1_95, %c0_96, %c0_97] : memref<3x16x32xf32, #tpu.memory_space<vmem>>, vector<1x16x32xf32>
    %169 = vector.shape_cast %168 : vector<1x16x32xf32> to vector<16x32xf32>
    %170 = vector.shape_cast %167 : vector<16x32xf32> to vector<1x16x32xf32>
    tpu.vector_store %arg10[%c1_95, %c0_96, %c0_97], %170 {strides = array<i32>} : memref<3x16x32xf32, #tpu.memory_space<vmem>>, vector<1x16x32xf32>,
    %c80 = arith.constant 80 : index
    %c0_98 = arith.constant 0 : index
    %171 = vector.load %arg11[%c80, %c0_98] : memref<128x32xf32, #tpu.memory_space<vmem>>, vector<16x16xf32>
    %172 = vector.extract_strided_slice %70 {offsets = [0, 0, 0], sizes = [1, 8, 16], strides = [1, 1, 1]} : vector<2x8x16xf32> to vector<1x8x16xf32>
    %173 = vector.shape_cast %172 : vector<1x8x16xf32> to vector<8x16xf32>
    %cst_99 = arith.constant dense<0.000000e+00> : vector<8x16xf32>
    %174 = tpu.matmul %173, %171, %cst_99 {dimension_numbers = #tpu.dot_dimension_numbers<[1], [0], [0], [1], [0, 0, 1, 1], [], []>} : vector<8x16xf32>, vector<16x16xf32>, vector<8x16xf32> -> vector<8x16xf32>
    %175 = arith.negf %174 : vector<8x16xf32>
    %176 = math.exp %175 : vector<8x16xf32>
    %cst_100 = arith.constant 1.000000e+00 : f32
    %177 = vector.broadcast %cst_100 : f32 to vector<8x16xf32>
    %178 = arith.addf %177, %176 : vector<8x16xf32>
    %179 = arith.divf %177, %178 : vector<8x16xf32>
    %180 = vector.extract_strided_slice %69 {offsets = [0, 64], sizes = [8, 32], strides = [1, 1]} : vector<16x96xf32> to vector<8x32xf32>
    %cst_101 = arith.constant dense<0.000000e+00> : vector<32x16xf32>
    %181 = tpu.matmul %180, %179, %cst_101 {dimension_numbers = #tpu.dot_dimension_numbers<[0], [0], [1], [1], [0, 1, 1, 1], [], []>} : vector<8x32xf32>, vector<8x16xf32>, vector<32x16xf32> -> vector<32x16xf32>
    %c96 = arith.constant 96 : index
    %c0_102 = arith.constant 0 : index
    %182 = vector.load %arg11[%c96, %c0_102] : memref<128x32xf32, #tpu.memory_space<vmem>>, vector<16x16xf32>
    %183 = vector.extract_strided_slice %181 {offsets = [0, 0], sizes = [16, 16], strides = [1, 1]} : vector<32x16xf32> to vector<16x16xf32>
    %184 = arith.mulf %182, %183 : vector<16x16xf32>
    %185 = vector.extract_strided_slice %181 {offsets = [16, 0], sizes = [16, 16], strides = [1, 1]} : vector<32x16xf32> to vector<16x16xf32>
    %186 = arith.addf %184, %185 : vector<16x16xf32>
    %cst_103 = arith.constant 0.000000e+00 : f32
    %187 = vector.broadcast %cst_103 : f32 to vector<16x16xf32>
    %188 = arith.maximumf %186, %187 : vector<16x16xf32>
    %c80_104 = arith.constant 80 : index
    %c16_105 = arith.constant 16 : index
    %189 = vector.load %arg11[%c80_104, %c16_105] : memref<128x32xf32, #tpu.memory_space<vmem>>, vector<16x16xf32>
    %190 = vector.extract_strided_slice %70 {offsets = [1, 0, 0], sizes = [1, 8, 16], strides = [1, 1, 1]} : vector<2x8x16xf32> to vector<1x8x16xf32>
    %191 = vector.shape_cast %190 : vector<1x8x16xf32> to vector<8x16xf32>
    %cst_106 = arith.constant dense<0.000000e+00> : vector<8x16xf32>
    %192 = tpu.matmul %191, %189, %cst_106 {dimension_numbers = #tpu.dot_dimension_numbers<[1], [0], [0], [1], [0, 0, 1, 1], [], []>} : vector<8x16xf32>, vector<16x16xf32>, vector<8x16xf32> -> vector<8x16xf32>
    %193 = arith.negf %192 : vector<8x16xf32>
    %194 = math.exp %193 : vector<8x16xf32>
    %cst_107 = arith.constant 1.000000e+00 : f32
    %195 = vector.broadcast %cst_107 : f32 to vector<8x16xf32>
    %196 = arith.addf %195, %194 : vector<8x16xf32>
    %197 = arith.divf %195, %196 : vector<8x16xf32>
    %198 = vector.extract_strided_slice %69 {offsets = [8, 64], sizes = [8, 32], strides = [1, 1]} : vector<16x96xf32> to vector<8x32xf32>
    %cst_108 = arith.constant dense<0.000000e+00> : vector<32x16xf32>
    %199 = tpu.matmul %198, %197, %cst_108 {dimension_numbers = #tpu.dot_dimension_numbers<[0], [0], [1], [1], [0, 1, 1, 1], [], []>} : vector<8x32xf32>, vector<8x16xf32>, vector<32x16xf32> -> vector<32x16xf32>
    %c96_109 = arith.constant 96 : index
    %c16_110 = arith.constant 16 : index
    %200 = vector.load %arg11[%c96_109, %c16_110] : memref<128x32xf32, #tpu.memory_space<vmem>>, vector<16x16xf32>
    %201 = vector.extract_strided_slice %199 {offsets = [0, 0], sizes = [16, 16], strides = [1, 1]} : vector<32x16xf32> to vector<16x16xf32>
    %202 = arith.mulf %200, %201 : vector<16x16xf32>
    %203 = vector.extract_strided_slice %199 {offsets = [16, 0], sizes = [16, 16], strides = [1, 1]} : vector<32x16xf32> to vector<16x16xf32>
    %204 = arith.addf %202, %203 : vector<16x16xf32>
    %cst_111 = arith.constant 0.000000e+00 : f32
    %205 = vector.broadcast %cst_111 : f32 to vector<16x16xf32>
    %206 = arith.maximumf %204, %205 : vector<16x16xf32>
    %207 = tpu.concatenate %174, %192 in 1 : vector<8x16xf32>, vector<8x16xf32> -> vector<8x32xf32>
    %c3_112 = arith.constant 3 : index
    %c0_113 = arith.constant 0 : index
    %c0_114 = arith.constant 0 : index
    %208 = vector.load %arg9[%c3_112, %c0_113, %c0_114] : memref<5x8x32xf32, #tpu.memory_space<vmem>>, vector<1x8x32xf32>
    %209 = vector.shape_cast %208 : vector<1x8x32xf32> to vector<8x32xf32>
    %210 = vector.shape_cast %207 : vector<8x32xf32> to vector<1x8x32xf32>
    tpu.vector_store %arg9[%c3_112, %c0_113, %c0_114], %210 {strides = array<i32>} : memref<5x8x32xf32, #tpu.memory_space<vmem>>, vector<1x8x32xf32>,
    %211 = tpu.concatenate %188, %206 in 1 : vector<16x16xf32>, vector<16x16xf32> -> vector<16x32xf32>
    %c2_115 = arith.constant 2 : index
    %c0_116 = arith.constant 0 : index
    %c0_117 = arith.constant 0 : index
    %212 = vector.load %arg10[%c2_115, %c0_116, %c0_117] : memref<3x16x32xf32, #tpu.memory_space<vmem>>, vector<1x16x32xf32>
    %213 = vector.shape_cast %212 : vector<1x16x32xf32> to vector<16x32xf32>
    %214 = vector.shape_cast %211 : vector<16x32xf32> to vector<1x16x32xf32>
    tpu.vector_store %arg10[%c2_115, %c0_116, %c0_117], %214 {strides = array<i32>} : memref<3x16x32xf32, #tpu.memory_space<vmem>>, vector<1x16x32xf32>,
    %c112 = arith.constant 112 : index
    %c0_118 = arith.constant 0 : index
    %215 = vector.load %arg11[%c112, %c0_118] : memref<128x32xf32, #tpu.memory_space<vmem>>, vector<16x16xf32>
    %216 = vector.extract_strided_slice %70 {offsets = [0, 0, 0], sizes = [1, 8, 16], strides = [1, 1, 1]} : vector<2x8x16xf32> to vector<1x8x16xf32>
    %217 = vector.shape_cast %216 : vector<1x8x16xf32> to vector<8x16xf32>
    %cst_119 = arith.constant dense<0.000000e+00> : vector<8x16xf32>
    %218 = tpu.matmul %217, %215, %cst_119 {dimension_numbers = #tpu.dot_dimension_numbers<[1], [0], [0], [1], [0, 0, 1, 1], [], []>} : vector<8x16xf32>, vector<16x16xf32>, vector<8x16xf32> -> vector<8x16xf32>
    %c112_120 = arith.constant 112 : index
    %c16_121 = arith.constant 16 : index
    %219 = vector.load %arg11[%c112_120, %c16_121] : memref<128x32xf32, #tpu.memory_space<vmem>>, vector<16x16xf32>
    %220 = vector.extract_strided_slice %70 {offsets = [1, 0, 0], sizes = [1, 8, 16], strides = [1, 1, 1]} : vector<2x8x16xf32> to vector<1x8x16xf32>
    %221 = vector.shape_cast %220 : vector<1x8x16xf32> to vector<8x16xf32>
    %cst_122 = arith.constant dense<0.000000e+00> : vector<8x16xf32>
    %222 = tpu.matmul %221, %219, %cst_122 {dimension_numbers = #tpu.dot_dimension_numbers<[1], [0], [0], [1], [0, 0, 1, 1], [], []>} : vector<8x16xf32>, vector<16x16xf32>, vector<8x16xf32> -> vector<8x16xf32>
    %223 = tpu.concatenate %218, %222 in 1 : vector<8x16xf32>, vector<8x16xf32> -> vector<8x32xf32>
    %c4 = arith.constant 4 : index
    %c0_123 = arith.constant 0 : index
    %c0_124 = arith.constant 0 : index
    %224 = vector.load %arg9[%c4, %c0_123, %c0_124] : memref<5x8x32xf32, #tpu.memory_space<vmem>>, vector<1x8x32xf32>
    %225 = vector.shape_cast %224 : vector<1x8x32xf32> to vector<8x32xf32>
    %226 = vector.shape_cast %223 : vector<8x32xf32> to vector<1x8x32xf32>
    tpu.vector_store %arg9[%c4, %c0_123, %c0_124], %226 {strides = array<i32>} : memref<5x8x32xf32, #tpu.memory_space<vmem>>, vector<1x8x32xf32>,
    return
  }
}

module attributes {stable_mosaic.version = 11 : i64} {
  func.func @_semaffi_kernel(%arg0: memref<160x256xf32, #tpu.memory_space<vmem>>, %arg1: memref<128x160xf32, #tpu.memory_space<vmem>>, %arg2: memref<128x1xf32, #tpu.memory_space<vmem>>, %arg3: memref<4x8x16xf32, #tpu.memory_space<vmem>>, %arg4: memref<32x192xf32, #tpu.memory_space<vmem>>, %arg5: memref<4x192x192xf32, #tpu.memory_space<vmem>>, %arg6: memref<4x1x192xf32, #tpu.memory_space<vmem>>, %arg7: memref<192x96xf32, #tpu.memory_space<vmem>>, %arg8: memref<1x96xf32, #tpu.memory_space<vmem>>, %arg9: memref<5x8x256xf32, #tpu.memory_space<vmem>>, %arg10: memref<3x16x256xf32, #tpu.memory_space<vmem>>, %arg11: memref<128x256xf32, #tpu.memory_space<vmem>>) attributes {dimension_semantics = [], scalar_prefetch = 0 : i64, scratch_operands = 1 : i64, tpu.core_type = #tpu.core_type<tc>} {
    %c0 = arith.constant 0 : index
    %c0_0 = arith.constant 0 : index
    %0 = vector.load %arg1[%c0, %c0_0] : memref<128x160xf32, #tpu.memory_space<vmem>>, vector<128x160xf32>
    %c0_1 = arith.constant 0 : index
    %c0_2 = arith.constant 0 : index
    %1 = vector.load %arg0[%c0_1, %c0_2] : memref<160x256xf32, #tpu.memory_space<vmem>>, vector<160x256xf32>
    %cst = arith.constant dense<0.000000e+00> : vector<128x256xf32>
    %2 = tpu.matmul %0, %1, %cst {dimension_numbers = #tpu.dot_dimension_numbers<[1], [0], [0], [1], [0, 0, 1, 1], [], []>} : vector<128x160xf32>, vector<160x256xf32>, vector<128x256xf32> -> vector<128x256xf32>
    %c0_3 = arith.constant 0 : index
    %c0_4 = arith.constant 0 : index
    %3 = vector.load %arg2[%c0_3, %c0_4] : memref<128x1xf32, #tpu.memory_space<vmem>>, vector<128x1xf32>
    %4 = vector.broadcast %3 : vector<128x1xf32> to vector<128x256xf32>
    %5 = arith.addf %2, %4 : vector<128x256xf32>
    %c0_5 = arith.constant 0 : index
    %c0_6 = arith.constant 0 : index
    %6 = vector.load %arg11[%c0_5, %c0_6] : memref<128x256xf32, #tpu.memory_space<vmem>>, vector<128x256xf32>
    tpu.vector_store %arg11[%c0_5, %c0_6], %5 {strides = array<i32>} : memref<128x256xf32, #tpu.memory_space<vmem>>, vector<128x256xf32>,
    %c0_7 = arith.constant 0 : index
    %c0_8 = arith.constant 0 : index
    %7 = vector.load %arg4[%c0_7, %c0_8] : memref<32x192xf32, #tpu.memory_space<vmem>>, vector<32x192xf32>
    %c0_9 = arith.constant 0 : index
    %c0_10 = arith.constant 0 : index
    %c0_11 = arith.constant 0 : index
    %8 = vector.load %arg5[%c0_9, %c0_10, %c0_11] : memref<4x192x192xf32, #tpu.memory_space<vmem>>, vector<1x192x192xf32>
    %9 = vector.shape_cast %8 : vector<1x192x192xf32> to vector<192x192xf32>
    %cst_12 = arith.constant dense<0.000000e+00> : vector<32x192xf32>
    %10 = tpu.matmul %7, %9, %cst_12 {dimension_numbers = #tpu.dot_dimension_numbers<[1], [0], [0], [1], [0, 0, 1, 1], [], []>} : vector<32x192xf32>, vector<192x192xf32>, vector<32x192xf32> -> vector<32x192xf32>
    %c0_13 = arith.constant 0 : index
    %c0_14 = arith.constant 0 : index
    %c0_15 = arith.constant 0 : index
    %11 = vector.load %arg6[%c0_13, %c0_14, %c0_15] : memref<4x1x192xf32, #tpu.memory_space<vmem>>, vector<1x1x192xf32>
    %12 = vector.shape_cast %11 : vector<1x1x192xf32> to vector<1x192xf32>
    %13 = vector.broadcast %12 : vector<1x192xf32> to vector<32x192xf32>
    %14 = arith.addf %10, %13 : vector<32x192xf32>
    %cst_16 = arith.constant 0.000000e+00 : f32
    %15 = vector.broadcast %cst_16 : f32 to vector<32x192xf32>
    %16 = arith.maximumf %14, %15 : vector<32x192xf32>
    %c1 = arith.constant 1 : index
    %c0_17 = arith.constant 0 : index
    %c0_18 = arith.constant 0 : index
    %17 = vector.load %arg5[%c1, %c0_17, %c0_18] : memref<4x192x192xf32, #tpu.memory_space<vmem>>, vector<1x192x192xf32>
    %18 = vector.shape_cast %17 : vector<1x192x192xf32> to vector<192x192xf32>
    %cst_19 = arith.constant dense<0.000000e+00> : vector<32x192xf32>
    %19 = tpu.matmul %16, %18, %cst_19 {dimension_numbers = #tpu.dot_dimension_numbers<[1], [0], [0], [1], [0, 0, 1, 1], [], []>} : vector<32x192xf32>, vector<192x192xf32>, vector<32x192xf32> -> vector<32x192xf32>
    %c1_20 = arith.constant 1 : index
    %c0_21 = arith.constant 0 : index
    %c0_22 = arith.constant 0 : index
    %20 = vector.load %arg6[%c1_20, %c0_21, %c0_22] : memref<4x1x192xf32, #tpu.memory_space<vmem>>, vector<1x1x192xf32>
    %21 = vector.shape_cast %20 : vector<1x1x192xf32> to vector<1x192xf32>
    %22 = vector.broadcast %21 : vector<1x192xf32> to vector<32x192xf32>
    %23 = arith.addf %19, %22 : vector<32x192xf32>
    %cst_23 = arith.constant 0.000000e+00 : f32
    %24 = vector.broadcast %cst_23 : f32 to vector<32x192xf32>
    %25 = arith.maximumf %23, %24 : vector<32x192xf32>
    %c2 = arith.constant 2 : index
    %c0_24 = arith.constant 0 : index
    %c0_25 = arith.constant 0 : index
    %26 = vector.load %arg5[%c2, %c0_24, %c0_25] : memref<4x192x192xf32, #tpu.memory_space<vmem>>, vector<1x192x192xf32>
    %27 = vector.shape_cast %26 : vector<1x192x192xf32> to vector<192x192xf32>
    %cst_26 = arith.constant dense<0.000000e+00> : vector<32x192xf32>
    %28 = tpu.matmul %25, %27, %cst_26 {dimension_numbers = #tpu.dot_dimension_numbers<[1], [0], [0], [1], [0, 0, 1, 1], [], []>} : vector<32x192xf32>, vector<192x192xf32>, vector<32x192xf32> -> vector<32x192xf32>
    %c2_27 = arith.constant 2 : index
    %c0_28 = arith.constant 0 : index
    %c0_29 = arith.constant 0 : index
    %29 = vector.load %arg6[%c2_27, %c0_28, %c0_29] : memref<4x1x192xf32, #tpu.memory_space<vmem>>, vector<1x1x192xf32>
    %30 = vector.shape_cast %29 : vector<1x1x192xf32> to vector<1x192xf32>
    %31 = vector.broadcast %30 : vector<1x192xf32> to vector<32x192xf32>
    %32 = arith.addf %28, %31 : vector<32x192xf32>
    %cst_30 = arith.constant 0.000000e+00 : f32
    %33 = vector.broadcast %cst_30 : f32 to vector<32x192xf32>
    %34 = arith.maximumf %32, %33 : vector<32x192xf32>
    %c3 = arith.constant 3 : index
    %c0_31 = arith.constant 0 : index
    %c0_32 = arith.constant 0 : index
    %35 = vector.load %arg5[%c3, %c0_31, %c0_32] : memref<4x192x192xf32, #tpu.memory_space<vmem>>, vector<1x192x192xf32>
    %36 = vector.shape_cast %35 : vector<1x192x192xf32> to vector<192x192xf32>
    %cst_33 = arith.constant dense<0.000000e+00> : vector<32x192xf32>
    %37 = tpu.matmul %34, %36, %cst_33 {dimension_numbers = #tpu.dot_dimension_numbers<[1], [0], [0], [1], [0, 0, 1, 1], [], []>} : vector<32x192xf32>, vector<192x192xf32>, vector<32x192xf32> -> vector<32x192xf32>
    %c3_34 = arith.constant 3 : index
    %c0_35 = arith.constant 0 : index
    %c0_36 = arith.constant 0 : index
    %38 = vector.load %arg6[%c3_34, %c0_35, %c0_36] : memref<4x1x192xf32, #tpu.memory_space<vmem>>, vector<1x1x192xf32>
    %39 = vector.shape_cast %38 : vector<1x1x192xf32> to vector<1x192xf32>
    %40 = vector.broadcast %39 : vector<1x192xf32> to vector<32x192xf32>
    %41 = arith.addf %37, %40 : vector<32x192xf32>
    %cst_37 = arith.constant 0.000000e+00 : f32
    %42 = vector.broadcast %cst_37 : f32 to vector<32x192xf32>
    %43 = arith.maximumf %41, %42 : vector<32x192xf32>
    %c0_38 = arith.constant 0 : index
    %c0_39 = arith.constant 0 : index
    %44 = vector.load %arg7[%c0_38, %c0_39] : memref<192x96xf32, #tpu.memory_space<vmem>>, vector<192x96xf32>
    %cst_40 = arith.constant dense<0.000000e+00> : vector<32x96xf32>
    %45 = tpu.matmul %43, %44, %cst_40 {dimension_numbers = #tpu.dot_dimension_numbers<[1], [0], [0], [1], [0, 0, 1, 1], [], []>} : vector<32x192xf32>, vector<192x96xf32>, vector<32x96xf32> -> vector<32x96xf32>
    %c0_41 = arith.constant 0 : index
    %c0_42 = arith.constant 0 : index
    %46 = vector.load %arg8[%c0_41, %c0_42] : memref<1x96xf32, #tpu.memory_space<vmem>>, vector<1x96xf32>
    %47 = vector.broadcast %46 : vector<1x96xf32> to vector<32x96xf32>
    %48 = arith.addf %45, %47 : vector<32x96xf32>
    %49 = tpu.iota {dimensions = array<i32: 1>} : vector<32x96xi32>
    %c32_i32 = arith.constant 32 : i32
    %c0_i32 = arith.constant 0 : i32
    %50 = arith.cmpi eq, %c32_i32, %c0_i32 : i32
    %c1_i32 = arith.constant 1 : i32
    %51 = arith.select %50, %c1_i32, %c32_i32 : i32
    %52 = vector.broadcast %51 : i32 to vector<32x96xi32>
    %53 = arith.remsi %49, %52 : vector<32x96xi32>
    %c0_i32_43 = arith.constant 0 : i32
    %54 = vector.broadcast %c0_i32_43 : i32 to vector<32x96xi32>
    %55 = arith.cmpi ne, %53, %54 : vector<32x96xi32>
    %c0_i32_44 = arith.constant 0 : i32
    %56 = vector.broadcast %c0_i32_44 : i32 to vector<32x96xi32>
    %57 = arith.cmpi slt, %53, %56 : vector<32x96xi32>
    %c0_i32_45 = arith.constant 0 : i32
    %58 = arith.cmpi slt, %51, %c0_i32_45 : i32
    %59 = vector.broadcast %58 : i1 to vector<32x96xi1>
    %60 = vector.broadcast %59 : vector<32x96xi1> to vector<32x96xi1>
    %61 = arith.xori %57, %60 : vector<32x96xi1>
    %62 = arith.andi %61, %55 : vector<32x96xi1>
    %63 = vector.broadcast %51 : i32 to vector<32x96xi32>
    %64 = arith.addi %53, %63 : vector<32x96xi32>
    %65 = arith.select %62, %64, %53 : vector<32x96xi1>, vector<32x96xi32>
    %c16_i32 = arith.constant 16 : i32
    %66 = vector.broadcast %c16_i32 : i32 to vector<32x96xi32>
    %67 = arith.cmpi slt, %65, %66 : vector<32x96xi32>
    %68 = math.absf %48 : vector<32x96xf32>
    %69 = arith.select %67, %68, %48 : vector<32x96xi1>, vector<32x96xf32>
    %c0_46 = arith.constant 0 : index
    %c0_47 = arith.constant 0 : index
    %c0_48 = arith.constant 0 : index
    %70 = vector.load %arg3[%c0_46, %c0_47, %c0_48] : memref<4x8x16xf32, #tpu.memory_space<vmem>>, vector<4x8x16xf32>
    %c0_49 = arith.constant 0 : index
    %c0_50 = arith.constant 0 : index
    %71 = vector.load %arg11[%c0_49, %c0_50] : memref<128x256xf32, #tpu.memory_space<vmem>>, vector<16x64xf32>
    %72 = vector.extract_strided_slice %70 {offsets = [0, 0, 0], sizes = [1, 8, 16], strides = [1, 1, 1]} : vector<4x8x16xf32> to vector<1x8x16xf32>
    %73 = vector.shape_cast %72 : vector<1x8x16xf32> to vector<8x16xf32>
    %cst_51 = arith.constant dense<0.000000e+00> : vector<8x64xf32>
    %74 = tpu.matmul %73, %71, %cst_51 {dimension_numbers = #tpu.dot_dimension_numbers<[1], [0], [0], [1], [0, 0, 1, 1], [], []>} : vector<8x16xf32>, vector<16x64xf32>, vector<8x64xf32> -> vector<8x64xf32>
    %c0_52 = arith.constant 0 : index
    %c64 = arith.constant 64 : index
    %75 = vector.load %arg11[%c0_52, %c64] : memref<128x256xf32, #tpu.memory_space<vmem>>, vector<16x64xf32>
    %76 = vector.extract_strided_slice %70 {offsets = [1, 0, 0], sizes = [1, 8, 16], strides = [1, 1, 1]} : vector<4x8x16xf32> to vector<1x8x16xf32>
    %77 = vector.shape_cast %76 : vector<1x8x16xf32> to vector<8x16xf32>
    %cst_53 = arith.constant dense<0.000000e+00> : vector<8x64xf32>
    %78 = tpu.matmul %77, %75, %cst_53 {dimension_numbers = #tpu.dot_dimension_numbers<[1], [0], [0], [1], [0, 0, 1, 1], [], []>} : vector<8x16xf32>, vector<16x64xf32>, vector<8x64xf32> -> vector<8x64xf32>
    %c0_54 = arith.constant 0 : index
    %c128 = arith.constant 128 : index
    %79 = vector.load %arg11[%c0_54, %c128] : memref<128x256xf32, #tpu.memory_space<vmem>>, vector<16x64xf32>
    %80 = vector.extract_strided_slice %70 {offsets = [2, 0, 0], sizes = [1, 8, 16], strides = [1, 1, 1]} : vector<4x8x16xf32> to vector<1x8x16xf32>
    %81 = vector.shape_cast %80 : vector<1x8x16xf32> to vector<8x16xf32>
    %cst_55 = arith.constant dense<0.000000e+00> : vector<8x64xf32>
    %82 = tpu.matmul %81, %79, %cst_55 {dimension_numbers = #tpu.dot_dimension_numbers<[1], [0], [0], [1], [0, 0, 1, 1], [], []>} : vector<8x16xf32>, vector<16x64xf32>, vector<8x64xf32> -> vector<8x64xf32>
    %c0_56 = arith.constant 0 : index
    %c192 = arith.constant 192 : index
    %83 = vector.load %arg11[%c0_56, %c192] : memref<128x256xf32, #tpu.memory_space<vmem>>, vector<16x64xf32>
    %84 = vector.extract_strided_slice %70 {offsets = [3, 0, 0], sizes = [1, 8, 16], strides = [1, 1, 1]} : vector<4x8x16xf32> to vector<1x8x16xf32>
    %85 = vector.shape_cast %84 : vector<1x8x16xf32> to vector<8x16xf32>
    %cst_57 = arith.constant dense<0.000000e+00> : vector<8x64xf32>
    %86 = tpu.matmul %85, %83, %cst_57 {dimension_numbers = #tpu.dot_dimension_numbers<[1], [0], [0], [1], [0, 0, 1, 1], [], []>} : vector<8x16xf32>, vector<16x64xf32>, vector<8x64xf32> -> vector<8x64xf32>
    %87 = tpu.concatenate %74, %78, %82, %86 in 1 : vector<8x64xf32>, vector<8x64xf32>, vector<8x64xf32>, vector<8x64xf32> -> vector<8x256xf32>
    %c0_58 = arith.constant 0 : index
    %c0_59 = arith.constant 0 : index
    %c0_60 = arith.constant 0 : index
    %88 = vector.load %arg9[%c0_58, %c0_59, %c0_60] : memref<5x8x256xf32, #tpu.memory_space<vmem>>, vector<1x8x256xf32>
    %89 = vector.shape_cast %88 : vector<1x8x256xf32> to vector<8x256xf32>
    %90 = vector.shape_cast %87 : vector<8x256xf32> to vector<1x8x256xf32>
    tpu.vector_store %arg9[%c0_58, %c0_59, %c0_60], %90 {strides = array<i32>} : memref<5x8x256xf32, #tpu.memory_space<vmem>>, vector<1x8x256xf32>,
    %c16 = arith.constant 16 : index
    %c0_61 = arith.constant 0 : index
    %91 = vector.load %arg11[%c16, %c0_61] : memref<128x256xf32, #tpu.memory_space<vmem>>, vector<16x64xf32>
    %92 = vector.extract_strided_slice %70 {offsets = [0, 0, 0], sizes = [1, 8, 16], strides = [1, 1, 1]} : vector<4x8x16xf32> to vector<1x8x16xf32>
    %93 = vector.shape_cast %92 : vector<1x8x16xf32> to vector<8x16xf32>
    %cst_62 = arith.constant dense<0.000000e+00> : vector<8x64xf32>
    %94 = tpu.matmul %93, %91, %cst_62 {dimension_numbers = #tpu.dot_dimension_numbers<[1], [0], [0], [1], [0, 0, 1, 1], [], []>} : vector<8x16xf32>, vector<16x64xf32>, vector<8x64xf32> -> vector<8x64xf32>
    %95 = arith.negf %94 : vector<8x64xf32>
    %96 = math.exp %95 : vector<8x64xf32>
    %cst_63 = arith.constant 1.000000e+00 : f32
    %97 = vector.broadcast %cst_63 : f32 to vector<8x64xf32>
    %98 = arith.addf %97, %96 : vector<8x64xf32>
    %99 = arith.divf %97, %98 : vector<8x64xf32>
    %100 = vector.extract_strided_slice %69 {offsets = [0, 0], sizes = [8, 32], strides = [1, 1]} : vector<32x96xf32> to vector<8x32xf32>
    %cst_64 = arith.constant dense<0.000000e+00> : vector<32x64xf32>
    %101 = tpu.matmul %100, %99, %cst_64 {dimension_numbers = #tpu.dot_dimension_numbers<[0], [0], [1], [1], [0, 1, 1, 1], [], []>} : vector<8x32xf32>, vector<8x64xf32>, vector<32x64xf32> -> vector<32x64xf32>
    %c32 = arith.constant 32 : index
    %c0_65 = arith.constant 0 : index
    %102 = vector.load %arg11[%c32, %c0_65] : memref<128x256xf32, #tpu.memory_space<vmem>>, vector<16x64xf32>
    %103 = vector.extract_strided_slice %101 {offsets = [0, 0], sizes = [16, 64], strides = [1, 1]} : vector<32x64xf32> to vector<16x64xf32>
    %104 = arith.mulf %102, %103 : vector<16x64xf32>
    %105 = vector.extract_strided_slice %101 {offsets = [16, 0], sizes = [16, 64], strides = [1, 1]} : vector<32x64xf32> to vector<16x64xf32>
    %106 = arith.addf %104, %105 : vector<16x64xf32>
    %cst_66 = arith.constant 0.000000e+00 : f32
    %107 = vector.broadcast %cst_66 : f32 to vector<16x64xf32>
    %108 = arith.maximumf %106, %107 : vector<16x64xf32>
    %c16_67 = arith.constant 16 : index
    %c64_68 = arith.constant 64 : index
    %109 = vector.load %arg11[%c16_67, %c64_68] : memref<128x256xf32, #tpu.memory_space<vmem>>, vector<16x64xf32>
    %110 = vector.extract_strided_slice %70 {offsets = [1, 0, 0], sizes = [1, 8, 16], strides = [1, 1, 1]} : vector<4x8x16xf32> to vector<1x8x16xf32>
    %111 = vector.shape_cast %110 : vector<1x8x16xf32> to vector<8x16xf32>
    %cst_69 = arith.constant dense<0.000000e+00> : vector<8x64xf32>
    %112 = tpu.matmul %111, %109, %cst_69 {dimension_numbers = #tpu.dot_dimension_numbers<[1], [0], [0], [1], [0, 0, 1, 1], [], []>} : vector<8x16xf32>, vector<16x64xf32>, vector<8x64xf32> -> vector<8x64xf32>
    %113 = arith.negf %112 : vector<8x64xf32>
    %114 = math.exp %113 : vector<8x64xf32>
    %cst_70 = arith.constant 1.000000e+00 : f32
    %115 = vector.broadcast %cst_70 : f32 to vector<8x64xf32>
    %116 = arith.addf %115, %114 : vector<8x64xf32>
    %117 = arith.divf %115, %116 : vector<8x64xf32>
    %118 = vector.extract_strided_slice %69 {offsets = [8, 0], sizes = [8, 32], strides = [1, 1]} : vector<32x96xf32> to vector<8x32xf32>
    %cst_71 = arith.constant dense<0.000000e+00> : vector<32x64xf32>
    %119 = tpu.matmul %118, %117, %cst_71 {dimension_numbers = #tpu.dot_dimension_numbers<[0], [0], [1], [1], [0, 1, 1, 1], [], []>} : vector<8x32xf32>, vector<8x64xf32>, vector<32x64xf32> -> vector<32x64xf32>
    %c32_72 = arith.constant 32 : index
    %c64_73 = arith.constant 64 : index
    %120 = vector.load %arg11[%c32_72, %c64_73] : memref<128x256xf32, #tpu.memory_space<vmem>>, vector<16x64xf32>
    %121 = vector.extract_strided_slice %119 {offsets = [0, 0], sizes = [16, 64], strides = [1, 1]} : vector<32x64xf32> to vector<16x64xf32>
    %122 = arith.mulf %120, %121 : vector<16x64xf32>
    %123 = vector.extract_strided_slice %119 {offsets = [16, 0], sizes = [16, 64], strides = [1, 1]} : vector<32x64xf32> to vector<16x64xf32>
    %124 = arith.addf %122, %123 : vector<16x64xf32>
    %cst_74 = arith.constant 0.000000e+00 : f32
    %125 = vector.broadcast %cst_74 : f32 to vector<16x64xf32>
    %126 = arith.maximumf %124, %125 : vector<16x64xf32>
    %c16_75 = arith.constant 16 : index
    %c128_76 = arith.constant 128 : index
    %127 = vector.load %arg11[%c16_75, %c128_76] : memref<128x256xf32, #tpu.memory_space<vmem>>, vector<16x64xf32>
    %128 = vector.extract_strided_slice %70 {offsets = [2, 0, 0], sizes = [1, 8, 16], strides = [1, 1, 1]} : vector<4x8x16xf32> to vector<1x8x16xf32>
    %129 = vector.shape_cast %128 : vector<1x8x16xf32> to vector<8x16xf32>
    %cst_77 = arith.constant dense<0.000000e+00> : vector<8x64xf32>
    %130 = tpu.matmul %129, %127, %cst_77 {dimension_numbers = #tpu.dot_dimension_numbers<[1], [0], [0], [1], [0, 0, 1, 1], [], []>} : vector<8x16xf32>, vector<16x64xf32>, vector<8x64xf32> -> vector<8x64xf32>
    %131 = arith.negf %130 : vector<8x64xf32>
    %132 = math.exp %131 : vector<8x64xf32>
    %cst_78 = arith.constant 1.000000e+00 : f32
    %133 = vector.broadcast %cst_78 : f32 to vector<8x64xf32>
    %134 = arith.addf %133, %132 : vector<8x64xf32>
    %135 = arith.divf %133, %134 : vector<8x64xf32>
    %136 = vector.extract_strided_slice %69 {offsets = [16, 0], sizes = [8, 32], strides = [1, 1]} : vector<32x96xf32> to vector<8x32xf32>
    %cst_79 = arith.constant dense<0.000000e+00> : vector<32x64xf32>
    %137 = tpu.matmul %136, %135, %cst_79 {dimension_numbers = #tpu.dot_dimension_numbers<[0], [0], [1], [1], [0, 1, 1, 1], [], []>} : vector<8x32xf32>, vector<8x64xf32>, vector<32x64xf32> -> vector<32x64xf32>
    %c32_80 = arith.constant 32 : index
    %c128_81 = arith.constant 128 : index
    %138 = vector.load %arg11[%c32_80, %c128_81] : memref<128x256xf32, #tpu.memory_space<vmem>>, vector<16x64xf32>
    %139 = vector.extract_strided_slice %137 {offsets = [0, 0], sizes = [16, 64], strides = [1, 1]} : vector<32x64xf32> to vector<16x64xf32>
    %140 = arith.mulf %138, %139 : vector<16x64xf32>
    %141 = vector.extract_strided_slice %137 {offsets = [16, 0], sizes = [16, 64], strides = [1, 1]} : vector<32x64xf32> to vector<16x64xf32>
    %142 = arith.addf %140, %141 : vector<16x64xf32>
    %cst_82 = arith.constant 0.000000e+00 : f32
    %143 = vector.broadcast %cst_82 : f32 to vector<16x64xf32>
    %144 = arith.maximumf %142, %143 : vector<16x64xf32>
    %c16_83 = arith.constant 16 : index
    %c192_84 = arith.constant 192 : index
    %145 = vector.load %arg11[%c16_83, %c192_84] : memref<128x256xf32, #tpu.memory_space<vmem>>, vector<16x64xf32>
    %146 = vector.extract_strided_slice %70 {offsets = [3, 0, 0], sizes = [1, 8, 16], strides = [1, 1, 1]} : vector<4x8x16xf32> to vector<1x8x16xf32>
    %147 = vector.shape_cast %146 : vector<1x8x16xf32> to vector<8x16xf32>
    %cst_85 = arith.constant dense<0.000000e+00> : vector<8x64xf32>
    %148 = tpu.matmul %147, %145, %cst_85 {dimension_numbers = #tpu.dot_dimension_numbers<[1], [0], [0], [1], [0, 0, 1, 1], [], []>} : vector<8x16xf32>, vector<16x64xf32>, vector<8x64xf32> -> vector<8x64xf32>
    %149 = arith.negf %148 : vector<8x64xf32>
    %150 = math.exp %149 : vector<8x64xf32>
    %cst_86 = arith.constant 1.000000e+00 : f32
    %151 = vector.broadcast %cst_86 : f32 to vector<8x64xf32>
    %152 = arith.addf %151, %150 : vector<8x64xf32>
    %153 = arith.divf %151, %152 : vector<8x64xf32>
    %154 = vector.extract_strided_slice %69 {offsets = [24, 0], sizes = [8, 32], strides = [1, 1]} : vector<32x96xf32> to vector<8x32xf32>
    %cst_87 = arith.constant dense<0.000000e+00> : vector<32x64xf32>
    %155 = tpu.matmul %154, %153, %cst_87 {dimension_numbers = #tpu.dot_dimension_numbers<[0], [0], [1], [1], [0, 1, 1, 1], [], []>} : vector<8x32xf32>, vector<8x64xf32>, vector<32x64xf32> -> vector<32x64xf32>
    %c32_88 = arith.constant 32 : index
    %c192_89 = arith.constant 192 : index
    %156 = vector.load %arg11[%c32_88, %c192_89] : memref<128x256xf32, #tpu.memory_space<vmem>>, vector<16x64xf32>
    %157 = vector.extract_strided_slice %155 {offsets = [0, 0], sizes = [16, 64], strides = [1, 1]} : vector<32x64xf32> to vector<16x64xf32>
    %158 = arith.mulf %156, %157 : vector<16x64xf32>
    %159 = vector.extract_strided_slice %155 {offsets = [16, 0], sizes = [16, 64], strides = [1, 1]} : vector<32x64xf32> to vector<16x64xf32>
    %160 = arith.addf %158, %159 : vector<16x64xf32>
    %cst_90 = arith.constant 0.000000e+00 : f32
    %161 = vector.broadcast %cst_90 : f32 to vector<16x64xf32>
    %162 = arith.maximumf %160, %161 : vector<16x64xf32>
    %163 = tpu.concatenate %94, %112, %130, %148 in 1 : vector<8x64xf32>, vector<8x64xf32>, vector<8x64xf32>, vector<8x64xf32> -> vector<8x256xf32>
    %c1_91 = arith.constant 1 : index
    %c0_92 = arith.constant 0 : index
    %c0_93 = arith.constant 0 : index
    %164 = vector.load %arg9[%c1_91, %c0_92, %c0_93] : memref<5x8x256xf32, #tpu.memory_space<vmem>>, vector<1x8x256xf32>
    %165 = vector.shape_cast %164 : vector<1x8x256xf32> to vector<8x256xf32>
    %166 = vector.shape_cast %163 : vector<8x256xf32> to vector<1x8x256xf32>
    tpu.vector_store %arg9[%c1_91, %c0_92, %c0_93], %166 {strides = array<i32>} : memref<5x8x256xf32, #tpu.memory_space<vmem>>, vector<1x8x256xf32>,
    %167 = tpu.concatenate %108, %126, %144, %162 in 1 : vector<16x64xf32>, vector<16x64xf32>, vector<16x64xf32>, vector<16x64xf32> -> vector<16x256xf32>
    %c0_94 = arith.constant 0 : index
    %c0_95 = arith.constant 0 : index
    %c0_96 = arith.constant 0 : index
    %168 = vector.load %arg10[%c0_94, %c0_95, %c0_96] : memref<3x16x256xf32, #tpu.memory_space<vmem>>, vector<1x16x256xf32>
    %169 = vector.shape_cast %168 : vector<1x16x256xf32> to vector<16x256xf32>
    %170 = vector.shape_cast %167 : vector<16x256xf32> to vector<1x16x256xf32>
    tpu.vector_store %arg10[%c0_94, %c0_95, %c0_96], %170 {strides = array<i32>} : memref<3x16x256xf32, #tpu.memory_space<vmem>>, vector<1x16x256xf32>,
    %c48 = arith.constant 48 : index
    %c0_97 = arith.constant 0 : index
    %171 = vector.load %arg11[%c48, %c0_97] : memref<128x256xf32, #tpu.memory_space<vmem>>, vector<16x64xf32>
    %172 = vector.extract_strided_slice %70 {offsets = [0, 0, 0], sizes = [1, 8, 16], strides = [1, 1, 1]} : vector<4x8x16xf32> to vector<1x8x16xf32>
    %173 = vector.shape_cast %172 : vector<1x8x16xf32> to vector<8x16xf32>
    %cst_98 = arith.constant dense<0.000000e+00> : vector<8x64xf32>
    %174 = tpu.matmul %173, %171, %cst_98 {dimension_numbers = #tpu.dot_dimension_numbers<[1], [0], [0], [1], [0, 0, 1, 1], [], []>} : vector<8x16xf32>, vector<16x64xf32>, vector<8x64xf32> -> vector<8x64xf32>
    %175 = arith.negf %174 : vector<8x64xf32>
    %176 = math.exp %175 : vector<8x64xf32>
    %cst_99 = arith.constant 1.000000e+00 : f32
    %177 = vector.broadcast %cst_99 : f32 to vector<8x64xf32>
    %178 = arith.addf %177, %176 : vector<8x64xf32>
    %179 = arith.divf %177, %178 : vector<8x64xf32>
    %180 = vector.extract_strided_slice %69 {offsets = [0, 32], sizes = [8, 32], strides = [1, 1]} : vector<32x96xf32> to vector<8x32xf32>
    %cst_100 = arith.constant dense<0.000000e+00> : vector<32x64xf32>
    %181 = tpu.matmul %180, %179, %cst_100 {dimension_numbers = #tpu.dot_dimension_numbers<[0], [0], [1], [1], [0, 1, 1, 1], [], []>} : vector<8x32xf32>, vector<8x64xf32>, vector<32x64xf32> -> vector<32x64xf32>
    %c64_101 = arith.constant 64 : index
    %c0_102 = arith.constant 0 : index
    %182 = vector.load %arg11[%c64_101, %c0_102] : memref<128x256xf32, #tpu.memory_space<vmem>>, vector<16x64xf32>
    %183 = vector.extract_strided_slice %181 {offsets = [0, 0], sizes = [16, 64], strides = [1, 1]} : vector<32x64xf32> to vector<16x64xf32>
    %184 = arith.mulf %182, %183 : vector<16x64xf32>
    %185 = vector.extract_strided_slice %181 {offsets = [16, 0], sizes = [16, 64], strides = [1, 1]} : vector<32x64xf32> to vector<16x64xf32>
    %186 = arith.addf %184, %185 : vector<16x64xf32>
    %cst_103 = arith.constant 0.000000e+00 : f32
    %187 = vector.broadcast %cst_103 : f32 to vector<16x64xf32>
    %188 = arith.maximumf %186, %187 : vector<16x64xf32>
    %c48_104 = arith.constant 48 : index
    %c64_105 = arith.constant 64 : index
    %189 = vector.load %arg11[%c48_104, %c64_105] : memref<128x256xf32, #tpu.memory_space<vmem>>, vector<16x64xf32>
    %190 = vector.extract_strided_slice %70 {offsets = [1, 0, 0], sizes = [1, 8, 16], strides = [1, 1, 1]} : vector<4x8x16xf32> to vector<1x8x16xf32>
    %191 = vector.shape_cast %190 : vector<1x8x16xf32> to vector<8x16xf32>
    %cst_106 = arith.constant dense<0.000000e+00> : vector<8x64xf32>
    %192 = tpu.matmul %191, %189, %cst_106 {dimension_numbers = #tpu.dot_dimension_numbers<[1], [0], [0], [1], [0, 0, 1, 1], [], []>} : vector<8x16xf32>, vector<16x64xf32>, vector<8x64xf32> -> vector<8x64xf32>
    %193 = arith.negf %192 : vector<8x64xf32>
    %194 = math.exp %193 : vector<8x64xf32>
    %cst_107 = arith.constant 1.000000e+00 : f32
    %195 = vector.broadcast %cst_107 : f32 to vector<8x64xf32>
    %196 = arith.addf %195, %194 : vector<8x64xf32>
    %197 = arith.divf %195, %196 : vector<8x64xf32>
    %198 = vector.extract_strided_slice %69 {offsets = [8, 32], sizes = [8, 32], strides = [1, 1]} : vector<32x96xf32> to vector<8x32xf32>
    %cst_108 = arith.constant dense<0.000000e+00> : vector<32x64xf32>
    %199 = tpu.matmul %198, %197, %cst_108 {dimension_numbers = #tpu.dot_dimension_numbers<[0], [0], [1], [1], [0, 1, 1, 1], [], []>} : vector<8x32xf32>, vector<8x64xf32>, vector<32x64xf32> -> vector<32x64xf32>
    %c64_109 = arith.constant 64 : index
    %c64_110 = arith.constant 64 : index
    %200 = vector.load %arg11[%c64_109, %c64_110] : memref<128x256xf32, #tpu.memory_space<vmem>>, vector<16x64xf32>
    %201 = vector.extract_strided_slice %199 {offsets = [0, 0], sizes = [16, 64], strides = [1, 1]} : vector<32x64xf32> to vector<16x64xf32>
    %202 = arith.mulf %200, %201 : vector<16x64xf32>
    %203 = vector.extract_strided_slice %199 {offsets = [16, 0], sizes = [16, 64], strides = [1, 1]} : vector<32x64xf32> to vector<16x64xf32>
    %204 = arith.addf %202, %203 : vector<16x64xf32>
    %cst_111 = arith.constant 0.000000e+00 : f32
    %205 = vector.broadcast %cst_111 : f32 to vector<16x64xf32>
    %206 = arith.maximumf %204, %205 : vector<16x64xf32>
    %c48_112 = arith.constant 48 : index
    %c128_113 = arith.constant 128 : index
    %207 = vector.load %arg11[%c48_112, %c128_113] : memref<128x256xf32, #tpu.memory_space<vmem>>, vector<16x64xf32>
    %208 = vector.extract_strided_slice %70 {offsets = [2, 0, 0], sizes = [1, 8, 16], strides = [1, 1, 1]} : vector<4x8x16xf32> to vector<1x8x16xf32>
    %209 = vector.shape_cast %208 : vector<1x8x16xf32> to vector<8x16xf32>
    %cst_114 = arith.constant dense<0.000000e+00> : vector<8x64xf32>
    %210 = tpu.matmul %209, %207, %cst_114 {dimension_numbers = #tpu.dot_dimension_numbers<[1], [0], [0], [1], [0, 0, 1, 1], [], []>} : vector<8x16xf32>, vector<16x64xf32>, vector<8x64xf32> -> vector<8x64xf32>
    %211 = arith.negf %210 : vector<8x64xf32>
    %212 = math.exp %211 : vector<8x64xf32>
    %cst_115 = arith.constant 1.000000e+00 : f32
    %213 = vector.broadcast %cst_115 : f32 to vector<8x64xf32>
    %214 = arith.addf %213, %212 : vector<8x64xf32>
    %215 = arith.divf %213, %214 : vector<8x64xf32>
    %216 = vector.extract_strided_slice %69 {offsets = [16, 32], sizes = [8, 32], strides = [1, 1]} : vector<32x96xf32> to vector<8x32xf32>
    %cst_116 = arith.constant dense<0.000000e+00> : vector<32x64xf32>
    %217 = tpu.matmul %216, %215, %cst_116 {dimension_numbers = #tpu.dot_dimension_numbers<[0], [0], [1], [1], [0, 1, 1, 1], [], []>} : vector<8x32xf32>, vector<8x64xf32>, vector<32x64xf32> -> vector<32x64xf32>
    %c64_117 = arith.constant 64 : index
    %c128_118 = arith.constant 128 : index
    %218 = vector.load %arg11[%c64_117, %c128_118] : memref<128x256xf32, #tpu.memory_space<vmem>>, vector<16x64xf32>
    %219 = vector.extract_strided_slice %217 {offsets = [0, 0], sizes = [16, 64], strides = [1, 1]} : vector<32x64xf32> to vector<16x64xf32>
    %220 = arith.mulf %218, %219 : vector<16x64xf32>
    %221 = vector.extract_strided_slice %217 {offsets = [16, 0], sizes = [16, 64], strides = [1, 1]} : vector<32x64xf32> to vector<16x64xf32>
    %222 = arith.addf %220, %221 : vector<16x64xf32>
    %cst_119 = arith.constant 0.000000e+00 : f32
    %223 = vector.broadcast %cst_119 : f32 to vector<16x64xf32>
    %224 = arith.maximumf %222, %223 : vector<16x64xf32>
    %c48_120 = arith.constant 48 : index
    %c192_121 = arith.constant 192 : index
    %225 = vector.load %arg11[%c48_120, %c192_121] : memref<128x256xf32, #tpu.memory_space<vmem>>, vector<16x64xf32>
    %226 = vector.extract_strided_slice %70 {offsets = [3, 0, 0], sizes = [1, 8, 16], strides = [1, 1, 1]} : vector<4x8x16xf32> to vector<1x8x16xf32>
    %227 = vector.shape_cast %226 : vector<1x8x16xf32> to vector<8x16xf32>
    %cst_122 = arith.constant dense<0.000000e+00> : vector<8x64xf32>
    %228 = tpu.matmul %227, %225, %cst_122 {dimension_numbers = #tpu.dot_dimension_numbers<[1], [0], [0], [1], [0, 0, 1, 1], [], []>} : vector<8x16xf32>, vector<16x64xf32>, vector<8x64xf32> -> vector<8x64xf32>
    %229 = arith.negf %228 : vector<8x64xf32>
    %230 = math.exp %229 : vector<8x64xf32>
    %cst_123 = arith.constant 1.000000e+00 : f32
    %231 = vector.broadcast %cst_123 : f32 to vector<8x64xf32>
    %232 = arith.addf %231, %230 : vector<8x64xf32>
    %233 = arith.divf %231, %232 : vector<8x64xf32>
    %234 = vector.extract_strided_slice %69 {offsets = [24, 32], sizes = [8, 32], strides = [1, 1]} : vector<32x96xf32> to vector<8x32xf32>
    %cst_124 = arith.constant dense<0.000000e+00> : vector<32x64xf32>
    %235 = tpu.matmul %234, %233, %cst_124 {dimension_numbers = #tpu.dot_dimension_numbers<[0], [0], [1], [1], [0, 1, 1, 1], [], []>} : vector<8x32xf32>, vector<8x64xf32>, vector<32x64xf32> -> vector<32x64xf32>
    %c64_125 = arith.constant 64 : index
    %c192_126 = arith.constant 192 : index
    %236 = vector.load %arg11[%c64_125, %c192_126] : memref<128x256xf32, #tpu.memory_space<vmem>>, vector<16x64xf32>
    %237 = vector.extract_strided_slice %235 {offsets = [0, 0], sizes = [16, 64], strides = [1, 1]} : vector<32x64xf32> to vector<16x64xf32>
    %238 = arith.mulf %236, %237 : vector<16x64xf32>
    %239 = vector.extract_strided_slice %235 {offsets = [16, 0], sizes = [16, 64], strides = [1, 1]} : vector<32x64xf32> to vector<16x64xf32>
    %240 = arith.addf %238, %239 : vector<16x64xf32>
    %cst_127 = arith.constant 0.000000e+00 : f32
    %241 = vector.broadcast %cst_127 : f32 to vector<16x64xf32>
    %242 = arith.maximumf %240, %241 : vector<16x64xf32>
    %243 = tpu.concatenate %174, %192, %210, %228 in 1 : vector<8x64xf32>, vector<8x64xf32>, vector<8x64xf32>, vector<8x64xf32> -> vector<8x256xf32>
    %c2_128 = arith.constant 2 : index
    %c0_129 = arith.constant 0 : index
    %c0_130 = arith.constant 0 : index
    %244 = vector.load %arg9[%c2_128, %c0_129, %c0_130] : memref<5x8x256xf32, #tpu.memory_space<vmem>>, vector<1x8x256xf32>
    %245 = vector.shape_cast %244 : vector<1x8x256xf32> to vector<8x256xf32>
    %246 = vector.shape_cast %243 : vector<8x256xf32> to vector<1x8x256xf32>
    tpu.vector_store %arg9[%c2_128, %c0_129, %c0_130], %246 {strides = array<i32>} : memref<5x8x256xf32, #tpu.memory_space<vmem>>, vector<1x8x256xf32>,
    %247 = tpu.concatenate %188, %206, %224, %242 in 1 : vector<16x64xf32>, vector<16x64xf32>, vector<16x64xf32>, vector<16x64xf32> -> vector<16x256xf32>
    %c1_131 = arith.constant 1 : index
    %c0_132 = arith.constant 0 : index
    %c0_133 = arith.constant 0 : index
    %248 = vector.load %arg10[%c1_131, %c0_132, %c0_133] : memref<3x16x256xf32, #tpu.memory_space<vmem>>, vector<1x16x256xf32>
    %249 = vector.shape_cast %248 : vector<1x16x256xf32> to vector<16x256xf32>
    %250 = vector.shape_cast %247 : vector<16x256xf32> to vector<1x16x256xf32>
    tpu.vector_store %arg10[%c1_131, %c0_132, %c0_133], %250 {strides = array<i32>} : memref<3x16x256xf32, #tpu.memory_space<vmem>>, vector<1x16x256xf32>,
    %c80 = arith.constant 80 : index
    %c0_134 = arith.constant 0 : index
    %251 = vector.load %arg11[%c80, %c0_134] : memref<128x256xf32, #tpu.memory_space<vmem>>, vector<16x64xf32>
    %252 = vector.extract_strided_slice %70 {offsets = [0, 0, 0], sizes = [1, 8, 16], strides = [1, 1, 1]} : vector<4x8x16xf32> to vector<1x8x16xf32>
    %253 = vector.shape_cast %252 : vector<1x8x16xf32> to vector<8x16xf32>
    %cst_135 = arith.constant dense<0.000000e+00> : vector<8x64xf32>
    %254 = tpu.matmul %253, %251, %cst_135 {dimension_numbers = #tpu.dot_dimension_numbers<[1], [0], [0], [1], [0, 0, 1, 1], [], []>} : vector<8x16xf32>, vector<16x64xf32>, vector<8x64xf32> -> vector<8x64xf32>
    %255 = arith.negf %254 : vector<8x64xf32>
    %256 = math.exp %255 : vector<8x64xf32>
    %cst_136 = arith.constant 1.000000e+00 : f32
    %257 = vector.broadcast %cst_136 : f32 to vector<8x64xf32>
    %258 = arith.addf %257, %256 : vector<8x64xf32>
    %259 = arith.divf %257, %258 : vector<8x64xf32>
    %260 = vector.extract_strided_slice %69 {offsets = [0, 64], sizes = [8, 32], strides = [1, 1]} : vector<32x96xf32> to vector<8x32xf32>
    %cst_137 = arith.constant dense<0.000000e+00> : vector<32x64xf32>
    %261 = tpu.matmul %260, %259, %cst_137 {dimension_numbers = #tpu.dot_dimension_numbers<[0], [0], [1], [1], [0, 1, 1, 1], [], []>} : vector<8x32xf32>, vector<8x64xf32>, vector<32x64xf32> -> vector<32x64xf32>
    %c96 = arith.constant 96 : index
    %c0_138 = arith.constant 0 : index
    %262 = vector.load %arg11[%c96, %c0_138] : memref<128x256xf32, #tpu.memory_space<vmem>>, vector<16x64xf32>
    %263 = vector.extract_strided_slice %261 {offsets = [0, 0], sizes = [16, 64], strides = [1, 1]} : vector<32x64xf32> to vector<16x64xf32>
    %264 = arith.mulf %262, %263 : vector<16x64xf32>
    %265 = vector.extract_strided_slice %261 {offsets = [16, 0], sizes = [16, 64], strides = [1, 1]} : vector<32x64xf32> to vector<16x64xf32>
    %266 = arith.addf %264, %265 : vector<16x64xf32>
    %cst_139 = arith.constant 0.000000e+00 : f32
    %267 = vector.broadcast %cst_139 : f32 to vector<16x64xf32>
    %268 = arith.maximumf %266, %267 : vector<16x64xf32>
    %c80_140 = arith.constant 80 : index
    %c64_141 = arith.constant 64 : index
    %269 = vector.load %arg11[%c80_140, %c64_141] : memref<128x256xf32, #tpu.memory_space<vmem>>, vector<16x64xf32>
    %270 = vector.extract_strided_slice %70 {offsets = [1, 0, 0], sizes = [1, 8, 16], strides = [1, 1, 1]} : vector<4x8x16xf32> to vector<1x8x16xf32>
    %271 = vector.shape_cast %270 : vector<1x8x16xf32> to vector<8x16xf32>
    %cst_142 = arith.constant dense<0.000000e+00> : vector<8x64xf32>
    %272 = tpu.matmul %271, %269, %cst_142 {dimension_numbers = #tpu.dot_dimension_numbers<[1], [0], [0], [1], [0, 0, 1, 1], [], []>} : vector<8x16xf32>, vector<16x64xf32>, vector<8x64xf32> -> vector<8x64xf32>
    %273 = arith.negf %272 : vector<8x64xf32>
    %274 = math.exp %273 : vector<8x64xf32>
    %cst_143 = arith.constant 1.000000e+00 : f32
    %275 = vector.broadcast %cst_143 : f32 to vector<8x64xf32>
    %276 = arith.addf %275, %274 : vector<8x64xf32>
    %277 = arith.divf %275, %276 : vector<8x64xf32>
    %278 = vector.extract_strided_slice %69 {offsets = [8, 64], sizes = [8, 32], strides = [1, 1]} : vector<32x96xf32> to vector<8x32xf32>
    %cst_144 = arith.constant dense<0.000000e+00> : vector<32x64xf32>
    %279 = tpu.matmul %278, %277, %cst_144 {dimension_numbers = #tpu.dot_dimension_numbers<[0], [0], [1], [1], [0, 1, 1, 1], [], []>} : vector<8x32xf32>, vector<8x64xf32>, vector<32x64xf32> -> vector<32x64xf32>
    %c96_145 = arith.constant 96 : index
    %c64_146 = arith.constant 64 : index
    %280 = vector.load %arg11[%c96_145, %c64_146] : memref<128x256xf32, #tpu.memory_space<vmem>>, vector<16x64xf32>
    %281 = vector.extract_strided_slice %279 {offsets = [0, 0], sizes = [16, 64], strides = [1, 1]} : vector<32x64xf32> to vector<16x64xf32>
    %282 = arith.mulf %280, %281 : vector<16x64xf32>
    %283 = vector.extract_strided_slice %279 {offsets = [16, 0], sizes = [16, 64], strides = [1, 1]} : vector<32x64xf32> to vector<16x64xf32>
    %284 = arith.addf %282, %283 : vector<16x64xf32>
    %cst_147 = arith.constant 0.000000e+00 : f32
    %285 = vector.broadcast %cst_147 : f32 to vector<16x64xf32>
    %286 = arith.maximumf %284, %285 : vector<16x64xf32>
    %c80_148 = arith.constant 80 : index
    %c128_149 = arith.constant 128 : index
    %287 = vector.load %arg11[%c80_148, %c128_149] : memref<128x256xf32, #tpu.memory_space<vmem>>, vector<16x64xf32>
    %288 = vector.extract_strided_slice %70 {offsets = [2, 0, 0], sizes = [1, 8, 16], strides = [1, 1, 1]} : vector<4x8x16xf32> to vector<1x8x16xf32>
    %289 = vector.shape_cast %288 : vector<1x8x16xf32> to vector<8x16xf32>
    %cst_150 = arith.constant dense<0.000000e+00> : vector<8x64xf32>
    %290 = tpu.matmul %289, %287, %cst_150 {dimension_numbers = #tpu.dot_dimension_numbers<[1], [0], [0], [1], [0, 0, 1, 1], [], []>} : vector<8x16xf32>, vector<16x64xf32>, vector<8x64xf32> -> vector<8x64xf32>
    %291 = arith.negf %290 : vector<8x64xf32>
    %292 = math.exp %291 : vector<8x64xf32>
    %cst_151 = arith.constant 1.000000e+00 : f32
    %293 = vector.broadcast %cst_151 : f32 to vector<8x64xf32>
    %294 = arith.addf %293, %292 : vector<8x64xf32>
    %295 = arith.divf %293, %294 : vector<8x64xf32>
    %296 = vector.extract_strided_slice %69 {offsets = [16, 64], sizes = [8, 32], strides = [1, 1]} : vector<32x96xf32> to vector<8x32xf32>
    %cst_152 = arith.constant dense<0.000000e+00> : vector<32x64xf32>
    %297 = tpu.matmul %296, %295, %cst_152 {dimension_numbers = #tpu.dot_dimension_numbers<[0], [0], [1], [1], [0, 1, 1, 1], [], []>} : vector<8x32xf32>, vector<8x64xf32>, vector<32x64xf32> -> vector<32x64xf32>
    %c96_153 = arith.constant 96 : index
    %c128_154 = arith.constant 128 : index
    %298 = vector.load %arg11[%c96_153, %c128_154] : memref<128x256xf32, #tpu.memory_space<vmem>>, vector<16x64xf32>
    %299 = vector.extract_strided_slice %297 {offsets = [0, 0], sizes = [16, 64], strides = [1, 1]} : vector<32x64xf32> to vector<16x64xf32>
    %300 = arith.mulf %298, %299 : vector<16x64xf32>
    %301 = vector.extract_strided_slice %297 {offsets = [16, 0], sizes = [16, 64], strides = [1, 1]} : vector<32x64xf32> to vector<16x64xf32>
    %302 = arith.addf %300, %301 : vector<16x64xf32>
    %cst_155 = arith.constant 0.000000e+00 : f32
    %303 = vector.broadcast %cst_155 : f32 to vector<16x64xf32>
    %304 = arith.maximumf %302, %303 : vector<16x64xf32>
    %c80_156 = arith.constant 80 : index
    %c192_157 = arith.constant 192 : index
    %305 = vector.load %arg11[%c80_156, %c192_157] : memref<128x256xf32, #tpu.memory_space<vmem>>, vector<16x64xf32>
    %306 = vector.extract_strided_slice %70 {offsets = [3, 0, 0], sizes = [1, 8, 16], strides = [1, 1, 1]} : vector<4x8x16xf32> to vector<1x8x16xf32>
    %307 = vector.shape_cast %306 : vector<1x8x16xf32> to vector<8x16xf32>
    %cst_158 = arith.constant dense<0.000000e+00> : vector<8x64xf32>
    %308 = tpu.matmul %307, %305, %cst_158 {dimension_numbers = #tpu.dot_dimension_numbers<[1], [0], [0], [1], [0, 0, 1, 1], [], []>} : vector<8x16xf32>, vector<16x64xf32>, vector<8x64xf32> -> vector<8x64xf32>
    %309 = arith.negf %308 : vector<8x64xf32>
    %310 = math.exp %309 : vector<8x64xf32>
    %cst_159 = arith.constant 1.000000e+00 : f32
    %311 = vector.broadcast %cst_159 : f32 to vector<8x64xf32>
    %312 = arith.addf %311, %310 : vector<8x64xf32>
    %313 = arith.divf %311, %312 : vector<8x64xf32>
    %314 = vector.extract_strided_slice %69 {offsets = [24, 64], sizes = [8, 32], strides = [1, 1]} : vector<32x96xf32> to vector<8x32xf32>
    %cst_160 = arith.constant dense<0.000000e+00> : vector<32x64xf32>
    %315 = tpu.matmul %314, %313, %cst_160 {dimension_numbers = #tpu.dot_dimension_numbers<[0], [0], [1], [1], [0, 1, 1, 1], [], []>} : vector<8x32xf32>, vector<8x64xf32>, vector<32x64xf32> -> vector<32x64xf32>
    %c96_161 = arith.constant 96 : index
    %c192_162 = arith.constant 192 : index
    %316 = vector.load %arg11[%c96_161, %c192_162] : memref<128x256xf32, #tpu.memory_space<vmem>>, vector<16x64xf32>
    %317 = vector.extract_strided_slice %315 {offsets = [0, 0], sizes = [16, 64], strides = [1, 1]} : vector<32x64xf32> to vector<16x64xf32>
    %318 = arith.mulf %316, %317 : vector<16x64xf32>
    %319 = vector.extract_strided_slice %315 {offsets = [16, 0], sizes = [16, 64], strides = [1, 1]} : vector<32x64xf32> to vector<16x64xf32>
    %320 = arith.addf %318, %319 : vector<16x64xf32>
    %cst_163 = arith.constant 0.000000e+00 : f32
    %321 = vector.broadcast %cst_163 : f32 to vector<16x64xf32>
    %322 = arith.maximumf %320, %321 : vector<16x64xf32>
    %323 = tpu.concatenate %254, %272, %290, %308 in 1 : vector<8x64xf32>, vector<8x64xf32>, vector<8x64xf32>, vector<8x64xf32> -> vector<8x256xf32>
    %c3_164 = arith.constant 3 : index
    %c0_165 = arith.constant 0 : index
    %c0_166 = arith.constant 0 : index
    %324 = vector.load %arg9[%c3_164, %c0_165, %c0_166] : memref<5x8x256xf32, #tpu.memory_space<vmem>>, vector<1x8x256xf32>
    %325 = vector.shape_cast %324 : vector<1x8x256xf32> to vector<8x256xf32>
    %326 = vector.shape_cast %323 : vector<8x256xf32> to vector<1x8x256xf32>
    tpu.vector_store %arg9[%c3_164, %c0_165, %c0_166], %326 {strides = array<i32>} : memref<5x8x256xf32, #tpu.memory_space<vmem>>, vector<1x8x256xf32>,
    %327 = tpu.concatenate %268, %286, %304, %322 in 1 : vector<16x64xf32>, vector<16x64xf32>, vector<16x64xf32>, vector<16x64xf32> -> vector<16x256xf32>
    %c2_167 = arith.constant 2 : index
    %c0_168 = arith.constant 0 : index
    %c0_169 = arith.constant 0 : index
    %328 = vector.load %arg10[%c2_167, %c0_168, %c0_169] : memref<3x16x256xf32, #tpu.memory_space<vmem>>, vector<1x16x256xf32>
    %329 = vector.shape_cast %328 : vector<1x16x256xf32> to vector<16x256xf32>
    %330 = vector.shape_cast %327 : vector<16x256xf32> to vector<1x16x256xf32>
    tpu.vector_store %arg10[%c2_167, %c0_168, %c0_169], %330 {strides = array<i32>} : memref<3x16x256xf32, #tpu.memory_space<vmem>>, vector<1x16x256xf32>,
    %c112 = arith.constant 112 : index
    %c0_170 = arith.constant 0 : index
    %331 = vector.load %arg11[%c112, %c0_170] : memref<128x256xf32, #tpu.memory_space<vmem>>, vector<16x64xf32>
    %332 = vector.extract_strided_slice %70 {offsets = [0, 0, 0], sizes = [1, 8, 16], strides = [1, 1, 1]} : vector<4x8x16xf32> to vector<1x8x16xf32>
    %333 = vector.shape_cast %332 : vector<1x8x16xf32> to vector<8x16xf32>
    %cst_171 = arith.constant dense<0.000000e+00> : vector<8x64xf32>
    %334 = tpu.matmul %333, %331, %cst_171 {dimension_numbers = #tpu.dot_dimension_numbers<[1], [0], [0], [1], [0, 0, 1, 1], [], []>} : vector<8x16xf32>, vector<16x64xf32>, vector<8x64xf32> -> vector<8x64xf32>
    %c112_172 = arith.constant 112 : index
    %c64_173 = arith.constant 64 : index
    %335 = vector.load %arg11[%c112_172, %c64_173] : memref<128x256xf32, #tpu.memory_space<vmem>>, vector<16x64xf32>
    %336 = vector.extract_strided_slice %70 {offsets = [1, 0, 0], sizes = [1, 8, 16], strides = [1, 1, 1]} : vector<4x8x16xf32> to vector<1x8x16xf32>
    %337 = vector.shape_cast %336 : vector<1x8x16xf32> to vector<8x16xf32>
    %cst_174 = arith.constant dense<0.000000e+00> : vector<8x64xf32>
    %338 = tpu.matmul %337, %335, %cst_174 {dimension_numbers = #tpu.dot_dimension_numbers<[1], [0], [0], [1], [0, 0, 1, 1], [], []>} : vector<8x16xf32>, vector<16x64xf32>, vector<8x64xf32> -> vector<8x64xf32>
    %c112_175 = arith.constant 112 : index
    %c128_176 = arith.constant 128 : index
    %339 = vector.load %arg11[%c112_175, %c128_176] : memref<128x256xf32, #tpu.memory_space<vmem>>, vector<16x64xf32>
    %340 = vector.extract_strided_slice %70 {offsets = [2, 0, 0], sizes = [1, 8, 16], strides = [1, 1, 1]} : vector<4x8x16xf32> to vector<1x8x16xf32>
    %341 = vector.shape_cast %340 : vector<1x8x16xf32> to vector<8x16xf32>
    %cst_177 = arith.constant dense<0.000000e+00> : vector<8x64xf32>
    %342 = tpu.matmul %341, %339, %cst_177 {dimension_numbers = #tpu.dot_dimension_numbers<[1], [0], [0], [1], [0, 0, 1, 1], [], []>} : vector<8x16xf32>, vector<16x64xf32>, vector<8x64xf32> -> vector<8x64xf32>
    %c112_178 = arith.constant 112 : index
    %c192_179 = arith.constant 192 : index
    %343 = vector.load %arg11[%c112_178, %c192_179] : memref<128x256xf32, #tpu.memory_space<vmem>>, vector<16x64xf32>
    %344 = vector.extract_strided_slice %70 {offsets = [3, 0, 0], sizes = [1, 8, 16], strides = [1, 1, 1]} : vector<4x8x16xf32> to vector<1x8x16xf32>
    %345 = vector.shape_cast %344 : vector<1x8x16xf32> to vector<8x16xf32>
    %cst_180 = arith.constant dense<0.000000e+00> : vector<8x64xf32>
    %346 = tpu.matmul %345, %343, %cst_180 {dimension_numbers = #tpu.dot_dimension_numbers<[1], [0], [0], [1], [0, 0, 1, 1], [], []>} : vector<8x16xf32>, vector<16x64xf32>, vector<8x64xf32> -> vector<8x64xf32>
    %347 = tpu.concatenate %334, %338, %342, %346 in 1 : vector<8x64xf32>, vector<8x64xf32>, vector<8x64xf32>, vector<8x64xf32> -> vector<8x256xf32>
    %c4 = arith.constant 4 : index
    %c0_181 = arith.constant 0 : index
    %c0_182 = arith.constant 0 : index
    %348 = vector.load %arg9[%c4, %c0_181, %c0_182] : memref<5x8x256xf32, #tpu.memory_space<vmem>>, vector<1x8x256xf32>
    %349 = vector.shape_cast %348 : vector<1x8x256xf32> to vector<8x256xf32>
    %350 = vector.shape_cast %347 : vector<8x256xf32> to vector<1x8x256xf32>
    tpu.vector_store %arg9[%c4, %c0_181, %c0_182], %350 {strides = array<i32>} : memref<5x8x256xf32, #tpu.memory_space<vmem>>, vector<1x8x256xf32>,
    return
  }
}

</mosaic_0001>

<llo_original>
// kernel: squeeze.20
$region0: #{squeeze.20}
  %s0 = inlined_call_operand.vmem [shape: f32[1,8,256], index: 0, kind: input, shape index: {}]
  %s1 = inlined_call_operand.vmem [shape: f32[8,4,8,8], index: 1, kind: output, shape index: {}]
  %v2 = vld [vmem:[%s0] sm:$0xff]
  %vm3 = vcmask 64512
  %4 = vst.msk [vmem:[%s1] sm:$0x1] %vm3, %v2
  %s5 = scalar_lea.vmem %s1, 31
  %6 = vst.msk [vmem:[%s5] sm:$0x2] %vm3, %v2
  %s7 = scalar_lea.vmem %s1, 62
  %8 = vst.msk [vmem:[%s7] sm:$0x4] %vm3, %v2
  %s9 = scalar_lea.vmem %s1, 93
  %10 = vst.msk [vmem:[%s9] sm:$0x8] %vm3, %v2
  %s11 = scalar_lea.vmem %s1, 124
  %12 = vst.msk [vmem:[%s11] sm:$0x10] %vm3, %v2
  %s13 = scalar_lea.vmem %s1, 155
  %14 = vst.msk [vmem:[%s13] sm:$0x20] %vm3, %v2
  %s15 = scalar_lea.vmem %s1, 186
  %16 = vst.msk [vmem:[%s15] sm:$0x40] %vm3, %v2
  %s17 = scalar_lea.vmem %s1, 217
  %18 = vst.msk [vmem:[%s17] sm:$0x80] %vm3, %v2
  %s19 = scalar_lea.vmem %s0, 8
  %v20 = vld [vmem:[%s19] sm:$0xff]
  %vm21 = vcmask 64512
  %s22 = scalar_lea.vmem %s1, 16
  %23 = vst.msk [vmem:[%s22] sm:$0x1] %vm21, %v20
  %s24 = scalar_lea.vmem %s1, 47
  %25 = vst.msk [vmem:[%s24] sm:$0x2] %vm21, %v20
  %s26 = scalar_lea.vmem %s1, 78
  %27 = vst.msk [vmem:[%s26] sm:$0x4] %vm21, %v20
  %s28 = scalar_lea.vmem %s1, 109
  %29 = vst.msk [vmem:[%s28] sm:$0x8] %vm21, %v20
  %s30 = scalar_lea.vmem %s1, 140
  %31 = vst.msk [vmem:[%s30] sm:$0x10] %vm21, %v20
  %s32 = scalar_lea.vmem %s1, 171
  %33 = vst.msk [vmem:[%s32] sm:$0x20] %vm21, %v20
  %s34 = scalar_lea.vmem %s1, 202
  %35 = vst.msk [vmem:[%s34] sm:$0x40] %vm21, %v20
  %s36 = scalar_lea.vmem %s1, 233
  %37 = vst.msk [vmem:[%s36] sm:$0x80] %vm21, %v20
  %v38 = vld.sshfl [vmem:[%s0] sm:$0xff pattern:$0xb3a29180]
  %39 = vrot.lane.b32.xlu0 %v38, 120
  %v40 = vpop.permute.xlu0 %39
  %vm41 = vcmask 64512
  %s42 = scalar_lea.vmem %s1, 1
  %43 = vst.msk [vmem:[%s42] ss:$16 sm:$0x3] %vm41, %v40
  %s44 = scalar_lea.vmem %s1, 1
  %45 = vst.msk [vmem:[%s44] ss:$16 sm:$0xc] %vm41, %v40
  %s46 = scalar_lea.vmem %s1, 1
  %47 = vst.msk [vmem:[%s46] ss:$16 sm:$0x30] %vm41, %v40
  %s48 = scalar_lea.vmem %s1, 1
  %49 = vst.msk [vmem:[%s48] ss:$16 sm:$0xc0] %vm41, %v40
  %s50 = scalar_lea.vmem %s0, 4
  %v51 = vld.sshfl [vmem:[%s50] sm:$0xff pattern:$0xb3a29180]
  %52 = vrot.lane.b32.xlu0 %v51, 120
  %v53 = vpop.permute.xlu0 %52
  %vm54 = vcmask 64512
  %s55 = scalar_lea.vmem %s1, 129
  %56 = vst.msk [vmem:[%s55] ss:$16 sm:$0x3] %vm54, %v53
  %s57 = scalar_lea.vmem %s1, 129
  %58 = vst.msk [vmem:[%s57] ss:$16 sm:$0xc] %vm54, %v53
  %s59 = scalar_lea.vmem %s1, 129
  %60 = vst.msk [vmem:[%s59] ss:$16 sm:$0x30] %vm54, %v53
  %s61 = scalar_lea.vmem %s1, 129
  %62 = vst.msk [vmem:[%s61] ss:$16 sm:$0xc0] %vm54, %v53
  %v63 = vld.sshfl [vmem:[%s0] sm:$0xff pattern:$0xb3a29180]
  %64 = vrot.lane.b32.xlu0 %v63, 112
  %v65 = vpop.permute.xlu0 %64
  %vm66 = vcmask 64512
  %s67 = scalar_lea.vmem %s1, 2
  %68 = vst.msk [vmem:[%s67] ss:$16 sm:$0x3] %vm66, %v65
  %s69 = scalar_lea.vmem %s1, 2
  %70 = vst.msk [vmem:[%s69] ss:$16 sm:$0xc] %vm66, %v65
  %s71 = scalar_lea.vmem %s1, 2
  %72 = vst.msk [vmem:[%s71] ss:$16 sm:$0x30] %vm66, %v65
  %s73 = scalar_lea.vmem %s1, 2
  %74 = vst.msk [vmem:[%s73] ss:$16 sm:$0xc0] %vm66, %v65
  %s75 = scalar_lea.vmem %s0, 4
  %v76 = vld.sshfl [vmem:[%s75] sm:$0xff pattern:$0xb3a29180]
  %77 = vrot.lane.b32.xlu0 %v76, 112
  %v78 = vpop.permute.xlu0 %77
  %vm79 = vcmask 64512
  %s80 = scalar_lea.vmem %s1, 130
  %81 = vst.msk [vmem:[%s80] ss:$16 sm:$0x3] %vm79, %v78
  %s82 = scalar_lea.vmem %s1, 130
  %83 = vst.msk [vmem:[%s82] ss:$16 sm:$0xc] %vm79, %v78
  %s84 = scalar_lea.vmem %s1, 130
  %85 = vst.msk [vmem:[%s84] ss:$16 sm:$0x30] %vm79, %v78
  %s86 = scalar_lea.vmem %s1, 130
  %87 = vst.msk [vmem:[%s86] ss:$16 sm:$0xc0] %vm79, %v78
  %v88 = vld.sshfl [vmem:[%s0] sm:$0xff pattern:$0xb3a29180]
  %89 = vrot.lane.b32.xlu0 %v88, 104
  %v90 = vpop.permute.xlu0 %89
  %vm91 = vcmask 64512
  %s92 = scalar_lea.vmem %s1, 3
  %93 = vst.msk [vmem:[%s92] ss:$16 sm:$0x3] %vm91, %v90
  %s94 = scalar_lea.vmem %s1, 3
  %95 = vst.msk [vmem:[%s94] ss:$16 sm:$0xc] %vm91, %v90
  %s96 = scalar_lea.vmem %s1, 3
  %97 = vst.msk [vmem:[%s96] ss:$16 sm:$0x30] %vm91, %v90
  %s98 = scalar_lea.vmem %s1, 3
  %99 = vst.msk [vmem:[%s98] ss:$16 sm:$0xc0] %vm91, %v90
  %s100 = scalar_lea.vmem %s0, 4
  %v101 = vld.sshfl [vmem:[%s100] sm:$0xff pattern:$0xb3a29180]
  %102 = vrot.lane.b32.xlu0 %v101, 104
  %v103 = vpop.permute.xlu0 %102
  %vm104 = vcmask 64512
  %s105 = scalar_lea.vmem %s1, 131
  %106 = vst.msk [vmem:[%s105] ss:$16 sm:$0x3] %vm104, %v103
  %s107 = scalar_lea.vmem %s1, 131
  %108 = vst.msk [vmem:[%s107] ss:$16 sm:$0xc] %vm104, %v103
  %s109 = scalar_lea.vmem %s1, 131
  %110 = vst.msk [vmem:[%s109] ss:$16 sm:$0x30] %vm104, %v103
  %s111 = scalar_lea.vmem %s1, 131
  %112 = vst.msk [vmem:[%s111] ss:$16 sm:$0xc0] %vm104, %v103
  %v113 = vld.sshfl [vmem:[%s0] sm:$0xff pattern:$0xb3a29180]
  %114 = vrot.lane.b32.xlu0 %v113, 96
  %v115 = vpop.permute.xlu0 %114
  %vm116 = vcmask 64512
  %s117 = scalar_lea.vmem %s1, 4
  %118 = vst.msk [vmem:[%s117] ss:$16 sm:$0x3] %vm116, %v115
  %s119 = scalar_lea.vmem %s1, 4
  %120 = vst.msk [vmem:[%s119] ss:$16 sm:$0xc] %vm116, %v115
  %s121 = scalar_lea.vmem %s1, 4
  %122 = vst.msk [vmem:[%s121] ss:$16 sm:$0x30] %vm116, %v115
  %s123 = scalar_lea.vmem %s1, 4
  %124 = vst.msk [vmem:[%s123] ss:$16 sm:$0xc0] %vm116, %v115
  %s125 = scalar_lea.vmem %s0, 4
  %v126 = vld.sshfl [vmem:[%s125] sm:$0xff pattern:$0xb3a29180]
  %127 = vrot.lane.b32.xlu0 %v126, 96
  %v128 = vpop.permute.xlu0 %127
  %vm129 = vcmask 64512
  %s130 = scalar_lea.vmem %s1, 132
  %131 = vst.msk [vmem:[%s130] ss:$16 sm:$0x3] %vm129, %v128
  %s132 = scalar_lea.vmem %s1, 132
  %133 = vst.msk [vmem:[%s132] ss:$16 sm:$0xc] %vm129, %v128
  %s134 = scalar_lea.vmem %s1, 132
  %135 = vst.msk [vmem:[%s134] ss:$16 sm:$0x30] %vm129, %v128
  %s136 = scalar_lea.vmem %s1, 132
  %137 = vst.msk [vmem:[%s136] ss:$16 sm:$0xc0] %vm129, %v128
  %v138 = vld.sshfl [vmem:[%s0] sm:$0xff pattern:$0xb3a29180]
  %139 = vrot.lane.b32.xlu0 %v138, 88
  %v140 = vpop.permute.xlu0 %139
  %vm141 = vcmask 64512
  %s142 = scalar_lea.vmem %s1, 5
  %143 = vst.msk [vmem:[%s142] ss:$16 sm:$0x3] %vm141, %v140
  %s144 = scalar_lea.vmem %s1, 5
  %145 = vst.msk [vmem:[%s144] ss:$16 sm:$0xc] %vm141, %v140
  %s146 = scalar_lea.vmem %s1, 5
  %147 = vst.msk [vmem:[%s146] ss:$16 sm:$0x30] %vm141, %v140
  %s148 = scalar_lea.vmem %s1, 5
  %149 = vst.msk [vmem:[%s148] ss:$16 sm:$0xc0] %vm141, %v140
  %s150 = scalar_lea.vmem %s0, 4
  %v151 = vld.sshfl [vmem:[%s150] sm:$0xff pattern:$0xb3a29180]
  %152 = vrot.lane.b32.xlu0 %v151, 88
  %v153 = vpop.permute.xlu0 %152
  %vm154 = vcmask 64512
  %s155 = scalar_lea.vmem %s1, 133
  %156 = vst.msk [vmem:[%s155] ss:$16 sm:$0x3] %vm154, %v153
  %s157 = scalar_lea.vmem %s1, 133
  %158 = vst.msk [vmem:[%s157] ss:$16 sm:$0xc] %vm154, %v153
  %s159 = scalar_lea.vmem %s1, 133
  %160 = vst.msk [vmem:[%s159] ss:$16 sm:$0x30] %vm154, %v153
  %s161 = scalar_lea.vmem %s1, 133
  %162 = vst.msk [vmem:[%s161] ss:$16 sm:$0xc0] %vm154, %v153
  %v163 = vld.sshfl [vmem:[%s0] sm:$0xff pattern:$0xb3a29180]
  %164 = vrot.lane.b32.xlu0 %v163, 80
  %v165 = vpop.permute.xlu0 %164
  %vm166 = vcmask 64512
  %s167 = scalar_lea.vmem %s1, 6
  %168 = vst.msk [vmem:[%s167] ss:$16 sm:$0x3] %vm166, %v165
  %s169 = scalar_lea.vmem %s1, 6
  %170 = vst.msk [vmem:[%s169] ss:$16 sm:$0xc] %vm166, %v165
  %s171 = scalar_lea.vmem %s1, 6
  %172 = vst.msk [vmem:[%s171] ss:$16 sm:$0x30] %vm166, %v165
  %s173 = scalar_lea.vmem %s1, 6
  %174 = vst.msk [vmem:[%s173] ss:$16 sm:$0xc0] %vm166, %v165
  %s175 = scalar_lea.vmem %s0, 4
  %v176 = vld.sshfl [vmem:[%s175] sm:$0xff pattern:$0xb3a29180]
  %177 = vrot.lane.b32.xlu0 %v176, 80
  %v178 = vpop.permute.xlu0 %177
  %vm179 = vcmask 64512
  %s180 = scalar_lea.vmem %s1, 134
  %181 = vst.msk [vmem:[%s180] ss:$16 sm:$0x3] %vm179, %v178
  %s182 = scalar_lea.vmem %s1, 134
  %183 = vst.msk [vmem:[%s182] ss:$16 sm:$0xc] %vm179, %v178
  %s184 = scalar_lea.vmem %s1, 134
  %185 = vst.msk [vmem:[%s184] ss:$16 sm:$0x30] %vm179, %v178
  %s186 = scalar_lea.vmem %s1, 134
  %187 = vst.msk [vmem:[%s186] ss:$16 sm:$0xc0] %vm179, %v178
  %v188 = vld.sshfl [vmem:[%s0] sm:$0xff pattern:$0xb3a29180]
  %189 = vrot.lane.b32.xlu0 %v188, 72
  %v190 = vpop.permute.xlu0 %189
  %vm191 = vcmask 64512
  %s192 = scalar_lea.vmem %s1, 7
  %193 = vst.msk [vmem:[%s192] ss:$16 sm:$0x3] %vm191, %v190
  %s194 = scalar_lea.vmem %s1, 7
  %195 = vst.msk [vmem:[%s194] ss:$16 sm:$0xc] %vm191, %v190
  %s196 = scalar_lea.vmem %s1, 7
  %197 = vst.msk [vmem:[%s196] ss:$16 sm:$0x30] %vm191, %v190
  %s198 = scalar_lea.vmem %s1, 7
  %199 = vst.msk [vmem:[%s198] ss:$16 sm:$0xc0] %vm191, %v190
  %s200 = scalar_lea.vmem %s0, 4
  %v201 = vld.sshfl [vmem:[%s200] sm:$0xff pattern:$0xb3a29180]
  %202 = vrot.lane.b32.xlu0 %v201, 72
  %v203 = vpop.permute.xlu0 %202
  %vm204 = vcmask 64512
  %s205 = scalar_lea.vmem %s1, 135
  %206 = vst.msk [vmem:[%s205] ss:$16 sm:$0x3] %vm204, %v203
  %s207 = scalar_lea.vmem %s1, 135
  %208 = vst.msk [vmem:[%s207] ss:$16 sm:$0xc] %vm204, %v203
  %s209 = scalar_lea.vmem %s1, 135
  %210 = vst.msk [vmem:[%s209] ss:$16 sm:$0x30] %vm204, %v203
  %s211 = scalar_lea.vmem %s1, 135
  %212 = vst.msk [vmem:[%s211] ss:$16 sm:$0xc0] %vm204, %v203
  %v213 = vld.sshfl [vmem:[%s0] sm:$0xff pattern:$0xb3a29180]
  %214 = vrot.lane.b32.xlu0 %v213, 64
  %v215 = vpop.permute.xlu0 %214
  %vm216 = vcmask 64512
  %s217 = scalar_lea.vmem %s1, 8
  %218 = vst.msk [vmem:[%s217] ss:$16 sm:$0x3] %vm216, %v215
  %s219 = scalar_lea.vmem %s1, 8
  %220 = vst.msk [vmem:[%s219] ss:$16 sm:$0xc] %vm216, %v215
  %s221 = scalar_lea.vmem %s1, 8
  %222 = vst.msk [vmem:[%s221] ss:$16 sm:$0x30] %vm216, %v215
  %s223 = scalar_lea.vmem %s1, 8
  %224 = vst.msk [vmem:[%s223] ss:$16 sm:$0xc0] %vm216, %v215
  %s225 = scalar_lea.vmem %s0, 4
  %v226 = vld.sshfl [vmem:[%s225] sm:$0xff pattern:$0xb3a29180]
  %227 = vrot.lane.b32.xlu0 %v226, 64
  %v228 = vpop.permute.xlu0 %227
  %vm229 = vcmask 64512
  %s230 = scalar_lea.vmem %s1, 136
  %231 = vst.msk [vmem:[%s230] ss:$16 sm:$0x3] %vm229, %v228
  %s232 = scalar_lea.vmem %s1, 136
  %233 = vst.msk [vmem:[%s232] ss:$16 sm:$0xc] %vm229, %v228
  %s234 = scalar_lea.vmem %s1, 136
  %235 = vst.msk [vmem:[%s234] ss:$16 sm:$0x30] %vm229, %v228
  %s236 = scalar_lea.vmem %s1, 136
  %237 = vst.msk [vmem:[%s236] ss:$16 sm:$0xc0] %vm229, %v228
  %v238 = vld.sshfl [vmem:[%s0] sm:$0xff pattern:$0xb3a29180]
  %239 = vrot.lane.b32.xlu0 %v238, 56
  %v240 = vpop.permute.xlu0 %239
  %vm241 = vcmask 64512
  %s242 = scalar_lea.vmem %s1, 9
  %243 = vst.msk [vmem:[%s242] ss:$16 sm:$0x3] %vm241, %v240
  %s244 = scalar_lea.vmem %s1, 9
  %245 = vst.msk [vmem:[%s244] ss:$16 sm:$0xc] %vm241, %v240
  %s246 = scalar_lea.vmem %s1, 9
  %247 = vst.msk [vmem:[%s246] ss:$16 sm:$0x30] %vm241, %v240
  %s248 = scalar_lea.vmem %s1, 9
  %249 = vst.msk [vmem:[%s248] ss:$16 sm:$0xc0] %vm241, %v240
  %s250 = scalar_lea.vmem %s0, 4
  %v251 = vld.sshfl [vmem:[%s250] sm:$0xff pattern:$0xb3a29180]
  %252 = vrot.lane.b32.xlu0 %v251, 56
  %v253 = vpop.permute.xlu0 %252
  %vm254 = vcmask 64512
  %s255 = scalar_lea.vmem %s1, 137
  %256 = vst.msk [vmem:[%s255] ss:$16 sm:$0x3] %vm254, %v253
  %s257 = scalar_lea.vmem %s1, 137
  %258 = vst.msk [vmem:[%s257] ss:$16 sm:$0xc] %vm254, %v253
  %s259 = scalar_lea.vmem %s1, 137
  %260 = vst.msk [vmem:[%s259] ss:$16 sm:$0x30] %vm254, %v253
  %s261 = scalar_lea.vmem %s1, 137
  %262 = vst.msk [vmem:[%s261] ss:$16 sm:$0xc0] %vm254, %v253
  %v263 = vld.sshfl [vmem:[%s0] sm:$0xff pattern:$0xb3a29180]
  %264 = vrot.lane.b32.xlu0 %v263, 48
  %v265 = vpop.permute.xlu0 %264
  %vm266 = vcmask 64512
  %s267 = scalar_lea.vmem %s1, 10
  %268 = vst.msk [vmem:[%s267] ss:$16 sm:$0x3] %vm266, %v265
  %s269 = scalar_lea.vmem %s1, 10
  %270 = vst.msk [vmem:[%s269] ss:$16 sm:$0xc] %vm266, %v265
  %s271 = scalar_lea.vmem %s1, 10
  %272 = vst.msk [vmem:[%s271] ss:$16 sm:$0x30] %vm266, %v265
  %s273 = scalar_lea.vmem %s1, 10
  %274 = vst.msk [vmem:[%s273] ss:$16 sm:$0xc0] %vm266, %v265
  %s275 = scalar_lea.vmem %s0, 4
  %v276 = vld.sshfl [vmem:[%s275] sm:$0xff pattern:$0xb3a29180]
  %277 = vrot.lane.b32.xlu0 %v276, 48
  %v278 = vpop.permute.xlu0 %277
  %vm279 = vcmask 64512
  %s280 = scalar_lea.vmem %s1, 138
  %281 = vst.msk [vmem:[%s280] ss:$16 sm:$0x3] %vm279, %v278
  %s282 = scalar_lea.vmem %s1, 138
  %283 = vst.msk [vmem:[%s282] ss:$16 sm:$0xc] %vm279, %v278
  %s284 = scalar_lea.vmem %s1, 138
  %285 = vst.msk [vmem:[%s284] ss:$16 sm:$0x30] %vm279, %v278
  %s286 = scalar_lea.vmem %s1, 138
  %287 = vst.msk [vmem:[%s286] ss:$16 sm:$0xc0] %vm279, %v278
  %v288 = vld.sshfl [vmem:[%s0] sm:$0xff pattern:$0xb3a29180]
  %289 = vrot.lane.b32.xlu0 %v288, 40
  %v290 = vpop.permute.xlu0 %289
  %vm291 = vcmask 64512
  %s292 = scalar_lea.vmem %s1, 11
  %293 = vst.msk [vmem:[%s292] ss:$16 sm:$0x3] %vm291, %v290
  %s294 = scalar_lea.vmem %s1, 11
  %295 = vst.msk [vmem:[%s294] ss:$16 sm:$0xc] %vm291, %v290
  %s296 = scalar_lea.vmem %s1, 11
  %297 = vst.msk [vmem:[%s296] ss:$16 sm:$0x30] %vm291, %v290
  %s298 = scalar_lea.vmem %s1, 11
  %299 = vst.msk [vmem:[%s298] ss:$16 sm:$0xc0] %vm291, %v290
  %s300 = scalar_lea.vmem %s0, 4
  %v301 = vld.sshfl [vmem:[%s300] sm:$0xff pattern:$0xb3a29180]
  %302 = vrot.lane.b32.xlu0 %v301, 40
  %v303 = vpop.permute.xlu0 %302
  %vm304 = vcmask 64512
  %s305 = scalar_lea.vmem %s1, 139
  %306 = vst.msk [vmem:[%s305] ss:$16 sm:$0x3] %vm304, %v303
  %s307 = scalar_lea.vmem %s1, 139
  %308 = vst.msk [vmem:[%s307] ss:$16 sm:$0xc] %vm304, %v303
  %s309 = scalar_lea.vmem %s1, 139
  %310 = vst.msk [vmem:[%s309] ss:$16 sm:$0x30] %vm304, %v303
  %s311 = scalar_lea.vmem %s1, 139
  %312 = vst.msk [vmem:[%s311] ss:$16 sm:$0xc0] %vm304, %v303
  %v313 = vld.sshfl [vmem:[%s0] sm:$0xff pattern:$0xb3a29180]
  %314 = vrot.lane.b32.xlu0 %v313, 32
  %v315 = vpop.permute.xlu0 %314
  %vm316 = vcmask 64512
  %s317 = scalar_lea.vmem %s1, 12
  %318 = vst.msk [vmem:[%s317] ss:$16 sm:$0x3] %vm316, %v315
  %s319 = scalar_lea.vmem %s1, 12
  %320 = vst.msk [vmem:[%s319] ss:$16 sm:$0xc] %vm316, %v315
  %s321 = scalar_lea.vmem %s1, 12
  %322 = vst.msk [vmem:[%s321] ss:$16 sm:$0x30] %vm316, %v315
  %s323 = scalar_lea.vmem %s1, 12
  %324 = vst.msk [vmem:[%s323] ss:$16 sm:$0xc0] %vm316, %v315
  %s325 = scalar_lea.vmem %s0, 4
  %v326 = vld.sshfl [vmem:[%s325] sm:$0xff pattern:$0xb3a29180]
  %327 = vrot.lane.b32.xlu0 %v326, 32
  %v328 = vpop.permute.xlu0 %327
  %vm329 = vcmask 64512
  %s330 = scalar_lea.vmem %s1, 140
  %331 = vst.msk [vmem:[%s330] ss:$16 sm:$0x3] %vm329, %v328
  %s332 = scalar_lea.vmem %s1, 140
  %333 = vst.msk [vmem:[%s332] ss:$16 sm:$0xc] %vm329, %v328
  %s334 = scalar_lea.vmem %s1, 140
  %335 = vst.msk [vmem:[%s334] ss:$16 sm:$0x30] %vm329, %v328
  %s336 = scalar_lea.vmem %s1, 140
  %337 = vst.msk [vmem:[%s336] ss:$16 sm:$0xc0] %vm329, %v328
  %v338 = vld.sshfl [vmem:[%s0] sm:$0xff pattern:$0xb3a29180]
  %339 = vrot.lane.b32.xlu0 %v338, 24
  %v340 = vpop.permute.xlu0 %339
  %vm341 = vcmask 64512
  %s342 = scalar_lea.vmem %s1, 13
  %343 = vst.msk [vmem:[%s342] ss:$16 sm:$0x3] %vm341, %v340
  %s344 = scalar_lea.vmem %s1, 13
  %345 = vst.msk [vmem:[%s344] ss:$16 sm:$0xc] %vm341, %v340
  %s346 = scalar_lea.vmem %s1, 13
  %347 = vst.msk [vmem:[%s346] ss:$16 sm:$0x30] %vm341, %v340
  %s348 = scalar_lea.vmem %s1, 13
  %349 = vst.msk [vmem:[%s348] ss:$16 sm:$0xc0] %vm341, %v340
  %s350 = scalar_lea.vmem %s0, 4
  %v351 = vld.sshfl [vmem:[%s350] sm:$0xff pattern:$0xb3a29180]
  %352 = vrot.lane.b32.xlu0 %v351, 24
  %v353 = vpop.permute.xlu0 %352
  %vm354 = vcmask 64512
  %s355 = scalar_lea.vmem %s1, 141
  %356 = vst.msk [vmem:[%s355] ss:$16 sm:$0x3] %vm354, %v353
  %s357 = scalar_lea.vmem %s1, 141
  %358 = vst.msk [vmem:[%s357] ss:$16 sm:$0xc] %vm354, %v353
  %s359 = scalar_lea.vmem %s1, 141
  %360 = vst.msk [vmem:[%s359] ss:$16 sm:$0x30] %vm354, %v353
  %s361 = scalar_lea.vmem %s1, 141
  %362 = vst.msk [vmem:[%s361] ss:$16 sm:$0xc0] %vm354, %v353
  %v363 = vld.sshfl [vmem:[%s0] sm:$0xff pattern:$0xb3a29180]
  %364 = vrot.lane.b32.xlu0 %v363, 16
  %v365 = vpop.permute.xlu0 %364
  %vm366 = vcmask 64512
  %s367 = scalar_lea.vmem %s1, 14
  %368 = vst.msk [vmem:[%s367] ss:$16 sm:$0x3] %vm366, %v365
  %s369 = scalar_lea.vmem %s1, 14
  %370 = vst.msk [vmem:[%s369] ss:$16 sm:$0xc] %vm366, %v365
  %s371 = scalar_lea.vmem %s1, 14
  %372 = vst.msk [vmem:[%s371] ss:$16 sm:$0x30] %vm366, %v365
  %s373 = scalar_lea.vmem %s1, 14
  %374 = vst.msk [vmem:[%s373] ss:$16 sm:$0xc0] %vm366, %v365
  %s375 = scalar_lea.vmem %s0, 4
  %v376 = vld.sshfl [vmem:[%s375] sm:$0xff pattern:$0xb3a29180]
  %377 = vrot.lane.b32.xlu0 %v376, 16
  %v378 = vpop.permute.xlu0 %377
  %vm379 = vcmask 64512
  %s380 = scalar_lea.vmem %s1, 142
  %381 = vst.msk [vmem:[%s380] ss:$16 sm:$0x3] %vm379, %v378
  %s382 = scalar_lea.vmem %s1, 142
  %383 = vst.msk [vmem:[%s382] ss:$16 sm:$0xc] %vm379, %v378
  %s384 = scalar_lea.vmem %s1, 142
  %385 = vst.msk [vmem:[%s384] ss:$16 sm:$0x30] %vm379, %v378
  %s386 = scalar_lea.vmem %s1, 142
  %387 = vst.msk [vmem:[%s386] ss:$16 sm:$0xc0] %vm379, %v378
  %v388 = vld.sshfl [vmem:[%s0] sm:$0xff pattern:$0xb3a29180]
  %389 = vrot.lane.b32.xlu0 %v388, 8
  %v390 = vpop.permute.xlu0 %389
  %vm391 = vcmask 64512
  %s392 = scalar_lea.vmem %s1, 15
  %393 = vst.msk [vmem:[%s392] ss:$16 sm:$0x3] %vm391, %v390
  %s394 = scalar_lea.vmem %s1, 15
  %395 = vst.msk [vmem:[%s394] ss:$16 sm:$0xc] %vm391, %v390
  %s396 = scalar_lea.vmem %s1, 15
  %397 = vst.msk [vmem:[%s396] ss:$16 sm:$0x30] %vm391, %v390
  %s398 = scalar_lea.vmem %s1, 15
  %399 = vst.msk [vmem:[%s398] ss:$16 sm:$0xc0] %vm391, %v390
  %s400 = scalar_lea.vmem %s0, 4
  %v401 = vld.sshfl [vmem:[%s400] sm:$0xff pattern:$0xb3a29180]
  %402 = vrot.lane.b32.xlu0 %v401, 8
  %v403 = vpop.permute.xlu0 %402
  %vm404 = vcmask 64512
  %s405 = scalar_lea.vmem %s1, 143
  %406 = vst.msk [vmem:[%s405] ss:$16 sm:$0x3] %vm404, %v403
  %s407 = scalar_lea.vmem %s1, 143
  %408 = vst.msk [vmem:[%s407] ss:$16 sm:$0xc] %vm404, %v403
  %s409 = scalar_lea.vmem %s1, 143
  %410 = vst.msk [vmem:[%s409] ss:$16 sm:$0x30] %vm404, %v403
  %s411 = scalar_lea.vmem %s1, 143
  %412 = vst.msk [vmem:[%s411] ss:$16 sm:$0xc0] %vm404, %v403

// kernel: squeeze.19
$region0: #{squeeze.19}
  %s0 = inlined_call_operand.vmem [shape: f32[1,8,256], index: 0, kind: input, shape index: {}]
  %s1 = inlined_call_operand.vmem [shape: f32[8,2,2,8,8], index: 1, kind: output, shape index: {}]
  %v2 = vld [vmem:[%s0] sm:$0xff]
  %vm3 = vcmask 64512
  %4 = vst.msk [vmem:[%s1] sm:$0x1] %vm3, %v2
  %s5 = scalar_lea.vmem %s1, 31
  %6 = vst.msk [vmem:[%s5] sm:$0x2] %vm3, %v2
  %s7 = scalar_lea.vmem %s1, 62
  %8 = vst.msk [vmem:[%s7] sm:$0x4] %vm3, %v2
  %s9 = scalar_lea.vmem %s1, 93
  %10 = vst.msk [vmem:[%s9] sm:$0x8] %vm3, %v2
  %s11 = scalar_lea.vmem %s1, 124
  %12 = vst.msk [vmem:[%s11] sm:$0x10] %vm3, %v2
  %s13 = scalar_lea.vmem %s1, 155
  %14 = vst.msk [vmem:[%s13] sm:$0x20] %vm3, %v2
  %s15 = scalar_lea.vmem %s1, 186
  %16 = vst.msk [vmem:[%s15] sm:$0x40] %vm3, %v2
  %s17 = scalar_lea.vmem %s1, 217
  %18 = vst.msk [vmem:[%s17] sm:$0x80] %vm3, %v2
  %s19 = scalar_lea.vmem %s0, 8
  %v20 = vld [vmem:[%s19] sm:$0xff]
  %vm21 = vcmask 64512
  %s22 = scalar_lea.vmem %s1, 16
  %23 = vst.msk [vmem:[%s22] sm:$0x1] %vm21, %v20
  %s24 = scalar_lea.vmem %s1, 47
  %25 = vst.msk [vmem:[%s24] sm:$0x2] %vm21, %v20
  %s26 = scalar_lea.vmem %s1, 78
  %27 = vst.msk [vmem:[%s26] sm:$0x4] %vm21, %v20
  %s28 = scalar_lea.vmem %s1, 109
  %29 = vst.msk [vmem:[%s28] sm:$0x8] %vm21, %v20
  %s30 = scalar_lea.vmem %s1, 140
  %31 = vst.msk [vmem:[%s30] sm:$0x10] %vm21, %v20
  %s32 = scalar_lea.vmem %s1, 171
  %33 = vst.msk [vmem:[%s32] sm:$0x20] %vm21, %v20
  %s34 = scalar_lea.vmem %s1, 202
  %35 = vst.msk [vmem:[%s34] sm:$0x40] %vm21, %v20
  %s36 = scalar_lea.vmem %s1, 233
  %37 = vst.msk [vmem:[%s36] sm:$0x80] %vm21, %v20
  %v38 = vld.sshfl [vmem:[%s0] sm:$0xff pattern:$0xb3a29180]
  %39 = vrot.lane.b32.xlu0 %v38, 120
  %v40 = vpop.permute.xlu0 %39
  %vm41 = vcmask 64512
  %s42 = scalar_lea.vmem %s1, 1
  %43 = vst.msk [vmem:[%s42] ss:$16 sm:$0x3] %vm41, %v40
  %s44 = scalar_lea.vmem %s1, 1
  %45 = vst.msk [vmem:[%s44] ss:$16 sm:$0xc] %vm41, %v40
  %s46 = scalar_lea.vmem %s1, 1
  %47 = vst.msk [vmem:[%s46] ss:$16 sm:$0x30] %vm41, %v40
  %s48 = scalar_lea.vmem %s1, 1
  %49 = vst.msk [vmem:[%s48] ss:$16 sm:$0xc0] %vm41, %v40
  %s50 = scalar_lea.vmem %s0, 4
  %v51 = vld.sshfl [vmem:[%s50] sm:$0xff pattern:$0xb3a29180]
  %52 = vrot.lane.b32.xlu0 %v51, 120
  %v53 = vpop.permute.xlu0 %52
  %vm54 = vcmask 64512
  %s55 = scalar_lea.vmem %s1, 129
  %56 = vst.msk [vmem:[%s55] ss:$16 sm:$0x3] %vm54, %v53
  %s57 = scalar_lea.vmem %s1, 129
  %58 = vst.msk [vmem:[%s57] ss:$16 sm:$0xc] %vm54, %v53
  %s59 = scalar_lea.vmem %s1, 129
  %60 = vst.msk [vmem:[%s59] ss:$16 sm:$0x30] %vm54, %v53
  %s61 = scalar_lea.vmem %s1, 129
  %62 = vst.msk [vmem:[%s61] ss:$16 sm:$0xc0] %vm54, %v53
  %v63 = vld.sshfl [vmem:[%s0] sm:$0xff pattern:$0xb3a29180]
  %64 = vrot.lane.b32.xlu0 %v63, 112
  %v65 = vpop.permute.xlu0 %64
  %vm66 = vcmask 64512
  %s67 = scalar_lea.vmem %s1, 2
  %68 = vst.msk [vmem:[%s67] ss:$16 sm:$0x3] %vm66, %v65
  %s69 = scalar_lea.vmem %s1, 2
  %70 = vst.msk [vmem:[%s69] ss:$16 sm:$0xc] %vm66, %v65
  %s71 = scalar_lea.vmem %s1, 2
  %72 = vst.msk [vmem:[%s71] ss:$16 sm:$0x30] %vm66, %v65
  %s73 = scalar_lea.vmem %s1, 2
  %74 = vst.msk [vmem:[%s73] ss:$16 sm:$0xc0] %vm66, %v65
  %s75 = scalar_lea.vmem %s0, 4
  %v76 = vld.sshfl [vmem:[%s75] sm:$0xff pattern:$0xb3a29180]
  %77 = vrot.lane.b32.xlu0 %v76, 112
  %v78 = vpop.permute.xlu0 %77
  %vm79 = vcmask 64512
  %s80 = scalar_lea.vmem %s1, 130
  %81 = vst.msk [vmem:[%s80] ss:$16 sm:$0x3] %vm79, %v78
  %s82 = scalar_lea.vmem %s1, 130
  %83 = vst.msk [vmem:[%s82] ss:$16 sm:$0xc] %vm79, %v78
  %s84 = scalar_lea.vmem %s1, 130
  %85 = vst.msk [vmem:[%s84] ss:$16 sm:$0x30] %vm79, %v78
  %s86 = scalar_lea.vmem %s1, 130
  %87 = vst.msk [vmem:[%s86] ss:$16 sm:$0xc0] %vm79, %v78
  %v88 = vld.sshfl [vmem:[%s0] sm:$0xff pattern:$0xb3a29180]
  %89 = vrot.lane.b32.xlu0 %v88, 104
  %v90 = vpop.permute.xlu0 %89
  %vm91 = vcmask 64512
  %s92 = scalar_lea.vmem %s1, 3
  %93 = vst.msk [vmem:[%s92] ss:$16 sm:$0x3] %vm91, %v90
  %s94 = scalar_lea.vmem %s1, 3
  %95 = vst.msk [vmem:[%s94] ss:$16 sm:$0xc] %vm91, %v90
  %s96 = scalar_lea.vmem %s1, 3
  %97 = vst.msk [vmem:[%s96] ss:$16 sm:$0x30] %vm91, %v90
  %s98 = scalar_lea.vmem %s1, 3
  %99 = vst.msk [vmem:[%s98] ss:$16 sm:$0xc0] %vm91, %v90
  %s100 = scalar_lea.vmem %s0, 4
  %v101 = vld.sshfl [vmem:[%s100] sm:$0xff pattern:$0xb3a29180]
  %102 = vrot.lane.b32.xlu0 %v101, 104
  %v103 = vpop.permute.xlu0 %102
  %vm104 = vcmask 64512
  %s105 = scalar_lea.vmem %s1, 131
  %106 = vst.msk [vmem:[%s105] ss:$16 sm:$0x3] %vm104, %v103
  %s107 = scalar_lea.vmem %s1, 131
  %108 = vst.msk [vmem:[%s107] ss:$16 sm:$0xc] %vm104, %v103
  %s109 = scalar_lea.vmem %s1, 131
  %110 = vst.msk [vmem:[%s109] ss:$16 sm:$0x30] %vm104, %v103
  %s111 = scalar_lea.vmem %s1, 131
  %112 = vst.msk [vmem:[%s111] ss:$16 sm:$0xc0] %vm104, %v103
  %v113 = vld.sshfl [vmem:[%s0] sm:$0xff pattern:$0xb3a29180]
  %114 = vrot.lane.b32.xlu0 %v113, 96
  %v115 = vpop.permute.xlu0 %114
  %vm116 = vcmask 64512
  %s117 = scalar_lea.vmem %s1, 4
  %118 = vst.msk [vmem:[%s117] ss:$16 sm:$0x3] %vm116, %v115
  %s119 = scalar_lea.vmem %s1, 4
  %120 = vst.msk [vmem:[%s119] ss:$16 sm:$0xc] %vm116, %v115
  %s121 = scalar_lea.vmem %s1, 4
  %122 = vst.msk [vmem:[%s121] ss:$16 sm:$0x30] %vm116, %v115
  %s123 = scalar_lea.vmem %s1, 4
  %124 = vst.msk [vmem:[%s123] ss:$16 sm:$0xc0] %vm116, %v115
  %s125 = scalar_lea.vmem %s0, 4
  %v126 = vld.sshfl [vmem:[%s125] sm:$0xff pattern:$0xb3a29180]
  %127 = vrot.lane.b32.xlu0 %v126, 96
  %v128 = vpop.permute.xlu0 %127
  %vm129 = vcmask 64512
  %s130 = scalar_lea.vmem %s1, 132
  %131 = vst.msk [vmem:[%s130] ss:$16 sm:$0x3] %vm129, %v128
  %s132 = scalar_lea.vmem %s1, 132
  %133 = vst.msk [vmem:[%s132] ss:$16 sm:$0xc] %vm129, %v128
  %s134 = scalar_lea.vmem %s1, 132
  %135 = vst.msk [vmem:[%s134] ss:$16 sm:$0x30] %vm129, %v128
  %s136 = scalar_lea.vmem %s1, 132
  %137 = vst.msk [vmem:[%s136] ss:$16 sm:$0xc0] %vm129, %v128
  %v138 = vld.sshfl [vmem:[%s0] sm:$0xff pattern:$0xb3a29180]
  %139 = vrot.lane.b32.xlu0 %v138, 88
  %v140 = vpop.permute.xlu0 %139
  %vm141 = vcmask 64512
  %s142 = scalar_lea.vmem %s1, 5
  %143 = vst.msk [vmem:[%s142] ss:$16 sm:$0x3] %vm141, %v140
  %s144 = scalar_lea.vmem %s1, 5
  %145 = vst.msk [vmem:[%s144] ss:$16 sm:$0xc] %vm141, %v140
  %s146 = scalar_lea.vmem %s1, 5
  %147 = vst.msk [vmem:[%s146] ss:$16 sm:$0x30] %vm141, %v140
  %s148 = scalar_lea.vmem %s1, 5
  %149 = vst.msk [vmem:[%s148] ss:$16 sm:$0xc0] %vm141, %v140
  %s150 = scalar_lea.vmem %s0, 4
  %v151 = vld.sshfl [vmem:[%s150] sm:$0xff pattern:$0xb3a29180]
  %152 = vrot.lane.b32.xlu0 %v151, 88
  %v153 = vpop.permute.xlu0 %152
  %vm154 = vcmask 64512
  %s155 = scalar_lea.vmem %s1, 133
  %156 = vst.msk [vmem:[%s155] ss:$16 sm:$0x3] %vm154, %v153
  %s157 = scalar_lea.vmem %s1, 133
  %158 = vst.msk [vmem:[%s157] ss:$16 sm:$0xc] %vm154, %v153
  %s159 = scalar_lea.vmem %s1, 133
  %160 = vst.msk [vmem:[%s159] ss:$16 sm:$0x30] %vm154, %v153
  %s161 = scalar_lea.vmem %s1, 133
  %162 = vst.msk [vmem:[%s161] ss:$16 sm:$0xc0] %vm154, %v153
  %v163 = vld.sshfl [vmem:[%s0] sm:$0xff pattern:$0xb3a29180]
  %164 = vrot.lane.b32.xlu0 %v163, 80
  %v165 = vpop.permute.xlu0 %164
  %vm166 = vcmask 64512
  %s167 = scalar_lea.vmem %s1, 6
  %168 = vst.msk [vmem:[%s167] ss:$16 sm:$0x3] %vm166, %v165
  %s169 = scalar_lea.vmem %s1, 6
  %170 = vst.msk [vmem:[%s169] ss:$16 sm:$0xc] %vm166, %v165
  %s171 = scalar_lea.vmem %s1, 6
  %172 = vst.msk [vmem:[%s171] ss:$16 sm:$0x30] %vm166, %v165
  %s173 = scalar_lea.vmem %s1, 6
  %174 = vst.msk [vmem:[%s173] ss:$16 sm:$0xc0] %vm166, %v165
  %s175 = scalar_lea.vmem %s0, 4
  %v176 = vld.sshfl [vmem:[%s175] sm:$0xff pattern:$0xb3a29180]
  %177 = vrot.lane.b32.xlu0 %v176, 80
  %v178 = vpop.permute.xlu0 %177
  %vm179 = vcmask 64512
  %s180 = scalar_lea.vmem %s1, 134
  %181 = vst.msk [vmem:[%s180] ss:$16 sm:$0x3] %vm179, %v178
  %s182 = scalar_lea.vmem %s1, 134
  %183 = vst.msk [vmem:[%s182] ss:$16 sm:$0xc] %vm179, %v178
  %s184 = scalar_lea.vmem %s1, 134
  %185 = vst.msk [vmem:[%s184] ss:$16 sm:$0x30] %vm179, %v178
  %s186 = scalar_lea.vmem %s1, 134
  %187 = vst.msk [vmem:[%s186] ss:$16 sm:$0xc0] %vm179, %v178
  %v188 = vld.sshfl [vmem:[%s0] sm:$0xff pattern:$0xb3a29180]
  %189 = vrot.lane.b32.xlu0 %v188, 72
  %v190 = vpop.permute.xlu0 %189
  %vm191 = vcmask 64512
  %s192 = scalar_lea.vmem %s1, 7
  %193 = vst.msk [vmem:[%s192] ss:$16 sm:$0x3] %vm191, %v190
  %s194 = scalar_lea.vmem %s1, 7
  %195 = vst.msk [vmem:[%s194] ss:$16 sm:$0xc] %vm191, %v190
  %s196 = scalar_lea.vmem %s1, 7
  %197 = vst.msk [vmem:[%s196] ss:$16 sm:$0x30] %vm191, %v190
  %s198 = scalar_lea.vmem %s1, 7
  %199 = vst.msk [vmem:[%s198] ss:$16 sm:$0xc0] %vm191, %v190
  %s200 = scalar_lea.vmem %s0, 4
  %v201 = vld.sshfl [vmem:[%s200] sm:$0xff pattern:$0xb3a29180]
  %202 = vrot.lane.b32.xlu0 %v201, 72
  %v203 = vpop.permute.xlu0 %202
  %vm204 = vcmask 64512
  %s205 = scalar_lea.vmem %s1, 135
  %206 = vst.msk [vmem:[%s205] ss:$16 sm:$0x3] %vm204, %v203
  %s207 = scalar_lea.vmem %s1, 135
  %208 = vst.msk [vmem:[%s207] ss:$16 sm:$0xc] %vm204, %v203
  %s209 = scalar_lea.vmem %s1, 135
  %210 = vst.msk [vmem:[%s209] ss:$16 sm:$0x30] %vm204, %v203
  %s211 = scalar_lea.vmem %s1, 135
  %212 = vst.msk [vmem:[%s211] ss:$16 sm:$0xc0] %vm204, %v203
  %v213 = vld.sshfl [vmem:[%s0] sm:$0xff pattern:$0xb3a29180]
  %214 = vrot.lane.b32.xlu0 %v213, 64
  %v215 = vpop.permute.xlu0 %214
  %vm216 = vcmask 64512
  %s217 = scalar_lea.vmem %s1, 8
  %218 = vst.msk [vmem:[%s217] ss:$16 sm:$0x3] %vm216, %v215
  %s219 = scalar_lea.vmem %s1, 8
  %220 = vst.msk [vmem:[%s219] ss:$16 sm:$0xc] %vm216, %v215
  %s221 = scalar_lea.vmem %s1, 8
  %222 = vst.msk [vmem:[%s221] ss:$16 sm:$0x30] %vm216, %v215
  %s223 = scalar_lea.vmem %s1, 8
  %224 = vst.msk [vmem:[%s223] ss:$16 sm:$0xc0] %vm216, %v215
  %s225 = scalar_lea.vmem %s0, 4
  %v226 = vld.sshfl [vmem:[%s225] sm:$0xff pattern:$0xb3a29180]
  %227 = vrot.lane.b32.xlu0 %v226, 64
  %v228 = vpop.permute.xlu0 %227
  %vm229 = vcmask 64512
  %s230 = scalar_lea.vmem %s1, 136
  %231 = vst.msk [vmem:[%s230] ss:$16 sm:$0x3] %vm229, %v228
  %s232 = scalar_lea.vmem %s1, 136
  %233 = vst.msk [vmem:[%s232] ss:$16 sm:$0xc] %vm229, %v228
  %s234 = scalar_lea.vmem %s1, 136
  %235 = vst.msk [vmem:[%s234] ss:$16 sm:$0x30] %vm229, %v228
  %s236 = scalar_lea.vmem %s1, 136
  %237 = vst.msk [vmem:[%s236] ss:$16 sm:$0xc0] %vm229, %v228
  %v238 = vld.sshfl [vmem:[%s0] sm:$0xff pattern:$0xb3a29180]
  %239 = vrot.lane.b32.xlu0 %v238, 56
  %v240 = vpop.permute.xlu0 %239
  %vm241 = vcmask 64512
  %s242 = scalar_lea.vmem %s1, 9
  %243 = vst.msk [vmem:[%s242] ss:$16 sm:$0x3] %vm241, %v240
  %s244 = scalar_lea.vmem %s1, 9
  %245 = vst.msk [vmem:[%s244] ss:$16 sm:$0xc] %vm241, %v240
  %s246 = scalar_lea.vmem %s1, 9
  %247 = vst.msk [vmem:[%s246] ss:$16 sm:$0x30] %vm241, %v240
  %s248 = scalar_lea.vmem %s1, 9
  %249 = vst.msk [vmem:[%s248] ss:$16 sm:$0xc0] %vm241, %v240
  %s250 = scalar_lea.vmem %s0, 4
  %v251 = vld.sshfl [vmem:[%s250] sm:$0xff pattern:$0xb3a29180]
  %252 = vrot.lane.b32.xlu0 %v251, 56
  %v253 = vpop.permute.xlu0 %252
  %vm254 = vcmask 64512
  %s255 = scalar_lea.vmem %s1, 137
  %256 = vst.msk [vmem:[%s255] ss:$16 sm:$0x3] %vm254, %v253
  %s257 = scalar_lea.vmem %s1, 137
  %258 = vst.msk [vmem:[%s257] ss:$16 sm:$0xc] %vm254, %v253
  %s259 = scalar_lea.vmem %s1, 137
  %260 = vst.msk [vmem:[%s259] ss:$16 sm:$0x30] %vm254, %v253
  %s261 = scalar_lea.vmem %s1, 137
  %262 = vst.msk [vmem:[%s261] ss:$16 sm:$0xc0] %vm254, %v253
  %v263 = vld.sshfl [vmem:[%s0] sm:$0xff pattern:$0xb3a29180]
  %264 = vrot.lane.b32.xlu0 %v263, 48
  %v265 = vpop.permute.xlu0 %264
  %vm266 = vcmask 64512
  %s267 = scalar_lea.vmem %s1, 10
  %268 = vst.msk [vmem:[%s267] ss:$16 sm:$0x3] %vm266, %v265
  %s269 = scalar_lea.vmem %s1, 10
  %270 = vst.msk [vmem:[%s269] ss:$16 sm:$0xc] %vm266, %v265
  %s271 = scalar_lea.vmem %s1, 10
  %272 = vst.msk [vmem:[%s271] ss:$16 sm:$0x30] %vm266, %v265
  %s273 = scalar_lea.vmem %s1, 10
  %274 = vst.msk [vmem:[%s273] ss:$16 sm:$0xc0] %vm266, %v265
  %s275 = scalar_lea.vmem %s0, 4
  %v276 = vld.sshfl [vmem:[%s275] sm:$0xff pattern:$0xb3a29180]
  %277 = vrot.lane.b32.xlu0 %v276, 48
  %v278 = vpop.permute.xlu0 %277
  %vm279 = vcmask 64512
  %s280 = scalar_lea.vmem %s1, 138
  %281 = vst.msk [vmem:[%s280] ss:$16 sm:$0x3] %vm279, %v278
  %s282 = scalar_lea.vmem %s1, 138
  %283 = vst.msk [vmem:[%s282] ss:$16 sm:$0xc] %vm279, %v278
  %s284 = scalar_lea.vmem %s1, 138
  %285 = vst.msk [vmem:[%s284] ss:$16 sm:$0x30] %vm279, %v278
  %s286 = scalar_lea.vmem %s1, 138
  %287 = vst.msk [vmem:[%s286] ss:$16 sm:$0xc0] %vm279, %v278
  %v288 = vld.sshfl [vmem:[%s0] sm:$0xff pattern:$0xb3a29180]
  %289 = vrot.lane.b32.xlu0 %v288, 40
  %v290 = vpop.permute.xlu0 %289
  %vm291 = vcmask 64512
  %s292 = scalar_lea.vmem %s1, 11
  %293 = vst.msk [vmem:[%s292] ss:$16 sm:$0x3] %vm291, %v290
  %s294 = scalar_lea.vmem %s1, 11
  %295 = vst.msk [vmem:[%s294] ss:$16 sm:$0xc] %vm291, %v290
  %s296 = scalar_lea.vmem %s1, 11
  %297 = vst.msk [vmem:[%s296] ss:$16 sm:$0x30] %vm291, %v290
  %s298 = scalar_lea.vmem %s1, 11
  %299 = vst.msk [vmem:[%s298] ss:$16 sm:$0xc0] %vm291, %v290
  %s300 = scalar_lea.vmem %s0, 4
  %v301 = vld.sshfl [vmem:[%s300] sm:$0xff pattern:$0xb3a29180]
  %302 = vrot.lane.b32.xlu0 %v301, 40
  %v303 = vpop.permute.xlu0 %302
  %vm304 = vcmask 64512
  %s305 = scalar_lea.vmem %s1, 139
  %306 = vst.msk [vmem:[%s305] ss:$16 sm:$0x3] %vm304, %v303
  %s307 = scalar_lea.vmem %s1, 139
  %308 = vst.msk [vmem:[%s307] ss:$16 sm:$0xc] %vm304, %v303
  %s309 = scalar_lea.vmem %s1, 139
  %310 = vst.msk [vmem:[%s309] ss:$16 sm:$0x30] %vm304, %v303
  %s311 = scalar_lea.vmem %s1, 139
  %312 = vst.msk [vmem:[%s311] ss:$16 sm:$0xc0] %vm304, %v303
  %v313 = vld.sshfl [vmem:[%s0] sm:$0xff pattern:$0xb3a29180]
  %314 = vrot.lane.b32.xlu0 %v313, 32
  %v315 = vpop.permute.xlu0 %314
  %vm316 = vcmask 64512
  %s317 = scalar_lea.vmem %s1, 12
  %318 = vst.msk [vmem:[%s317] ss:$16 sm:$0x3] %vm316, %v315
  %s319 = scalar_lea.vmem %s1, 12
  %320 = vst.msk [vmem:[%s319] ss:$16 sm:$0xc] %vm316, %v315
  %s321 = scalar_lea.vmem %s1, 12
  %322 = vst.msk [vmem:[%s321] ss:$16 sm:$0x30] %vm316, %v315
  %s323 = scalar_lea.vmem %s1, 12
  %324 = vst.msk [vmem:[%s323] ss:$16 sm:$0xc0] %vm316, %v315
  %s325 = scalar_lea.vmem %s0, 4
  %v326 = vld.sshfl [vmem:[%s325] sm:$0xff pattern:$0xb3a29180]
  %327 = vrot.lane.b32.xlu0 %v326, 32
  %v328 = vpop.permute.xlu0 %327
  %vm329 = vcmask 64512
  %s330 = scalar_lea.vmem %s1, 140
  %331 = vst.msk [vmem:[%s330] ss:$16 sm:$0x3] %vm329, %v328
  %s332 = scalar_lea.vmem %s1, 140
  %333 = vst.msk [vmem:[%s332] ss:$16 sm:$0xc] %vm329, %v328
  %s334 = scalar_lea.vmem %s1, 140
  %335 = vst.msk [vmem:[%s334] ss:$16 sm:$0x30] %vm329, %v328
  %s336 = scalar_lea.vmem %s1, 140
  %337 = vst.msk [vmem:[%s336] ss:$16 sm:$0xc0] %vm329, %v328
  %v338 = vld.sshfl [vmem:[%s0] sm:$0xff pattern:$0xb3a29180]
  %339 = vrot.lane.b32.xlu0 %v338, 24
  %v340 = vpop.permute.xlu0 %339
  %vm341 = vcmask 64512
  %s342 = scalar_lea.vmem %s1, 13
  %343 = vst.msk [vmem:[%s342] ss:$16 sm:$0x3] %vm341, %v340
  %s344 = scalar_lea.vmem %s1, 13
  %345 = vst.msk [vmem:[%s344] ss:$16 sm:$0xc] %vm341, %v340
  %s346 = scalar_lea.vmem %s1, 13
  %347 = vst.msk [vmem:[%s346] ss:$16 sm:$0x30] %vm341, %v340
  %s348 = scalar_lea.vmem %s1, 13
  %349 = vst.msk [vmem:[%s348] ss:$16 sm:$0xc0] %vm341, %v340
  %s350 = scalar_lea.vmem %s0, 4
  %v351 = vld.sshfl [vmem:[%s350] sm:$0xff pattern:$0xb3a29180]
  %352 = vrot.lane.b32.xlu0 %v351, 24
  %v353 = vpop.permute.xlu0 %352
  %vm354 = vcmask 64512
  %s355 = scalar_lea.vmem %s1, 141
  %356 = vst.msk [vmem:[%s355] ss:$16 sm:$0x3] %vm354, %v353
  %s357 = scalar_lea.vmem %s1, 141
  %358 = vst.msk [vmem:[%s357] ss:$16 sm:$0xc] %vm354, %v353
  %s359 = scalar_lea.vmem %s1, 141
  %360 = vst.msk [vmem:[%s359] ss:$16 sm:$0x30] %vm354, %v353
  %s361 = scalar_lea.vmem %s1, 141
  %362 = vst.msk [vmem:[%s361] ss:$16 sm:$0xc0] %vm354, %v353
  %v363 = vld.sshfl [vmem:[%s0] sm:$0xff pattern:$0xb3a29180]
  %364 = vrot.lane.b32.xlu0 %v363, 16
  %v365 = vpop.permute.xlu0 %364
  %vm366 = vcmask 64512
  %s367 = scalar_lea.vmem %s1, 14
  %368 = vst.msk [vmem:[%s367] ss:$16 sm:$0x3] %vm366, %v365
  %s369 = scalar_lea.vmem %s1, 14
  %370 = vst.msk [vmem:[%s369] ss:$16 sm:$0xc] %vm366, %v365
  %s371 = scalar_lea.vmem %s1, 14
  %372 = vst.msk [vmem:[%s371] ss:$16 sm:$0x30] %vm366, %v365
  %s373 = scalar_lea.vmem %s1, 14
  %374 = vst.msk [vmem:[%s373] ss:$16 sm:$0xc0] %vm366, %v365
  %s375 = scalar_lea.vmem %s0, 4
  %v376 = vld.sshfl [vmem:[%s375] sm:$0xff pattern:$0xb3a29180]
  %377 = vrot.lane.b32.xlu0 %v376, 16
  %v378 = vpop.permute.xlu0 %377
  %vm379 = vcmask 64512
  %s380 = scalar_lea.vmem %s1, 142
  %381 = vst.msk [vmem:[%s380] ss:$16 sm:$0x3] %vm379, %v378
  %s382 = scalar_lea.vmem %s1, 142
  %383 = vst.msk [vmem:[%s382] ss:$16 sm:$0xc] %vm379, %v378
  %s384 = scalar_lea.vmem %s1, 142
  %385 = vst.msk [vmem:[%s384] ss:$16 sm:$0x30] %vm379, %v378
  %s386 = scalar_lea.vmem %s1, 142
  %387 = vst.msk [vmem:[%s386] ss:$16 sm:$0xc0] %vm379, %v378
  %v388 = vld.sshfl [vmem:[%s0] sm:$0xff pattern:$0xb3a29180]
  %389 = vrot.lane.b32.xlu0 %v388, 8
  %v390 = vpop.permute.xlu0 %389
  %vm391 = vcmask 64512
  %s392 = scalar_lea.vmem %s1, 15
  %393 = vst.msk [vmem:[%s392] ss:$16 sm:$0x3] %vm391, %v390
  %s394 = scalar_lea.vmem %s1, 15
  %395 = vst.msk [vmem:[%s394] ss:$16 sm:$0xc] %vm391, %v390
  %s396 = scalar_lea.vmem %s1, 15
  %397 = vst.msk [vmem:[%s396] ss:$16 sm:$0x30] %vm391, %v390
  %s398 = scalar_lea.vmem %s1, 15
  %399 = vst.msk [vmem:[%s398] ss:$16 sm:$0xc0] %vm391, %v390
  %s400 = scalar_lea.vmem %s0, 4
  %v401 = vld.sshfl [vmem:[%s400] sm:$0xff pattern:$0xb3a29180]
  %402 = vrot.lane.b32.xlu0 %v401, 8
  %v403 = vpop.permute.xlu0 %402
  %vm404 = vcmask 64512
  %s405 = scalar_lea.vmem %s1, 143
  %406 = vst.msk [vmem:[%s405] ss:$16 sm:$0x3] %vm404, %v403
  %s407 = scalar_lea.vmem %s1, 143
  %408 = vst.msk [vmem:[%s407] ss:$16 sm:$0xc] %vm404, %v403
  %s409 = scalar_lea.vmem %s1, 143
  %410 = vst.msk [vmem:[%s409] ss:$16 sm:$0x30] %vm404, %v403
  %s411 = scalar_lea.vmem %s1, 143
  %412 = vst.msk [vmem:[%s411] ss:$16 sm:$0xc0] %vm404, %v403

// kernel: semaffinet_core_forward.3
$region0: #{semaffinet_core_forward.3}
  #allocation0 [shape = 'u32[]', space=smem, size = 0x4, offset = 0x4, fixed_abs, tag = 'smem constant byte address 0x4 - core index']
  #allocation1 [shape = 'u32[144,128]{1,0:T(1,128)}', space=vmem, size = 0x12000, scoped, tag = 'internal scratch']
  #allocation2 [shape = 'f32[128,32]{1,0:T(8,128)}', space=vmem, size = 0x10000, scoped, tag = 'scratch operand']
  %s0 = inlined_call_operand.vmem [shape: f32[160,32], index: 0, kind: input, shape index: {}]
  %s1 = inlined_call_operand.vmem [shape: f32[128,160], index: 1, kind: input, shape index: {}]
  %s2 = inlined_call_operand.vmem [shape: f32[128,1], index: 2, kind: input, shape index: {}]
  %s3 = inlined_call_operand.vmem [shape: f32[2,8,16], index: 3, kind: input, shape index: {}]
  %s4 = inlined_call_operand.vmem [shape: f32[16,192], index: 4, kind: input, shape index: {}]
  %s5 = inlined_call_operand.vmem [shape: f32[4,192,192], index: 5, kind: input, shape index: {}]
  %s6 = inlined_call_operand.vmem [shape: f32[4,1,192], index: 6, kind: input, shape index: {}]
  %s7 = inlined_call_operand.vmem [shape: f32[192,96], index: 7, kind: input, shape index: {}]
  %s8 = inlined_call_operand.vmem [shape: f32[1,96], index: 8, kind: input, shape index: {}]
  %s9 = inlined_call_operand.vmem [shape: f32[5,8,32], index: 9, kind: output, shape index: {0}]
  %s10 = inlined_call_operand.hbm [shape: f32[3,16,32], index: 10, kind: output, shape index: {1}]
  %11 = xla_tuple %s9, %s10
  %s12 = sld [smem:[#allocation0]]
  $region54: #{semaffinet_core_forward.3} parent=0
    _
  %s14 = ssub.s32 1, %s12
  %s15 = scalar_select 0, %s14, %s12
  $region1: #{semaffinet_core_forward.3} parent=0
    #allocation3 [shape = 'u8[24576]{0}', space=vmem, size = 0x6000, scoped, tag = 'output window, operand 1, single buffered']
    #allocation4 [shape = 's32[1]{0}', space=sflag, size = 0x4, scoped, tag = 'scoped memory for semaffinet_core_forward.3']
    %16 = vsyncpa [#allocation4], 0
    // Predicated region
    $region2: #{semaffinet_core_forward.3} parent=1 // pred_check
      _
    $region3: #{semaffinet_core_forward.3} parent=1 // pred_check_branch
      %18 = sbr.rel (0) target = $region5
    $region4: #{semaffinet_core_forward.3} parent=1 // pred_region
      _
    $region5: #{semaffinet_core_forward.3} parent=1 // pred_fallthru
      _
    // Predicated region
    $region6: #{semaffinet_core_forward.3} parent=1 // pred_check
      _
    $region7: #{semaffinet_core_forward.3} parent=1 // pred_check_branch
      %20 = sbr.rel (0) target = $region9
    $region8: #{semaffinet_core_forward.3} parent=1 // pred_region
      _
    $region9: #{semaffinet_core_forward.3} parent=1 // pred_fallthru
      _
    // Predicated region
    $region10: #{semaffinet_core_forward.3} parent=1 // pred_check
      _
    $region11: #{semaffinet_core_forward.3} parent=1 // pred_check_branch
      %22 = sbr.rel (0) target = $region13
    $region12: #{semaffinet_core_forward.3} parent=1 // pred_region
      _
    $region13: #{semaffinet_core_forward.3} parent=1 // pred_fallthru
      _
    // Predicated region
    $region14: #{semaffinet_core_forward.3} parent=1 // pred_check
      _
    $region15: #{semaffinet_core_forward.3} parent=1 // pred_check_branch
      %24 = sbr.rel (0) target = $region17
    $region16: #{semaffinet_core_forward.3} parent=1 // pred_region
      _
    $region17: #{semaffinet_core_forward.3} parent=1 // pred_fallthru
      _
    // Predicated region
    $region18: #{semaffinet_core_forward.3} parent=1 // pred_check
      _
    $region19: #{semaffinet_core_forward.3} parent=1 // pred_check_branch
      %26 = sbr.rel (0) target = $region21
    $region20: #{semaffinet_core_forward.3} parent=1 // pred_region
      _
    $region21: #{semaffinet_core_forward.3} parent=1 // pred_fallthru
      _
    // Predicated region
    $region22: #{semaffinet_core_forward.3} parent=1 // pred_check
      _
    $region23: #{semaffinet_core_forward.3} parent=1 // pred_check_branch
      %28 = sbr.rel (0) target = $region25
    $region24: #{semaffinet_core_forward.3} parent=1 // pred_region
      _
    $region25: #{semaffinet_core_forward.3} parent=1 // pred_fallthru
      _
    // Predicated region
    $region26: #{semaffinet_core_forward.3} parent=1 // pred_check
      _
    $region27: #{semaffinet_core_forward.3} parent=1 // pred_check_branch
      %30 = sbr.rel (0) target = $region29
    $region28: #{semaffinet_core_forward.3} parent=1 // pred_region
      _
    $region29: #{semaffinet_core_forward.3} parent=1 // pred_fallthru
      _
    // Predicated region
    $region30: #{semaffinet_core_forward.3} parent=1 // pred_check
      _
    $region31: #{semaffinet_core_forward.3} parent=1 // pred_check_branch
      %32 = sbr.rel (0) target = $region33
    $region32: #{semaffinet_core_forward.3} parent=1 // pred_region
      _
    $region33: #{semaffinet_core_forward.3} parent=1 // pred_fallthru
      _
    // Predicated region
    $region34: #{semaffinet_core_forward.3} parent=1 // pred_check
      _
    $region35: #{semaffinet_core_forward.3} parent=1 // pred_check_branch
      %34 = sbr.rel (0) target = $region37
    $region36: #{semaffinet_core_forward.3} parent=1 // pred_region
      _
    $region37: #{semaffinet_core_forward.3} parent=1 // pred_fallthru
      _
    %v35 = vld [vmem:[%s1] sm:$0xff]
    %v36 = vld [vmem:[%s1 + $0x8] sm:$0xff]
    %v37 = vld [vmem:[%s1 + $0x10] sm:$0xff]
    %v38 = vld [vmem:[%s1 + $0x18] sm:$0xff]
    %v39 = vld [vmem:[%s1 + $0x20] sm:$0xff]
    %v40 = vld [vmem:[%s1 + $0x28] sm:$0xff]
    %v41 = vld [vmem:[%s1 + $0x30] sm:$0xff]
    %v42 = vld [vmem:[%s1 + $0x38] sm:$0xff]
    %v43 = vld [vmem:[%s1 + $0x40] sm:$0xff]
    %v44 = vld [vmem:[%s1 + $0x48] sm:$0xff]
    %v45 = vld [vmem:[%s1 + $0x50] sm:$0xff]
    %v46 = vld [vmem:[%s1 + $0x58] sm:$0xff]
    %v47 = vld [vmem:[%s1 + $0x60] sm:$0xff]
    %v48 = vld [vmem:[%s1 + $0x68] sm:$0xff]
    %v49 = vld [vmem:[%s1 + $0x70] sm:$0xff]
    %v50 = vld [vmem:[%s1 + $0x78] sm:$0xff]
    %v51 = vld [vmem:[%s1 + $0x80] sm:$0xff]
    %v52 = vld [vmem:[%s1 + $0x88] sm:$0xff]
    %v53 = vld [vmem:[%s1 + $0x90] sm:$0xff]
    %v54 = vld [vmem:[%s1 + $0x98] sm:$0xff]
    %v55 = vld [vmem:[%s1 + $0xa0] sm:$0xff]
    %v56 = vld [vmem:[%s1 + $0xa8] sm:$0xff]
    %v57 = vld [vmem:[%s1 + $0xb0] sm:$0xff]
    %v58 = vld [vmem:[%s1 + $0xb8] sm:$0xff]
    %v59 = vld [vmem:[%s1 + $0xc0] sm:$0xff]
    %v60 = vld [vmem:[%s1 + $0xc8] sm:$0xff]
    %v61 = vld [vmem:[%s1 + $0xd0] sm:$0xff]
    %v62 = vld [vmem:[%s1 + $0xd8] sm:$0xff]
    %v63 = vld [vmem:[%s1 + $0xe0] sm:$0xff]
    %v64 = vld [vmem:[%s1 + $0xe8] sm:$0xff]
    %v65 = vld [vmem:[%s1 + $0xf0] sm:$0xff]
    %v66 = vld [vmem:[%s1 + $0xf8] sm:$0xff]
    %v67 = vld [vmem:[%s0] sm:$0xff]
    %v68 = vld [vmem:[%s0 + $0x8] sm:$0xff]
    %v69 = vld [vmem:[%s0 + $0x10] sm:$0xff]
    %v70 = vld [vmem:[%s0 + $0x18] sm:$0xff]
    %v71 = vld [vmem:[%s0 + $0x20] sm:$0xff]
    %v72 = vld [vmem:[%s0 + $0x28] sm:$0xff]
    %v73 = vld [vmem:[%s0 + $0x30] sm:$0xff]
    %v74 = vld [vmem:[%s0 + $0x38] sm:$0xff]
    %v75 = vld [vmem:[%s0 + $0x40] sm:$0xff]
    %v76 = vld [vmem:[%s0 + $0x48] sm:$0xff]
    %v77 = vld [vmem:[%s0 + $0x50] sm:$0xff]
    %v78 = vld [vmem:[%s0 + $0x58] sm:$0xff]
    %v79 = vld [vmem:[%s0 + $0x60] sm:$0xff]
    %v80 = vld [vmem:[%s0 + $0x68] sm:$0xff]
    %v81 = vld [vmem:[%s0 + $0x70] sm:$0xff]
    %v82 = vld [vmem:[%s0 + $0x78] sm:$0xff]
    %v83 = vld [vmem:[%s0 + $0x80] sm:$0xff]
    %v84 = vld [vmem:[%s0 + $0x88] sm:$0xff]
    %v85 = vld [vmem:[%s0 + $0x90] sm:$0xff]
    %v86 = vld [vmem:[%s0 + $0x98] sm:$0xff]
    %v87 = vld [vmem:[%s2] sm:$0xff]
    %v88 = vld [vmem:[%s2 + $0x8] sm:$0xff]
    %v89 = vld [vmem:[%s2 + $0x10] sm:$0xff]
    %v90 = vld [vmem:[%s2 + $0x18] sm:$0xff]
    %v91 = vld [vmem:[%s2 + $0x20] sm:$0xff]
    %v92 = vld [vmem:[%s2 + $0x28] sm:$0xff]
    %v93 = vld [vmem:[%s2 + $0x30] sm:$0xff]
    %v94 = vld [vmem:[%s2 + $0x38] sm:$0xff]
    %v95 = vld [vmem:[%s2 + $0x40] sm:$0xff]
    %v96 = vld [vmem:[%s2 + $0x48] sm:$0xff]
    %v97 = vld [vmem:[%s2 + $0x50] sm:$0xff]
    %v98 = vld [vmem:[%s2 + $0x58] sm:$0xff]
    %v99 = vld [vmem:[%s2 + $0x60] sm:$0xff]
    %v100 = vld [vmem:[%s2 + $0x68] sm:$0xff]
    %v101 = vld [vmem:[%s2 + $0x70] sm:$0xff]
    %v102 = vld [vmem:[%s2 + $0x78] sm:$0xff]
    %104 = vset.pattern.permute.xlu0 0
    %105 = vperm.xlu0 %104, %v87
    %v106 = vpop.permute.xlu0 %105
    %109 = vset.pattern.permute.xlu0 0
    %110 = vperm.xlu0 %109, %v88
    %v111 = vpop.permute.xlu0 %110
    %114 = vset.pattern.permute.xlu0 0
    %115 = vperm.xlu0 %114, %v89
    %v116 = vpop.permute.xlu0 %115
    %119 = vset.pattern.permute.xlu0 0
    %120 = vperm.xlu0 %119, %v90
    %v121 = vpop.permute.xlu0 %120
    %124 = vset.pattern.permute.xlu0 0
    %125 = vperm.xlu0 %124, %v91
    %v126 = vpop.permute.xlu0 %125
    %129 = vset.pattern.permute.xlu0 0
    %130 = vperm.xlu0 %129, %v92
    %v131 = vpop.permute.xlu0 %130
    %134 = vset.pattern.permute.xlu0 0
    %135 = vperm.xlu0 %134, %v93
    %v136 = vpop.permute.xlu0 %135
    %139 = vset.pattern.permute.xlu0 0
    %140 = vperm.xlu0 %139, %v94
    %v141 = vpop.permute.xlu0 %140
    %144 = vset.pattern.permute.xlu0 0
    %145 = vperm.xlu0 %144, %v95
    %v146 = vpop.permute.xlu0 %145
    %149 = vset.pattern.permute.xlu0 0
    %150 = vperm.xlu0 %149, %v96
    %v151 = vpop.permute.xlu0 %150
    %154 = vset.pattern.permute.xlu0 0
    %155 = vperm.xlu0 %154, %v97
    %v156 = vpop.permute.xlu0 %155
    %159 = vset.pattern.permute.xlu0 0
    %160 = vperm.xlu0 %159, %v98
    %v161 = vpop.permute.xlu0 %160
    %164 = vset.pattern.permute.xlu0 0
    %165 = vperm.xlu0 %164, %v99
    %v166 = vpop.permute.xlu0 %165
    %169 = vset.pattern.permute.xlu0 0
    %170 = vperm.xlu0 %169, %v100
    %v171 = vpop.permute.xlu0 %170
    %174 = vset.pattern.permute.xlu0 0
    %175 = vperm.xlu0 %174, %v101
    %v176 = vpop.permute.xlu0 %175
    %179 = vset.pattern.permute.xlu0 0
    %180 = vperm.xlu0 %179, %v102
    %v181 = vpop.permute.xlu0 %180
    %vm183 = vcmask 261120
    %v185 = vsel %vm183, %v36, 0
    %v188 = vsel %vm183, %v38, 0
    %v191 = vsel %vm183, %v40, 0
    %v194 = vsel %vm183, %v42, 0
    %v197 = vsel %vm183, %v44, 0
    %v200 = vsel %vm183, %v46, 0
    %v203 = vsel %vm183, %v48, 0
    %v206 = vsel %vm183, %v50, 0
    %v209 = vsel %vm183, %v52, 0
    %v212 = vsel %vm183, %v54, 0
    %v215 = vsel %vm183, %v56, 0
    %v218 = vsel %vm183, %v58, 0
    %v221 = vsel %vm183, %v60, 0
    %v224 = vsel %vm183, %v62, 0
    %v227 = vsel %vm183, %v64, 0
    %v230 = vsel %vm183, %v66, 0
    %232 = vmatprep.subr.mxu0 0.0
    %233 = vmatpush1.msra.mxu0 %v67
    %234 = vmatprep.subr.mxu0 0.0
    %235 = vmatpush1.msra.mxu0 %v68
    %236 = vmatprep.subr.mxu0 0.0
    %237 = vmatpush1.msra.mxu0 %v69
    %238 = vmatprep.subr.mxu0 0.0
    %239 = vmatpush1.msra.mxu0 %v70
    %240 = vmatprep.subr.mxu0 0.0
    %241 = vmatpush1.msra.mxu0 %v71
    %242 = vmatprep.subr.mxu0 0.0
    %243 = vmatpush1.msra.mxu0 %v72
    %244 = vmatprep.subr.mxu0 0.0
    %245 = vmatpush1.msra.mxu0 %v73
    %246 = vmatprep.subr.mxu0 0.0
    %247 = vmatpush1.msra.mxu0 %v74
    %248 = vmatprep.subr.mxu0 0.0
    %249 = vmatpush1.msra.mxu0 %v75
    %250 = vmatprep.subr.mxu0 0.0
    %251 = vmatpush1.msra.mxu0 %v76
    %252 = vmatprep.subr.mxu0 0.0
    %253 = vmatpush1.msra.mxu0 %v77
    %254 = vmatprep.subr.mxu0 0.0
    %255 = vmatpush1.msra.mxu0 %v78
    %256 = vmatprep.subr.mxu0 0.0
    %257 = vmatpush1.msra.mxu0 %v79
    %258 = vmatprep.subr.mxu0 0.0
    %259 = vmatpush1.msra.mxu0 %v80
    %260 = vmatprep.subr.mxu0 0.0
    %261 = vmatpush1.msra.mxu0 %v81
    %262 = vmatprep.subr.mxu0 0.0
    %263 = vmatpush1.msra.mxu0 %v82
    %264 = vmatprep.subr.mxu0 0.0
    %265 = vmatpush1.msra.mxu0 %v83
    %266 = vmatprep.subr.mxu0 0.0
    %267 = vmatpush1.msra.mxu0 %v84
    %268 = vmatprep.subr.mxu0 0.0
    %269 = vmatpush1.msra.mxu0 %v85
    %270 = vmatprep.subr.mxu0 0.0
    %271 = vmatpush1.msra.mxu0 %v86
    %272 = vmatprep.subr.mxu0 0.0
    %273 = vmatpush1.msra.mxu0 0.0
    %274 = vmatprep.subr.mxu0 0.0
    %275 = vmatpush1.msra.mxu0 0.0
    %276 = vmatprep.subr.mxu0 0.0
    %277 = vmatpush1.msra.mxu0 0.0
    %278 = vmatprep.subr.mxu0 0.0
    %279 = vmatpush1.msra.mxu0 0.0
    %280 = vmatprep.subr.mxu0 0.0
    %281 = vmatpush1.msra.mxu0 0.0
    %282 = vmatprep.subr.mxu0 0.0
    %283 = vmatpush1.msra.mxu0 0.0
    %284 = vmatprep.subr.mxu0 0.0
    %285 = vmatpush1.msra.mxu0 0.0
    %286 = vmatprep.subr.mxu0 0.0
    %287 = vmatpush1.msra.mxu0 0.0
    %288 = vmatprep.subr.mxu0 0.0
    %289 = vmatpush1.msra.mxu0 0.0
    %290 = vmatprep.subr.mxu0 0.0
    %291 = vmatpush1.msra.mxu0 0.0
    %292 = vmatprep.subr.mxu0 0.0
    %293 = vmatpush1.msra.mxu0 0.0
    %294 = vmatprep.subr.mxu0 0.0
    %295 = vmatpush1.msra.mxu0 0.0
    %296 = vmatprep.mubr.f32.mxu0 %v185
    %297 = vmatmul.mubr.f32.gmra.mrb[0].mxu0 %v35
    %v298 = vpop.f32.mrb[0].mxu0
    %v299 = vadd.f32 %v106, %v298
    %v300 = vpop.f32.mrb[0].mxu0
    %301 = vmatprep.mubr.f32.mxu0 %v188
    %302 = vmatmul.mubr.f32.gmra.mrb[0].mxu0 %v37
    %v303 = vpop.f32.mrb[0].mxu0
    %v304 = vadd.f32 %v111, %v303
    %v305 = vpop.f32.mrb[0].mxu0
    %306 = vmatprep.mubr.f32.mxu0 %v191
    %307 = vmatmul.mubr.f32.gmra.mrb[0].mxu0 %v39
    %v308 = vpop.f32.mrb[0].mxu0
    %v309 = vadd.f32 %v116, %v308
    %v310 = vpop.f32.mrb[0].mxu0
    %311 = vmatprep.mubr.f32.mxu0 %v194
    %312 = vmatmul.mubr.f32.gmra.mrb[0].mxu0 %v41
    %v313 = vpop.f32.mrb[0].mxu0
    %v314 = vadd.f32 %v121, %v313
    %v315 = vpop.f32.mrb[0].mxu0
    %316 = vmatprep.mubr.f32.mxu0 %v197
    %317 = vmatmul.mubr.f32.gmra.mrb[0].mxu0 %v43
    %v318 = vpop.f32.mrb[0].mxu0
    %v319 = vadd.f32 %v126, %v318
    %v320 = vpop.f32.mrb[0].mxu0
    %321 = vmatprep.mubr.f32.mxu0 %v200
    %322 = vmatmul.mubr.f32.gmra.mrb[0].mxu0 %v45
    %v323 = vpop.f32.mrb[0].mxu0
    %v324 = vadd.f32 %v131, %v323
    %v325 = vpop.f32.mrb[0].mxu0
    %326 = vmatprep.mubr.f32.mxu0 %v203
    %327 = vmatmul.mubr.f32.gmra.mrb[0].mxu0 %v47
    %v328 = vpop.f32.mrb[0].mxu0
    %v329 = vadd.f32 %v136, %v328
    %v330 = vpop.f32.mrb[0].mxu0
    %331 = vmatprep.mubr.f32.mxu0 %v206
    %332 = vmatmul.mubr.f32.gmra.mrb[0].mxu0 %v49
    %v333 = vpop.f32.mrb[0].mxu0
    %v334 = vadd.f32 %v141, %v333
    %v335 = vpop.f32.mrb[0].mxu0
    %336 = vmatprep.mubr.f32.mxu0 %v209
    %337 = vmatmul.mubr.f32.gmra.mrb[0].mxu0 %v51
    %v338 = vpop.f32.mrb[0].mxu0
    %v339 = vadd.f32 %v146, %v338
    %v340 = vpop.f32.mrb[0].mxu0
    %341 = vmatprep.mubr.f32.mxu0 %v212
    %342 = vmatmul.mubr.f32.gmra.mrb[0].mxu0 %v53
    %v343 = vpop.f32.mrb[0].mxu0
    %v344 = vadd.f32 %v151, %v343
    %v345 = vpop.f32.mrb[0].mxu0
    %346 = vmatprep.mubr.f32.mxu0 %v215
    %347 = vmatmul.mubr.f32.gmra.mrb[0].mxu0 %v55
    %v348 = vpop.f32.mrb[0].mxu0
    %v349 = vadd.f32 %v156, %v348
    %v350 = vpop.f32.mrb[0].mxu0
    %351 = vmatprep.mubr.f32.mxu0 %v218
    %352 = vmatmul.mubr.f32.gmra.mrb[0].mxu0 %v57
    %v353 = vpop.f32.mrb[0].mxu0
    %v354 = vadd.f32 %v161, %v353
    %v355 = vpop.f32.mrb[0].mxu0
    %356 = vmatprep.mubr.f32.mxu0 %v221
    %357 = vmatmul.mubr.f32.gmra.mrb[0].mxu0 %v59
    %v358 = vpop.f32.mrb[0].mxu0
    %v359 = vadd.f32 %v166, %v358
    %v360 = vpop.f32.mrb[0].mxu0
    %361 = vmatprep.mubr.f32.mxu0 %v224
    %362 = vmatmul.mubr.f32.gmra.mrb[0].mxu0 %v61
    %v363 = vpop.f32.mrb[0].mxu0
    %v364 = vadd.f32 %v171, %v363
    %v365 = vpop.f32.mrb[0].mxu0
    %366 = vmatprep.mubr.f32.mxu0 %v227
    %367 = vmatmul.mubr.f32.gmra.mrb[0].mxu0 %v63
    %v368 = vpop.f32.mrb[0].mxu0
    %v369 = vadd.f32 %v176, %v368
    %v370 = vpop.f32.mrb[0].mxu0
    %371 = vmatprep.mubr.f32.mxu0 %v230
    %372 = vmatmul.mubr.f32.gmra.mrb[0].mxu0 %v65
    %v373 = vpop.f32.mrb[0].mxu0
    %v374 = vadd.f32 %v181, %v373
    %v375 = vpop.f32.mrb[0].mxu0
    %376 = vdwg.mxu0
    %377 = vst.msk [vmem:[#allocation2] sm:$0xff] %vm183, %v299
    %378 = vst.msk [vmem:[#allocation2 + $0x8] sm:$0xff] %vm183, %v304
    %379 = vst.msk [vmem:[#allocation2 + $0x10] sm:$0xff] %vm183, %v309
    %380 = vst.msk [vmem:[#allocation2 + $0x18] sm:$0xff] %vm183, %v314
    %381 = vst.msk [vmem:[#allocation2 + $0x20] sm:$0xff] %vm183, %v319
    %382 = vst.msk [vmem:[#allocation2 + $0x28] sm:$0xff] %vm183, %v324
    %383 = vst.msk [vmem:[#allocation2 + $0x30] sm:$0xff] %vm183, %v329
    %384 = vst.msk [vmem:[#allocation2 + $0x38] sm:$0xff] %vm183, %v334
    %385 = vst.msk [vmem:[#allocation2 + $0x40] sm:$0xff] %vm183, %v339
    %386 = vst.msk [vmem:[#allocation2 + $0x48] sm:$0xff] %vm183, %v344
    %387 = vst.msk [vmem:[#allocation2 + $0x50] sm:$0xff] %vm183, %v349
    %388 = vst.msk [vmem:[#allocation2 + $0x58] sm:$0xff] %vm183, %v354
    %389 = vst.msk [vmem:[#allocation2 + $0x60] sm:$0xff] %vm183, %v359
    %390 = vst.msk [vmem:[#allocation2 + $0x68] sm:$0xff] %vm183, %v364
    %391 = vst.msk [vmem:[#allocation2 + $0x70] sm:$0xff] %vm183, %v369
    %392 = vst.msk [vmem:[#allocation2 + $0x78] sm:$0xff] %vm183, %v374
    %v393 = vld [vmem:[%s4] sm:$0xff]
    %v394 = vld [vmem:[%s4 + $0x8] sm:$0xff]
    %v395 = vld [vmem:[%s4 + $0x10] sm:$0xff]
    %v396 = vld [vmem:[%s4 + $0x18] sm:$0xff]
    %v397 = vld [vmem:[%s5] sm:$0xff]
    %v398 = vld [vmem:[%s5 + $0x8] sm:$0xff]
    %v399 = vld [vmem:[%s5 + $0x10] sm:$0xff]
    %v400 = vld [vmem:[%s5 + $0x18] sm:$0xff]
    %v401 = vld [vmem:[%s5 + $0x20] sm:$0xff]
    %v402 = vld [vmem:[%s5 + $0x28] sm:$0xff]
    %v403 = vld [vmem:[%s5 + $0x30] sm:$0xff]
    %v404 = vld [vmem:[%s5 + $0x38] sm:$0xff]
    %v405 = vld [vmem:[%s5 + $0x40] sm:$0xff]
    %v406 = vld [vmem:[%s5 + $0x48] sm:$0xff]
    %v407 = vld [vmem:[%s5 + $0x50] sm:$0xff]
    %v408 = vld [vmem:[%s5 + $0x58] sm:$0xff]
    %v409 = vld [vmem:[%s5 + $0x60] sm:$0xff]
    %v410 = vld [vmem:[%s5 + $0x68] sm:$0xff]
    %v411 = vld [vmem:[%s5 + $0x70] sm:$0xff]
    %v412 = vld [vmem:[%s5 + $0x78] sm:$0xff]
    %v413 = vld [vmem:[%s5 + $0x80] sm:$0xff]
    %v414 = vld [vmem:[%s5 + $0x88] sm:$0xff]
    %v415 = vld [vmem:[%s5 + $0x90] sm:$0xff]
    %v416 = vld [vmem:[%s5 + $0x98] sm:$0xff]
    %v417 = vld [vmem:[%s5 + $0xa0] sm:$0xff]
    %v418 = vld [vmem:[%s5 + $0xa8] sm:$0xff]
    %v419 = vld [vmem:[%s5 + $0xb0] sm:$0xff]
    %v420 = vld [vmem:[%s5 + $0xb8] sm:$0xff]
    %v421 = vld [vmem:[%s5 + $0xc0] sm:$0xff]
    %v422 = vld [vmem:[%s5 + $0xc8] sm:$0xff]
    %v423 = vld [vmem:[%s5 + $0xd0] sm:$0xff]
    %v424 = vld [vmem:[%s5 + $0xd8] sm:$0xff]
    %v425 = vld [vmem:[%s5 + $0xe0] sm:$0xff]
    %v426 = vld [vmem:[%s5 + $0xe8] sm:$0xff]
    %v427 = vld [vmem:[%s5 + $0xf0] sm:$0xff]
    %v428 = vld [vmem:[%s5 + $0xf8] sm:$0xff]
    %v429 = vld [vmem:[%s5 + $0x100] sm:$0xff]
    %v430 = vld [vmem:[%s5 + $0x108] sm:$0xff]
    %v431 = vld [vmem:[%s5 + $0x110] sm:$0xff]
    %v432 = vld [vmem:[%s5 + $0x118] sm:$0xff]
    %v433 = vld [vmem:[%s5 + $0x120] sm:$0xff]
    %v434 = vld [vmem:[%s5 + $0x128] sm:$0xff]
    %v435 = vld [vmem:[%s5 + $0x130] sm:$0xff]
    %v436 = vld [vmem:[%s5 + $0x138] sm:$0xff]
    %v437 = vld [vmem:[%s5 + $0x140] sm:$0xff]
    %v438 = vld [vmem:[%s5 + $0x148] sm:$0xff]
    %v439 = vld [vmem:[%s5 + $0x150] sm:$0xff]
    %v440 = vld [vmem:[%s5 + $0x158] sm:$0xff]
    %v441 = vld [vmem:[%s5 + $0x160] sm:$0xff]
    %v442 = vld [vmem:[%s5 + $0x168] sm:$0xff]
    %v443 = vld [vmem:[%s5 + $0x170] sm:$0xff]
    %v444 = vld [vmem:[%s5 + $0x178] sm:$0xff]
    %v445 = vld [vmem:[%s6] sm:$0x3]
    %v447 = vlaneseq
    %v448 = vshrl.u32 %v447, 7
    %v449 = vsub.s32 0, %v448
    %v450 = vrot.slane %v445, %v449
    %v451 = vlaneseq
    %v452 = vshrl.u32 %v451, 7
    %v453 = vsub.s32 1, %v452
    %v454 = vrot.slane %v445, %v453
    %vm457 = vcmask 523264
    %v459 = vsel %vm457, %v394, 0
    %v462 = vsel %vm457, %v396, 0
    %464 = vmatprep.subr.mxu0 %v398
    %465 = vmatpush1.msra.mxu0 %v397
    %466 = vmatprep.subr.mxu0 %v400
    %467 = vmatpush1.msra.mxu0 %v399
    %468 = vmatprep.subr.mxu0 %v402
    %469 = vmatpush1.msra.mxu0 %v401
    %470 = vmatprep.subr.mxu0 %v404
    %471 = vmatpush1.msra.mxu0 %v403
    %472 = vmatprep.subr.mxu0 %v406
    %473 = vmatpush1.msra.mxu0 %v405
    %474 = vmatprep.subr.mxu0 %v408
    %475 = vmatpush1.msra.mxu0 %v407
    %476 = vmatprep.subr.mxu0 %v410
    %477 = vmatpush1.msra.mxu0 %v409
    %478 = vmatprep.subr.mxu0 %v412
    %479 = vmatpush1.msra.mxu0 %v411
    %480 = vmatprep.subr.mxu0 %v414
    %481 = vmatpush1.msra.mxu0 %v413
    %482 = vmatprep.subr.mxu0 %v416
    %483 = vmatpush1.msra.mxu0 %v415
    %484 = vmatprep.subr.mxu0 %v418
    %485 = vmatpush1.msra.mxu0 %v417
    %486 = vmatprep.subr.mxu0 %v420
    %487 = vmatpush1.msra.mxu0 %v419
    %488 = vmatprep.subr.mxu0 %v422
    %489 = vmatpush1.msra.mxu0 %v421
    %490 = vmatprep.subr.mxu0 %v424
    %491 = vmatpush1.msra.mxu0 %v423
    %492 = vmatprep.subr.mxu0 %v426
    %493 = vmatpush1.msra.mxu0 %v425
    %494 = vmatprep.subr.mxu0 %v428
    %495 = vmatpush1.msra.mxu0 %v427
    %496 = vmatprep.subr.mxu0 %v430
    %497 = vmatpush1.msra.mxu0 %v429
    %498 = vmatprep.subr.mxu0 %v432
    %499 = vmatpush1.msra.mxu0 %v431
    %500 = vmatprep.subr.mxu0 %v434
    %501 = vmatpush1.msra.mxu0 %v433
    %502 = vmatprep.subr.mxu0 %v436
    %503 = vmatpush1.msra.mxu0 %v435
    %504 = vmatprep.subr.mxu0 %v438
    %505 = vmatpush1.msra.mxu0 %v437
    %506 = vmatprep.subr.mxu0 %v440
    %507 = vmatpush1.msra.mxu0 %v439
    %508 = vmatprep.subr.mxu0 %v442
    %509 = vmatpush1.msra.mxu0 %v441
    %510 = vmatprep.subr.mxu0 %v444
    %511 = vmatpush1.msra.mxu0 %v443
    %512 = vmatprep.subr.mxu0 0.0
    %513 = vmatpush1.msra.mxu0 0.0
    %514 = vmatprep.subr.mxu0 0.0
    %515 = vmatpush1.msra.mxu0 0.0
    %516 = vmatprep.subr.mxu0 0.0
    %517 = vmatpush1.msra.mxu0 0.0
    %518 = vmatprep.subr.mxu0 0.0
    %519 = vmatpush1.msra.mxu0 0.0
    %520 = vmatprep.subr.mxu0 0.0
    %521 = vmatpush1.msra.mxu0 0.0
    %522 = vmatprep.subr.mxu0 0.0
    %523 = vmatpush1.msra.mxu0 0.0
    %524 = vmatprep.subr.mxu0 0.0
    %525 = vmatpush1.msra.mxu0 0.0
    %526 = vmatprep.subr.mxu0 0.0
    %527 = vmatpush1.msra.mxu0 0.0
    %528 = vmatprep.mubr.f32.mxu0 %v459
    %529 = vmatmul.mubr.f32.gmra.mrb[0].mxu0 %v393
    %v530 = vpop.f32.mrb[0].mxu0
    %v531 = vadd.f32 %v450, %v530
    %v532 = vpop.f32.mrb[0].mxu0
    %v533 = vadd.f32 %v454, %v532
    %534 = vmatprep.mubr.f32.mxu0 %v462
    %535 = vmatmul.mubr.f32.gmra.mrb[0].mxu0 %v395
    %v536 = vpop.f32.mrb[0].mxu0
    %v537 = vadd.f32 %v450, %v536
    %v538 = vpop.f32.mrb[0].mxu0
    %v539 = vadd.f32 %v454, %v538
    %540 = vdwg.mxu0
    %v541 = vmax.f32 %v531, 0.0
    %v542 = vmax.f32 %v533, 0.0
    %v543 = vmax.f32 %v537, 0.0
    %v544 = vmax.f32 %v539, 0.0
    %s545 = scalar_lea.vmem %s5, 384
    %v546 = vld [vmem:[%s545] sm:$0xff]
    %v547 = vld [vmem:[%s545 + $0x8] sm:$0xff]
    %v548 = vld [vmem:[%s545 + $0x10] sm:$0xff]
    %v549 = vld [vmem:[%s545 + $0x18] sm:$0xff]
    %v550 = vld [vmem:[%s545 + $0x20] sm:$0xff]
    %v551 = vld [vmem:[%s545 + $0x28] sm:$0xff]
    %v552 = vld [vmem:[%s545 + $0x30] sm:$0xff]
    %v553 = vld [vmem:[%s545 + $0x38] sm:$0xff]
    %v554 = vld [vmem:[%s545 + $0x40] sm:$0xff]
    %v555 = vld [vmem:[%s545 + $0x48] sm:$0xff]
    %v556 = vld [vmem:[%s545 + $0x50] sm:$0xff]
    %v557 = vld [vmem:[%s545 + $0x58] sm:$0xff]
    %v558 = vld [vmem:[%s545 + $0x60] sm:$0xff]
    %v559 = vld [vmem:[%s545 + $0x68] sm:$0xff]
    %v560 = vld [vmem:[%s545 + $0x70] sm:$0xff]
    %v561 = vld [vmem:[%s545 + $0x78] sm:$0xff]
    %v562 = vld [vmem:[%s545 + $0x80] sm:$0xff]
    %v563 = vld [vmem:[%s545 + $0x88] sm:$0xff]
    %v564 = vld [vmem:[%s545 + $0x90] sm:$0xff]
    %v565 = vld [vmem:[%s545 + $0x98] sm:$0xff]
    %v566 = vld [vmem:[%s545 + $0xa0] sm:$0xff]
    %v567 = vld [vmem:[%s545 + $0xa8] sm:$0xff]
    %v568 = vld [vmem:[%s545 + $0xb0] sm:$0xff]
    %v569 = vld [vmem:[%s545 + $0xb8] sm:$0xff]
    %v570 = vld [vmem:[%s545 + $0xc0] sm:$0xff]
    %v571 = vld [vmem:[%s545 + $0xc8] sm:$0xff]
    %v572 = vld [vmem:[%s545 + $0xd0] sm:$0xff]
    %v573 = vld [vmem:[%s545 + $0xd8] sm:$0xff]
    %v574 = vld [vmem:[%s545 + $0xe0] sm:$0xff]
    %v575 = vld [vmem:[%s545 + $0xe8] sm:$0xff]
    %v576 = vld [vmem:[%s545 + $0xf0] sm:$0xff]
    %v577 = vld [vmem:[%s545 + $0xf8] sm:$0xff]
    %v578 = vld [vmem:[%s545 + $0x100] sm:$0xff]
    %v579 = vld [vmem:[%s545 + $0x108] sm:$0xff]
    %v580 = vld [vmem:[%s545 + $0x110] sm:$0xff]
    %v581 = vld [vmem:[%s545 + $0x118] sm:$0xff]
    %v582 = vld [vmem:[%s545 + $0x120] sm:$0xff]
    %v583 = vld [vmem:[%s545 + $0x128] sm:$0xff]
    %v584 = vld [vmem:[%s545 + $0x130] sm:$0xff]
    %v585 = vld [vmem:[%s545 + $0x138] sm:$0xff]
    %v586 = vld [vmem:[%s545 + $0x140] sm:$0xff]
    %v587 = vld [vmem:[%s545 + $0x148] sm:$0xff]
    %v588 = vld [vmem:[%s545 + $0x150] sm:$0xff]
    %v589 = vld [vmem:[%s545 + $0x158] sm:$0xff]
    %v590 = vld [vmem:[%s545 + $0x160] sm:$0xff]
    %v591 = vld [vmem:[%s545 + $0x168] sm:$0xff]
    %v592 = vld [vmem:[%s545 + $0x170] sm:$0xff]
    %v593 = vld [vmem:[%s545 + $0x178] sm:$0xff]
    %s594 = scalar_lea.vmem %s6, 2
    %v595 = vld [vmem:[%s594] sm:$0x3]
    %v597 = vlaneseq
    %v598 = vshrl.u32 %v597, 7
    %v599 = vsub.s32 0, %v598
    %v600 = vrot.slane %v595, %v599
    %v601 = vlaneseq
    %v602 = vshrl.u32 %v601, 7
    %v603 = vsub.s32 1, %v602
    %v604 = vrot.slane %v595, %v603
    %v608 = vsel %vm457, %v542, 0
    %v611 = vsel %vm457, %v544, 0
    %613 = vmatprep.subr.mxu0 %v547
    %614 = vmatpush1.msra.mxu0 %v546
    %615 = vmatprep.subr.mxu0 %v549
    %616 = vmatpush1.msra.mxu0 %v548
    %617 = vmatprep.subr.mxu0 %v551
    %618 = vmatpush1.msra.mxu0 %v550
    %619 = vmatprep.subr.mxu0 %v553
    %620 = vmatpush1.msra.mxu0 %v552
    %621 = vmatprep.subr.mxu0 %v555
    %622 = vmatpush1.msra.mxu0 %v554
    %623 = vmatprep.subr.mxu0 %v557
    %624 = vmatpush1.msra.mxu0 %v556
    %625 = vmatprep.subr.mxu0 %v559
    %626 = vmatpush1.msra.mxu0 %v558
    %627 = vmatprep.subr.mxu0 %v561
    %628 = vmatpush1.msra.mxu0 %v560
    %629 = vmatprep.subr.mxu0 %v563
    %630 = vmatpush1.msra.mxu0 %v562
    %631 = vmatprep.subr.mxu0 %v565
    %632 = vmatpush1.msra.mxu0 %v564
    %633 = vmatprep.subr.mxu0 %v567
    %634 = vmatpush1.msra.mxu0 %v566
    %635 = vmatprep.subr.mxu0 %v569
    %636 = vmatpush1.msra.mxu0 %v568
    %637 = vmatprep.subr.mxu0 %v571
    %638 = vmatpush1.msra.mxu0 %v570
    %639 = vmatprep.subr.mxu0 %v573
    %640 = vmatpush1.msra.mxu0 %v572
    %641 = vmatprep.subr.mxu0 %v575
    %642 = vmatpush1.msra.mxu0 %v574
    %643 = vmatprep.subr.mxu0 %v577
    %644 = vmatpush1.msra.mxu0 %v576
    %645 = vmatprep.subr.mxu0 %v579
    %646 = vmatpush1.msra.mxu0 %v578
    %647 = vmatprep.subr.mxu0 %v581
    %648 = vmatpush1.msra.mxu0 %v580
    %649 = vmatprep.subr.mxu0 %v583
    %650 = vmatpush1.msra.mxu0 %v582
    %651 = vmatprep.subr.mxu0 %v585
    %652 = vmatpush1.msra.mxu0 %v584
    %653 = vmatprep.subr.mxu0 %v587
    %654 = vmatpush1.msra.mxu0 %v586
    %655 = vmatprep.subr.mxu0 %v589
    %656 = vmatpush1.msra.mxu0 %v588
    %657 = vmatprep.subr.mxu0 %v591
    %658 = vmatpush1.msra.mxu0 %v590
    %659 = vmatprep.subr.mxu0 %v593
    %660 = vmatpush1.msra.mxu0 %v592
    %661 = vmatprep.subr.mxu0 0.0
    %662 = vmatpush1.msra.mxu0 0.0
    %663 = vmatprep.subr.mxu0 0.0
    %664 = vmatpush1.msra.mxu0 0.0
    %665 = vmatprep.subr.mxu0 0.0
    %666 = vmatpush1.msra.mxu0 0.0
    %667 = vmatprep.subr.mxu0 0.0
    %668 = vmatpush1.msra.mxu0 0.0
    %669 = vmatprep.subr.mxu0 0.0
    %670 = vmatpush1.msra.mxu0 0.0
    %671 = vmatprep.subr.mxu0 0.0
    %672 = vmatpush1.msra.mxu0 0.0
    %673 = vmatprep.subr.mxu0 0.0
    %674 = vmatpush1.msra.mxu0 0.0
    %675 = vmatprep.subr.mxu0 0.0
    %676 = vmatpush1.msra.mxu0 0.0
    %677 = vmatprep.mubr.f32.mxu0 %v608
    %678 = vmatmul.mubr.f32.gmra.mrb[0].mxu0 %v541
    %v679 = vpop.f32.mrb[0].mxu0
    %v680 = vadd.f32 %v600, %v679
    %v681 = vpop.f32.mrb[0].mxu0
    %v682 = vadd.f32 %v604, %v681
    %683 = vmatprep.mubr.f32.mxu0 %v611
    %684 = vmatmul.mubr.f32.gmra.mrb[0].mxu0 %v543
    %v685 = vpop.f32.mrb[0].mxu0
    %v686 = vadd.f32 %v600, %v685
    %v687 = vpop.f32.mrb[0].mxu0
    %v688 = vadd.f32 %v604, %v687
    %689 = vdwg.mxu0
    %v690 = vmax.f32 %v680, 0.0
    %v691 = vmax.f32 %v682, 0.0
    %v692 = vmax.f32 %v686, 0.0
    %v693 = vmax.f32 %v688, 0.0
    %s694 = scalar_lea.vmem %s5, 768
    %v695 = vld [vmem:[%s694] sm:$0xff]
    %v696 = vld [vmem:[%s694 + $0x8] sm:$0xff]
    %v697 = vld [vmem:[%s694 + $0x10] sm:$0xff]
    %v698 = vld [vmem:[%s694 + $0x18] sm:$0xff]
    %v699 = vld [vmem:[%s694 + $0x20] sm:$0xff]
    %v700 = vld [vmem:[%s694 + $0x28] sm:$0xff]
    %v701 = vld [vmem:[%s694 + $0x30] sm:$0xff]
    %v702 = vld [vmem:[%s694 + $0x38] sm:$0xff]
    %v703 = vld [vmem:[%s694 + $0x40] sm:$0xff]
    %v704 = vld [vmem:[%s694 + $0x48] sm:$0xff]
    %v705 = vld [vmem:[%s694 + $0x50] sm:$0xff]
    %v706 = vld [vmem:[%s694 + $0x58] sm:$0xff]
    %v707 = vld [vmem:[%s694 + $0x60] sm:$0xff]
    %v708 = vld [vmem:[%s694 + $0x68] sm:$0xff]
    %v709 = vld [vmem:[%s694 + $0x70] sm:$0xff]
    %v710 = vld [vmem:[%s694 + $0x78] sm:$0xff]
    %v711 = vld [vmem:[%s694 + $0x80] sm:$0xff]
    %v712 = vld [vmem:[%s694 + $0x88] sm:$0xff]
    %v713 = vld [vmem:[%s694 + $0x90] sm:$0xff]
    %v714 = vld [vmem:[%s694 + $0x98] sm:$0xff]
    %v715 = vld [vmem:[%s694 + $0xa0] sm:$0xff]
    %v716 = vld [vmem:[%s694 + $0xa8] sm:$0xff]
    %v717 = vld [vmem:[%s694 + $0xb0] sm:$0xff]
    %v718 = vld [vmem:[%s694 + $0xb8] sm:$0xff]
    %v719 = vld [vmem:[%s694 + $0xc0] sm:$0xff]
    %v720 = vld [vmem:[%s694 + $0xc8] sm:$0xff]
    %v721 = vld [vmem:[%s694 + $0xd0] sm:$0xff]
    %v722 = vld [vmem:[%s694 + $0xd8] sm:$0xff]
    %v723 = vld [vmem:[%s694 + $0xe0] sm:$0xff]
    %v724 = vld [vmem:[%s694 + $0xe8] sm:$0xff]
    %v725 = vld [vmem:[%s694 + $0xf0] sm:$0xff]
    %v726 = vld [vmem:[%s694 + $0xf8] sm:$0xff]
    %v727 = vld [vmem:[%s694 + $0x100] sm:$0xff]
    %v728 = vld [vmem:[%s694 + $0x108] sm:$0xff]
    %v729 = vld [vmem:[%s694 + $0x110] sm:$0xff]
    %v730 = vld [vmem:[%s694 + $0x118] sm:$0xff]
    %v731 = vld [vmem:[%s694 + $0x120] sm:$0xff]
    %v732 = vld [vmem:[%s694 + $0x128] sm:$0xff]
    %v733 = vld [vmem:[%s694 + $0x130] sm:$0xff]
    %v734 = vld [vmem:[%s694 + $0x138] sm:$0xff]
    %v735 = vld [vmem:[%s694 + $0x140] sm:$0xff]
    %v736 = vld [vmem:[%s694 + $0x148] sm:$0xff]
    %v737 = vld [vmem:[%s694 + $0x150] sm:$0xff]
    %v738 = vld [vmem:[%s694 + $0x158] sm:$0xff]
    %v739 = vld [vmem:[%s694 + $0x160] sm:$0xff]
    %v740 = vld [vmem:[%s694 + $0x168] sm:$0xff]
    %v741 = vld [vmem:[%s694 + $0x170] sm:$0xff]
    %v742 = vld [vmem:[%s694 + $0x178] sm:$0xff]
    %s743 = scalar_lea.vmem %s6, 4
    %v744 = vld [vmem:[%s743] sm:$0x3]
    %v746 = vlaneseq
    %v747 = vshrl.u32 %v746, 7
    %v748 = vsub.s32 0, %v747
    %v749 = vrot.slane %v744, %v748
    %v750 = vlaneseq
    %v751 = vshrl.u32 %v750, 7
    %v752 = vsub.s32 1, %v751
    %v753 = vrot.slane %v744, %v752
    %v757 = vsel %vm457, %v691, 0
    %v760 = vsel %vm457, %v693, 0
    %762 = vmatprep.subr.mxu0 %v696
    %763 = vmatpush1.msra.mxu0 %v695
    %764 = vmatprep.subr.mxu0 %v698
    %765 = vmatpush1.msra.mxu0 %v697
    %766 = vmatprep.subr.mxu0 %v700
    %767 = vmatpush1.msra.mxu0 %v699
    %768 = vmatprep.subr.mxu0 %v702
    %769 = vmatpush1.msra.mxu0 %v701
    %770 = vmatprep.subr.mxu0 %v704
    %771 = vmatpush1.msra.mxu0 %v703
    %772 = vmatprep.subr.mxu0 %v706
    %773 = vmatpush1.msra.mxu0 %v705
    %774 = vmatprep.subr.mxu0 %v708
    %775 = vmatpush1.msra.mxu0 %v707
    %776 = vmatprep.subr.mxu0 %v710
    %777 = vmatpush1.msra.mxu0 %v709
    %778 = vmatprep.subr.mxu0 %v712
    %779 = vmatpush1.msra.mxu0 %v711
    %780 = vmatprep.subr.mxu0 %v714
    %781 = vmatpush1.msra.mxu0 %v713
    %782 = vmatprep.subr.mxu0 %v716
    %783 = vmatpush1.msra.mxu0 %v715
    %784 = vmatprep.subr.mxu0 %v718
    %785 = vmatpush1.msra.mxu0 %v717
    %786 = vmatprep.subr.mxu0 %v720
    %787 = vmatpush1.msra.mxu0 %v719
    %788 = vmatprep.subr.mxu0 %v722
    %789 = vmatpush1.msra.mxu0 %v721
    %790 = vmatprep.subr.mxu0 %v724
    %791 = vmatpush1.msra.mxu0 %v723
    %792 = vmatprep.subr.mxu0 %v726
    %793 = vmatpush1.msra.mxu0 %v725
    %794 = vmatprep.subr.mxu0 %v728
    %795 = vmatpush1.msra.mxu0 %v727
    %796 = vmatprep.subr.mxu0 %v730
    %797 = vmatpush1.msra.mxu0 %v729
    %798 = vmatprep.subr.mxu0 %v732
    %799 = vmatpush1.msra.mxu0 %v731
    %800 = vmatprep.subr.mxu0 %v734
    %801 = vmatpush1.msra.mxu0 %v733
    %802 = vmatprep.subr.mxu0 %v736
    %803 = vmatpush1.msra.mxu0 %v735
    %804 = vmatprep.subr.mxu0 %v738
    %805 = vmatpush1.msra.mxu0 %v737
    %806 = vmatprep.subr.mxu0 %v740
    %807 = vmatpush1.msra.mxu0 %v739
    %808 = vmatprep.subr.mxu0 %v742
    %809 = vmatpush1.msra.mxu0 %v741
    %810 = vmatprep.subr.mxu0 0.0
    %811 = vmatpush1.msra.mxu0 0.0
    %812 = vmatprep.subr.mxu0 0.0
    %813 = vmatpush1.msra.mxu0 0.0
    %814 = vmatprep.subr.mxu0 0.0
    %815 = vmatpush1.msra.mxu0 0.0
    %816 = vmatprep.subr.mxu0 0.0
    %817 = vmatpush1.msra.mxu0 0.0
    %818 = vmatprep.subr.mxu0 0.0
    %819 = vmatpush1.msra.mxu0 0.0
    %820 = vmatprep.subr.mxu0 0.0
    %821 = vmatpush1.msra.mxu0 0.0
    %822 = vmatprep.subr.mxu0 0.0
    %823 = vmatpush1.msra.mxu0 0.0
    %824 = vmatprep.subr.mxu0 0.0
    %825 = vmatpush1.msra.mxu0 0.0
    %826 = vmatprep.mubr.f32.mxu0 %v757
    %827 = vmatmul.mubr.f32.gmra.mrb[0].mxu0 %v690
    %v828 = vpop.f32.mrb[0].mxu0
    %v829 = vadd.f32 %v749, %v828
    %v830 = vpop.f32.mrb[0].mxu0
    %v831 = vadd.f32 %v753, %v830
    %832 = vmatprep.mubr.f32.mxu0 %v760
    %833 = vmatmul.mubr.f32.gmra.mrb[0].mxu0 %v692
    %v834 = vpop.f32.mrb[0].mxu0
    %v835 = vadd.f32 %v749, %v834
    %v836 = vpop.f32.mrb[0].mxu0
    %v837 = vadd.f32 %v753, %v836
    %838 = vdwg.mxu0
    %v839 = vmax.f32 %v829, 0.0
    %v840 = vmax.f32 %v831, 0.0
    %v841 = vmax.f32 %v835, 0.0
    %v842 = vmax.f32 %v837, 0.0
    %s843 = scalar_lea.vmem %s5, 1152
    %v844 = vld [vmem:[%s843] sm:$0xff]
    %v845 = vld [vmem:[%s843 + $0x8] sm:$0xff]
    %v846 = vld [vmem:[%s843 + $0x10] sm:$0xff]
    %v847 = vld [vmem:[%s843 + $0x18] sm:$0xff]
    %v848 = vld [vmem:[%s843 + $0x20] sm:$0xff]
    %v849 = vld [vmem:[%s843 + $0x28] sm:$0xff]
    %v850 = vld [vmem:[%s843 + $0x30] sm:$0xff]
    %v851 = vld [vmem:[%s843 + $0x38] sm:$0xff]
    %v852 = vld [vmem:[%s843 + $0x40] sm:$0xff]
    %v853 = vld [vmem:[%s843 + $0x48] sm:$0xff]
    %v854 = vld [vmem:[%s843 + $0x50] sm:$0xff]
    %v855 = vld [vmem:[%s843 + $0x58] sm:$0xff]
    %v856 = vld [vmem:[%s843 + $0x60] sm:$0xff]
    %v857 = vld [vmem:[%s843 + $0x68] sm:$0xff]
    %v858 = vld [vmem:[%s843 + $0x70] sm:$0xff]
    %v859 = vld [vmem:[%s843 + $0x78] sm:$0xff]
    %v860 = vld [vmem:[%s843 + $0x80] sm:$0xff]
    %v861 = vld [vmem:[%s843 + $0x88] sm:$0xff]
    %v862 = vld [vmem:[%s843 + $0x90] sm:$0xff]
    %v863 = vld [vmem:[%s843 + $0x98] sm:$0xff]
    %v864 = vld [vmem:[%s843 + $0xa0] sm:$0xff]
    %v865 = vld [vmem:[%s843 + $0xa8] sm:$0xff]
    %v866 = vld [vmem:[%s843 + $0xb0] sm:$0xff]
    %v867 = vld [vmem:[%s843 + $0xb8] sm:$0xff]
    %v868 = vld [vmem:[%s843 + $0xc0] sm:$0xff]
    %v869 = vld [vmem:[%s843 + $0xc8] sm:$0xff]
    %v870 = vld [vmem:[%s843 + $0xd0] sm:$0xff]
    %v871 = vld [vmem:[%s843 + $0xd8] sm:$0xff]
    %v872 = vld [vmem:[%s843 + $0xe0] sm:$0xff]
    %v873 = vld [vmem:[%s843 + $0xe8] sm:$0xff]
    %v874 = vld [vmem:[%s843 + $0xf0] sm:$0xff]
    %v875 = vld [vmem:[%s843 + $0xf8] sm:$0xff]
    %v876 = vld [vmem:[%s843 + $0x100] sm:$0xff]
    %v877 = vld [vmem:[%s843 + $0x108] sm:$0xff]
    %v878 = vld [vmem:[%s843 + $0x110] sm:$0xff]
    %v879 = vld [vmem:[%s843 + $0x118] sm:$0xff]
    %v880 = vld [vmem:[%s843 + $0x120] sm:$0xff]
    %v881 = vld [vmem:[%s843 + $0x128] sm:$0xff]
    %v882 = vld [vmem:[%s843 + $0x130] sm:$0xff]
    %v883 = vld [vmem:[%s843 + $0x138] sm:$0xff]
    %v884 = vld [vmem:[%s843 + $0x140] sm:$0xff]
    %v885 = vld [vmem:[%s843 + $0x148] sm:$0xff]
    %v886 = vld [vmem:[%s843 + $0x150] sm:$0xff]
    %v887 = vld [vmem:[%s843 + $0x158] sm:$0xff]
    %v888 = vld [vmem:[%s843 + $0x160] sm:$0xff]
    %v889 = vld [vmem:[%s843 + $0x168] sm:$0xff]
    %v890 = vld [vmem:[%s843 + $0x170] sm:$0xff]
    %v891 = vld [vmem:[%s843 + $0x178] sm:$0xff]
    %s892 = scalar_lea.vmem %s6, 6
    %v893 = vld [vmem:[%s892] sm:$0x3]
    %v895 = vlaneseq
    %v896 = vshrl.u32 %v895, 7
    %v897 = vsub.s32 0, %v896
    %v898 = vrot.slane %v893, %v897
    %v899 = vlaneseq
    %v900 = vshrl.u32 %v899, 7
    %v901 = vsub.s32 1, %v900
    %v902 = vrot.slane %v893, %v901
    %v906 = vsel %vm457, %v840, 0
    %v909 = vsel %vm457, %v842, 0
    %911 = vmatprep.subr.mxu0 %v845
    %912 = vmatpush1.msra.mxu0 %v844
    %913 = vmatprep.subr.mxu0 %v847
    %914 = vmatpush1.msra.mxu0 %v846
    %915 = vmatprep.subr.mxu0 %v849
    %916 = vmatpush1.msra.mxu0 %v848
    %917 = vmatprep.subr.mxu0 %v851
    %918 = vmatpush1.msra.mxu0 %v850
    %919 = vmatprep.subr.mxu0 %v853
    %920 = vmatpush1.msra.mxu0 %v852
    %921 = vmatprep.subr.mxu0 %v855
    %922 = vmatpush1.msra.mxu0 %v854
    %923 = vmatprep.subr.mxu0 %v857
    %924 = vmatpush1.msra.mxu0 %v856
    %925 = vmatprep.subr.mxu0 %v859
    %926 = vmatpush1.msra.mxu0 %v858
    %927 = vmatprep.subr.mxu0 %v861
    %928 = vmatpush1.msra.mxu0 %v860
    %929 = vmatprep.subr.mxu0 %v863
    %930 = vmatpush1.msra.mxu0 %v862
    %931 = vmatprep.subr.mxu0 %v865
    %932 = vmatpush1.msra.mxu0 %v864
    %933 = vmatprep.subr.mxu0 %v867
    %934 = vmatpush1.msra.mxu0 %v866
    %935 = vmatprep.subr.mxu0 %v869
    %936 = vmatpush1.msra.mxu0 %v868
    %937 = vmatprep.subr.mxu0 %v871
    %938 = vmatpush1.msra.mxu0 %v870
    %939 = vmatprep.subr.mxu0 %v873
    %940 = vmatpush1.msra.mxu0 %v872
    %941 = vmatprep.subr.mxu0 %v875
    %942 = vmatpush1.msra.mxu0 %v874
    %943 = vmatprep.subr.mxu0 %v877
    %944 = vmatpush1.msra.mxu0 %v876
    %945 = vmatprep.subr.mxu0 %v879
    %946 = vmatpush1.msra.mxu0 %v878
    %947 = vmatprep.subr.mxu0 %v881
    %948 = vmatpush1.msra.mxu0 %v880
    %949 = vmatprep.subr.mxu0 %v883
    %950 = vmatpush1.msra.mxu0 %v882
    %951 = vmatprep.subr.mxu0 %v885
    %952 = vmatpush1.msra.mxu0 %v884
    %953 = vmatprep.subr.mxu0 %v887
    %954 = vmatpush1.msra.mxu0 %v886
    %955 = vmatprep.subr.mxu0 %v889
    %956 = vmatpush1.msra.mxu0 %v888
    %957 = vmatprep.subr.mxu0 %v891
    %958 = vmatpush1.msra.mxu0 %v890
    %959 = vmatprep.subr.mxu0 0.0
    %960 = vmatpush1.msra.mxu0 0.0
    %961 = vmatprep.subr.mxu0 0.0
    %962 = vmatpush1.msra.mxu0 0.0
    %963 = vmatprep.subr.mxu0 0.0
    %964 = vmatpush1.msra.mxu0 0.0
    %965 = vmatprep.subr.mxu0 0.0
    %966 = vmatpush1.msra.mxu0 0.0
    %967 = vmatprep.subr.mxu0 0.0
    %968 = vmatpush1.msra.mxu0 0.0
    %969 = vmatprep.subr.mxu0 0.0
    %970 = vmatpush1.msra.mxu0 0.0
    %971 = vmatprep.subr.mxu0 0.0
    %972 = vmatpush1.msra.mxu0 0.0
    %973 = vmatprep.subr.mxu0 0.0
    %974 = vmatpush1.msra.mxu0 0.0
    %975 = vmatprep.mubr.f32.mxu0 %v906
    %976 = vmatmul.mubr.f32.gmra.mrb[0].mxu0 %v839
    %v977 = vpop.f32.mrb[0].mxu0
    %v978 = vadd.f32 %v898, %v977
    %v979 = vpop.f32.mrb[0].mxu0
    %v980 = vadd.f32 %v902, %v979
    %981 = vmatprep.mubr.f32.mxu0 %v909
    %982 = vmatmul.mubr.f32.gmra.mrb[0].mxu0 %v841
    %v983 = vpop.f32.mrb[0].mxu0
    %v984 = vadd.f32 %v898, %v983
    %v985 = vpop.f32.mrb[0].mxu0
    %v986 = vadd.f32 %v902, %v985
    %987 = vdwg.mxu0
    %v988 = vmax.f32 %v978, 0.0
    %v989 = vmax.f32 %v980, 0.0
    %v990 = vmax.f32 %v984, 0.0
    %v991 = vmax.f32 %v986, 0.0
    %v992 = vld [vmem:[%s7] sm:$0xff]
    %v993 = vld [vmem:[%s7 + $0x8] sm:$0xff]
    %v994 = vld [vmem:[%s7 + $0x10] sm:$0xff]
    %v995 = vld [vmem:[%s7 + $0x18] sm:$0xff]
    %v996 = vld [vmem:[%s7 + $0x20] sm:$0xff]
    %v997 = vld [vmem:[%s7 + $0x28] sm:$0xff]
    %v998 = vld [vmem:[%s7 + $0x30] sm:$0xff]
    %v999 = vld [vmem:[%s7 + $0x38] sm:$0xff]
    %v1000 = vld [vmem:[%s7 + $0x40] sm:$0xff]
    %v1001 = vld [vmem:[%s7 + $0x48] sm:$0xff]
    %v1002 = vld [vmem:[%s7 + $0x50] sm:$0xff]
    %v1003 = vld [vmem:[%s7 + $0x58] sm:$0xff]
    %v1004 = vld [vmem:[%s7 + $0x60] sm:$0xff]
    %v1005 = vld [vmem:[%s7 + $0x68] sm:$0xff]
    %v1006 = vld [vmem:[%s7 + $0x70] sm:$0xff]
    %v1007 = vld [vmem:[%s7 + $0x78] sm:$0xff]
    %v1008 = vld [vmem:[%s7 + $0x80] sm:$0xff]
    %v1009 = vld [vmem:[%s7 + $0x88] sm:$0xff]
    %v1010 = vld [vmem:[%s7 + $0x90] sm:$0xff]
    %v1011 = vld [vmem:[%s7 + $0x98] sm:$0xff]
    %v1012 = vld [vmem:[%s7 + $0xa0] sm:$0xff]
    %v1013 = vld [vmem:[%s7 + $0xa8] sm:$0xff]
    %v1014 = vld [vmem:[%s7 + $0xb0] sm:$0xff]
    %v1015 = vld [vmem:[%s7 + $0xb8] sm:$0xff]
    %v1016 = vld [vmem:[%s8] sm:$0x1]
    %v1018 = vlaneseq
    %v1019 = vshrl.u32 %v1018, 7
    %v1020 = vsub.s32 0, %v1019
    %v1021 = vrot.slane %v1016, %v1020
    %v1024 = vsel %vm457, %v989, 0
    %v1027 = vsel %vm457, %v991, 0
    %1029 = vmatprep.subr.mxu0 0.0
    %1030 = vmatpush1.msra.mxu0 %v992
    %1031 = vmatprep.subr.mxu0 0.0
    %1032 = vmatpush1.msra.mxu0 %v993
    %1033 = vmatprep.subr.mxu0 0.0
    %1034 = vmatpush1.msra.mxu0 %v994
    %1035 = vmatprep.subr.mxu0 0.0
    %1036 = vmatpush1.msra.mxu0 %v995
    %1037 = vmatprep.subr.mxu0 0.0
    %1038 = vmatpush1.msra.mxu0 %v996
    %1039 = vmatprep.subr.mxu0 0.0
    %1040 = vmatpush1.msra.mxu0 %v997
    %1041 = vmatprep.subr.mxu0 0.0
    %1042 = vmatpush1.msra.mxu0 %v998
    %1043 = vmatprep.subr.mxu0 0.0
    %1044 = vmatpush1.msra.mxu0 %v999
    %1045 = vmatprep.subr.mxu0 0.0
    %1046 = vmatpush1.msra.mxu0 %v1000
    %1047 = vmatprep.subr.mxu0 0.0
    %1048 = vmatpush1.msra.mxu0 %v1001
    %1049 = vmatprep.subr.mxu0 0.0
    %1050 = vmatpush1.msra.mxu0 %v1002
    %1051 = vmatprep.subr.mxu0 0.0
    %1052 = vmatpush1.msra.mxu0 %v1003
    %1053 = vmatprep.subr.mxu0 0.0
    %1054 = vmatpush1.msra.mxu0 %v1004
    %1055 = vmatprep.subr.mxu0 0.0
    %1056 = vmatpush1.msra.mxu0 %v1005
    %1057 = vmatprep.subr.mxu0 0.0
    %1058 = vmatpush1.msra.mxu0 %v1006
    %1059 = vmatprep.subr.mxu0 0.0
    %1060 = vmatpush1.msra.mxu0 %v1007
    %1061 = vmatprep.subr.mxu0 0.0
    %1062 = vmatpush1.msra.mxu0 %v1008
    %1063 = vmatprep.subr.mxu0 0.0
    %1064 = vmatpush1.msra.mxu0 %v1009
    %1065 = vmatprep.subr.mxu0 0.0
    %1066 = vmatpush1.msra.mxu0 %v1010
    %1067 = vmatprep.subr.mxu0 0.0
    %1068 = vmatpush1.msra.mxu0 %v1011
    %1069 = vmatprep.subr.mxu0 0.0
    %1070 = vmatpush1.msra.mxu0 %v1012
    %1071 = vmatprep.subr.mxu0 0.0
    %1072 = vmatpush1.msra.mxu0 %v1013
    %1073 = vmatprep.subr.mxu0 0.0
    %1074 = vmatpush1.msra.mxu0 %v1014
    %1075 = vmatprep.subr.mxu0 0.0
    %1076 = vmatpush1.msra.mxu0 %v1015
    %1077 = vmatprep.subr.mxu0 0.0
    %1078 = vmatpush1.msra.mxu0 0.0
    %1079 = vmatprep.subr.mxu0 0.0
    %1080 = vmatpush1.msra.mxu0 0.0
    %1081 = vmatprep.subr.mxu0 0.0
    %1082 = vmatpush1.msra.mxu0 0.0
    %1083 = vmatprep.subr.mxu0 0.0
    %1084 = vmatpush1.msra.mxu0 0.0
    %1085 = vmatprep.subr.mxu0 0.0
    %1086 = vmatpush1.msra.mxu0 0.0
    %1087 = vmatprep.subr.mxu0 0.0
    %1088 = vmatpush1.msra.mxu0 0.0
    %1089 = vmatprep.subr.mxu0 0.0
    %1090 = vmatpush1.msra.mxu0 0.0
    %1091 = vmatprep.subr.mxu0 0.0
    %1092 = vmatpush1.msra.mxu0 0.0
    %1093 = vmatprep.mubr.f32.mxu0 %v1024
    %1094 = vmatmul.mubr.f32.gmra.mrb[0].mxu0 %v988
    %v1095 = vpop.f32.mrb[0].mxu0
    %v1096 = vadd.f32 %v1021, %v1095
    %v1097 = vpop.f32.mrb[0].mxu0
    %1098 = vmatprep.mubr.f32.mxu0 %v1027
    %1099 = vmatmul.mubr.f32.gmra.mrb[0].mxu0 %v990
    %v1100 = vpop.f32.mrb[0].mxu0
    %v1101 = vadd.f32 %v1021, %v1100
    %v1102 = vpop.f32.mrb[0].mxu0
    %1103 = vdwg.mxu0
    %v1104 = vlaneseq
    %v1105 = vand.u32 %v1104, 127
    %vm1106 = vcmp.lt.s32.totalorder %v1105, 0
    %v1107 = vsub.s32 0, %v1105
    %v1108 = vsel %vm1106, %v1107, %v1105
    %v1109 = vshrl.u32 %v1108, 5
    %v1110 = vand.u32 %v1108, 31
    %v1111 = vsub.s32 0, %v1110
    %v1112 = vsel %vm1106, %v1111, %v1110
    %vm1113 = vcmp.ne.s32.totalorder %v1112, 0
    %vm1114 = vcmp.lt.s32.totalorder %v1112, 0
    %vm1115 = vmand %vm1114, %vm1113
    %v1116 = vadd.s32 %v1112, 32
    %v1117 = vsel %vm1115, %v1116, %v1112
    %vm1118 = vcmp.lt.s32.totalorder %v1117, 16
    %v1119 = vand.u32 2147483647, %v1096
    %v1120 = vand.u32 2147483647, %v1101
    %v1121 = vsel %vm1118, %v1119, %v1096
    %v1122 = vsel %vm1118, %v1120, %v1101
    %v1123 = vld [vmem:[%s3] sm:$0xff]
    %v1124 = vld [vmem:[%s3 + $0x8] sm:$0xff]
    %v1125 = vld [vmem:[#allocation2] sm:$0xff]
    %v1126 = vld [vmem:[#allocation2 + $0x8] sm:$0xff]
    %vm1127 = vcmask 130048
    %v1129 = vsel %vm1127, %v1123, 0
    %1131 = vmatprep.subr.mxu0 0.0
    %1132 = vmatpush1.msra.mxu0 %v1125
    %1133 = vmatprep.subr.mxu0 0.0
    %1134 = vmatpush1.msra.mxu0 %v1126
    %1135 = vmatprep.subr.mxu0 0.0
    %1136 = vmatpush1.msra.mxu0 0.0
    %1137 = vmatprep.subr.mxu0 0.0
    %1138 = vmatpush1.msra.mxu0 0.0
    %1139 = vmatprep.subr.mxu0 0.0
    %1140 = vmatpush1.msra.mxu0 0.0
    %1141 = vmatprep.subr.mxu0 0.0
    %1142 = vmatpush1.msra.mxu0 0.0
    %1143 = vmatprep.subr.mxu0 0.0
    %1144 = vmatpush1.msra.mxu0 0.0
    %1145 = vmatprep.subr.mxu0 0.0
    %1146 = vmatpush1.msra.mxu0 0.0
    %1147 = vmatprep.subr.mxu0 0.0
    %1148 = vmatpush1.msra.mxu0 0.0
    %1149 = vmatprep.subr.mxu0 0.0
    %1150 = vmatpush1.msra.mxu0 0.0
    %1151 = vmatprep.subr.mxu0 0.0
    %1152 = vmatpush1.msra.mxu0 0.0
    %1153 = vmatprep.subr.mxu0 0.0
    %1154 = vmatpush1.msra.mxu0 0.0
    %1155 = vmatprep.subr.mxu0 0.0
    %1156 = vmatpush1.msra.mxu0 0.0
    %1157 = vmatprep.subr.mxu0 0.0
    %1158 = vmatpush1.msra.mxu0 0.0
    %1159 = vmatprep.subr.mxu0 0.0
    %1160 = vmatpush1.msra.mxu0 0.0
    %1161 = vmatprep.subr.mxu0 0.0
    %1162 = vmatpush1.msra.mxu0 0.0
    %1163 = vmatprep.subr.mxu0 0.0
    %1164 = vmatpush1.msra.mxu0 0.0
    %1165 = vmatprep.subr.mxu0 0.0
    %1166 = vmatpush1.msra.mxu0 0.0
    %1167 = vmatprep.subr.mxu0 0.0
    %1168 = vmatpush1.msra.mxu0 0.0
    %1169 = vmatprep.subr.mxu0 0.0
    %1170 = vmatpush1.msra.mxu0 0.0
    %1171 = vmatprep.subr.mxu0 0.0
    %1172 = vmatpush1.msra.mxu0 0.0
    %1173 = vmatprep.subr.mxu0 0.0
    %1174 = vmatpush1.msra.mxu0 0.0
    %1175 = vmatprep.subr.mxu0 0.0
    %1176 = vmatpush1.msra.mxu0 0.0
    %1177 = vmatprep.subr.mxu0 0.0
    %1178 = vmatpush1.msra.mxu0 0.0
    %1179 = vmatprep.subr.mxu0 0.0
    %1180 = vmatpush1.msra.mxu0 0.0
    %1181 = vmatprep.subr.mxu0 0.0
    %1182 = vmatpush1.msra.mxu0 0.0
    %1183 = vmatprep.subr.mxu0 0.0
    %1184 = vmatpush1.msra.mxu0 0.0
    %1185 = vmatprep.subr.mxu0 0.0
    %1186 = vmatpush1.msra.mxu0 0.0
    %1187 = vmatprep.subr.mxu0 0.0
    %1188 = vmatpush1.msra.mxu0 0.0
    %1189 = vmatprep.subr.mxu0 0.0
    %1190 = vmatpush1.msra.mxu0 0.0
    %1191 = vmatprep.subr.mxu0 0.0
    %1192 = vmatpush1.msra.mxu0 0.0
    %1193 = vmatprep.subr.mxu0 0.0
    %1194 = vmatpush1.msra.mxu0 0.0
    %1195 = vmatprep.mubr.f32.mxu0 0.0
    %1196 = vmatmul.mubr.f32.gmra.mrb[0].mxu0 %v1129
    %v1197 = vpop.f32.mrb[0].mxu0
    %v1198 = vadd.f32 0.0, %v1197
    %v1199 = vpop.f32.mrb[0].mxu0
    %1200 = vdwg.mxu0
    %1203 = vrot.lane.b32.xlu0 %v1125, 112
    %v1204 = vpop.permute.xlu0 %1203
    %1205 = vrot.lane.b32.xlu0 %v1126, 112
    %v1206 = vpop.permute.xlu0 %1205
    %v1210 = vsel %vm1127, %v1124, 0
    %1212 = vmatprep.subr.mxu0 0.0
    %1213 = vmatpush1.msra.mxu0 %v1204
    %1214 = vmatprep.subr.mxu0 0.0
    %1215 = vmatpush1.msra.mxu0 %v1206
    %1216 = vmatprep.subr.mxu0 0.0
    %1217 = vmatpush1.msra.mxu0 0.0
    %1218 = vmatprep.subr.mxu0 0.0
    %1219 = vmatpush1.msra.mxu0 0.0
    %1220 = vmatprep.subr.mxu0 0.0
    %1221 = vmatpush1.msra.mxu0 0.0
    %1222 = vmatprep.subr.mxu0 0.0
    %1223 = vmatpush1.msra.mxu0 0.0
    %1224 = vmatprep.subr.mxu0 0.0
    %1225 = vmatpush1.msra.mxu0 0.0
    %1226 = vmatprep.subr.mxu0 0.0
    %1227 = vmatpush1.msra.mxu0 0.0
    %1228 = vmatprep.subr.mxu0 0.0
    %1229 = vmatpush1.msra.mxu0 0.0
    %1230 = vmatprep.subr.mxu0 0.0
    %1231 = vmatpush1.msra.mxu0 0.0
    %1232 = vmatprep.subr.mxu0 0.0
    %1233 = vmatpush1.msra.mxu0 0.0
    %1234 = vmatprep.subr.mxu0 0.0
    %1235 = vmatpush1.msra.mxu0 0.0
    %1236 = vmatprep.subr.mxu0 0.0
    %1237 = vmatpush1.msra.mxu0 0.0
    %1238 = vmatprep.subr.mxu0 0.0
    %1239 = vmatpush1.msra.mxu0 0.0
    %1240 = vmatprep.subr.mxu0 0.0
    %1241 = vmatpush1.msra.mxu0 0.0
    %1242 = vmatprep.subr.mxu0 0.0
    %1243 = vmatpush1.msra.mxu0 0.0
    %1244 = vmatprep.subr.mxu0 0.0
    %1245 = vmatpush1.msra.mxu0 0.0
    %1246 = vmatprep.subr.mxu0 0.0
    %1247 = vmatpush1.msra.mxu0 0.0
    %1248 = vmatprep.subr.mxu0 0.0
    %1249 = vmatpush1.msra.mxu0 0.0
    %1250 = vmatprep.subr.mxu0 0.0
    %1251 = vmatpush1.msra.mxu0 0.0
    %1252 = vmatprep.subr.mxu0 0.0
    %1253 = vmatpush1.msra.mxu0 0.0
    %1254 = vmatprep.subr.mxu0 0.0
    %1255 = vmatpush1.msra.mxu0 0.0
    %1256 = vmatprep.subr.mxu0 0.0
    %1257 = vmatpush1.msra.mxu0 0.0
    %1258 = vmatprep.subr.mxu0 0.0
    %1259 = vmatpush1.msra.mxu0 0.0
    %1260 = vmatprep.subr.mxu0 0.0
    %1261 = vmatpush1.msra.mxu0 0.0
    %1262 = vmatprep.subr.mxu0 0.0
    %1263 = vmatpush1.msra.mxu0 0.0
    %1264 = vmatprep.subr.mxu0 0.0
    %1265 = vmatpush1.msra.mxu0 0.0
    %1266 = vmatprep.subr.mxu0 0.0
    %1267 = vmatpush1.msra.mxu0 0.0
    %1268 = vmatprep.subr.mxu0 0.0
    %1269 = vmatpush1.msra.mxu0 0.0
    %1270 = vmatprep.subr.mxu0 0.0
    %1271 = vmatpush1.msra.mxu0 0.0
    %1272 = vmatprep.subr.mxu0 0.0
    %1273 = vmatpush1.msra.mxu0 0.0
    %1274 = vmatprep.subr.mxu0 0.0
    %1275 = vmatpush1.msra.mxu0 0.0
    %1276 = vmatprep.mubr.f32.mxu0 0.0
    %1277 = vmatmul.mubr.f32.gmra.mrb[0].mxu0 %v1210
    %v1278 = vpop.f32.mrb[0].mxu0
    %v1279 = vadd.f32 0.0, %v1278
    %v1280 = vpop.f32.mrb[0].mxu0
    %1281 = vdwg.mxu0
    %1283 = vrot.lane.b32.xlu0 %v1279, 16
    %v1284 = vpop.permute.xlu0 %1283
    %v1286 = vsel %vm1127, %v1198, %v1284
    %1287 = vst.msk [vmem:[%s9] sm:$0xff] %vm183, %v1286
    %v1288 = vld [vmem:[#allocation2 + $0x10] sm:$0xff]
    %v1289 = vld [vmem:[#allocation2 + $0x18] sm:$0xff]
    %1290 = vmatprep.subr.mxu0 0.0
    %1291 = vmatpush1.msra.mxu0 %v1288
    %1292 = vmatprep.subr.mxu0 0.0
    %1293 = vmatpush1.msra.mxu0 %v1289
    %1294 = vmatprep.subr.mxu0 0.0
    %1295 = vmatpush1.msra.mxu0 0.0
    %1296 = vmatprep.subr.mxu0 0.0
    %1297 = vmatpush1.msra.mxu0 0.0
    %1298 = vmatprep.subr.mxu0 0.0
    %1299 = vmatpush1.msra.mxu0 0.0
    %1300 = vmatprep.subr.mxu0 0.0
    %1301 = vmatpush1.msra.mxu0 0.0
    %1302 = vmatprep.subr.mxu0 0.0
    %1303 = vmatpush1.msra.mxu0 0.0
    %1304 = vmatprep.subr.mxu0 0.0
    %1305 = vmatpush1.msra.mxu0 0.0
    %1306 = vmatprep.subr.mxu0 0.0
    %1307 = vmatpush1.msra.mxu0 0.0
    %1308 = vmatprep.subr.mxu0 0.0
    %1309 = vmatpush1.msra.mxu0 0.0
    %1310 = vmatprep.subr.mxu0 0.0
    %1311 = vmatpush1.msra.mxu0 0.0
    %1312 = vmatprep.subr.mxu0 0.0
    %1313 = vmatpush1.msra.mxu0 0.0
    %1314 = vmatprep.subr.mxu0 0.0
    %1315 = vmatpush1.msra.mxu0 0.0
    %1316 = vmatprep.subr.mxu0 0.0
    %1317 = vmatpush1.msra.mxu0 0.0
    %1318 = vmatprep.subr.mxu0 0.0
    %1319 = vmatpush1.msra.mxu0 0.0
    %1320 = vmatprep.subr.mxu0 0.0
    %1321 = vmatpush1.msra.mxu0 0.0
    %1322 = vmatprep.subr.mxu0 0.0
    %1323 = vmatpush1.msra.mxu0 0.0
    %1324 = vmatprep.subr.mxu0 0.0
    %1325 = vmatpush1.msra.mxu0 0.0
    %1326 = vmatprep.subr.mxu0 0.0
    %1327 = vmatpush1.msra.mxu0 0.0
    %1328 = vmatprep.subr.mxu0 0.0
    %1329 = vmatpush1.msra.mxu0 0.0
    %1330 = vmatprep.subr.mxu0 0.0
    %1331 = vmatpush1.msra.mxu0 0.0
    %1332 = vmatprep.subr.mxu0 0.0
    %1333 = vmatpush1.msra.mxu0 0.0
    %1334 = vmatprep.subr.mxu0 0.0
    %1335 = vmatpush1.msra.mxu0 0.0
    %1336 = vmatprep.subr.mxu0 0.0
    %1337 = vmatpush1.msra.mxu0 0.0
    %1338 = vmatprep.subr.mxu0 0.0
    %1339 = vmatpush1.msra.mxu0 0.0
    %1340 = vmatprep.subr.mxu0 0.0
    %1341 = vmatpush1.msra.mxu0 0.0
    %1342 = vmatprep.subr.mxu0 0.0
    %1343 = vmatpush1.msra.mxu0 0.0
    %1344 = vmatprep.subr.mxu0 0.0
    %1345 = vmatpush1.msra.mxu0 0.0
    %1346 = vmatprep.subr.mxu0 0.0
    %1347 = vmatpush1.msra.mxu0 0.0
    %1348 = vmatprep.subr.mxu0 0.0
    %1349 = vmatpush1.msra.mxu0 0.0
    %1350 = vmatprep.subr.mxu0 0.0
    %1351 = vmatpush1.msra.mxu0 0.0
    %1352 = vmatprep.subr.mxu0 0.0
    %1353 = vmatpush1.msra.mxu0 0.0
    %1354 = vmatprep.mubr.f32.mxu0 0.0
    %1355 = vmatmul.mubr.f32.gmra.mrb[0].mxu0 %v1129
    %v1356 = vpop.f32.mrb[0].mxu0
    %v1357 = vadd.f32 0.0, %v1356
    %v1358 = vpop.f32.mrb[0].mxu0
    %1359 = vdwg.mxu0
    %v1360 = vxor.u32 %v1357, 2147483648
    %v1361 = vmul.f32 %v1360, 1.442695
    %v1362 = vpow.pop %v1361
    %v1363 = vadd.f32 %v1362, 1.0
    %v1364 = vrcp.pop %v1363
    %v1365 = vmul.f32 1.0, %v1364
    %1366 = vxpose.xlu0.b32.start [1/16] %v1121, 128
    %1367 = vxpose.xlu0.b32.cont [2/16] 0.0, 128
    %1368 = vxpose.xlu0.b32.cont [3/16] 0.0, 128
    %1369 = vxpose.xlu0.b32.cont [4/16] 0.0, 128
    %1370 = vxpose.xlu0.b32.cont [5/16] 0.0, 128
    %1371 = vxpose.xlu0.b32.cont [6/16] 0.0, 128
    %1372 = vxpose.xlu0.b32.cont [7/16] 0.0, 128
    %1373 = vxpose.xlu0.b32.cont [8/16] 0.0, 128
    %1374 = vxpose.xlu0.b32.cont [9/16] 0.0, 128
    %1375 = vxpose.xlu0.b32.cont [10/16] 0.0, 128
    %1376 = vxpose.xlu0.b32.cont [11/16] 0.0, 128
    %1377 = vxpose.xlu0.b32.cont [12/16] 0.0, 128
    %1378 = vxpose.xlu0.b32.cont [13/16] 0.0, 128
    %1379 = vxpose.xlu0.b32.cont [14/16] 0.0, 128
    %1380 = vxpose.xlu0.b32.cont [15/16] 0.0, 128
    %1381 = vxpose.xlu0.b32.end [16/16] 0.0, 128
    %v1382 = vpop.trf.xlu0
    %v1383 = vpop.trf.xlu0
    %v1384 = vpop.trf.xlu0
    %v1385 = vpop.trf.xlu0
    %v1386 = vpop.trf.xlu0
    %v1387 = vpop.trf.xlu0
    %v1388 = vpop.trf.xlu0
    %v1389 = vpop.trf.xlu0
    %v1390 = vpop.trf.xlu0
    %v1391 = vpop.trf.xlu0
    %v1392 = vpop.trf.xlu0
    %v1393 = vpop.trf.xlu0
    %v1394 = vpop.trf.xlu0
    %v1395 = vpop.trf.xlu0
    %v1396 = vpop.trf.xlu0
    %v1397 = vpop.trf.xlu0
    %vm1398 = vcmask 64512
    %v1400 = vsel %vm1398, %v1382, 0
    %v1403 = vsel %vm1398, %v1383, 0
    %v1406 = vsel %vm1398, %v1384, 0
    %v1409 = vsel %vm1398, %v1385, 0
    %1411 = vmatprep.subr.mxu0 0.0
    %1412 = vmatpush1.msra.mxu0 %v1365
    %1413 = vmatprep.subr.mxu0 0.0
    %1414 = vmatpush1.msra.mxu0 0.0
    %1415 = vmatprep.subr.mxu0 0.0
    %1416 = vmatpush1.msra.mxu0 0.0
    %1417 = vmatprep.subr.mxu0 0.0
    %1418 = vmatpush1.msra.mxu0 0.0
    %1419 = vmatprep.subr.mxu0 0.0
    %1420 = vmatpush1.msra.mxu0 0.0
    %1421 = vmatprep.subr.mxu0 0.0
    %1422 = vmatpush1.msra.mxu0 0.0
    %1423 = vmatprep.subr.mxu0 0.0
    %1424 = vmatpush1.msra.mxu0 0.0
    %1425 = vmatprep.subr.mxu0 0.0
    %1426 = vmatpush1.msra.mxu0 0.0
    %1427 = vmatprep.subr.mxu0 0.0
    %1428 = vmatpush1.msra.mxu0 0.0
    %1429 = vmatprep.subr.mxu0 0.0
    %1430 = vmatpush1.msra.mxu0 0.0
    %1431 = vmatprep.subr.mxu0 0.0
    %1432 = vmatpush1.msra.mxu0 0.0
    %1433 = vmatprep.subr.mxu0 0.0
    %1434 = vmatpush1.msra.mxu0 0.0
    %1435 = vmatprep.subr.mxu0 0.0
    %1436 = vmatpush1.msra.mxu0 0.0
    %1437 = vmatprep.subr.mxu0 0.0
    %1438 = vmatpush1.msra.mxu0 0.0
    %1439 = vmatprep.subr.mxu0 0.0
    %1440 = vmatpush1.msra.mxu0 0.0
    %1441 = vmatprep.subr.mxu0 0.0
    %1442 = vmatpush1.msra.mxu0 0.0
    %1443 = vmatprep.subr.mxu0 0.0
    %1444 = vmatpush1.msra.mxu0 0.0
    %1445 = vmatprep.subr.mxu0 0.0
    %1446 = vmatpush1.msra.mxu0 0.0
    %1447 = vmatprep.subr.mxu0 0.0
    %1448 = vmatpush1.msra.mxu0 0.0
    %1449 = vmatprep.subr.mxu0 0.0
    %1450 = vmatpush1.msra.mxu0 0.0
    %1451 = vmatprep.subr.mxu0 0.0
    %1452 = vmatpush1.msra.mxu0 0.0
    %1453 = vmatprep.subr.mxu0 0.0
    %1454 = vmatpush1.msra.mxu0 0.0
    %1455 = vmatprep.subr.mxu0 0.0
    %1456 = vmatpush1.msra.mxu0 0.0
    %1457 = vmatprep.subr.mxu0 0.0
    %1458 = vmatpush1.msra.mxu0 0.0
    %1459 = vmatprep.subr.mxu0 0.0
    %1460 = vmatpush1.msra.mxu0 0.0
    %1461 = vmatprep.subr.mxu0 0.0
    %1462 = vmatpush1.msra.mxu0 0.0
    %1463 = vmatprep.subr.mxu0 0.0
    %1464 = vmatpush1.msra.mxu0 0.0
    %1465 = vmatprep.subr.mxu0 0.0
    %1466 = vmatpush1.msra.mxu0 0.0
    %1467 = vmatprep.subr.mxu0 0.0
    %1468 = vmatpush1.msra.mxu0 0.0
    %1469 = vmatprep.subr.mxu0 0.0
    %1470 = vmatpush1.msra.mxu0 0.0
    %1471 = vmatprep.subr.mxu0 0.0
    %1472 = vmatpush1.msra.mxu0 0.0
    %1473 = vmatprep.subr.mxu0 0.0
    %1474 = vmatpush1.msra.mxu0 0.0
    %1475 = vmatprep.mubr.f32.mxu0 0.0
    %1476 = vmatmul.mubr.f32.gmra.mrb[0].mxu0 %v1400
    %v1477 = vpop.f32.mrb[0].mxu0
    %v1478 = vadd.f32 0.0, %v1477
    %v1479 = vpop.f32.mrb[0].mxu0
    %1480 = vmatprep.mubr.f32.mxu0 0.0
    %1481 = vmatmul.mubr.f32.gmra.mrb[0].mxu0 %v1403
    %v1482 = vpop.f32.mrb[0].mxu0
    %v1483 = vadd.f32 0.0, %v1482
    %v1484 = vpop.f32.mrb[0].mxu0
    %1485 = vmatprep.mubr.f32.mxu0 0.0
    %1486 = vmatmul.mubr.f32.gmra.mrb[0].mxu0 %v1406
    %v1487 = vpop.f32.mrb[0].mxu0
    %v1488 = vadd.f32 0.0, %v1487
    %v1489 = vpop.f32.mrb[0].mxu0
    %1490 = vmatprep.mubr.f32.mxu0 0.0
    %1491 = vmatmul.mubr.f32.gmra.mrb[0].mxu0 %v1409
    %v1492 = vpop.f32.mrb[0].mxu0
    %v1493 = vadd.f32 0.0, %v1492
    %v1494 = vpop.f32.mrb[0].mxu0
    %1495 = vdwg.mxu0
    %v1496 = vld [vmem:[#allocation2 + $0x20] sm:$0xff]
    %v1497 = vld [vmem:[#allocation2 + $0x28] sm:$0xff]
    %v1498 = vmul.f32 %v1496, %v1478
    %v1499 = vmul.f32 %v1497, %v1483
    %v1500 = vadd.f32 %v1498, %v1488
    %v1501 = vadd.f32 %v1499, %v1493
    %v1502 = vmax.f32 %v1500, 0.0
    %v1503 = vmax.f32 %v1501, 0.0
    %1506 = vrot.lane.b32.xlu0 %v1288, 112
    %v1507 = vpop.permute.xlu0 %1506
    %1508 = vrot.lane.b32.xlu0 %v1289, 112
    %v1509 = vpop.permute.xlu0 %1508
    %1512 = vmatprep.subr.mxu0 0.0
    %1513 = vmatpush1.msra.mxu0 %v1507
    %1514 = vmatprep.subr.mxu0 0.0
    %1515 = vmatpush1.msra.mxu0 %v1509
    %1516 = vmatprep.subr.mxu0 0.0
    %1517 = vmatpush1.msra.mxu0 0.0
    %1518 = vmatprep.subr.mxu0 0.0
    %1519 = vmatpush1.msra.mxu0 0.0
    %1520 = vmatprep.subr.mxu0 0.0
    %1521 = vmatpush1.msra.mxu0 0.0
    %1522 = vmatprep.subr.mxu0 0.0
    %1523 = vmatpush1.msra.mxu0 0.0
    %1524 = vmatprep.subr.mxu0 0.0
    %1525 = vmatpush1.msra.mxu0 0.0
    %1526 = vmatprep.subr.mxu0 0.0
    %1527 = vmatpush1.msra.mxu0 0.0
    %1528 = vmatprep.subr.mxu0 0.0
    %1529 = vmatpush1.msra.mxu0 0.0
    %1530 = vmatprep.subr.mxu0 0.0
    %1531 = vmatpush1.msra.mxu0 0.0
    %1532 = vmatprep.subr.mxu0 0.0
    %1533 = vmatpush1.msra.mxu0 0.0
    %1534 = vmatprep.subr.mxu0 0.0
    %1535 = vmatpush1.msra.mxu0 0.0
    %1536 = vmatprep.subr.mxu0 0.0
    %1537 = vmatpush1.msra.mxu0 0.0
    %1538 = vmatprep.subr.mxu0 0.0
    %1539 = vmatpush1.msra.mxu0 0.0
    %1540 = vmatprep.subr.mxu0 0.0
    %1541 = vmatpush1.msra.mxu0 0.0
    %1542 = vmatprep.subr.mxu0 0.0
    %1543 = vmatpush1.msra.mxu0 0.0
    %1544 = vmatprep.subr.mxu0 0.0
    %1545 = vmatpush1.msra.mxu0 0.0
    %1546 = vmatprep.subr.mxu0 0.0
    %1547 = vmatpush1.msra.mxu0 0.0
    %1548 = vmatprep.subr.mxu0 0.0
    %1549 = vmatpush1.msra.mxu0 0.0
    %1550 = vmatprep.subr.mxu0 0.0
    %1551 = vmatpush1.msra.mxu0 0.0
    %1552 = vmatprep.subr.mxu0 0.0
    %1553 = vmatpush1.msra.mxu0 0.0
    %1554 = vmatprep.subr.mxu0 0.0
    %1555 = vmatpush1.msra.mxu0 0.0
    %1556 = vmatprep.subr.mxu0 0.0
    %1557 = vmatpush1.msra.mxu0 0.0
    %1558 = vmatprep.subr.mxu0 0.0
    %1559 = vmatpush1.msra.mxu0 0.0
    %1560 = vmatprep.subr.mxu0 0.0
    %1561 = vmatpush1.msra.mxu0 0.0
    %1562 = vmatprep.subr.mxu0 0.0
    %1563 = vmatpush1.msra.mxu0 0.0
    %1564 = vmatprep.subr.mxu0 0.0
    %1565 = vmatpush1.msra.mxu0 0.0
    %1566 = vmatprep.subr.mxu0 0.0
    %1567 = vmatpush1.msra.mxu0 0.0
    %1568 = vmatprep.subr.mxu0 0.0
    %1569 = vmatpush1.msra.mxu0 0.0
    %1570 = vmatprep.subr.mxu0 0.0
    %1571 = vmatpush1.msra.mxu0 0.0
    %1572 = vmatprep.subr.mxu0 0.0
    %1573 = vmatpush1.msra.mxu0 0.0
    %1574 = vmatprep.subr.mxu0 0.0
    %1575 = vmatpush1.msra.mxu0 0.0
    %1576 = vmatprep.mubr.f32.mxu0 0.0
    %1577 = vmatmul.mubr.f32.gmra.mrb[0].mxu0 %v1210
    %v1578 = vpop.f32.mrb[0].mxu0
    %v1579 = vadd.f32 0.0, %v1578
    %v1580 = vpop.f32.mrb[0].mxu0
    %1581 = vdwg.mxu0
    %v1582 = vxor.u32 %v1579, 2147483648
    %v1583 = vmul.f32 %v1582, 1.442695
    %v1584 = vpow.pop %v1583
    %v1585 = vadd.f32 %v1584, 1.0
    %v1586 = vrcp.pop %v1585
    %v1587 = vmul.f32 1.0, %v1586
    %1588 = vxpose.xlu0.b32.start [1/16] %v1122, 128
    %1589 = vxpose.xlu0.b32.cont [2/16] 0.0, 128
    %1590 = vxpose.xlu0.b32.cont [3/16] 0.0, 128
    %1591 = vxpose.xlu0.b32.cont [4/16] 0.0, 128
    %1592 = vxpose.xlu0.b32.cont [5/16] 0.0, 128
    %1593 = vxpose.xlu0.b32.cont [6/16] 0.0, 128
    %1594 = vxpose.xlu0.b32.cont [7/16] 0.0, 128
    %1595 = vxpose.xlu0.b32.cont [8/16] 0.0, 128
    %1596 = vxpose.xlu0.b32.cont [9/16] 0.0, 128
    %1597 = vxpose.xlu0.b32.cont [10/16] 0.0, 128
    %1598 = vxpose.xlu0.b32.cont [11/16] 0.0, 128
    %1599 = vxpose.xlu0.b32.cont [12/16] 0.0, 128
    %1600 = vxpose.xlu0.b32.cont [13/16] 0.0, 128
    %1601 = vxpose.xlu0.b32.cont [14/16] 0.0, 128
    %1602 = vxpose.xlu0.b32.cont [15/16] 0.0, 128
    %1603 = vxpose.xlu0.b32.end [16/16] 0.0, 128
    %v1604 = vpop.trf.xlu0
    %v1605 = vpop.trf.xlu0
    %v1606 = vpop.trf.xlu0
    %v1607 = vpop.trf.xlu0
    %v1608 = vpop.trf.xlu0
    %v1609 = vpop.trf.xlu0
    %v1610 = vpop.trf.xlu0
    %v1611 = vpop.trf.xlu0
    %v1612 = vpop.trf.xlu0
    %v1613 = vpop.trf.xlu0
    %v1614 = vpop.trf.xlu0
    %v1615 = vpop.trf.xlu0
    %v1616 = vpop.trf.xlu0
    %v1617 = vpop.trf.xlu0
    %v1618 = vpop.trf.xlu0
    %v1619 = vpop.trf.xlu0
    %v1621 = vsel %vm1398, %v1604, 0
    %v1624 = vsel %vm1398, %v1605, 0
    %v1627 = vsel %vm1398, %v1606, 0
    %v1630 = vsel %vm1398, %v1607, 0
    %1632 = vmatprep.subr.mxu0 0.0
    %1633 = vmatpush1.msra.mxu0 %v1587
    %1634 = vmatprep.subr.mxu0 0.0
    %1635 = vmatpush1.msra.mxu0 0.0
    %1636 = vmatprep.subr.mxu0 0.0
    %1637 = vmatpush1.msra.mxu0 0.0
    %1638 = vmatprep.subr.mxu0 0.0
    %1639 = vmatpush1.msra.mxu0 0.0
    %1640 = vmatprep.subr.mxu0 0.0
    %1641 = vmatpush1.msra.mxu0 0.0
    %1642 = vmatprep.subr.mxu0 0.0
    %1643 = vmatpush1.msra.mxu0 0.0
    %1644 = vmatprep.subr.mxu0 0.0
    %1645 = vmatpush1.msra.mxu0 0.0
    %1646 = vmatprep.subr.mxu0 0.0
    %1647 = vmatpush1.msra.mxu0 0.0
    %1648 = vmatprep.subr.mxu0 0.0
    %1649 = vmatpush1.msra.mxu0 0.0
    %1650 = vmatprep.subr.mxu0 0.0
    %1651 = vmatpush1.msra.mxu0 0.0
    %1652 = vmatprep.subr.mxu0 0.0
    %1653 = vmatpush1.msra.mxu0 0.0
    %1654 = vmatprep.subr.mxu0 0.0
    %1655 = vmatpush1.msra.mxu0 0.0
    %1656 = vmatprep.subr.mxu0 0.0
    %1657 = vmatpush1.msra.mxu0 0.0
    %1658 = vmatprep.subr.mxu0 0.0
    %1659 = vmatpush1.msra.mxu0 0.0
    %1660 = vmatprep.subr.mxu0 0.0
    %1661 = vmatpush1.msra.mxu0 0.0
    %1662 = vmatprep.subr.mxu0 0.0
    %1663 = vmatpush1.msra.mxu0 0.0
    %1664 = vmatprep.subr.mxu0 0.0
    %1665 = vmatpush1.msra.mxu0 0.0
    %1666 = vmatprep.subr.mxu0 0.0
    %1667 = vmatpush1.msra.mxu0 0.0
    %1668 = vmatprep.subr.mxu0 0.0
    %1669 = vmatpush1.msra.mxu0 0.0
    %1670 = vmatprep.subr.mxu0 0.0
    %1671 = vmatpush1.msra.mxu0 0.0
    %1672 = vmatprep.subr.mxu0 0.0
    %1673 = vmatpush1.msra.mxu0 0.0
    %1674 = vmatprep.subr.mxu0 0.0
    %1675 = vmatpush1.msra.mxu0 0.0
    %1676 = vmatprep.subr.mxu0 0.0
    %1677 = vmatpush1.msra.mxu0 0.0
    %1678 = vmatprep.subr.mxu0 0.0
    %1679 = vmatpush1.msra.mxu0 0.0
    %1680 = vmatprep.subr.mxu0 0.0
    %1681 = vmatpush1.msra.mxu0 0.0
    %1682 = vmatprep.subr.mxu0 0.0
    %1683 = vmatpush1.msra.mxu0 0.0
    %1684 = vmatprep.subr.mxu0 0.0
    %1685 = vmatpush1.msra.mxu0 0.0
    %1686 = vmatprep.subr.mxu0 0.0
    %1687 = vmatpush1.msra.mxu0 0.0
    %1688 = vmatprep.subr.mxu0 0.0
    %1689 = vmatpush1.msra.mxu0 0.0
    %1690 = vmatprep.subr.mxu0 0.0
    %1691 = vmatpush1.msra.mxu0 0.0
    %1692 = vmatprep.subr.mxu0 0.0
    %1693 = vmatpush1.msra.mxu0 0.0
    %1694 = vmatprep.subr.mxu0 0.0
    %1695 = vmatpush1.msra.mxu0 0.0
    %1696 = vmatprep.mubr.f32.mxu0 0.0
    %1697 = vmatmul.mubr.f32.gmra.mrb[0].mxu0 %v1621
    %v1698 = vpop.f32.mrb[0].mxu0
    %v1699 = vadd.f32 0.0, %v1698
    %v1700 = vpop.f32.mrb[0].mxu0
    %1701 = vmatprep.mubr.f32.mxu0 0.0
    %1702 = vmatmul.mubr.f32.gmra.mrb[0].mxu0 %v1624
    %v1703 = vpop.f32.mrb[0].mxu0
    %v1704 = vadd.f32 0.0, %v1703
    %v1705 = vpop.f32.mrb[0].mxu0
    %1706 = vmatprep.mubr.f32.mxu0 0.0
    %1707 = vmatmul.mubr.f32.gmra.mrb[0].mxu0 %v1627
    %v1708 = vpop.f32.mrb[0].mxu0
    %v1709 = vadd.f32 0.0, %v1708
    %v1710 = vpop.f32.mrb[0].mxu0
    %1711 = vmatprep.mubr.f32.mxu0 0.0
    %1712 = vmatmul.mubr.f32.gmra.mrb[0].mxu0 %v1630
    %v1713 = vpop.f32.mrb[0].mxu0
    %v1714 = vadd.f32 0.0, %v1713
    %v1715 = vpop.f32.mrb[0].mxu0
    %1716 = vdwg.mxu0
    %1719 = vrot.lane.b32.xlu0 %v1699, 16
    %v1720 = vpop.permute.xlu0 %1719
    %1721 = vrot.lane.b32.xlu0 %v1704, 16
    %v1722 = vpop.permute.xlu0 %1721
    %v1725 = vmul.f32 %v1496, %v1720
    %v1726 = vmul.f32 %v1497, %v1722
    %1729 = vrot.lane.b32.xlu0 %v1709, 16
    %v1730 = vpop.permute.xlu0 %1729
    %1731 = vrot.lane.b32.xlu0 %v1714, 16
    %v1732 = vpop.permute.xlu0 %1731
    %v1735 = vadd.f32 %v1725, %v1730
    %v1736 = vadd.f32 %v1726, %v1732
    %v1737 = vmax.f32 %v1735, 0.0
    %v1738 = vmax.f32 %v1736, 0.0
    %1740 = vrot.lane.b32.xlu0 %v1579, 16
    %v1741 = vpop.permute.xlu0 %1740
    %v1743 = vsel %vm1127, %v1357, %v1741
    %s1744 = scalar_lea.vmem %s9, 8
    %1745 = vst.msk [vmem:[%s1744] sm:$0xff] %vm183, %v1743
    %v1746 = vsel %vm1127, %v1502, %v1737
    %v1747 = vsel %vm1127, %v1503, %v1738
    %1748 = vst.msk [vmem:[#allocation3] sm:$0xff] %vm183, %v1746
    %1749 = vst.msk [vmem:[#allocation3 + $0x8] sm:$0xff] %vm183, %v1747
    %v1750 = vld [vmem:[#allocation2 + $0x30] sm:$0xff]
    %v1751 = vld [vmem:[#allocation2 + $0x38] sm:$0xff]
    %1752 = vmatprep.subr.mxu0 0.0
    %1753 = vmatpush1.msra.mxu0 %v1750
    %1754 = vmatprep.subr.mxu0 0.0
    %1755 = vmatpush1.msra.mxu0 %v1751
    %1756 = vmatprep.subr.mxu0 0.0
    %1757 = vmatpush1.msra.mxu0 0.0
    %1758 = vmatprep.subr.mxu0 0.0
    %1759 = vmatpush1.msra.mxu0 0.0
    %1760 = vmatprep.subr.mxu0 0.0
    %1761 = vmatpush1.msra.mxu0 0.0
    %1762 = vmatprep.subr.mxu0 0.0
    %1763 = vmatpush1.msra.mxu0 0.0
    %1764 = vmatprep.subr.mxu0 0.0
    %1765 = vmatpush1.msra.mxu0 0.0
    %1766 = vmatprep.subr.mxu0 0.0
    %1767 = vmatpush1.msra.mxu0 0.0
    %1768 = vmatprep.subr.mxu0 0.0
    %1769 = vmatpush1.msra.mxu0 0.0
    %1770 = vmatprep.subr.mxu0 0.0
    %1771 = vmatpush1.msra.mxu0 0.0
    %1772 = vmatprep.subr.mxu0 0.0
    %1773 = vmatpush1.msra.mxu0 0.0
    %1774 = vmatprep.subr.mxu0 0.0
    %1775 = vmatpush1.msra.mxu0 0.0
    %1776 = vmatprep.subr.mxu0 0.0
    %1777 = vmatpush1.msra.mxu0 0.0
    %1778 = vmatprep.subr.mxu0 0.0
    %1779 = vmatpush1.msra.mxu0 0.0
    %1780 = vmatprep.subr.mxu0 0.0
    %1781 = vmatpush1.msra.mxu0 0.0
    %1782 = vmatprep.subr.mxu0 0.0
    %1783 = vmatpush1.msra.mxu0 0.0
    %1784 = vmatprep.subr.mxu0 0.0
    %1785 = vmatpush1.msra.mxu0 0.0
    %1786 = vmatprep.subr.mxu0 0.0
    %1787 = vmatpush1.msra.mxu0 0.0
    %1788 = vmatprep.subr.mxu0 0.0
    %1789 = vmatpush1.msra.mxu0 0.0
    %1790 = vmatprep.subr.mxu0 0.0
    %1791 = vmatpush1.msra.mxu0 0.0
    %1792 = vmatprep.subr.mxu0 0.0
    %1793 = vmatpush1.msra.mxu0 0.0
    %1794 = vmatprep.subr.mxu0 0.0
    %1795 = vmatpush1.msra.mxu0 0.0
    %1796 = vmatprep.subr.mxu0 0.0
    %1797 = vmatpush1.msra.mxu0 0.0
    %1798 = vmatprep.subr.mxu0 0.0
    %1799 = vmatpush1.msra.mxu0 0.0
    %1800 = vmatprep.subr.mxu0 0.0
    %1801 = vmatpush1.msra.mxu0 0.0
    %1802 = vmatprep.subr.mxu0 0.0
    %1803 = vmatpush1.msra.mxu0 0.0
    %1804 = vmatprep.subr.mxu0 0.0
    %1805 = vmatpush1.msra.mxu0 0.0
    %1806 = vmatprep.subr.mxu0 0.0
    %1807 = vmatpush1.msra.mxu0 0.0
    %1808 = vmatprep.subr.mxu0 0.0
    %1809 = vmatpush1.msra.mxu0 0.0
    %1810 = vmatprep.subr.mxu0 0.0
    %1811 = vmatpush1.msra.mxu0 0.0
    %1812 = vmatprep.subr.mxu0 0.0
    %1813 = vmatpush1.msra.mxu0 0.0
    %1814 = vmatprep.subr.mxu0 0.0
    %1815 = vmatpush1.msra.mxu0 0.0
    %1816 = vmatprep.mubr.f32.mxu0 0.0
    %1817 = vmatmul.mubr.f32.gmra.mrb[0].mxu0 %v1129
    %v1818 = vpop.f32.mrb[0].mxu0
    %v1819 = vadd.f32 0.0, %v1818
    %v1820 = vpop.f32.mrb[0].mxu0
    %1821 = vdwg.mxu0
    %v1822 = vxor.u32 %v1819, 2147483648
    %v1823 = vmul.f32 %v1822, 1.442695
    %v1824 = vpow.pop %v1823
    %v1825 = vadd.f32 %v1824, 1.0
    %v1826 = vrcp.pop %v1825
    %v1827 = vmul.f32 1.0, %v1826
    %1829 = vrot.lane.b32.xlu0 %v1121, 96
    %v1830 = vpop.permute.xlu0 %1829
    %1832 = vxpose.xlu0.b32.start [1/16] %v1830, 128
    %1833 = vxpose.xlu0.b32.cont [2/16] 0.0, 128
    %1834 = vxpose.xlu0.b32.cont [3/16] 0.0, 128
    %1835 = vxpose.xlu0.b32.cont [4/16] 0.0, 128
    %1836 = vxpose.xlu0.b32.cont [5/16] 0.0, 128
    %1837 = vxpose.xlu0.b32.cont [6/16] 0.0, 128
    %1838 = vxpose.xlu0.b32.cont [7/16] 0.0, 128
    %1839 = vxpose.xlu0.b32.cont [8/16] 0.0, 128
    %1840 = vxpose.xlu0.b32.cont [9/16] 0.0, 128
    %1841 = vxpose.xlu0.b32.cont [10/16] 0.0, 128
    %1842 = vxpose.xlu0.b32.cont [11/16] 0.0, 128
    %1843 = vxpose.xlu0.b32.cont [12/16] 0.0, 128
    %1844 = vxpose.xlu0.b32.cont [13/16] 0.0, 128
    %1845 = vxpose.xlu0.b32.cont [14/16] 0.0, 128
    %1846 = vxpose.xlu0.b32.cont [15/16] 0.0, 128
    %1847 = vxpose.xlu0.b32.end [16/16] 0.0, 128
    %v1848 = vpop.trf.xlu0
    %v1849 = vpop.trf.xlu0
    %v1850 = vpop.trf.xlu0
    %v1851 = vpop.trf.xlu0
    %v1852 = vpop.trf.xlu0
    %v1853 = vpop.trf.xlu0
    %v1854 = vpop.trf.xlu0
    %v1855 = vpop.trf.xlu0
    %v1856 = vpop.trf.xlu0
    %v1857 = vpop.trf.xlu0
    %v1858 = vpop.trf.xlu0
    %v1859 = vpop.trf.xlu0
    %v1860 = vpop.trf.xlu0
    %v1861 = vpop.trf.xlu0
    %v1862 = vpop.trf.xlu0
    %v1863 = vpop.trf.xlu0
    %v1865 = vsel %vm1398, %v1848, 0
    %v1868 = vsel %vm1398, %v1849, 0
    %v1871 = vsel %vm1398, %v1850, 0
    %v1874 = vsel %vm1398, %v1851, 0
    %1876 = vmatprep.subr.mxu0 0.0
    %1877 = vmatpush1.msra.mxu0 %v1827
    %1878 = vmatprep.subr.mxu0 0.0
    %1879 = vmatpush1.msra.mxu0 0.0
    %1880 = vmatprep.subr.mxu0 0.0
    %1881 = vmatpush1.msra.mxu0 0.0
    %1882 = vmatprep.subr.mxu0 0.0
    %1883 = vmatpush1.msra.mxu0 0.0
    %1884 = vmatprep.subr.mxu0 0.0
    %1885 = vmatpush1.msra.mxu0 0.0
    %1886 = vmatprep.subr.mxu0 0.0
    %1887 = vmatpush1.msra.mxu0 0.0
    %1888 = vmatprep.subr.mxu0 0.0
    %1889 = vmatpush1.msra.mxu0 0.0
    %1890 = vmatprep.subr.mxu0 0.0
    %1891 = vmatpush1.msra.mxu0 0.0
    %1892 = vmatprep.subr.mxu0 0.0
    %1893 = vmatpush1.msra.mxu0 0.0
    %1894 = vmatprep.subr.mxu0 0.0
    %1895 = vmatpush1.msra.mxu0 0.0
    %1896 = vmatprep.subr.mxu0 0.0
    %1897 = vmatpush1.msra.mxu0 0.0
    %1898 = vmatprep.subr.mxu0 0.0
    %1899 = vmatpush1.msra.mxu0 0.0
    %1900 = vmatprep.subr.mxu0 0.0
    %1901 = vmatpush1.msra.mxu0 0.0
    %1902 = vmatprep.subr.mxu0 0.0
    %1903 = vmatpush1.msra.mxu0 0.0
    %1904 = vmatprep.subr.mxu0 0.0
    %1905 = vmatpush1.msra.mxu0 0.0
    %1906 = vmatprep.subr.mxu0 0.0
    %1907 = vmatpush1.msra.mxu0 0.0
    %1908 = vmatprep.subr.mxu0 0.0
    %1909 = vmatpush1.msra.mxu0 0.0
    %1910 = vmatprep.subr.mxu0 0.0
    %1911 = vmatpush1.msra.mxu0 0.0
    %1912 = vmatprep.subr.mxu0 0.0
    %1913 = vmatpush1.msra.mxu0 0.0
    %1914 = vmatprep.subr.mxu0 0.0
    %1915 = vmatpush1.msra.mxu0 0.0
    %1916 = vmatprep.subr.mxu0 0.0
    %1917 = vmatpush1.msra.mxu0 0.0
    %1918 = vmatprep.subr.mxu0 0.0
    %1919 = vmatpush1.msra.mxu0 0.0
    %1920 = vmatprep.subr.mxu0 0.0
    %1921 = vmatpush1.msra.mxu0 0.0
    %1922 = vmatprep.subr.mxu0 0.0
    %1923 = vmatpush1.msra.mxu0 0.0
    %1924 = vmatprep.subr.mxu0 0.0
    %1925 = vmatpush1.msra.mxu0 0.0
    %1926 = vmatprep.subr.mxu0 0.0
    %1927 = vmatpush1.msra.mxu0 0.0
    %1928 = vmatprep.subr.mxu0 0.0
    %1929 = vmatpush1.msra.mxu0 0.0
    %1930 = vmatprep.subr.mxu0 0.0
    %1931 = vmatpush1.msra.mxu0 0.0
    %1932 = vmatprep.subr.mxu0 0.0
    %1933 = vmatpush1.msra.mxu0 0.0
    %1934 = vmatprep.subr.mxu0 0.0
    %1935 = vmatpush1.msra.mxu0 0.0
    %1936 = vmatprep.subr.mxu0 0.0
    %1937 = vmatpush1.msra.mxu0 0.0
    %1938 = vmatprep.subr.mxu0 0.0
    %1939 = vmatpush1.msra.mxu0 0.0
    %1940 = vmatprep.mubr.f32.mxu0 0.0
    %1941 = vmatmul.mubr.f32.gmra.mrb[0].mxu0 %v1865
    %v1942 = vpop.f32.mrb[0].mxu0
    %v1943 = vadd.f32 0.0, %v1942
    %v1944 = vpop.f32.mrb[0].mxu0
    %1945 = vmatprep.mubr.f32.mxu0 0.0
    %1946 = vmatmul.mubr.f32.gmra.mrb[0].mxu0 %v1868
    %v1947 = vpop.f32.mrb[0].mxu0
    %v1948 = vadd.f32 0.0, %v1947
    %v1949 = vpop.f32.mrb[0].mxu0
    %1950 = vmatprep.mubr.f32.mxu0 0.0
    %1951 = vmatmul.mubr.f32.gmra.mrb[0].mxu0 %v1871
    %v1952 = vpop.f32.mrb[0].mxu0
    %v1953 = vadd.f32 0.0, %v1952
    %v1954 = vpop.f32.mrb[0].mxu0
    %1955 = vmatprep.mubr.f32.mxu0 0.0
    %1956 = vmatmul.mubr.f32.gmra.mrb[0].mxu0 %v1874
    %v1957 = vpop.f32.mrb[0].mxu0
    %v1958 = vadd.f32 0.0, %v1957
    %v1959 = vpop.f32.mrb[0].mxu0
    %1960 = vdwg.mxu0
    %v1961 = vld [vmem:[#allocation2 + $0x40] sm:$0xff]
    %v1962 = vld [vmem:[#allocation2 + $0x48] sm:$0xff]
    %v1963 = vmul.f32 %v1961, %v1943
    %v1964 = vmul.f32 %v1962, %v1948
    %v1965 = vadd.f32 %v1963, %v1953
    %v1966 = vadd.f32 %v1964, %v1958
    %v1967 = vmax.f32 %v1965, 0.0
    %v1968 = vmax.f32 %v1966, 0.0
    %1971 = vrot.lane.b32.xlu0 %v1750, 112
    %v1972 = vpop.permute.xlu0 %1971
    %1973 = vrot.lane.b32.xlu0 %v1751, 112
    %v1974 = vpop.permute.xlu0 %1973
    %1977 = vmatprep.subr.mxu0 0.0
    %1978 = vmatpush1.msra.mxu0 %v1972
    %1979 = vmatprep.subr.mxu0 0.0
    %1980 = vmatpush1.msra.mxu0 %v1974
    %1981 = vmatprep.subr.mxu0 0.0
    %1982 = vmatpush1.msra.mxu0 0.0
    %1983 = vmatprep.subr.mxu0 0.0
    %1984 = vmatpush1.msra.mxu0 0.0
    %1985 = vmatprep.subr.mxu0 0.0
    %1986 = vmatpush1.msra.mxu0 0.0
    %1987 = vmatprep.subr.mxu0 0.0
    %1988 = vmatpush1.msra.mxu0 0.0
    %1989 = vmatprep.subr.mxu0 0.0
    %1990 = vmatpush1.msra.mxu0 0.0
    %1991 = vmatprep.subr.mxu0 0.0
    %1992 = vmatpush1.msra.mxu0 0.0
    %1993 = vmatprep.subr.mxu0 0.0
    %1994 = vmatpush1.msra.mxu0 0.0
    %1995 = vmatprep.subr.mxu0 0.0
    %1996 = vmatpush1.msra.mxu0 0.0
    %1997 = vmatprep.subr.mxu0 0.0
    %1998 = vmatpush1.msra.mxu0 0.0
    %1999 = vmatprep.subr.mxu0 0.0
    %2000 = vmatpush1.msra.mxu0 0.0
    %2001 = vmatprep.subr.mxu0 0.0
    %2002 = vmatpush1.msra.mxu0 0.0
    %2003 = vmatprep.subr.mxu0 0.0
    %2004 = vmatpush1.msra.mxu0 0.0
    %2005 = vmatprep.subr.mxu0 0.0
    %2006 = vmatpush1.msra.mxu0 0.0
    %2007 = vmatprep.subr.mxu0 0.0
    %2008 = vmatpush1.msra.mxu0 0.0
    %2009 = vmatprep.subr.mxu0 0.0
    %2010 = vmatpush1.msra.mxu0 0.0
    %2011 = vmatprep.subr.mxu0 0.0
    %2012 = vmatpush1.msra.mxu0 0.0
    %2013 = vmatprep.subr.mxu0 0.0
    %2014 = vmatpush1.msra.mxu0 0.0
    %2015 = vmatprep.subr.mxu0 0.0
    %2016 = vmatpush1.msra.mxu0 0.0
    %2017 = vmatprep.subr.mxu0 0.0
    %2018 = vmatpush1.msra.mxu0 0.0
    %2019 = vmatprep.subr.mxu0 0.0
    %2020 = vmatpush1.msra.mxu0 0.0
    %2021 = vmatprep.subr.mxu0 0.0
    %2022 = vmatpush1.msra.mxu0 0.0
    %2023 = vmatprep.subr.mxu0 0.0
    %2024 = vmatpush1.msra.mxu0 0.0
    %2025 = vmatprep.subr.mxu0 0.0
    %2026 = vmatpush1.msra.mxu0 0.0
    %2027 = vmatprep.subr.mxu0 0.0
    %2028 = vmatpush1.msra.mxu0 0.0
    %2029 = vmatprep.subr.mxu0 0.0
    %2030 = vmatpush1.msra.mxu0 0.0
    %2031 = vmatprep.subr.mxu0 0.0
    %2032 = vmatpush1.msra.mxu0 0.0
    %2033 = vmatprep.subr.mxu0 0.0
    %2034 = vmatpush1.msra.mxu0 0.0
    %2035 = vmatprep.subr.mxu0 0.0
    %2036 = vmatpush1.msra.mxu0 0.0
    %2037 = vmatprep.subr.mxu0 0.0
    %2038 = vmatpush1.msra.mxu0 0.0
    %2039 = vmatprep.subr.mxu0 0.0
    %2040 = vmatpush1.msra.mxu0 0.0
    %2041 = vmatprep.mubr.f32.mxu0 0.0
    %2042 = vmatmul.mubr.f32.gmra.mrb[0].mxu0 %v1210
    %v2043 = vpop.f32.mrb[0].mxu0
    %v2044 = vadd.f32 0.0, %v2043
    %v2045 = vpop.f32.mrb[0].mxu0
    %2046 = vdwg.mxu0
    %v2047 = vxor.u32 %v2044, 2147483648
    %v2048 = vmul.f32 %v2047, 1.442695
    %v2049 = vpow.pop %v2048
    %v2050 = vadd.f32 %v2049, 1.0
    %v2051 = vrcp.pop %v2050
    %v2052 = vmul.f32 1.0, %v2051
    %2054 = vrot.lane.b32.xlu0 %v1122, 96
    %v2055 = vpop.permute.xlu0 %2054
    %2057 = vxpose.xlu0.b32.start [1/16] %v2055, 128
    %2058 = vxpose.xlu0.b32.cont [2/16] 0.0, 128
    %2059 = vxpose.xlu0.b32.cont [3/16] 0.0, 128
    %2060 = vxpose.xlu0.b32.cont [4/16] 0.0, 128
    %2061 = vxpose.xlu0.b32.cont [5/16] 0.0, 128
    %2062 = vxpose.xlu0.b32.cont [6/16] 0.0, 128
    %2063 = vxpose.xlu0.b32.cont [7/16] 0.0, 128
    %2064 = vxpose.xlu0.b32.cont [8/16] 0.0, 128
    %2065 = vxpose.xlu0.b32.cont [9/16] 0.0, 128
    %2066 = vxpose.xlu0.b32.cont [10/16] 0.0, 128
    %2067 = vxpose.xlu0.b32.cont [11/16] 0.0, 128
    %2068 = vxpose.xlu0.b32.cont [12/16] 0.0, 128
    %2069 = vxpose.xlu0.b32.cont [13/16] 0.0, 128
    %2070 = vxpose.xlu0.b32.cont [14/16] 0.0, 128
    %2071 = vxpose.xlu0.b32.cont [15/16] 0.0, 128
    %2072 = vxpose.xlu0.b32.end [16/16] 0.0, 128
    %v2073 = vpop.trf.xlu0
    %v2074 = vpop.trf.xlu0
    %v2075 = vpop.trf.xlu0
    %v2076 = vpop.trf.xlu0
    %v2077 = vpop.trf.xlu0
    %v2078 = vpop.trf.xlu0
    %v2079 = vpop.trf.xlu0
    %v2080 = vpop.trf.xlu0
    %v2081 = vpop.trf.xlu0
    %v2082 = vpop.trf.xlu0
    %v2083 = vpop.trf.xlu0
    %v2084 = vpop.trf.xlu0
    %v2085 = vpop.trf.xlu0
    %v2086 = vpop.trf.xlu0
    %v2087 = vpop.trf.xlu0
    %v2088 = vpop.trf.xlu0
    %v2090 = vsel %vm1398, %v2073, 0
    %v2093 = vsel %vm1398, %v2074, 0
    %v2096 = vsel %vm1398, %v2075, 0
    %v2099 = vsel %vm1398, %v2076, 0
    %2101 = vmatprep.subr.mxu0 0.0
    %2102 = vmatpush1.msra.mxu0 %v2052
    %2103 = vmatprep.subr.mxu0 0.0
    %2104 = vmatpush1.msra.mxu0 0.0
    %2105 = vmatprep.subr.mxu0 0.0
    %2106 = vmatpush1.msra.mxu0 0.0
    %2107 = vmatprep.subr.mxu0 0.0
    %2108 = vmatpush1.msra.mxu0 0.0
    %2109 = vmatprep.subr.mxu0 0.0
    %2110 = vmatpush1.msra.mxu0 0.0
    %2111 = vmatprep.subr.mxu0 0.0
    %2112 = vmatpush1.msra.mxu0 0.0
    %2113 = vmatprep.subr.mxu0 0.0
    %2114 = vmatpush1.msra.mxu0 0.0
    %2115 = vmatprep.subr.mxu0 0.0
    %2116 = vmatpush1.msra.mxu0 0.0
    %2117 = vmatprep.subr.mxu0 0.0
    %2118 = vmatpush1.msra.mxu0 0.0
    %2119 = vmatprep.subr.mxu0 0.0
    %2120 = vmatpush1.msra.mxu0 0.0
    %2121 = vmatprep.subr.mxu0 0.0
    %2122 = vmatpush1.msra.mxu0 0.0
    %2123 = vmatprep.subr.mxu0 0.0
    %2124 = vmatpush1.msra.mxu0 0.0
    %2125 = vmatprep.subr.mxu0 0.0
    %2126 = vmatpush1.msra.mxu0 0.0
    %2127 = vmatprep.subr.mxu0 0.0
    %2128 = vmatpush1.msra.mxu0 0.0
    %2129 = vmatprep.subr.mxu0 0.0
    %2130 = vmatpush1.msra.mxu0 0.0
    %2131 = vmatprep.subr.mxu0 0.0
    %2132 = vmatpush1.msra.mxu0 0.0
    %2133 = vmatprep.subr.mxu0 0.0
    %2134 = vmatpush1.msra.mxu0 0.0
    %2135 = vmatprep.subr.mxu0 0.0
    %2136 = vmatpush1.msra.mxu0 0.0
    %2137 = vmatprep.subr.mxu0 0.0
    %2138 = vmatpush1.msra.mxu0 0.0
    %2139 = vmatprep.subr.mxu0 0.0
    %2140 = vmatpush1.msra.mxu0 0.0
    %2141 = vmatprep.subr.mxu0 0.0
    %2142 = vmatpush1.msra.mxu0 0.0
    %2143 = vmatprep.subr.mxu0 0.0
    %2144 = vmatpush1.msra.mxu0 0.0
    %2145 = vmatprep.subr.mxu0 0.0
    %2146 = vmatpush1.msra.mxu0 0.0
    %2147 = vmatprep.subr.mxu0 0.0
    %2148 = vmatpush1.msra.mxu0 0.0
    %2149 = vmatprep.subr.mxu0 0.0
    %2150 = vmatpush1.msra.mxu0 0.0
    %2151 = vmatprep.subr.mxu0 0.0
    %2152 = vmatpush1.msra.mxu0 0.0
    %2153 = vmatprep.subr.mxu0 0.0
    %2154 = vmatpush1.msra.mxu0 0.0
    %2155 = vmatprep.subr.mxu0 0.0
    %2156 = vmatpush1.msra.mxu0 0.0
    %2157 = vmatprep.subr.mxu0 0.0
    %2158 = vmatpush1.msra.mxu0 0.0
    %2159 = vmatprep.subr.mxu0 0.0
    %2160 = vmatpush1.msra.mxu0 0.0
    %2161 = vmatprep.subr.mxu0 0.0
    %2162 = vmatpush1.msra.mxu0 0.0
    %2163 = vmatprep.subr.mxu0 0.0
    %2164 = vmatpush1.msra.mxu0 0.0
    %2165 = vmatprep.mubr.f32.mxu0 0.0
    %2166 = vmatmul.mubr.f32.gmra.mrb[0].mxu0 %v2090
    %v2167 = vpop.f32.mrb[0].mxu0
    %v2168 = vadd.f32 0.0, %v2167
    %v2169 = vpop.f32.mrb[0].mxu0
    %2170 = vmatprep.mubr.f32.mxu0 0.0
    %2171 = vmatmul.mubr.f32.gmra.mrb[0].mxu0 %v2093
    %v2172 = vpop.f32.mrb[0].mxu0
    %v2173 = vadd.f32 0.0, %v2172
    %v2174 = vpop.f32.mrb[0].mxu0
    %2175 = vmatprep.mubr.f32.mxu0 0.0
    %2176 = vmatmul.mubr.f32.gmra.mrb[0].mxu0 %v2096
    %v2177 = vpop.f32.mrb[0].mxu0
    %v2178 = vadd.f32 0.0, %v2177
    %v2179 = vpop.f32.mrb[0].mxu0
    %2180 = vmatprep.mubr.f32.mxu0 0.0
    %2181 = vmatmul.mubr.f32.gmra.mrb[0].mxu0 %v2099
    %v2182 = vpop.f32.mrb[0].mxu0
    %v2183 = vadd.f32 0.0, %v2182
    %v2184 = vpop.f32.mrb[0].mxu0
    %2185 = vdwg.mxu0
    %2188 = vrot.lane.b32.xlu0 %v2168, 16
    %v2189 = vpop.permute.xlu0 %2188
    %2190 = vrot.lane.b32.xlu0 %v2173, 16
    %v2191 = vpop.permute.xlu0 %2190
    %v2194 = vmul.f32 %v1961, %v2189
    %v2195 = vmul.f32 %v1962, %v2191
    %2198 = vrot.lane.b32.xlu0 %v2178, 16
    %v2199 = vpop.permute.xlu0 %2198
    %2200 = vrot.lane.b32.xlu0 %v2183, 16
    %v2201 = vpop.permute.xlu0 %2200
    %v2204 = vadd.f32 %v2194, %v2199
    %v2205 = vadd.f32 %v2195, %v2201
    %v2206 = vmax.f32 %v2204, 0.0
    %v2207 = vmax.f32 %v2205, 0.0
    %2209 = vrot.lane.b32.xlu0 %v2044, 16
    %v2210 = vpop.permute.xlu0 %2209
    %v2212 = vsel %vm1127, %v1819, %v2210
    %s2213 = scalar_lea.vmem %s9, 16
    %2214 = vst.msk [vmem:[%s2213] sm:$0xff] %vm183, %v2212
    %v2215 = vsel %vm1127, %v1967, %v2206
    %v2216 = vsel %vm1127, %v1968, %v2207
    %s2217 = scalar_lea.vmem [#allocation3], 16
    %2218 = vst.msk [vmem:[%s2217] sm:$0xff] %vm183, %v2215
    %2219 = vst.msk [vmem:[%s2217 + $0x8] sm:$0xff] %vm183, %v2216
    %v2220 = vld [vmem:[#allocation2 + $0x50] sm:$0xff]
    %v2221 = vld [vmem:[#allocation2 + $0x58] sm:$0xff]
    %2222 = vmatprep.subr.mxu0 0.0
    %2223 = vmatpush1.msra.mxu0 %v2220
    %2224 = vmatprep.subr.mxu0 0.0
    %2225 = vmatpush1.msra.mxu0 %v2221
    %2226 = vmatprep.subr.mxu0 0.0
    %2227 = vmatpush1.msra.mxu0 0.0
    %2228 = vmatprep.subr.mxu0 0.0
    %2229 = vmatpush1.msra.mxu0 0.0
    %2230 = vmatprep.subr.mxu0 0.0
    %2231 = vmatpush1.msra.mxu0 0.0
    %2232 = vmatprep.subr.mxu0 0.0
    %2233 = vmatpush1.msra.mxu0 0.0
    %2234 = vmatprep.subr.mxu0 0.0
    %2235 = vmatpush1.msra.mxu0 0.0
    %2236 = vmatprep.subr.mxu0 0.0
    %2237 = vmatpush1.msra.mxu0 0.0
    %2238 = vmatprep.subr.mxu0 0.0
    %2239 = vmatpush1.msra.mxu0 0.0
    %2240 = vmatprep.subr.mxu0 0.0
    %2241 = vmatpush1.msra.mxu0 0.0
    %2242 = vmatprep.subr.mxu0 0.0
    %2243 = vmatpush1.msra.mxu0 0.0
    %2244 = vmatprep.subr.mxu0 0.0
    %2245 = vmatpush1.msra.mxu0 0.0
    %2246 = vmatprep.subr.mxu0 0.0
    %2247 = vmatpush1.msra.mxu0 0.0
    %2248 = vmatprep.subr.mxu0 0.0
    %2249 = vmatpush1.msra.mxu0 0.0
    %2250 = vmatprep.subr.mxu0 0.0
    %2251 = vmatpush1.msra.mxu0 0.0
    %2252 = vmatprep.subr.mxu0 0.0
    %2253 = vmatpush1.msra.mxu0 0.0
    %2254 = vmatprep.subr.mxu0 0.0
    %2255 = vmatpush1.msra.mxu0 0.0
    %2256 = vmatprep.subr.mxu0 0.0
    %2257 = vmatpush1.msra.mxu0 0.0
    %2258 = vmatprep.subr.mxu0 0.0
    %2259 = vmatpush1.msra.mxu0 0.0
    %2260 = vmatprep.subr.mxu0 0.0
    %2261 = vmatpush1.msra.mxu0 0.0
    %2262 = vmatprep.subr.mxu0 0.0
    %2263 = vmatpush1.msra.mxu0 0.0
    %2264 = vmatprep.subr.mxu0 0.0
    %2265 = vmatpush1.msra.mxu0 0.0
    %2266 = vmatprep.subr.mxu0 0.0
    %2267 = vmatpush1.msra.mxu0 0.0
    %2268 = vmatprep.subr.mxu0 0.0
    %2269 = vmatpush1.msra.mxu0 0.0
    %2270 = vmatprep.subr.mxu0 0.0
    %2271 = vmatpush1.msra.mxu0 0.0
    %2272 = vmatprep.subr.mxu0 0.0
    %2273 = vmatpush1.msra.mxu0 0.0
    %2274 = vmatprep.subr.mxu0 0.0
    %2275 = vmatpush1.msra.mxu0 0.0
    %2276 = vmatprep.subr.mxu0 0.0
    %2277 = vmatpush1.msra.mxu0 0.0
    %2278 = vmatprep.subr.mxu0 0.0
    %2279 = vmatpush1.msra.mxu0 0.0
    %2280 = vmatprep.subr.mxu0 0.0
    %2281 = vmatpush1.msra.mxu0 0.0
    %2282 = vmatprep.subr.mxu0 0.0
    %2283 = vmatpush1.msra.mxu0 0.0
    %2284 = vmatprep.subr.mxu0 0.0
    %2285 = vmatpush1.msra.mxu0 0.0
    %2286 = vmatprep.mubr.f32.mxu0 0.0
    %2287 = vmatmul.mubr.f32.gmra.mrb[0].mxu0 %v1129
    %v2288 = vpop.f32.mrb[0].mxu0
    %v2289 = vadd.f32 0.0, %v2288
    %v2290 = vpop.f32.mrb[0].mxu0
    %2291 = vdwg.mxu0
    %v2292 = vxor.u32 %v2289, 2147483648
    %v2293 = vmul.f32 %v2292, 1.442695
    %v2294 = vpow.pop %v2293
    %v2295 = vadd.f32 %v2294, 1.0
    %v2296 = vrcp.pop %v2295
    %v2297 = vmul.f32 1.0, %v2296
    %2298 = vrot.lane.b32.xlu0 %v1121, 64
    %v2299 = vpop.permute.xlu0 %2298
    %2301 = vxpose.xlu0.b32.start [1/16] %v2299, 128
    %2302 = vxpose.xlu0.b32.cont [2/16] 0.0, 128
    %2303 = vxpose.xlu0.b32.cont [3/16] 0.0, 128
    %2304 = vxpose.xlu0.b32.cont [4/16] 0.0, 128
    %2305 = vxpose.xlu0.b32.cont [5/16] 0.0, 128
    %2306 = vxpose.xlu0.b32.cont [6/16] 0.0, 128
    %2307 = vxpose.xlu0.b32.cont [7/16] 0.0, 128
    %2308 = vxpose.xlu0.b32.cont [8/16] 0.0, 128
    %2309 = vxpose.xlu0.b32.cont [9/16] 0.0, 128
    %2310 = vxpose.xlu0.b32.cont [10/16] 0.0, 128
    %2311 = vxpose.xlu0.b32.cont [11/16] 0.0, 128
    %2312 = vxpose.xlu0.b32.cont [12/16] 0.0, 128
    %2313 = vxpose.xlu0.b32.cont [13/16] 0.0, 128
    %2314 = vxpose.xlu0.b32.cont [14/16] 0.0, 128
    %2315 = vxpose.xlu0.b32.cont [15/16] 0.0, 128
    %2316 = vxpose.xlu0.b32.end [16/16] 0.0, 128
    %v2317 = vpop.trf.xlu0
    %v2318 = vpop.trf.xlu0
    %v2319 = vpop.trf.xlu0
    %v2320 = vpop.trf.xlu0
    %v2321 = vpop.trf.xlu0
    %v2322 = vpop.trf.xlu0
    %v2323 = vpop.trf.xlu0
    %v2324 = vpop.trf.xlu0
    %v2325 = vpop.trf.xlu0
    %v2326 = vpop.trf.xlu0
    %v2327 = vpop.trf.xlu0
    %v2328 = vpop.trf.xlu0
    %v2329 = vpop.trf.xlu0
    %v2330 = vpop.trf.xlu0
    %v2331 = vpop.trf.xlu0
    %v2332 = vpop.trf.xlu0
    %v2334 = vsel %vm1398, %v2317, 0
    %v2337 = vsel %vm1398, %v2318, 0
    %v2340 = vsel %vm1398, %v2319, 0
    %v2343 = vsel %vm1398, %v2320, 0
    %2345 = vmatprep.subr.mxu0 0.0
    %2346 = vmatpush1.msra.mxu0 %v2297
    %2347 = vmatprep.subr.mxu0 0.0
    %2348 = vmatpush1.msra.mxu0 0.0
    %2349 = vmatprep.subr.mxu0 0.0
    %2350 = vmatpush1.msra.mxu0 0.0
    %2351 = vmatprep.subr.mxu0 0.0
    %2352 = vmatpush1.msra.mxu0 0.0
    %2353 = vmatprep.subr.mxu0 0.0
    %2354 = vmatpush1.msra.mxu0 0.0
    %2355 = vmatprep.subr.mxu0 0.0
    %2356 = vmatpush1.msra.mxu0 0.0
    %2357 = vmatprep.subr.mxu0 0.0
    %2358 = vmatpush1.msra.mxu0 0.0
    %2359 = vmatprep.subr.mxu0 0.0
    %2360 = vmatpush1.msra.mxu0 0.0
    %2361 = vmatprep.subr.mxu0 0.0
    %2362 = vmatpush1.msra.mxu0 0.0
    %2363 = vmatprep.subr.mxu0 0.0
    %2364 = vmatpush1.msra.mxu0 0.0
    %2365 = vmatprep.subr.mxu0 0.0
    %2366 = vmatpush1.msra.mxu0 0.0
    %2367 = vmatprep.subr.mxu0 0.0
    %2368 = vmatpush1.msra.mxu0 0.0
    %2369 = vmatprep.subr.mxu0 0.0
    %2370 = vmatpush1.msra.mxu0 0.0
    %2371 = vmatprep.subr.mxu0 0.0
    %2372 = vmatpush1.msra.mxu0 0.0
    %2373 = vmatprep.subr.mxu0 0.0
    %2374 = vmatpush1.msra.mxu0 0.0
    %2375 = vmatprep.subr.mxu0 0.0
    %2376 = vmatpush1.msra.mxu0 0.0
    %2377 = vmatprep.subr.mxu0 0.0
    %2378 = vmatpush1.msra.mxu0 0.0
    %2379 = vmatprep.subr.mxu0 0.0
    %2380 = vmatpush1.msra.mxu0 0.0
    %2381 = vmatprep.subr.mxu0 0.0
    %2382 = vmatpush1.msra.mxu0 0.0
    %2383 = vmatprep.subr.mxu0 0.0
    %2384 = vmatpush1.msra.mxu0 0.0
    %2385 = vmatprep.subr.mxu0 0.0
    %2386 = vmatpush1.msra.mxu0 0.0
    %2387 = vmatprep.subr.mxu0 0.0
    %2388 = vmatpush1.msra.mxu0 0.0
    %2389 = vmatprep.subr.mxu0 0.0
    %2390 = vmatpush1.msra.mxu0 0.0
    %2391 = vmatprep.subr.mxu0 0.0
    %2392 = vmatpush1.msra.mxu0 0.0
    %2393 = vmatprep.subr.mxu0 0.0
    %2394 = vmatpush1.msra.mxu0 0.0
    %2395 = vmatprep.subr.mxu0 0.0
    %2396 = vmatpush1.msra.mxu0 0.0
    %2397 = vmatprep.subr.mxu0 0.0
    %2398 = vmatpush1.msra.mxu0 0.0
    %2399 = vmatprep.subr.mxu0 0.0
    %2400 = vmatpush1.msra.mxu0 0.0
    %2401 = vmatprep.subr.mxu0 0.0
    %2402 = vmatpush1.msra.mxu0 0.0
    %2403 = vmatprep.subr.mxu0 0.0
    %2404 = vmatpush1.msra.mxu0 0.0
    %2405 = vmatprep.subr.mxu0 0.0
    %2406 = vmatpush1.msra.mxu0 0.0
    %2407 = vmatprep.subr.mxu0 0.0
    %2408 = vmatpush1.msra.mxu0 0.0
    %2409 = vmatprep.mubr.f32.mxu0 0.0
    %2410 = vmatmul.mubr.f32.gmra.mrb[0].mxu0 %v2334
    %v2411 = vpop.f32.mrb[0].mxu0
    %v2412 = vadd.f32 0.0, %v2411
    %v2413 = vpop.f32.mrb[0].mxu0
    %2414 = vmatprep.mubr.f32.mxu0 0.0
    %2415 = vmatmul.mubr.f32.gmra.mrb[0].mxu0 %v2337
    %v2416 = vpop.f32.mrb[0].mxu0
    %v2417 = vadd.f32 0.0, %v2416
    %v2418 = vpop.f32.mrb[0].mxu0
    %2419 = vmatprep.mubr.f32.mxu0 0.0
    %2420 = vmatmul.mubr.f32.gmra.mrb[0].mxu0 %v2340
    %v2421 = vpop.f32.mrb[0].mxu0
    %v2422 = vadd.f32 0.0, %v2421
    %v2423 = vpop.f32.mrb[0].mxu0
    %2424 = vmatprep.mubr.f32.mxu0 0.0
    %2425 = vmatmul.mubr.f32.gmra.mrb[0].mxu0 %v2343
    %v2426 = vpop.f32.mrb[0].mxu0
    %v2427 = vadd.f32 0.0, %v2426
    %v2428 = vpop.f32.mrb[0].mxu0
    %2429 = vdwg.mxu0
    %v2430 = vld [vmem:[#allocation2 + $0x60] sm:$0xff]
    %v2431 = vld [vmem:[#allocation2 + $0x68] sm:$0xff]
    %v2432 = vmul.f32 %v2430, %v2412
    %v2433 = vmul.f32 %v2431, %v2417
    %v2434 = vadd.f32 %v2432, %v2422
    %v2435 = vadd.f32 %v2433, %v2427
    %v2436 = vmax.f32 %v2434, 0.0
    %v2437 = vmax.f32 %v2435, 0.0
    %2440 = vrot.lane.b32.xlu0 %v2220, 112
    %v2441 = vpop.permute.xlu0 %2440
    %2442 = vrot.lane.b32.xlu0 %v2221, 112
    %v2443 = vpop.permute.xlu0 %2442
    %2446 = vmatprep.subr.mxu0 0.0
    %2447 = vmatpush1.msra.mxu0 %v2441
    %2448 = vmatprep.subr.mxu0 0.0
    %2449 = vmatpush1.msra.mxu0 %v2443
    %2450 = vmatprep.subr.mxu0 0.0
    %2451 = vmatpush1.msra.mxu0 0.0
    %2452 = vmatprep.subr.mxu0 0.0
    %2453 = vmatpush1.msra.mxu0 0.0
    %2454 = vmatprep.subr.mxu0 0.0
    %2455 = vmatpush1.msra.mxu0 0.0
    %2456 = vmatprep.subr.mxu0 0.0
    %2457 = vmatpush1.msra.mxu0 0.0
    %2458 = vmatprep.subr.mxu0 0.0
    %2459 = vmatpush1.msra.mxu0 0.0
    %2460 = vmatprep.subr.mxu0 0.0
    %2461 = vmatpush1.msra.mxu0 0.0
    %2462 = vmatprep.subr.mxu0 0.0
    %2463 = vmatpush1.msra.mxu0 0.0
    %2464 = vmatprep.subr.mxu0 0.0
    %2465 = vmatpush1.msra.mxu0 0.0
    %2466 = vmatprep.subr.mxu0 0.0
    %2467 = vmatpush1.msra.mxu0 0.0
    %2468 = vmatprep.subr.mxu0 0.0
    %2469 = vmatpush1.msra.mxu0 0.0
    %2470 = vmatprep.subr.mxu0 0.0
    %2471 = vmatpush1.msra.mxu0 0.0
    %2472 = vmatprep.subr.mxu0 0.0
    %2473 = vmatpush1.msra.mxu0 0.0
    %2474 = vmatprep.subr.mxu0 0.0
    %2475 = vmatpush1.msra.mxu0 0.0
    %2476 = vmatprep.subr.mxu0 0.0
    %2477 = vmatpush1.msra.mxu0 0.0
    %2478 = vmatprep.subr.mxu0 0.0
    %2479 = vmatpush1.msra.mxu0 0.0
    %2480 = vmatprep.subr.mxu0 0.0
    %2481 = vmatpush1.msra.mxu0 0.0
    %2482 = vmatprep.subr.mxu0 0.0
    %2483 = vmatpush1.msra.mxu0 0.0
    %2484 = vmatprep.subr.mxu0 0.0
    %2485 = vmatpush1.msra.mxu0 0.0
    %2486 = vmatprep.subr.mxu0 0.0
    %2487 = vmatpush1.msra.mxu0 0.0
    %2488 = vmatprep.subr.mxu0 0.0
    %2489 = vmatpush1.msra.mxu0 0.0
    %2490 = vmatprep.subr.mxu0 0.0
    %2491 = vmatpush1.msra.mxu0 0.0
    %2492 = vmatprep.subr.mxu0 0.0
    %2493 = vmatpush1.msra.mxu0 0.0
    %2494 = vmatprep.subr.mxu0 0.0
    %2495 = vmatpush1.msra.mxu0 0.0
    %2496 = vmatprep.subr.mxu0 0.0
    %2497 = vmatpush1.msra.mxu0 0.0
    %2498 = vmatprep.subr.mxu0 0.0
    %2499 = vmatpush1.msra.mxu0 0.0
    %2500 = vmatprep.subr.mxu0 0.0
    %2501 = vmatpush1.msra.mxu0 0.0
    %2502 = vmatprep.subr.mxu0 0.0
    %2503 = vmatpush1.msra.mxu0 0.0
    %2504 = vmatprep.subr.mxu0 0.0
    %2505 = vmatpush1.msra.mxu0 0.0
    %2506 = vmatprep.subr.mxu0 0.0
    %2507 = vmatpush1.msra.mxu0 0.0
    %2508 = vmatprep.subr.mxu0 0.0
    %2509 = vmatpush1.msra.mxu0 0.0
    %2510 = vmatprep.mubr.f32.mxu0 0.0
    %2511 = vmatmul.mubr.f32.gmra.mrb[0].mxu0 %v1210
    %v2512 = vpop.f32.mrb[0].mxu0
    %v2513 = vadd.f32 0.0, %v2512
    %v2514 = vpop.f32.mrb[0].mxu0
    %2515 = vdwg.mxu0
    %v2516 = vxor.u32 %v2513, 2147483648
    %v2517 = vmul.f32 %v2516, 1.442695
    %v2518 = vpow.pop %v2517
    %v2519 = vadd.f32 %v2518, 1.0
    %v2520 = vrcp.pop %v2519
    %v2521 = vmul.f32 1.0, %v2520
    %2522 = vrot.lane.b32.xlu0 %v1122, 64
    %v2523 = vpop.permute.xlu0 %2522
    %2525 = vxpose.xlu0.b32.start [1/16] %v2523, 128
    %2526 = vxpose.xlu0.b32.cont [2/16] 0.0, 128
    %2527 = vxpose.xlu0.b32.cont [3/16] 0.0, 128
    %2528 = vxpose.xlu0.b32.cont [4/16] 0.0, 128
    %2529 = vxpose.xlu0.b32.cont [5/16] 0.0, 128
    %2530 = vxpose.xlu0.b32.cont [6/16] 0.0, 128
    %2531 = vxpose.xlu0.b32.cont [7/16] 0.0, 128
    %2532 = vxpose.xlu0.b32.cont [8/16] 0.0, 128
    %2533 = vxpose.xlu0.b32.cont [9/16] 0.0, 128
    %2534 = vxpose.xlu0.b32.cont [10/16] 0.0, 128
    %2535 = vxpose.xlu0.b32.cont [11/16] 0.0, 128
    %2536 = vxpose.xlu0.b32.cont [12/16] 0.0, 128
    %2537 = vxpose.xlu0.b32.cont [13/16] 0.0, 128
    %2538 = vxpose.xlu0.b32.cont [14/16] 0.0, 128
    %2539 = vxpose.xlu0.b32.cont [15/16] 0.0, 128
    %2540 = vxpose.xlu0.b32.end [16/16] 0.0, 128
    %v2541 = vpop.trf.xlu0
    %v2542 = vpop.trf.xlu0
    %v2543 = vpop.trf.xlu0
    %v2544 = vpop.trf.xlu0
    %v2545 = vpop.trf.xlu0
    %v2546 = vpop.trf.xlu0
    %v2547 = vpop.trf.xlu0
    %v2548 = vpop.trf.xlu0
    %v2549 = vpop.trf.xlu0
    %v2550 = vpop.trf.xlu0
    %v2551 = vpop.trf.xlu0
    %v2552 = vpop.trf.xlu0
    %v2553 = vpop.trf.xlu0
    %v2554 = vpop.trf.xlu0
    %v2555 = vpop.trf.xlu0
    %v2556 = vpop.trf.xlu0
    %v2558 = vsel %vm1398, %v2541, 0
    %v2561 = vsel %vm1398, %v2542, 0
    %v2564 = vsel %vm1398, %v2543, 0
    %v2567 = vsel %vm1398, %v2544, 0
    %2569 = vmatprep.subr.mxu0 0.0
    %2570 = vmatpush1.msra.mxu0 %v2521
    %2571 = vmatprep.subr.mxu0 0.0
    %2572 = vmatpush1.msra.mxu0 0.0
    %2573 = vmatprep.subr.mxu0 0.0
    %2574 = vmatpush1.msra.mxu0 0.0
    %2575 = vmatprep.subr.mxu0 0.0
    %2576 = vmatpush1.msra.mxu0 0.0
    %2577 = vmatprep.subr.mxu0 0.0
    %2578 = vmatpush1.msra.mxu0 0.0
    %2579 = vmatprep.subr.mxu0 0.0
    %2580 = vmatpush1.msra.mxu0 0.0
    %2581 = vmatprep.subr.mxu0 0.0
    %2582 = vmatpush1.msra.mxu0 0.0
    %2583 = vmatprep.subr.mxu0 0.0
    %2584 = vmatpush1.msra.mxu0 0.0
    %2585 = vmatprep.subr.mxu0 0.0
    %2586 = vmatpush1.msra.mxu0 0.0
    %2587 = vmatprep.subr.mxu0 0.0
    %2588 = vmatpush1.msra.mxu0 0.0
    %2589 = vmatprep.subr.mxu0 0.0
    %2590 = vmatpush1.msra.mxu0 0.0
    %2591 = vmatprep.subr.mxu0 0.0
    %2592 = vmatpush1.msra.mxu0 0.0
    %2593 = vmatprep.subr.mxu0 0.0
    %2594 = vmatpush1.msra.mxu0 0.0
    %2595 = vmatprep.subr.mxu0 0.0
    %2596 = vmatpush1.msra.mxu0 0.0
    %2597 = vmatprep.subr.mxu0 0.0
    %2598 = vmatpush1.msra.mxu0 0.0
    %2599 = vmatprep.subr.mxu0 0.0
    %2600 = vmatpush1.msra.mxu0 0.0
    %2601 = vmatprep.subr.mxu0 0.0
    %2602 = vmatpush1.msra.mxu0 0.0
    %2603 = vmatprep.subr.mxu0 0.0
    %2604 = vmatpush1.msra.mxu0 0.0
    %2605 = vmatprep.subr.mxu0 0.0
    %2606 = vmatpush1.msra.mxu0 0.0
    %2607 = vmatprep.subr.mxu0 0.0
    %2608 = vmatpush1.msra.mxu0 0.0
    %2609 = vmatprep.subr.mxu0 0.0
    %2610 = vmatpush1.msra.mxu0 0.0
    %2611 = vmatprep.subr.mxu0 0.0
    %2612 = vmatpush1.msra.mxu0 0.0
    %2613 = vmatprep.subr.mxu0 0.0
    %2614 = vmatpush1.msra.mxu0 0.0
    %2615 = vmatprep.subr.mxu0 0.0
    %2616 = vmatpush1.msra.mxu0 0.0
    %2617 = vmatprep.subr.mxu0 0.0
    %2618 = vmatpush1.msra.mxu0 0.0
    %2619 = vmatprep.subr.mxu0 0.0
    %2620 = vmatpush1.msra.mxu0 0.0
    %2621 = vmatprep.subr.mxu0 0.0
    %2622 = vmatpush1.msra.mxu0 0.0
    %2623 = vmatprep.subr.mxu0 0.0
    %2624 = vmatpush1.msra.mxu0 0.0
    %2625 = vmatprep.subr.mxu0 0.0
    %2626 = vmatpush1.msra.mxu0 0.0
    %2627 = vmatprep.subr.mxu0 0.0
    %2628 = vmatpush1.msra.mxu0 0.0
    %2629 = vmatprep.subr.mxu0 0.0
    %2630 = vmatpush1.msra.mxu0 0.0
    %2631 = vmatprep.subr.mxu0 0.0
    %2632 = vmatpush1.msra.mxu0 0.0
    %2633 = vmatprep.mubr.f32.mxu0 0.0
    %2634 = vmatmul.mubr.f32.gmra.mrb[0].mxu0 %v2558
    %v2635 = vpop.f32.mrb[0].mxu0
    %v2636 = vadd.f32 0.0, %v2635
    %v2637 = vpop.f32.mrb[0].mxu0
    %2638 = vmatprep.mubr.f32.mxu0 0.0
    %2639 = vmatmul.mubr.f32.gmra.mrb[0].mxu0 %v2561
    %v2640 = vpop.f32.mrb[0].mxu0
    %v2641 = vadd.f32 0.0, %v2640
    %v2642 = vpop.f32.mrb[0].mxu0
    %2643 = vmatprep.mubr.f32.mxu0 0.0
    %2644 = vmatmul.mubr.f32.gmra.mrb[0].mxu0 %v2564
    %v2645 = vpop.f32.mrb[0].mxu0
    %v2646 = vadd.f32 0.0, %v2645
    %v2647 = vpop.f32.mrb[0].mxu0
    %2648 = vmatprep.mubr.f32.mxu0 0.0
    %2649 = vmatmul.mubr.f32.gmra.mrb[0].mxu0 %v2567
    %v2650 = vpop.f32.mrb[0].mxu0
    %v2651 = vadd.f32 0.0, %v2650
    %v2652 = vpop.f32.mrb[0].mxu0
    %2653 = vdwg.mxu0
    %2656 = vrot.lane.b32.xlu0 %v2636, 16
    %v2657 = vpop.permute.xlu0 %2656
    %2658 = vrot.lane.b32.xlu0 %v2641, 16
    %v2659 = vpop.permute.xlu0 %2658
    %v2662 = vmul.f32 %v2430, %v2657
    %v2663 = vmul.f32 %v2431, %v2659
    %2666 = vrot.lane.b32.xlu0 %v2646, 16
    %v2667 = vpop.permute.xlu0 %2666
    %2668 = vrot.lane.b32.xlu0 %v2651, 16
    %v2669 = vpop.permute.xlu0 %2668
    %v2672 = vadd.f32 %v2662, %v2667
    %v2673 = vadd.f32 %v2663, %v2669
    %v2674 = vmax.f32 %v2672, 0.0
    %v2675 = vmax.f32 %v2673, 0.0
    %2677 = vrot.lane.b32.xlu0 %v2513, 16
    %v2678 = vpop.permute.xlu0 %2677
    %v2680 = vsel %vm1127, %v2289, %v2678
    %s2681 = scalar_lea.vmem %s9, 24
    %2682 = vst.msk [vmem:[%s2681] sm:$0xff] %vm183, %v2680
    %v2683 = vsel %vm1127, %v2436, %v2674
    %v2684 = vsel %vm1127, %v2437, %v2675
    %s2685 = scalar_lea.vmem [#allocation3], 32
    %2686 = vst.msk [vmem:[%s2685] sm:$0xff] %vm183, %v2683
    %2687 = vst.msk [vmem:[%s2685 + $0x8] sm:$0xff] %vm183, %v2684
    %v2688 = vld [vmem:[#allocation2 + $0x70] sm:$0xff]
    %v2689 = vld [vmem:[#allocation2 + $0x78] sm:$0xff]
    %2690 = vmatprep.subr.mxu0 0.0
    %2691 = vmatpush1.msra.mxu0 %v2688
    %2692 = vmatprep.subr.mxu0 0.0
    %2693 = vmatpush1.msra.mxu0 %v2689
    %2694 = vmatprep.subr.mxu0 0.0
    %2695 = vmatpush1.msra.mxu0 0.0
    %2696 = vmatprep.subr.mxu0 0.0
    %2697 = vmatpush1.msra.mxu0 0.0
    %2698 = vmatprep.subr.mxu0 0.0
    %2699 = vmatpush1.msra.mxu0 0.0
    %2700 = vmatprep.subr.mxu0 0.0
    %2701 = vmatpush1.msra.mxu0 0.0
    %2702 = vmatprep.subr.mxu0 0.0
    %2703 = vmatpush1.msra.mxu0 0.0
    %2704 = vmatprep.subr.mxu0 0.0
    %2705 = vmatpush1.msra.mxu0 0.0
    %2706 = vmatprep.subr.mxu0 0.0
    %2707 = vmatpush1.msra.mxu0 0.0
    %2708 = vmatprep.subr.mxu0 0.0
    %2709 = vmatpush1.msra.mxu0 0.0
    %2710 = vmatprep.subr.mxu0 0.0
    %2711 = vmatpush1.msra.mxu0 0.0
    %2712 = vmatprep.subr.mxu0 0.0
    %2713 = vmatpush1.msra.mxu0 0.0
    %2714 = vmatprep.subr.mxu0 0.0
    %2715 = vmatpush1.msra.mxu0 0.0
    %2716 = vmatprep.subr.mxu0 0.0
    %2717 = vmatpush1.msra.mxu0 0.0
    %2718 = vmatprep.subr.mxu0 0.0
    %2719 = vmatpush1.msra.mxu0 0.0
    %2720 = vmatprep.subr.mxu0 0.0
    %2721 = vmatpush1.msra.mxu0 0.0
    %2722 = vmatprep.subr.mxu0 0.0
    %2723 = vmatpush1.msra.mxu0 0.0
    %2724 = vmatprep.subr.mxu0 0.0
    %2725 = vmatpush1.msra.mxu0 0.0
    %2726 = vmatprep.subr.mxu0 0.0
    %2727 = vmatpush1.msra.mxu0 0.0
    %2728 = vmatprep.subr.mxu0 0.0
    %2729 = vmatpush1.msra.mxu0 0.0
    %2730 = vmatprep.subr.mxu0 0.0
    %2731 = vmatpush1.msra.mxu0 0.0
    %2732 = vmatprep.subr.mxu0 0.0
    %2733 = vmatpush1.msra.mxu0 0.0
    %2734 = vmatprep.subr.mxu0 0.0
    %2735 = vmatpush1.msra.mxu0 0.0
    %2736 = vmatprep.subr.mxu0 0.0
    %2737 = vmatpush1.msra.mxu0 0.0
    %2738 = vmatprep.subr.mxu0 0.0
    %2739 = vmatpush1.msra.mxu0 0.0
    %2740 = vmatprep.subr.mxu0 0.0
    %2741 = vmatpush1.msra.mxu0 0.0
    %2742 = vmatprep.subr.mxu0 0.0
    %2743 = vmatpush1.msra.mxu0 0.0
    %2744 = vmatprep.subr.mxu0 0.0
    %2745 = vmatpush1.msra.mxu0 0.0
    %2746 = vmatprep.subr.mxu0 0.0
    %2747 = vmatpush1.msra.mxu0 0.0
    %2748 = vmatprep.subr.mxu0 0.0
    %2749 = vmatpush1.msra.mxu0 0.0
    %2750 = vmatprep.subr.mxu0 0.0
    %2751 = vmatpush1.msra.mxu0 0.0
    %2752 = vmatprep.subr.mxu0 0.0
    %2753 = vmatpush1.msra.mxu0 0.0
    %2754 = vmatprep.mubr.f32.mxu0 0.0
    %2755 = vmatmul.mubr.f32.gmra.mrb[0].mxu0 %v1129
    %v2756 = vpop.f32.mrb[0].mxu0
    %v2757 = vadd.f32 0.0, %v2756
    %v2758 = vpop.f32.mrb[0].mxu0
    %2759 = vdwg.mxu0
    %2762 = vrot.lane.b32.xlu0 %v2688, 112
    %v2763 = vpop.permute.xlu0 %2762
    %2764 = vrot.lane.b32.xlu0 %v2689, 112
    %v2765 = vpop.permute.xlu0 %2764
    %2768 = vmatprep.subr.mxu0 0.0
    %2769 = vmatpush1.msra.mxu0 %v2763
    %2770 = vmatprep.subr.mxu0 0.0
    %2771 = vmatpush1.msra.mxu0 %v2765
    %2772 = vmatprep.subr.mxu0 0.0
    %2773 = vmatpush1.msra.mxu0 0.0
    %2774 = vmatprep.subr.mxu0 0.0
    %2775 = vmatpush1.msra.mxu0 0.0
    %2776 = vmatprep.subr.mxu0 0.0
    %2777 = vmatpush1.msra.mxu0 0.0
    %2778 = vmatprep.subr.mxu0 0.0
    %2779 = vmatpush1.msra.mxu0 0.0
    %2780 = vmatprep.subr.mxu0 0.0
    %2781 = vmatpush1.msra.mxu0 0.0
    %2782 = vmatprep.subr.mxu0 0.0
    %2783 = vmatpush1.msra.mxu0 0.0
    %2784 = vmatprep.subr.mxu0 0.0
    %2785 = vmatpush1.msra.mxu0 0.0
    %2786 = vmatprep.subr.mxu0 0.0
    %2787 = vmatpush1.msra.mxu0 0.0
    %2788 = vmatprep.subr.mxu0 0.0
    %2789 = vmatpush1.msra.mxu0 0.0
    %2790 = vmatprep.subr.mxu0 0.0
    %2791 = vmatpush1.msra.mxu0 0.0
    %2792 = vmatprep.subr.mxu0 0.0
    %2793 = vmatpush1.msra.mxu0 0.0
    %2794 = vmatprep.subr.mxu0 0.0
    %2795 = vmatpush1.msra.mxu0 0.0
    %2796 = vmatprep.subr.mxu0 0.0
    %2797 = vmatpush1.msra.mxu0 0.0
    %2798 = vmatprep.subr.mxu0 0.0
    %2799 = vmatpush1.msra.mxu0 0.0
    %2800 = vmatprep.subr.mxu0 0.0
    %2801 = vmatpush1.msra.mxu0 0.0
    %2802 = vmatprep.subr.mxu0 0.0
    %2803 = vmatpush1.msra.mxu0 0.0
    %2804 = vmatprep.subr.mxu0 0.0
    %2805 = vmatpush1.msra.mxu0 0.0
    %2806 = vmatprep.subr.mxu0 0.0
    %2807 = vmatpush1.msra.mxu0 0.0
    %2808 = vmatprep.subr.mxu0 0.0
    %2809 = vmatpush1.msra.mxu0 0.0
    %2810 = vmatprep.subr.mxu0 0.0
    %2811 = vmatpush1.msra.mxu0 0.0
    %2812 = vmatprep.subr.mxu0 0.0
    %2813 = vmatpush1.msra.mxu0 0.0
    %2814 = vmatprep.subr.mxu0 0.0
    %2815 = vmatpush1.msra.mxu0 0.0
    %2816 = vmatprep.subr.mxu0 0.0
    %2817 = vmatpush1.msra.mxu0 0.0
    %2818 = vmatprep.subr.mxu0 0.0
    %2819 = vmatpush1.msra.mxu0 0.0
    %2820 = vmatprep.subr.mxu0 0.0
    %2821 = vmatpush1.msra.mxu0 0.0
    %2822 = vmatprep.subr.mxu0 0.0
    %2823 = vmatpush1.msra.mxu0 0.0
    %2824 = vmatprep.subr.mxu0 0.0
    %2825 = vmatpush1.msra.mxu0 0.0
    %2826 = vmatprep.subr.mxu0 0.0
    %2827 = vmatpush1.msra.mxu0 0.0
    %2828 = vmatprep.subr.mxu0 0.0
    %2829 = vmatpush1.msra.mxu0 0.0
    %2830 = vmatprep.subr.mxu0 0.0
    %2831 = vmatpush1.msra.mxu0 0.0
    %2832 = vmatprep.mubr.f32.mxu0 0.0
    %2833 = vmatmul.mubr.f32.gmra.mrb[0].mxu0 %v1210
    %v2834 = vpop.f32.mrb[0].mxu0
    %v2835 = vadd.f32 0.0, %v2834
    %v2836 = vpop.f32.mrb[0].mxu0
    %2837 = vdwg.mxu0
    %2839 = vrot.lane.b32.xlu0 %v2835, 16
    %v2840 = vpop.permute.xlu0 %2839
    %v2842 = vsel %vm1127, %v2757, %v2840
    %s2843 = scalar_lea.vmem %s9, 32
    %2844 = vst.msk [vmem:[%s2843] sm:$0xff] %vm183, %v2842
    // Predicated region
    $region38: #{semaffinet_core_forward.3} parent=1 // pred_check
      _
    $region39: #{semaffinet_core_forward.3} parent=1 // pred_check_branch
      %2846 = sbr.rel (0) target = $region41
    $region40: #{semaffinet_core_forward.3} parent=1 // pred_region
      _
    $region41: #{semaffinet_core_forward.3} parent=1 // pred_fallthru
      _
    // Predicated region
    $region42: #{semaffinet_core_forward.3} parent=1 // pred_check
      _
    $region43: #{semaffinet_core_forward.3} parent=1 // pred_check_branch
      %2848 = sbr.rel (0) target = $region45
    $region44: #{semaffinet_core_forward.3} parent=1 // pred_region
      %s2850 = ssub.s32 768, 768
      %2851 = vsyncadd [#allocation4], %s2850
      %s2852 = sshll.u32 [#allocation3], 4
      %s2853 = int_to_ptr.vmem [resolvable:$true] %s2852
      %2858 = dma.vmem_to_hbm [thread:$0]  %s2853, 768, %s10, [#allocation4], 128, 128, 8
    $region45: #{semaffinet_core_forward.3} parent=1 // pred_fallthru
      _
    // Predicated region
    $region46: #{semaffinet_core_forward.3} parent=1 // pred_check
      _
    $region47: #{semaffinet_core_forward.3} parent=1 // pred_check_branch
      %2860 = sbr.rel (0) target = $region49
    $region48: #{semaffinet_core_forward.3} parent=1 // pred_region
      _
    $region49: #{semaffinet_core_forward.3} parent=1 // pred_fallthru
      _
    // Predicated region
    $region50: #{semaffinet_core_forward.3} parent=1 // pred_check
      _
    $region51: #{semaffinet_core_forward.3} parent=1 // pred_check_branch
      %2862 = sbr.rel (0) target = $region53
    $region52: #{semaffinet_core_forward.3} parent=1 // pred_region
      %2863 = dma.done [#allocation4], 768
    $region53: #{semaffinet_core_forward.3} parent=1 // pred_fallthru
      _
    %2864 = vsyncpa [#allocation4], 1

// kernel: semaffinet_core_forward.2
$region0: #{semaffinet_core_forward.2}
  #allocation0 [shape = 'u32[]', space=smem, size = 0x4, offset = 0x4, fixed_abs, tag = 'smem constant byte address 0x4 - core index']
  #allocation1 [shape = 'u32[144,128]{1,0:T(1,128)}', space=vmem, size = 0x12000, scoped, tag = 'internal scratch']
  #allocation2 [shape = 'f32[128,256]{1,0:T(8,128)}', space=vmem, size = 0x20000, scoped, tag = 'scratch operand']
  %s0 = inlined_call_operand.vmem [shape: f32[160,256], index: 0, kind: input, shape index: {}]
  %s1 = inlined_call_operand.vmem [shape: f32[128,160], index: 1, kind: input, shape index: {}]
  %s2 = inlined_call_operand.vmem [shape: f32[128,1], index: 2, kind: input, shape index: {}]
  %s3 = inlined_call_operand.vmem [shape: f32[4,8,16], index: 3, kind: input, shape index: {}]
  %s4 = inlined_call_operand.vmem [shape: f32[32,192], index: 4, kind: input, shape index: {}]
  %s5 = inlined_call_operand.vmem [shape: f32[4,192,192], index: 5, kind: input, shape index: {}]
  %s6 = inlined_call_operand.vmem [shape: f32[4,1,192], index: 6, kind: input, shape index: {}]
  %s7 = inlined_call_operand.vmem [shape: f32[192,96], index: 7, kind: input, shape index: {}]
  %s8 = inlined_call_operand.vmem [shape: f32[1,96], index: 8, kind: input, shape index: {}]
  %s9 = inlined_call_operand.vmem [shape: f32[5,8,256], index: 9, kind: output, shape index: {0}]
  %s10 = inlined_call_operand.hbm [shape: f32[3,16,256], index: 10, kind: output, shape index: {1}]
  %11 = xla_tuple %s9, %s10
  %s12 = sld [smem:[#allocation0]]
  $region54: #{semaffinet_core_forward.2} parent=0
    _
  %s14 = ssub.s32 1, %s12
  %s15 = scalar_select 0, %s14, %s12
  $region1: #{semaffinet_core_forward.2} parent=0
    #allocation3 [shape = 'u8[49152]{0}', space=vmem, size = 0xc000, scoped, tag = 'output window, operand 1, single buffered']
    #allocation4 [shape = 's32[1]{0}', space=sflag, size = 0x4, scoped, tag = 'scoped memory for semaffinet_core_forward.2']
    %16 = vsyncpa [#allocation4], 0
    // Predicated region
    $region2: #{semaffinet_core_forward.2} parent=1 // pred_check
      _
    $region3: #{semaffinet_core_forward.2} parent=1 // pred_check_branch
      %18 = sbr.rel (0) target = $region5
    $region4: #{semaffinet_core_forward.2} parent=1 // pred_region
      _
    $region5: #{semaffinet_core_forward.2} parent=1 // pred_fallthru
      _
    // Predicated region
    $region6: #{semaffinet_core_forward.2} parent=1 // pred_check
      _
    $region7: #{semaffinet_core_forward.2} parent=1 // pred_check_branch
      %20 = sbr.rel (0) target = $region9
    $region8: #{semaffinet_core_forward.2} parent=1 // pred_region
      _
    $region9: #{semaffinet_core_forward.2} parent=1 // pred_fallthru
      _
    // Predicated region
    $region10: #{semaffinet_core_forward.2} parent=1 // pred_check
      _
    $region11: #{semaffinet_core_forward.2} parent=1 // pred_check_branch
      %22 = sbr.rel (0) target = $region13
    $region12: #{semaffinet_core_forward.2} parent=1 // pred_region
      _
    $region13: #{semaffinet_core_forward.2} parent=1 // pred_fallthru
      _
    // Predicated region
    $region14: #{semaffinet_core_forward.2} parent=1 // pred_check
      _
    $region15: #{semaffinet_core_forward.2} parent=1 // pred_check_branch
      %24 = sbr.rel (0) target = $region17
    $region16: #{semaffinet_core_forward.2} parent=1 // pred_region
      _
    $region17: #{semaffinet_core_forward.2} parent=1 // pred_fallthru
      _
    // Predicated region
    $region18: #{semaffinet_core_forward.2} parent=1 // pred_check
      _
    $region19: #{semaffinet_core_forward.2} parent=1 // pred_check_branch
      %26 = sbr.rel (0) target = $region21
    $region20: #{semaffinet_core_forward.2} parent=1 // pred_region
      _
    $region21: #{semaffinet_core_forward.2} parent=1 // pred_fallthru
      _
    // Predicated region
    $region22: #{semaffinet_core_forward.2} parent=1 // pred_check
      _
    $region23: #{semaffinet_core_forward.2} parent=1 // pred_check_branch
      %28 = sbr.rel (0) target = $region25
    $region24: #{semaffinet_core_forward.2} parent=1 // pred_region
      _
    $region25: #{semaffinet_core_forward.2} parent=1 // pred_fallthru
      _
    // Predicated region
    $region26: #{semaffinet_core_forward.2} parent=1 // pred_check
      _
    $region27: #{semaffinet_core_forward.2} parent=1 // pred_check_branch
      %30 = sbr.rel (0) target = $region29
    $region28: #{semaffinet_core_forward.2} parent=1 // pred_region
      _
    $region29: #{semaffinet_core_forward.2} parent=1 // pred_fallthru
      _
    // Predicated region
    $region30: #{semaffinet_core_forward.2} parent=1 // pred_check
      _
    $region31: #{semaffinet_core_forward.2} parent=1 // pred_check_branch
      %32 = sbr.rel (0) target = $region33
    $region32: #{semaffinet_core_forward.2} parent=1 // pred_region
      _
    $region33: #{semaffinet_core_forward.2} parent=1 // pred_fallthru
      _
    // Predicated region
    $region34: #{semaffinet_core_forward.2} parent=1 // pred_check
      _
    $region35: #{semaffinet_core_forward.2} parent=1 // pred_check_branch
      %34 = sbr.rel (0) target = $region37
    $region36: #{semaffinet_core_forward.2} parent=1 // pred_region
      _
    $region37: #{semaffinet_core_forward.2} parent=1 // pred_fallthru
      _
    %v35 = vld [vmem:[%s1] sm:$0xff]
    %v36 = vld [vmem:[%s1 + $0x8] sm:$0xff]
    %v37 = vld [vmem:[%s1 + $0x10] sm:$0xff]
    %v38 = vld [vmem:[%s1 + $0x18] sm:$0xff]
    %v39 = vld [vmem:[%s1 + $0x20] sm:$0xff]
    %v40 = vld [vmem:[%s1 + $0x28] sm:$0xff]
    %v41 = vld [vmem:[%s1 + $0x30] sm:$0xff]
    %v42 = vld [vmem:[%s1 + $0x38] sm:$0xff]
    %v43 = vld [vmem:[%s1 + $0x40] sm:$0xff]
    %v44 = vld [vmem:[%s1 + $0x48] sm:$0xff]
    %v45 = vld [vmem:[%s1 + $0x50] sm:$0xff]
    %v46 = vld [vmem:[%s1 + $0x58] sm:$0xff]
    %v47 = vld [vmem:[%s1 + $0x60] sm:$0xff]
    %v48 = vld [vmem:[%s1 + $0x68] sm:$0xff]
    %v49 = vld [vmem:[%s1 + $0x70] sm:$0xff]
    %v50 = vld [vmem:[%s1 + $0x78] sm:$0xff]
    %v51 = vld [vmem:[%s1 + $0x80] sm:$0xff]
    %v52 = vld [vmem:[%s1 + $0x88] sm:$0xff]
    %v53 = vld [vmem:[%s1 + $0x90] sm:$0xff]
    %v54 = vld [vmem:[%s1 + $0x98] sm:$0xff]
    %v55 = vld [vmem:[%s1 + $0xa0] sm:$0xff]
    %v56 = vld [vmem:[%s1 + $0xa8] sm:$0xff]
    %v57 = vld [vmem:[%s1 + $0xb0] sm:$0xff]
    %v58 = vld [vmem:[%s1 + $0xb8] sm:$0xff]
    %v59 = vld [vmem:[%s1 + $0xc0] sm:$0xff]
    %v60 = vld [vmem:[%s1 + $0xc8] sm:$0xff]
    %v61 = vld [vmem:[%s1 + $0xd0] sm:$0xff]
    %v62 = vld [vmem:[%s1 + $0xd8] sm:$0xff]
    %v63 = vld [vmem:[%s1 + $0xe0] sm:$0xff]
    %v64 = vld [vmem:[%s1 + $0xe8] sm:$0xff]
    %v65 = vld [vmem:[%s1 + $0xf0] sm:$0xff]
    %v66 = vld [vmem:[%s1 + $0xf8] sm:$0xff]
    %v67 = vld [vmem:[%s0] sm:$0xff]
    %v68 = vld [vmem:[%s0 + $0x8] sm:$0xff]
    %v69 = vld [vmem:[%s0 + $0x10] sm:$0xff]
    %v70 = vld [vmem:[%s0 + $0x18] sm:$0xff]
    %v71 = vld [vmem:[%s0 + $0x20] sm:$0xff]
    %v72 = vld [vmem:[%s0 + $0x28] sm:$0xff]
    %v73 = vld [vmem:[%s0 + $0x30] sm:$0xff]
    %v74 = vld [vmem:[%s0 + $0x38] sm:$0xff]
    %v75 = vld [vmem:[%s0 + $0x40] sm:$0xff]
    %v76 = vld [vmem:[%s0 + $0x48] sm:$0xff]
    %v77 = vld [vmem:[%s0 + $0x50] sm:$0xff]
    %v78 = vld [vmem:[%s0 + $0x58] sm:$0xff]
    %v79 = vld [vmem:[%s0 + $0x60] sm:$0xff]
    %v80 = vld [vmem:[%s0 + $0x68] sm:$0xff]
    %v81 = vld [vmem:[%s0 + $0x70] sm:$0xff]
    %v82 = vld [vmem:[%s0 + $0x78] sm:$0xff]
    %v83 = vld [vmem:[%s0 + $0x80] sm:$0xff]
    %v84 = vld [vmem:[%s0 + $0x88] sm:$0xff]
    %v85 = vld [vmem:[%s0 + $0x90] sm:$0xff]
    %v86 = vld [vmem:[%s0 + $0x98] sm:$0xff]
    %v87 = vld [vmem:[%s0 + $0xa0] sm:$0xff]
    %v88 = vld [vmem:[%s0 + $0xa8] sm:$0xff]
    %v89 = vld [vmem:[%s0 + $0xb0] sm:$0xff]
    %v90 = vld [vmem:[%s0 + $0xb8] sm:$0xff]
    %v91 = vld [vmem:[%s0 + $0xc0] sm:$0xff]
    %v92 = vld [vmem:[%s0 + $0xc8] sm:$0xff]
    %v93 = vld [vmem:[%s0 + $0xd0] sm:$0xff]
    %v94 = vld [vmem:[%s0 + $0xd8] sm:$0xff]
    %v95 = vld [vmem:[%s0 + $0xe0] sm:$0xff]
    %v96 = vld [vmem:[%s0 + $0xe8] sm:$0xff]
    %v97 = vld [vmem:[%s0 + $0xf0] sm:$0xff]
    %v98 = vld [vmem:[%s0 + $0xf8] sm:$0xff]
    %v99 = vld [vmem:[%s0 + $0x100] sm:$0xff]
    %v100 = vld [vmem:[%s0 + $0x108] sm:$0xff]
    %v101 = vld [vmem:[%s0 + $0x110] sm:$0xff]
    %v102 = vld [vmem:[%s0 + $0x118] sm:$0xff]
    %v103 = vld [vmem:[%s0 + $0x120] sm:$0xff]
    %v104 = vld [vmem:[%s0 + $0x128] sm:$0xff]
    %v105 = vld [vmem:[%s0 + $0x130] sm:$0xff]
    %v106 = vld [vmem:[%s0 + $0x138] sm:$0xff]
    %v107 = vld [vmem:[%s2] sm:$0xff]
    %v108 = vld [vmem:[%s2 + $0x8] sm:$0xff]
    %v109 = vld [vmem:[%s2 + $0x10] sm:$0xff]
    %v110 = vld [vmem:[%s2 + $0x18] sm:$0xff]
    %v111 = vld [vmem:[%s2 + $0x20] sm:$0xff]
    %v112 = vld [vmem:[%s2 + $0x28] sm:$0xff]
    %v113 = vld [vmem:[%s2 + $0x30] sm:$0xff]
    %v114 = vld [vmem:[%s2 + $0x38] sm:$0xff]
    %v115 = vld [vmem:[%s2 + $0x40] sm:$0xff]
    %v116 = vld [vmem:[%s2 + $0x48] sm:$0xff]
    %v117 = vld [vmem:[%s2 + $0x50] sm:$0xff]
    %v118 = vld [vmem:[%s2 + $0x58] sm:$0xff]
    %v119 = vld [vmem:[%s2 + $0x60] sm:$0xff]
    %v120 = vld [vmem:[%s2 + $0x68] sm:$0xff]
    %v121 = vld [vmem:[%s2 + $0x70] sm:$0xff]
    %v122 = vld [vmem:[%s2 + $0x78] sm:$0xff]
    %124 = vset.pattern.permute.xlu0 0
    %125 = vperm.xlu0 %124, %v107
    %v126 = vpop.permute.xlu0 %125
    %129 = vset.pattern.permute.xlu0 0
    %130 = vperm.xlu0 %129, %v108
    %v131 = vpop.permute.xlu0 %130
    %134 = vset.pattern.permute.xlu0 0
    %135 = vperm.xlu0 %134, %v109
    %v136 = vpop.permute.xlu0 %135
    %139 = vset.pattern.permute.xlu0 0
    %140 = vperm.xlu0 %139, %v110
    %v141 = vpop.permute.xlu0 %140
    %144 = vset.pattern.permute.xlu0 0
    %145 = vperm.xlu0 %144, %v111
    %v146 = vpop.permute.xlu0 %145
    %149 = vset.pattern.permute.xlu0 0
    %150 = vperm.xlu0 %149, %v112
    %v151 = vpop.permute.xlu0 %150
    %154 = vset.pattern.permute.xlu0 0
    %155 = vperm.xlu0 %154, %v113
    %v156 = vpop.permute.xlu0 %155
    %159 = vset.pattern.permute.xlu0 0
    %160 = vperm.xlu0 %159, %v114
    %v161 = vpop.permute.xlu0 %160
    %164 = vset.pattern.permute.xlu0 0
    %165 = vperm.xlu0 %164, %v115
    %v166 = vpop.permute.xlu0 %165
    %169 = vset.pattern.permute.xlu0 0
    %170 = vperm.xlu0 %169, %v116
    %v171 = vpop.permute.xlu0 %170
    %174 = vset.pattern.permute.xlu0 0
    %175 = vperm.xlu0 %174, %v117
    %v176 = vpop.permute.xlu0 %175
    %179 = vset.pattern.permute.xlu0 0
    %180 = vperm.xlu0 %179, %v118
    %v181 = vpop.permute.xlu0 %180
    %184 = vset.pattern.permute.xlu0 0
    %185 = vperm.xlu0 %184, %v119
    %v186 = vpop.permute.xlu0 %185
    %189 = vset.pattern.permute.xlu0 0
    %190 = vperm.xlu0 %189, %v120
    %v191 = vpop.permute.xlu0 %190
    %194 = vset.pattern.permute.xlu0 0
    %195 = vperm.xlu0 %194, %v121
    %v196 = vpop.permute.xlu0 %195
    %199 = vset.pattern.permute.xlu0 0
    %200 = vperm.xlu0 %199, %v122
    %v201 = vpop.permute.xlu0 %200
    %vm203 = vcmask 261120
    %v205 = vsel %vm203, %v36, 0
    %v208 = vsel %vm203, %v38, 0
    %v211 = vsel %vm203, %v40, 0
    %v214 = vsel %vm203, %v42, 0
    %v217 = vsel %vm203, %v44, 0
    %v220 = vsel %vm203, %v46, 0
    %v223 = vsel %vm203, %v48, 0
    %v226 = vsel %vm203, %v50, 0
    %v229 = vsel %vm203, %v52, 0
    %v232 = vsel %vm203, %v54, 0
    %v235 = vsel %vm203, %v56, 0
    %v238 = vsel %vm203, %v58, 0
    %v241 = vsel %vm203, %v60, 0
    %v244 = vsel %vm203, %v62, 0
    %v247 = vsel %vm203, %v64, 0
    %v250 = vsel %vm203, %v66, 0
    %252 = vmatprep.subr.mxu0 %v68
    %253 = vmatpush1.msra.mxu0 %v67
    %254 = vmatprep.subr.mxu0 %v70
    %255 = vmatpush1.msra.mxu0 %v69
    %256 = vmatprep.subr.mxu0 %v72
    %257 = vmatpush1.msra.mxu0 %v71
    %258 = vmatprep.subr.mxu0 %v74
    %259 = vmatpush1.msra.mxu0 %v73
    %260 = vmatprep.subr.mxu0 %v76
    %261 = vmatpush1.msra.mxu0 %v75
    %262 = vmatprep.subr.mxu0 %v78
    %263 = vmatpush1.msra.mxu0 %v77
    %264 = vmatprep.subr.mxu0 %v80
    %265 = vmatpush1.msra.mxu0 %v79
    %266 = vmatprep.subr.mxu0 %v82
    %267 = vmatpush1.msra.mxu0 %v81
    %268 = vmatprep.subr.mxu0 %v84
    %269 = vmatpush1.msra.mxu0 %v83
    %270 = vmatprep.subr.mxu0 %v86
    %271 = vmatpush1.msra.mxu0 %v85
    %272 = vmatprep.subr.mxu0 %v88
    %273 = vmatpush1.msra.mxu0 %v87
    %274 = vmatprep.subr.mxu0 %v90
    %275 = vmatpush1.msra.mxu0 %v89
    %276 = vmatprep.subr.mxu0 %v92
    %277 = vmatpush1.msra.mxu0 %v91
    %278 = vmatprep.subr.mxu0 %v94
    %279 = vmatpush1.msra.mxu0 %v93
    %280 = vmatprep.subr.mxu0 %v96
    %281 = vmatpush1.msra.mxu0 %v95
    %282 = vmatprep.subr.mxu0 %v98
    %283 = vmatpush1.msra.mxu0 %v97
    %284 = vmatprep.subr.mxu0 %v100
    %285 = vmatpush1.msra.mxu0 %v99
    %286 = vmatprep.subr.mxu0 %v102
    %287 = vmatpush1.msra.mxu0 %v101
    %288 = vmatprep.subr.mxu0 %v104
    %289 = vmatpush1.msra.mxu0 %v103
    %290 = vmatprep.subr.mxu0 %v106
    %291 = vmatpush1.msra.mxu0 %v105
    %292 = vmatprep.subr.mxu0 0.0
    %293 = vmatpush1.msra.mxu0 0.0
    %294 = vmatprep.subr.mxu0 0.0
    %295 = vmatpush1.msra.mxu0 0.0
    %296 = vmatprep.subr.mxu0 0.0
    %297 = vmatpush1.msra.mxu0 0.0
    %298 = vmatprep.subr.mxu0 0.0
    %299 = vmatpush1.msra.mxu0 0.0
    %300 = vmatprep.subr.mxu0 0.0
    %301 = vmatpush1.msra.mxu0 0.0
    %302 = vmatprep.subr.mxu0 0.0
    %303 = vmatpush1.msra.mxu0 0.0
    %304 = vmatprep.subr.mxu0 0.0
    %305 = vmatpush1.msra.mxu0 0.0
    %306 = vmatprep.subr.mxu0 0.0
    %307 = vmatpush1.msra.mxu0 0.0
    %308 = vmatprep.subr.mxu0 0.0
    %309 = vmatpush1.msra.mxu0 0.0
    %310 = vmatprep.subr.mxu0 0.0
    %311 = vmatpush1.msra.mxu0 0.0
    %312 = vmatprep.subr.mxu0 0.0
    %313 = vmatpush1.msra.mxu0 0.0
    %314 = vmatprep.subr.mxu0 0.0
    %315 = vmatpush1.msra.mxu0 0.0
    %316 = vmatprep.mubr.f32.mxu0 %v205
    %317 = vmatmul.mubr.f32.gmra.mrb[0].mxu0 %v35
    %v318 = vpop.f32.mrb[0].mxu0
    %v319 = vadd.f32 %v126, %v318
    %v320 = vpop.f32.mrb[0].mxu0
    %v321 = vadd.f32 %v126, %v320
    %322 = vmatprep.mubr.f32.mxu0 %v208
    %323 = vmatmul.mubr.f32.gmra.mrb[0].mxu0 %v37
    %v324 = vpop.f32.mrb[0].mxu0
    %v325 = vadd.f32 %v131, %v324
    %v326 = vpop.f32.mrb[0].mxu0
    %v327 = vadd.f32 %v131, %v326
    %328 = vmatprep.mubr.f32.mxu0 %v211
    %329 = vmatmul.mubr.f32.gmra.mrb[0].mxu0 %v39
    %v330 = vpop.f32.mrb[0].mxu0
    %v331 = vadd.f32 %v136, %v330
    %v332 = vpop.f32.mrb[0].mxu0
    %v333 = vadd.f32 %v136, %v332
    %334 = vmatprep.mubr.f32.mxu0 %v214
    %335 = vmatmul.mubr.f32.gmra.mrb[0].mxu0 %v41
    %v336 = vpop.f32.mrb[0].mxu0
    %v337 = vadd.f32 %v141, %v336
    %v338 = vpop.f32.mrb[0].mxu0
    %v339 = vadd.f32 %v141, %v338
    %340 = vmatprep.mubr.f32.mxu0 %v217
    %341 = vmatmul.mubr.f32.gmra.mrb[0].mxu0 %v43
    %v342 = vpop.f32.mrb[0].mxu0
    %v343 = vadd.f32 %v146, %v342
    %v344 = vpop.f32.mrb[0].mxu0
    %v345 = vadd.f32 %v146, %v344
    %346 = vmatprep.mubr.f32.mxu0 %v220
    %347 = vmatmul.mubr.f32.gmra.mrb[0].mxu0 %v45
    %v348 = vpop.f32.mrb[0].mxu0
    %v349 = vadd.f32 %v151, %v348
    %v350 = vpop.f32.mrb[0].mxu0
    %v351 = vadd.f32 %v151, %v350
    %352 = vmatprep.mubr.f32.mxu0 %v223
    %353 = vmatmul.mubr.f32.gmra.mrb[0].mxu0 %v47
    %v354 = vpop.f32.mrb[0].mxu0
    %v355 = vadd.f32 %v156, %v354
    %v356 = vpop.f32.mrb[0].mxu0
    %v357 = vadd.f32 %v156, %v356
    %358 = vmatprep.mubr.f32.mxu0 %v226
    %359 = vmatmul.mubr.f32.gmra.mrb[0].mxu0 %v49
    %v360 = vpop.f32.mrb[0].mxu0
    %v361 = vadd.f32 %v161, %v360
    %v362 = vpop.f32.mrb[0].mxu0
    %v363 = vadd.f32 %v161, %v362
    %364 = vmatprep.mubr.f32.mxu0 %v229
    %365 = vmatmul.mubr.f32.gmra.mrb[0].mxu0 %v51
    %v366 = vpop.f32.mrb[0].mxu0
    %v367 = vadd.f32 %v166, %v366
    %v368 = vpop.f32.mrb[0].mxu0
    %v369 = vadd.f32 %v166, %v368
    %370 = vmatprep.mubr.f32.mxu0 %v232
    %371 = vmatmul.mubr.f32.gmra.mrb[0].mxu0 %v53
    %v372 = vpop.f32.mrb[0].mxu0
    %v373 = vadd.f32 %v171, %v372
    %v374 = vpop.f32.mrb[0].mxu0
    %v375 = vadd.f32 %v171, %v374
    %376 = vmatprep.mubr.f32.mxu0 %v235
    %377 = vmatmul.mubr.f32.gmra.mrb[0].mxu0 %v55
    %v378 = vpop.f32.mrb[0].mxu0
    %v379 = vadd.f32 %v176, %v378
    %v380 = vpop.f32.mrb[0].mxu0
    %v381 = vadd.f32 %v176, %v380
    %382 = vmatprep.mubr.f32.mxu0 %v238
    %383 = vmatmul.mubr.f32.gmra.mrb[0].mxu0 %v57
    %v384 = vpop.f32.mrb[0].mxu0
    %v385 = vadd.f32 %v181, %v384
    %v386 = vpop.f32.mrb[0].mxu0
    %v387 = vadd.f32 %v181, %v386
    %388 = vmatprep.mubr.f32.mxu0 %v241
    %389 = vmatmul.mubr.f32.gmra.mrb[0].mxu0 %v59
    %v390 = vpop.f32.mrb[0].mxu0
    %v391 = vadd.f32 %v186, %v390
    %v392 = vpop.f32.mrb[0].mxu0
    %v393 = vadd.f32 %v186, %v392
    %394 = vmatprep.mubr.f32.mxu0 %v244
    %395 = vmatmul.mubr.f32.gmra.mrb[0].mxu0 %v61
    %v396 = vpop.f32.mrb[0].mxu0
    %v397 = vadd.f32 %v191, %v396
    %v398 = vpop.f32.mrb[0].mxu0
    %v399 = vadd.f32 %v191, %v398
    %400 = vmatprep.mubr.f32.mxu0 %v247
    %401 = vmatmul.mubr.f32.gmra.mrb[0].mxu0 %v63
    %v402 = vpop.f32.mrb[0].mxu0
    %v403 = vadd.f32 %v196, %v402
    %v404 = vpop.f32.mrb[0].mxu0
    %v405 = vadd.f32 %v196, %v404
    %406 = vmatprep.mubr.f32.mxu0 %v250
    %407 = vmatmul.mubr.f32.gmra.mrb[0].mxu0 %v65
    %v408 = vpop.f32.mrb[0].mxu0
    %v409 = vadd.f32 %v201, %v408
    %v410 = vpop.f32.mrb[0].mxu0
    %v411 = vadd.f32 %v201, %v410
    %412 = vdwg.mxu0
    %413 = vst [vmem:[#allocation2] sm:$0xff] %v319
    %414 = vst [vmem:[#allocation2 + $0x8] sm:$0xff] %v321
    %415 = vst [vmem:[#allocation2 + $0x10] sm:$0xff] %v325
    %416 = vst [vmem:[#allocation2 + $0x18] sm:$0xff] %v327
    %417 = vst [vmem:[#allocation2 + $0x20] sm:$0xff] %v331
    %418 = vst [vmem:[#allocation2 + $0x28] sm:$0xff] %v333
    %419 = vst [vmem:[#allocation2 + $0x30] sm:$0xff] %v337
    %420 = vst [vmem:[#allocation2 + $0x38] sm:$0xff] %v339
    %421 = vst [vmem:[#allocation2 + $0x40] sm:$0xff] %v343
    %422 = vst [vmem:[#allocation2 + $0x48] sm:$0xff] %v345
    %423 = vst [vmem:[#allocation2 + $0x50] sm:$0xff] %v349
    %424 = vst [vmem:[#allocation2 + $0x58] sm:$0xff] %v351
    %425 = vst [vmem:[#allocation2 + $0x60] sm:$0xff] %v355
    %426 = vst [vmem:[#allocation2 + $0x68] sm:$0xff] %v357
    %427 = vst [vmem:[#allocation2 + $0x70] sm:$0xff] %v361
    %428 = vst [vmem:[#allocation2 + $0x78] sm:$0xff] %v363
    %429 = vst [vmem:[#allocation2 + $0x80] sm:$0xff] %v367
    %430 = vst [vmem:[#allocation2 + $0x88] sm:$0xff] %v369
    %431 = vst [vmem:[#allocation2 + $0x90] sm:$0xff] %v373
    %432 = vst [vmem:[#allocation2 + $0x98] sm:$0xff] %v375
    %433 = vst [vmem:[#allocation2 + $0xa0] sm:$0xff] %v379
    %434 = vst [vmem:[#allocation2 + $0xa8] sm:$0xff] %v381
    %435 = vst [vmem:[#allocation2 + $0xb0] sm:$0xff] %v385
    %436 = vst [vmem:[#allocation2 + $0xb8] sm:$0xff] %v387
    %437 = vst [vmem:[#allocation2 + $0xc0] sm:$0xff] %v391
    %438 = vst [vmem:[#allocation2 + $0xc8] sm:$0xff] %v393
    %439 = vst [vmem:[#allocation2 + $0xd0] sm:$0xff] %v397
    %440 = vst [vmem:[#allocation2 + $0xd8] sm:$0xff] %v399
    %441 = vst [vmem:[#allocation2 + $0xe0] sm:$0xff] %v403
    %442 = vst [vmem:[#allocation2 + $0xe8] sm:$0xff] %v405
    %443 = vst [vmem:[#allocation2 + $0xf0] sm:$0xff] %v409
    %444 = vst [vmem:[#allocation2 + $0xf8] sm:$0xff] %v411
    %v445 = vld [vmem:[%s4] sm:$0xff]
    %v446 = vld [vmem:[%s4 + $0x8] sm:$0xff]
    %v447 = vld [vmem:[%s4 + $0x10] sm:$0xff]
    %v448 = vld [vmem:[%s4 + $0x18] sm:$0xff]
    %v449 = vld [vmem:[%s4 + $0x20] sm:$0xff]
    %v450 = vld [vmem:[%s4 + $0x28] sm:$0xff]
    %v451 = vld [vmem:[%s4 + $0x30] sm:$0xff]
    %v452 = vld [vmem:[%s4 + $0x38] sm:$0xff]
    %v453 = vld [vmem:[%s5] sm:$0xff]
    %v454 = vld [vmem:[%s5 + $0x8] sm:$0xff]
    %v455 = vld [vmem:[%s5 + $0x10] sm:$0xff]
    %v456 = vld [vmem:[%s5 + $0x18] sm:$0xff]
    %v457 = vld [vmem:[%s5 + $0x20] sm:$0xff]
    %v458 = vld [vmem:[%s5 + $0x28] sm:$0xff]
    %v459 = vld [vmem:[%s5 + $0x30] sm:$0xff]
    %v460 = vld [vmem:[%s5 + $0x38] sm:$0xff]
    %v461 = vld [vmem:[%s5 + $0x40] sm:$0xff]
    %v462 = vld [vmem:[%s5 + $0x48] sm:$0xff]
    %v463 = vld [vmem:[%s5 + $0x50] sm:$0xff]
    %v464 = vld [vmem:[%s5 + $0x58] sm:$0xff]
    %v465 = vld [vmem:[%s5 + $0x60] sm:$0xff]
    %v466 = vld [vmem:[%s5 + $0x68] sm:$0xff]
    %v467 = vld [vmem:[%s5 + $0x70] sm:$0xff]
    %v468 = vld [vmem:[%s5 + $0x78] sm:$0xff]
    %v469 = vld [vmem:[%s5 + $0x80] sm:$0xff]
    %v470 = vld [vmem:[%s5 + $0x88] sm:$0xff]
    %v471 = vld [vmem:[%s5 + $0x90] sm:$0xff]
    %v472 = vld [vmem:[%s5 + $0x98] sm:$0xff]
    %v473 = vld [vmem:[%s5 + $0xa0] sm:$0xff]
    %v474 = vld [vmem:[%s5 + $0xa8] sm:$0xff]
    %v475 = vld [vmem:[%s5 + $0xb0] sm:$0xff]
    %v476 = vld [vmem:[%s5 + $0xb8] sm:$0xff]
    %v477 = vld [vmem:[%s5 + $0xc0] sm:$0xff]
    %v478 = vld [vmem:[%s5 + $0xc8] sm:$0xff]
    %v479 = vld [vmem:[%s5 + $0xd0] sm:$0xff]
    %v480 = vld [vmem:[%s5 + $0xd8] sm:$0xff]
    %v481 = vld [vmem:[%s5 + $0xe0] sm:$0xff]
    %v482 = vld [vmem:[%s5 + $0xe8] sm:$0xff]
    %v483 = vld [vmem:[%s5 + $0xf0] sm:$0xff]
    %v484 = vld [vmem:[%s5 + $0xf8] sm:$0xff]
    %v485 = vld [vmem:[%s5 + $0x100] sm:$0xff]
    %v486 = vld [vmem:[%s5 + $0x108] sm:$0xff]
    %v487 = vld [vmem:[%s5 + $0x110] sm:$0xff]
    %v488 = vld [vmem:[%s5 + $0x118] sm:$0xff]
    %v489 = vld [vmem:[%s5 + $0x120] sm:$0xff]
    %v490 = vld [vmem:[%s5 + $0x128] sm:$0xff]
    %v491 = vld [vmem:[%s5 + $0x130] sm:$0xff]
    %v492 = vld [vmem:[%s5 + $0x138] sm:$0xff]
    %v493 = vld [vmem:[%s5 + $0x140] sm:$0xff]
    %v494 = vld [vmem:[%s5 + $0x148] sm:$0xff]
    %v495 = vld [vmem:[%s5 + $0x150] sm:$0xff]
    %v496 = vld [vmem:[%s5 + $0x158] sm:$0xff]
    %v497 = vld [vmem:[%s5 + $0x160] sm:$0xff]
    %v498 = vld [vmem:[%s5 + $0x168] sm:$0xff]
    %v499 = vld [vmem:[%s5 + $0x170] sm:$0xff]
    %v500 = vld [vmem:[%s5 + $0x178] sm:$0xff]
    %v501 = vld [vmem:[%s6] sm:$0x3]
    %v503 = vlaneseq
    %v504 = vshrl.u32 %v503, 7
    %v505 = vsub.s32 0, %v504
    %v506 = vrot.slane %v501, %v505
    %v507 = vlaneseq
    %v508 = vshrl.u32 %v507, 7
    %v509 = vsub.s32 1, %v508
    %v510 = vrot.slane %v501, %v509
    %vm513 = vcmask 523264
    %v515 = vsel %vm513, %v446, 0
    %v518 = vsel %vm513, %v448, 0
    %v521 = vsel %vm513, %v450, 0
    %v524 = vsel %vm513, %v452, 0
    %526 = vmatprep.subr.mxu0 %v454
    %527 = vmatpush1.msra.mxu0 %v453
    %528 = vmatprep.subr.mxu0 %v456
    %529 = vmatpush1.msra.mxu0 %v455
    %530 = vmatprep.subr.mxu0 %v458
    %531 = vmatpush1.msra.mxu0 %v457
    %532 = vmatprep.subr.mxu0 %v460
    %533 = vmatpush1.msra.mxu0 %v459
    %534 = vmatprep.subr.mxu0 %v462
    %535 = vmatpush1.msra.mxu0 %v461
    %536 = vmatprep.subr.mxu0 %v464
    %537 = vmatpush1.msra.mxu0 %v463
    %538 = vmatprep.subr.mxu0 %v466
    %539 = vmatpush1.msra.mxu0 %v465
    %540 = vmatprep.subr.mxu0 %v468
    %541 = vmatpush1.msra.mxu0 %v467
    %542 = vmatprep.subr.mxu0 %v470
    %543 = vmatpush1.msra.mxu0 %v469
    %544 = vmatprep.subr.mxu0 %v472
    %545 = vmatpush1.msra.mxu0 %v471
    %546 = vmatprep.subr.mxu0 %v474
    %547 = vmatpush1.msra.mxu0 %v473
    %548 = vmatprep.subr.mxu0 %v476
    %549 = vmatpush1.msra.mxu0 %v475
    %550 = vmatprep.subr.mxu0 %v478
    %551 = vmatpush1.msra.mxu0 %v477
    %552 = vmatprep.subr.mxu0 %v480
    %553 = vmatpush1.msra.mxu0 %v479
    %554 = vmatprep.subr.mxu0 %v482
    %555 = vmatpush1.msra.mxu0 %v481
    %556 = vmatprep.subr.mxu0 %v484
    %557 = vmatpush1.msra.mxu0 %v483
    %558 = vmatprep.subr.mxu0 %v486
    %559 = vmatpush1.msra.mxu0 %v485
    %560 = vmatprep.subr.mxu0 %v488
    %561 = vmatpush1.msra.mxu0 %v487
    %562 = vmatprep.subr.mxu0 %v490
    %563 = vmatpush1.msra.mxu0 %v489
    %564 = vmatprep.subr.mxu0 %v492
    %565 = vmatpush1.msra.mxu0 %v491
    %566 = vmatprep.subr.mxu0 %v494
    %567 = vmatpush1.msra.mxu0 %v493
    %568 = vmatprep.subr.mxu0 %v496
    %569 = vmatpush1.msra.mxu0 %v495
    %570 = vmatprep.subr.mxu0 %v498
    %571 = vmatpush1.msra.mxu0 %v497
    %572 = vmatprep.subr.mxu0 %v500
    %573 = vmatpush1.msra.mxu0 %v499
    %574 = vmatprep.subr.mxu0 0.0
    %575 = vmatpush1.msra.mxu0 0.0
    %576 = vmatprep.subr.mxu0 0.0
    %577 = vmatpush1.msra.mxu0 0.0
    %578 = vmatprep.subr.mxu0 0.0
    %579 = vmatpush1.msra.mxu0 0.0
    %580 = vmatprep.subr.mxu0 0.0
    %581 = vmatpush1.msra.mxu0 0.0
    %582 = vmatprep.subr.mxu0 0.0
    %583 = vmatpush1.msra.mxu0 0.0
    %584 = vmatprep.subr.mxu0 0.0
    %585 = vmatpush1.msra.mxu0 0.0
    %586 = vmatprep.subr.mxu0 0.0
    %587 = vmatpush1.msra.mxu0 0.0
    %588 = vmatprep.subr.mxu0 0.0
    %589 = vmatpush1.msra.mxu0 0.0
    %590 = vmatprep.mubr.f32.mxu0 %v515
    %591 = vmatmul.mubr.f32.gmra.mrb[0].mxu0 %v445
    %v592 = vpop.f32.mrb[0].mxu0
    %v593 = vadd.f32 %v506, %v592
    %v594 = vpop.f32.mrb[0].mxu0
    %v595 = vadd.f32 %v510, %v594
    %596 = vmatprep.mubr.f32.mxu0 %v518
    %597 = vmatmul.mubr.f32.gmra.mrb[0].mxu0 %v447
    %v598 = vpop.f32.mrb[0].mxu0
    %v599 = vadd.f32 %v506, %v598
    %v600 = vpop.f32.mrb[0].mxu0
    %v601 = vadd.f32 %v510, %v600
    %602 = vmatprep.mubr.f32.mxu0 %v521
    %603 = vmatmul.mubr.f32.gmra.mrb[0].mxu0 %v449
    %v604 = vpop.f32.mrb[0].mxu0
    %v605 = vadd.f32 %v506, %v604
    %v606 = vpop.f32.mrb[0].mxu0
    %v607 = vadd.f32 %v510, %v606
    %608 = vmatprep.mubr.f32.mxu0 %v524
    %609 = vmatmul.mubr.f32.gmra.mrb[0].mxu0 %v451
    %v610 = vpop.f32.mrb[0].mxu0
    %v611 = vadd.f32 %v506, %v610
    %v612 = vpop.f32.mrb[0].mxu0
    %v613 = vadd.f32 %v510, %v612
    %614 = vdwg.mxu0
    %v615 = vmax.f32 %v593, 0.0
    %v616 = vmax.f32 %v595, 0.0
    %v617 = vmax.f32 %v599, 0.0
    %v618 = vmax.f32 %v601, 0.0
    %v619 = vmax.f32 %v605, 0.0
    %v620 = vmax.f32 %v607, 0.0
    %v621 = vmax.f32 %v611, 0.0
    %v622 = vmax.f32 %v613, 0.0
    %s623 = scalar_lea.vmem %s5, 384
    %v624 = vld [vmem:[%s623] sm:$0xff]
    %v625 = vld [vmem:[%s623 + $0x8] sm:$0xff]
    %v626 = vld [vmem:[%s623 + $0x10] sm:$0xff]
    %v627 = vld [vmem:[%s623 + $0x18] sm:$0xff]
    %v628 = vld [vmem:[%s623 + $0x20] sm:$0xff]
    %v629 = vld [vmem:[%s623 + $0x28] sm:$0xff]
    %v630 = vld [vmem:[%s623 + $0x30] sm:$0xff]
    %v631 = vld [vmem:[%s623 + $0x38] sm:$0xff]
    %v632 = vld [vmem:[%s623 + $0x40] sm:$0xff]
    %v633 = vld [vmem:[%s623 + $0x48] sm:$0xff]
    %v634 = vld [vmem:[%s623 + $0x50] sm:$0xff]
    %v635 = vld [vmem:[%s623 + $0x58] sm:$0xff]
    %v636 = vld [vmem:[%s623 + $0x60] sm:$0xff]
    %v637 = vld [vmem:[%s623 + $0x68] sm:$0xff]
    %v638 = vld [vmem:[%s623 + $0x70] sm:$0xff]
    %v639 = vld [vmem:[%s623 + $0x78] sm:$0xff]
    %v640 = vld [vmem:[%s623 + $0x80] sm:$0xff]
    %v641 = vld [vmem:[%s623 + $0x88] sm:$0xff]
    %v642 = vld [vmem:[%s623 + $0x90] sm:$0xff]
    %v643 = vld [vmem:[%s623 + $0x98] sm:$0xff]
    %v644 = vld [vmem:[%s623 + $0xa0] sm:$0xff]
    %v645 = vld [vmem:[%s623 + $0xa8] sm:$0xff]
    %v646 = vld [vmem:[%s623 + $0xb0] sm:$0xff]
    %v647 = vld [vmem:[%s623 + $0xb8] sm:$0xff]
    %v648 = vld [vmem:[%s623 + $0xc0] sm:$0xff]
    %v649 = vld [vmem:[%s623 + $0xc8] sm:$0xff]
    %v650 = vld [vmem:[%s623 + $0xd0] sm:$0xff]
    %v651 = vld [vmem:[%s623 + $0xd8] sm:$0xff]
    %v652 = vld [vmem:[%s623 + $0xe0] sm:$0xff]
    %v653 = vld [vmem:[%s623 + $0xe8] sm:$0xff]
    %v654 = vld [vmem:[%s623 + $0xf0] sm:$0xff]
    %v655 = vld [vmem:[%s623 + $0xf8] sm:$0xff]
    %v656 = vld [vmem:[%s623 + $0x100] sm:$0xff]
    %v657 = vld [vmem:[%s623 + $0x108] sm:$0xff]
    %v658 = vld [vmem:[%s623 + $0x110] sm:$0xff]
    %v659 = vld [vmem:[%s623 + $0x118] sm:$0xff]
    %v660 = vld [vmem:[%s623 + $0x120] sm:$0xff]
    %v661 = vld [vmem:[%s623 + $0x128] sm:$0xff]
    %v662 = vld [vmem:[%s623 + $0x130] sm:$0xff]
    %v663 = vld [vmem:[%s623 + $0x138] sm:$0xff]
    %v664 = vld [vmem:[%s623 + $0x140] sm:$0xff]
    %v665 = vld [vmem:[%s623 + $0x148] sm:$0xff]
    %v666 = vld [vmem:[%s623 + $0x150] sm:$0xff]
    %v667 = vld [vmem:[%s623 + $0x158] sm:$0xff]
    %v668 = vld [vmem:[%s623 + $0x160] sm:$0xff]
    %v669 = vld [vmem:[%s623 + $0x168] sm:$0xff]
    %v670 = vld [vmem:[%s623 + $0x170] sm:$0xff]
    %v671 = vld [vmem:[%s623 + $0x178] sm:$0xff]
    %s672 = scalar_lea.vmem %s6, 2
    %v673 = vld [vmem:[%s672] sm:$0x3]
    %v675 = vlaneseq
    %v676 = vshrl.u32 %v675, 7
    %v677 = vsub.s32 0, %v676
    %v678 = vrot.slane %v673, %v677
    %v679 = vlaneseq
    %v680 = vshrl.u32 %v679, 7
    %v681 = vsub.s32 1, %v680
    %v682 = vrot.slane %v673, %v681
    %v686 = vsel %vm513, %v616, 0
    %v689 = vsel %vm513, %v618, 0
    %v692 = vsel %vm513, %v620, 0
    %v695 = vsel %vm513, %v622, 0
    %697 = vmatprep.subr.mxu0 %v625
    %698 = vmatpush1.msra.mxu0 %v624
    %699 = vmatprep.subr.mxu0 %v627
    %700 = vmatpush1.msra.mxu0 %v626
    %701 = vmatprep.subr.mxu0 %v629
    %702 = vmatpush1.msra.mxu0 %v628
    %703 = vmatprep.subr.mxu0 %v631
    %704 = vmatpush1.msra.mxu0 %v630
    %705 = vmatprep.subr.mxu0 %v633
    %706 = vmatpush1.msra.mxu0 %v632
    %707 = vmatprep.subr.mxu0 %v635
    %708 = vmatpush1.msra.mxu0 %v634
    %709 = vmatprep.subr.mxu0 %v637
    %710 = vmatpush1.msra.mxu0 %v636
    %711 = vmatprep.subr.mxu0 %v639
    %712 = vmatpush1.msra.mxu0 %v638
    %713 = vmatprep.subr.mxu0 %v641
    %714 = vmatpush1.msra.mxu0 %v640
    %715 = vmatprep.subr.mxu0 %v643
    %716 = vmatpush1.msra.mxu0 %v642
    %717 = vmatprep.subr.mxu0 %v645
    %718 = vmatpush1.msra.mxu0 %v644
    %719 = vmatprep.subr.mxu0 %v647
    %720 = vmatpush1.msra.mxu0 %v646
    %721 = vmatprep.subr.mxu0 %v649
    %722 = vmatpush1.msra.mxu0 %v648
    %723 = vmatprep.subr.mxu0 %v651
    %724 = vmatpush1.msra.mxu0 %v650
    %725 = vmatprep.subr.mxu0 %v653
    %726 = vmatpush1.msra.mxu0 %v652
    %727 = vmatprep.subr.mxu0 %v655
    %728 = vmatpush1.msra.mxu0 %v654
    %729 = vmatprep.subr.mxu0 %v657
    %730 = vmatpush1.msra.mxu0 %v656
    %731 = vmatprep.subr.mxu0 %v659
    %732 = vmatpush1.msra.mxu0 %v658
    %733 = vmatprep.subr.mxu0 %v661
    %734 = vmatpush1.msra.mxu0 %v660
    %735 = vmatprep.subr.mxu0 %v663
    %736 = vmatpush1.msra.mxu0 %v662
    %737 = vmatprep.subr.mxu0 %v665
    %738 = vmatpush1.msra.mxu0 %v664
    %739 = vmatprep.subr.mxu0 %v667
    %740 = vmatpush1.msra.mxu0 %v666
    %741 = vmatprep.subr.mxu0 %v669
    %742 = vmatpush1.msra.mxu0 %v668
    %743 = vmatprep.subr.mxu0 %v671
    %744 = vmatpush1.msra.mxu0 %v670
    %745 = vmatprep.subr.mxu0 0.0
    %746 = vmatpush1.msra.mxu0 0.0
    %747 = vmatprep.subr.mxu0 0.0
    %748 = vmatpush1.msra.mxu0 0.0
    %749 = vmatprep.subr.mxu0 0.0
    %750 = vmatpush1.msra.mxu0 0.0
    %751 = vmatprep.subr.mxu0 0.0
    %752 = vmatpush1.msra.mxu0 0.0
    %753 = vmatprep.subr.mxu0 0.0
    %754 = vmatpush1.msra.mxu0 0.0
    %755 = vmatprep.subr.mxu0 0.0
    %756 = vmatpush1.msra.mxu0 0.0
    %757 = vmatprep.subr.mxu0 0.0
    %758 = vmatpush1.msra.mxu0 0.0
    %759 = vmatprep.subr.mxu0 0.0
    %760 = vmatpush1.msra.mxu0 0.0
    %761 = vmatprep.mubr.f32.mxu0 %v686
    %762 = vmatmul.mubr.f32.gmra.mrb[0].mxu0 %v615
    %v763 = vpop.f32.mrb[0].mxu0
    %v764 = vadd.f32 %v678, %v763
    %v765 = vpop.f32.mrb[0].mxu0
    %v766 = vadd.f32 %v682, %v765
    %767 = vmatprep.mubr.f32.mxu0 %v689
    %768 = vmatmul.mubr.f32.gmra.mrb[0].mxu0 %v617
    %v769 = vpop.f32.mrb[0].mxu0
    %v770 = vadd.f32 %v678, %v769
    %v771 = vpop.f32.mrb[0].mxu0
    %v772 = vadd.f32 %v682, %v771
    %773 = vmatprep.mubr.f32.mxu0 %v692
    %774 = vmatmul.mubr.f32.gmra.mrb[0].mxu0 %v619
    %v775 = vpop.f32.mrb[0].mxu0
    %v776 = vadd.f32 %v678, %v775
    %v777 = vpop.f32.mrb[0].mxu0
    %v778 = vadd.f32 %v682, %v777
    %779 = vmatprep.mubr.f32.mxu0 %v695
    %780 = vmatmul.mubr.f32.gmra.mrb[0].mxu0 %v621
    %v781 = vpop.f32.mrb[0].mxu0
    %v782 = vadd.f32 %v678, %v781
    %v783 = vpop.f32.mrb[0].mxu0
    %v784 = vadd.f32 %v682, %v783
    %785 = vdwg.mxu0
    %v786 = vmax.f32 %v764, 0.0
    %v787 = vmax.f32 %v766, 0.0
    %v788 = vmax.f32 %v770, 0.0
    %v789 = vmax.f32 %v772, 0.0
    %v790 = vmax.f32 %v776, 0.0
    %v791 = vmax.f32 %v778, 0.0
    %v792 = vmax.f32 %v782, 0.0
    %v793 = vmax.f32 %v784, 0.0
    %s794 = scalar_lea.vmem %s5, 768
    %v795 = vld [vmem:[%s794] sm:$0xff]
    %v796 = vld [vmem:[%s794 + $0x8] sm:$0xff]
    %v797 = vld [vmem:[%s794 + $0x10] sm:$0xff]
    %v798 = vld [vmem:[%s794 + $0x18] sm:$0xff]
    %v799 = vld [vmem:[%s794 + $0x20] sm:$0xff]
    %v800 = vld [vmem:[%s794 + $0x28] sm:$0xff]
    %v801 = vld [vmem:[%s794 + $0x30] sm:$0xff]
    %v802 = vld [vmem:[%s794 + $0x38] sm:$0xff]
    %v803 = vld [vmem:[%s794 + $0x40] sm:$0xff]
    %v804 = vld [vmem:[%s794 + $0x48] sm:$0xff]
    %v805 = vld [vmem:[%s794 + $0x50] sm:$0xff]
    %v806 = vld [vmem:[%s794 + $0x58] sm:$0xff]
    %v807 = vld [vmem:[%s794 + $0x60] sm:$0xff]
    %v808 = vld [vmem:[%s794 + $0x68] sm:$0xff]
    %v809 = vld [vmem:[%s794 + $0x70] sm:$0xff]
    %v810 = vld [vmem:[%s794 + $0x78] sm:$0xff]
    %v811 = vld [vmem:[%s794 + $0x80] sm:$0xff]
    %v812 = vld [vmem:[%s794 + $0x88] sm:$0xff]
    %v813 = vld [vmem:[%s794 + $0x90] sm:$0xff]
    %v814 = vld [vmem:[%s794 + $0x98] sm:$0xff]
    %v815 = vld [vmem:[%s794 + $0xa0] sm:$0xff]
    %v816 = vld [vmem:[%s794 + $0xa8] sm:$0xff]
    %v817 = vld [vmem:[%s794 + $0xb0] sm:$0xff]
    %v818 = vld [vmem:[%s794 + $0xb8] sm:$0xff]
    %v819 = vld [vmem:[%s794 + $0xc0] sm:$0xff]
    %v820 = vld [vmem:[%s794 + $0xc8] sm:$0xff]
    %v821 = vld [vmem:[%s794 + $0xd0] sm:$0xff]
    %v822 = vld [vmem:[%s794 + $0xd8] sm:$0xff]
    %v823 = vld [vmem:[%s794 + $0xe0] sm:$0xff]
    %v824 = vld [vmem:[%s794 + $0xe8] sm:$0xff]
    %v825 = vld [vmem:[%s794 + $0xf0] sm:$0xff]
    %v826 = vld [vmem:[%s794 + $0xf8] sm:$0xff]
    %v827 = vld [vmem:[%s794 + $0x100] sm:$0xff]
    %v828 = vld [vmem:[%s794 + $0x108] sm:$0xff]
    %v829 = vld [vmem:[%s794 + $0x110] sm:$0xff]
    %v830 = vld [vmem:[%s794 + $0x118] sm:$0xff]
    %v831 = vld [vmem:[%s794 + $0x120] sm:$0xff]
    %v832 = vld [vmem:[%s794 + $0x128] sm:$0xff]
    %v833 = vld [vmem:[%s794 + $0x130] sm:$0xff]
    %v834 = vld [vmem:[%s794 + $0x138] sm:$0xff]
    %v835 = vld [vmem:[%s794 + $0x140] sm:$0xff]
    %v836 = vld [vmem:[%s794 + $0x148] sm:$0xff]
    %v837 = vld [vmem:[%s794 + $0x150] sm:$0xff]
    %v838 = vld [vmem:[%s794 + $0x158] sm:$0xff]
    %v839 = vld [vmem:[%s794 + $0x160] sm:$0xff]
    %v840 = vld [vmem:[%s794 + $0x168] sm:$0xff]
    %v841 = vld [vmem:[%s794 + $0x170] sm:$0xff]
    %v842 = vld [vmem:[%s794 + $0x178] sm:$0xff]
    %s843 = scalar_lea.vmem %s6, 4
    %v844 = vld [vmem:[%s843] sm:$0x3]
    %v846 = vlaneseq
    %v847 = vshrl.u32 %v846, 7
    %v848 = vsub.s32 0, %v847
    %v849 = vrot.slane %v844, %v848
    %v850 = vlaneseq
    %v851 = vshrl.u32 %v850, 7
    %v852 = vsub.s32 1, %v851
    %v853 = vrot.slane %v844, %v852
    %v857 = vsel %vm513, %v787, 0
    %v860 = vsel %vm513, %v789, 0
    %v863 = vsel %vm513, %v791, 0
    %v866 = vsel %vm513, %v793, 0
    %868 = vmatprep.subr.mxu0 %v796
    %869 = vmatpush1.msra.mxu0 %v795
    %870 = vmatprep.subr.mxu0 %v798
    %871 = vmatpush1.msra.mxu0 %v797
    %872 = vmatprep.subr.mxu0 %v800
    %873 = vmatpush1.msra.mxu0 %v799
    %874 = vmatprep.subr.mxu0 %v802
    %875 = vmatpush1.msra.mxu0 %v801
    %876 = vmatprep.subr.mxu0 %v804
    %877 = vmatpush1.msra.mxu0 %v803
    %878 = vmatprep.subr.mxu0 %v806
    %879 = vmatpush1.msra.mxu0 %v805
    %880 = vmatprep.subr.mxu0 %v808
    %881 = vmatpush1.msra.mxu0 %v807
    %882 = vmatprep.subr.mxu0 %v810
    %883 = vmatpush1.msra.mxu0 %v809
    %884 = vmatprep.subr.mxu0 %v812
    %885 = vmatpush1.msra.mxu0 %v811
    %886 = vmatprep.subr.mxu0 %v814
    %887 = vmatpush1.msra.mxu0 %v813
    %888 = vmatprep.subr.mxu0 %v816
    %889 = vmatpush1.msra.mxu0 %v815
    %890 = vmatprep.subr.mxu0 %v818
    %891 = vmatpush1.msra.mxu0 %v817
    %892 = vmatprep.subr.mxu0 %v820
    %893 = vmatpush1.msra.mxu0 %v819
    %894 = vmatprep.subr.mxu0 %v822
    %895 = vmatpush1.msra.mxu0 %v821
    %896 = vmatprep.subr.mxu0 %v824
    %897 = vmatpush1.msra.mxu0 %v823
    %898 = vmatprep.subr.mxu0 %v826
    %899 = vmatpush1.msra.mxu0 %v825
    %900 = vmatprep.subr.mxu0 %v828
    %901 = vmatpush1.msra.mxu0 %v827
    %902 = vmatprep.subr.mxu0 %v830
    %903 = vmatpush1.msra.mxu0 %v829
    %904 = vmatprep.subr.mxu0 %v832
    %905 = vmatpush1.msra.mxu0 %v831
    %906 = vmatprep.subr.mxu0 %v834
    %907 = vmatpush1.msra.mxu0 %v833
    %908 = vmatprep.subr.mxu0 %v836
    %909 = vmatpush1.msra.mxu0 %v835
    %910 = vmatprep.subr.mxu0 %v838
    %911 = vmatpush1.msra.mxu0 %v837
    %912 = vmatprep.subr.mxu0 %v840
    %913 = vmatpush1.msra.mxu0 %v839
    %914 = vmatprep.subr.mxu0 %v842
    %915 = vmatpush1.msra.mxu0 %v841
    %916 = vmatprep.subr.mxu0 0.0
    %917 = vmatpush1.msra.mxu0 0.0
    %918 = vmatprep.subr.mxu0 0.0
    %919 = vmatpush1.msra.mxu0 0.0
    %920 = vmatprep.subr.mxu0 0.0
    %921 = vmatpush1.msra.mxu0 0.0
    %922 = vmatprep.subr.mxu0 0.0
    %923 = vmatpush1.msra.mxu0 0.0
    %924 = vmatprep.subr.mxu0 0.0
    %925 = vmatpush1.msra.mxu0 0.0
    %926 = vmatprep.subr.mxu0 0.0
    %927 = vmatpush1.msra.mxu0 0.0
    %928 = vmatprep.subr.mxu0 0.0
    %929 = vmatpush1.msra.mxu0 0.0
    %930 = vmatprep.subr.mxu0 0.0
    %931 = vmatpush1.msra.mxu0 0.0
    %932 = vmatprep.mubr.f32.mxu0 %v857
    %933 = vmatmul.mubr.f32.gmra.mrb[0].mxu0 %v786
    %v934 = vpop.f32.mrb[0].mxu0
    %v935 = vadd.f32 %v849, %v934
    %v936 = vpop.f32.mrb[0].mxu0
    %v937 = vadd.f32 %v853, %v936
    %938 = vmatprep.mubr.f32.mxu0 %v860
    %939 = vmatmul.mubr.f32.gmra.mrb[0].mxu0 %v788
    %v940 = vpop.f32.mrb[0].mxu0
    %v941 = vadd.f32 %v849, %v940
    %v942 = vpop.f32.mrb[0].mxu0
    %v943 = vadd.f32 %v853, %v942
    %944 = vmatprep.mubr.f32.mxu0 %v863
    %945 = vmatmul.mubr.f32.gmra.mrb[0].mxu0 %v790
    %v946 = vpop.f32.mrb[0].mxu0
    %v947 = vadd.f32 %v849, %v946
    %v948 = vpop.f32.mrb[0].mxu0
    %v949 = vadd.f32 %v853, %v948
    %950 = vmatprep.mubr.f32.mxu0 %v866
    %951 = vmatmul.mubr.f32.gmra.mrb[0].mxu0 %v792
    %v952 = vpop.f32.mrb[0].mxu0
    %v953 = vadd.f32 %v849, %v952
    %v954 = vpop.f32.mrb[0].mxu0
    %v955 = vadd.f32 %v853, %v954
    %956 = vdwg.mxu0
    %v957 = vmax.f32 %v935, 0.0
    %v958 = vmax.f32 %v937, 0.0
    %v959 = vmax.f32 %v941, 0.0
    %v960 = vmax.f32 %v943, 0.0
    %v961 = vmax.f32 %v947, 0.0
    %v962 = vmax.f32 %v949, 0.0
    %v963 = vmax.f32 %v953, 0.0
    %v964 = vmax.f32 %v955, 0.0
    %s965 = scalar_lea.vmem %s5, 1152
    %v966 = vld [vmem:[%s965] sm:$0xff]
    %v967 = vld [vmem:[%s965 + $0x8] sm:$0xff]
    %v968 = vld [vmem:[%s965 + $0x10] sm:$0xff]
    %v969 = vld [vmem:[%s965 + $0x18] sm:$0xff]
    %v970 = vld [vmem:[%s965 + $0x20] sm:$0xff]
    %v971 = vld [vmem:[%s965 + $0x28] sm:$0xff]
    %v972 = vld [vmem:[%s965 + $0x30] sm:$0xff]
    %v973 = vld [vmem:[%s965 + $0x38] sm:$0xff]
    %v974 = vld [vmem:[%s965 + $0x40] sm:$0xff]
    %v975 = vld [vmem:[%s965 + $0x48] sm:$0xff]
    %v976 = vld [vmem:[%s965 + $0x50] sm:$0xff]
    %v977 = vld [vmem:[%s965 + $0x58] sm:$0xff]
    %v978 = vld [vmem:[%s965 + $0x60] sm:$0xff]
    %v979 = vld [vmem:[%s965 + $0x68] sm:$0xff]
    %v980 = vld [vmem:[%s965 + $0x70] sm:$0xff]
    %v981 = vld [vmem:[%s965 + $0x78] sm:$0xff]
    %v982 = vld [vmem:[%s965 + $0x80] sm:$0xff]
    %v983 = vld [vmem:[%s965 + $0x88] sm:$0xff]
    %v984 = vld [vmem:[%s965 + $0x90] sm:$0xff]
    %v985 = vld [vmem:[%s965 + $0x98] sm:$0xff]
    %v986 = vld [vmem:[%s965 + $0xa0] sm:$0xff]
    %v987 = vld [vmem:[%s965 + $0xa8] sm:$0xff]
    %v988 = vld [vmem:[%s965 + $0xb0] sm:$0xff]
    %v989 = vld [vmem:[%s965 + $0xb8] sm:$0xff]
    %v990 = vld [vmem:[%s965 + $0xc0] sm:$0xff]
    %v991 = vld [vmem:[%s965 + $0xc8] sm:$0xff]
    %v992 = vld [vmem:[%s965 + $0xd0] sm:$0xff]
    %v993 = vld [vmem:[%s965 + $0xd8] sm:$0xff]
    %v994 = vld [vmem:[%s965 + $0xe0] sm:$0xff]
    %v995 = vld [vmem:[%s965 + $0xe8] sm:$0xff]
    %v996 = vld [vmem:[%s965 + $0xf0] sm:$0xff]
    %v997 = vld [vmem:[%s965 + $0xf8] sm:$0xff]
    %v998 = vld [vmem:[%s965 + $0x100] sm:$0xff]
    %v999 = vld [vmem:[%s965 + $0x108] sm:$0xff]
    %v1000 = vld [vmem:[%s965 + $0x110] sm:$0xff]
    %v1001 = vld [vmem:[%s965 + $0x118] sm:$0xff]
    %v1002 = vld [vmem:[%s965 + $0x120] sm:$0xff]
    %v1003 = vld [vmem:[%s965 + $0x128] sm:$0xff]
    %v1004 = vld [vmem:[%s965 + $0x130] sm:$0xff]
    %v1005 = vld [vmem:[%s965 + $0x138] sm:$0xff]
    %v1006 = vld [vmem:[%s965 + $0x140] sm:$0xff]
    %v1007 = vld [vmem:[%s965 + $0x148] sm:$0xff]
    %v1008 = vld [vmem:[%s965 + $0x150] sm:$0xff]
    %v1009 = vld [vmem:[%s965 + $0x158] sm:$0xff]
    %v1010 = vld [vmem:[%s965 + $0x160] sm:$0xff]
    %v1011 = vld [vmem:[%s965 + $0x168] sm:$0xff]
    %v1012 = vld [vmem:[%s965 + $0x170] sm:$0xff]
    %v1013 = vld [vmem:[%s965 + $0x178] sm:$0xff]
    %s1014 = scalar_lea.vmem %s6, 6
    %v1015 = vld [vmem:[%s1014] sm:$0x3]
    %v1017 = vlaneseq
    %v1018 = vshrl.u32 %v1017, 7
    %v1019 = vsub.s32 0, %v1018
    %v1020 = vrot.slane %v1015, %v1019
    %v1021 = vlaneseq
    %v1022 = vshrl.u32 %v1021, 7
    %v1023 = vsub.s32 1, %v1022
    %v1024 = vrot.slane %v1015, %v1023
    %v1028 = vsel %vm513, %v958, 0
    %v1031 = vsel %vm513, %v960, 0
    %v1034 = vsel %vm513, %v962, 0
    %v1037 = vsel %vm513, %v964, 0
    %1039 = vmatprep.subr.mxu0 %v967
    %1040 = vmatpush1.msra.mxu0 %v966
    %1041 = vmatprep.subr.mxu0 %v969
    %1042 = vmatpush1.msra.mxu0 %v968
    %1043 = vmatprep.subr.mxu0 %v971
    %1044 = vmatpush1.msra.mxu0 %v970
    %1045 = vmatprep.subr.mxu0 %v973
    %1046 = vmatpush1.msra.mxu0 %v972
    %1047 = vmatprep.subr.mxu0 %v975
    %1048 = vmatpush1.msra.mxu0 %v974
    %1049 = vmatprep.subr.mxu0 %v977
    %1050 = vmatpush1.msra.mxu0 %v976
    %1051 = vmatprep.subr.mxu0 %v979
    %1052 = vmatpush1.msra.mxu0 %v978
    %1053 = vmatprep.subr.mxu0 %v981
    %1054 = vmatpush1.msra.mxu0 %v980
    %1055 = vmatprep.subr.mxu0 %v983
    %1056 = vmatpush1.msra.mxu0 %v982
    %1057 = vmatprep.subr.mxu0 %v985
    %1058 = vmatpush1.msra.mxu0 %v984
    %1059 = vmatprep.subr.mxu0 %v987
    %1060 = vmatpush1.msra.mxu0 %v986
    %1061 = vmatprep.subr.mxu0 %v989
    %1062 = vmatpush1.msra.mxu0 %v988
    %1063 = vmatprep.subr.mxu0 %v991
    %1064 = vmatpush1.msra.mxu0 %v990
    %1065 = vmatprep.subr.mxu0 %v993
    %1066 = vmatpush1.msra.mxu0 %v992
    %1067 = vmatprep.subr.mxu0 %v995
    %1068 = vmatpush1.msra.mxu0 %v994
    %1069 = vmatprep.subr.mxu0 %v997
    %1070 = vmatpush1.msra.mxu0 %v996
    %1071 = vmatprep.subr.mxu0 %v999
    %1072 = vmatpush1.msra.mxu0 %v998
    %1073 = vmatprep.subr.mxu0 %v1001
    %1074 = vmatpush1.msra.mxu0 %v1000
    %1075 = vmatprep.subr.mxu0 %v1003
    %1076 = vmatpush1.msra.mxu0 %v1002
    %1077 = vmatprep.subr.mxu0 %v1005
    %1078 = vmatpush1.msra.mxu0 %v1004
    %1079 = vmatprep.subr.mxu0 %v1007
    %1080 = vmatpush1.msra.mxu0 %v1006
    %1081 = vmatprep.subr.mxu0 %v1009
    %1082 = vmatpush1.msra.mxu0 %v1008
    %1083 = vmatprep.subr.mxu0 %v1011
    %1084 = vmatpush1.msra.mxu0 %v1010
    %1085 = vmatprep.subr.mxu0 %v1013
    %1086 = vmatpush1.msra.mxu0 %v1012
    %1087 = vmatprep.subr.mxu0 0.0
    %1088 = vmatpush1.msra.mxu0 0.0
    %1089 = vmatprep.subr.mxu0 0.0
    %1090 = vmatpush1.msra.mxu0 0.0
    %1091 = vmatprep.subr.mxu0 0.0
    %1092 = vmatpush1.msra.mxu0 0.0
    %1093 = vmatprep.subr.mxu0 0.0
    %1094 = vmatpush1.msra.mxu0 0.0
    %1095 = vmatprep.subr.mxu0 0.0
    %1096 = vmatpush1.msra.mxu0 0.0
    %1097 = vmatprep.subr.mxu0 0.0
    %1098 = vmatpush1.msra.mxu0 0.0
    %1099 = vmatprep.subr.mxu0 0.0
    %1100 = vmatpush1.msra.mxu0 0.0
    %1101 = vmatprep.subr.mxu0 0.0
    %1102 = vmatpush1.msra.mxu0 0.0
    %1103 = vmatprep.mubr.f32.mxu0 %v1028
    %1104 = vmatmul.mubr.f32.gmra.mrb[0].mxu0 %v957
    %v1105 = vpop.f32.mrb[0].mxu0
    %v1106 = vadd.f32 %v1020, %v1105
    %v1107 = vpop.f32.mrb[0].mxu0
    %v1108 = vadd.f32 %v1024, %v1107
    %1109 = vmatprep.mubr.f32.mxu0 %v1031
    %1110 = vmatmul.mubr.f32.gmra.mrb[0].mxu0 %v959
    %v1111 = vpop.f32.mrb[0].mxu0
    %v1112 = vadd.f32 %v1020, %v1111
    %v1113 = vpop.f32.mrb[0].mxu0
    %v1114 = vadd.f32 %v1024, %v1113
    %1115 = vmatprep.mubr.f32.mxu0 %v1034
    %1116 = vmatmul.mubr.f32.gmra.mrb[0].mxu0 %v961
    %v1117 = vpop.f32.mrb[0].mxu0
    %v1118 = vadd.f32 %v1020, %v1117
    %v1119 = vpop.f32.mrb[0].mxu0
    %v1120 = vadd.f32 %v1024, %v1119
    %1121 = vmatprep.mubr.f32.mxu0 %v1037
    %1122 = vmatmul.mubr.f32.gmra.mrb[0].mxu0 %v963
    %v1123 = vpop.f32.mrb[0].mxu0
    %v1124 = vadd.f32 %v1020, %v1123
    %v1125 = vpop.f32.mrb[0].mxu0
    %v1126 = vadd.f32 %v1024, %v1125
    %1127 = vdwg.mxu0
    %v1128 = vmax.f32 %v1106, 0.0
    %v1129 = vmax.f32 %v1108, 0.0
    %v1130 = vmax.f32 %v1112, 0.0
    %v1131 = vmax.f32 %v1114, 0.0
    %v1132 = vmax.f32 %v1118, 0.0
    %v1133 = vmax.f32 %v1120, 0.0
    %v1134 = vmax.f32 %v1124, 0.0
    %v1135 = vmax.f32 %v1126, 0.0
    %v1136 = vld [vmem:[%s7] sm:$0xff]
    %v1137 = vld [vmem:[%s7 + $0x8] sm:$0xff]
    %v1138 = vld [vmem:[%s7 + $0x10] sm:$0xff]
    %v1139 = vld [vmem:[%s7 + $0x18] sm:$0xff]
    %v1140 = vld [vmem:[%s7 + $0x20] sm:$0xff]
    %v1141 = vld [vmem:[%s7 + $0x28] sm:$0xff]
    %v1142 = vld [vmem:[%s7 + $0x30] sm:$0xff]
    %v1143 = vld [vmem:[%s7 + $0x38] sm:$0xff]
    %v1144 = vld [vmem:[%s7 + $0x40] sm:$0xff]
    %v1145 = vld [vmem:[%s7 + $0x48] sm:$0xff]
    %v1146 = vld [vmem:[%s7 + $0x50] sm:$0xff]
    %v1147 = vld [vmem:[%s7 + $0x58] sm:$0xff]
    %v1148 = vld [vmem:[%s7 + $0x60] sm:$0xff]
    %v1149 = vld [vmem:[%s7 + $0x68] sm:$0xff]
    %v1150 = vld [vmem:[%s7 + $0x70] sm:$0xff]
    %v1151 = vld [vmem:[%s7 + $0x78] sm:$0xff]
    %v1152 = vld [vmem:[%s7 + $0x80] sm:$0xff]
    %v1153 = vld [vmem:[%s7 + $0x88] sm:$0xff]
    %v1154 = vld [vmem:[%s7 + $0x90] sm:$0xff]
    %v1155 = vld [vmem:[%s7 + $0x98] sm:$0xff]
    %v1156 = vld [vmem:[%s7 + $0xa0] sm:$0xff]
    %v1157 = vld [vmem:[%s7 + $0xa8] sm:$0xff]
    %v1158 = vld [vmem:[%s7 + $0xb0] sm:$0xff]
    %v1159 = vld [vmem:[%s7 + $0xb8] sm:$0xff]
    %v1160 = vld [vmem:[%s8] sm:$0x1]
    %v1162 = vlaneseq
    %v1163 = vshrl.u32 %v1162, 7
    %v1164 = vsub.s32 0, %v1163
    %v1165 = vrot.slane %v1160, %v1164
    %v1168 = vsel %vm513, %v1129, 0
    %v1171 = vsel %vm513, %v1131, 0
    %v1174 = vsel %vm513, %v1133, 0
    %v1177 = vsel %vm513, %v1135, 0
    %1179 = vmatprep.subr.mxu0 0.0
    %1180 = vmatpush1.msra.mxu0 %v1136
    %1181 = vmatprep.subr.mxu0 0.0
    %1182 = vmatpush1.msra.mxu0 %v1137
    %1183 = vmatprep.subr.mxu0 0.0
    %1184 = vmatpush1.msra.mxu0 %v1138
    %1185 = vmatprep.subr.mxu0 0.0
    %1186 = vmatpush1.msra.mxu0 %v1139
    %1187 = vmatprep.subr.mxu0 0.0
    %1188 = vmatpush1.msra.mxu0 %v1140
    %1189 = vmatprep.subr.mxu0 0.0
    %1190 = vmatpush1.msra.mxu0 %v1141
    %1191 = vmatprep.subr.mxu0 0.0
    %1192 = vmatpush1.msra.mxu0 %v1142
    %1193 = vmatprep.subr.mxu0 0.0
    %1194 = vmatpush1.msra.mxu0 %v1143
    %1195 = vmatprep.subr.mxu0 0.0
    %1196 = vmatpush1.msra.mxu0 %v1144
    %1197 = vmatprep.subr.mxu0 0.0
    %1198 = vmatpush1.msra.mxu0 %v1145
    %1199 = vmatprep.subr.mxu0 0.0
    %1200 = vmatpush1.msra.mxu0 %v1146
    %1201 = vmatprep.subr.mxu0 0.0
    %1202 = vmatpush1.msra.mxu0 %v1147
    %1203 = vmatprep.subr.mxu0 0.0
    %1204 = vmatpush1.msra.mxu0 %v1148
    %1205 = vmatprep.subr.mxu0 0.0
    %1206 = vmatpush1.msra.mxu0 %v1149
    %1207 = vmatprep.subr.mxu0 0.0
    %1208 = vmatpush1.msra.mxu0 %v1150
    %1209 = vmatprep.subr.mxu0 0.0
    %1210 = vmatpush1.msra.mxu0 %v1151
    %1211 = vmatprep.subr.mxu0 0.0
    %1212 = vmatpush1.msra.mxu0 %v1152
    %1213 = vmatprep.subr.mxu0 0.0
    %1214 = vmatpush1.msra.mxu0 %v1153
    %1215 = vmatprep.subr.mxu0 0.0
    %1216 = vmatpush1.msra.mxu0 %v1154
    %1217 = vmatprep.subr.mxu0 0.0
    %1218 = vmatpush1.msra.mxu0 %v1155
    %1219 = vmatprep.subr.mxu0 0.0
    %1220 = vmatpush1.msra.mxu0 %v1156
    %1221 = vmatprep.subr.mxu0 0.0
    %1222 = vmatpush1.msra.mxu0 %v1157
    %1223 = vmatprep.subr.mxu0 0.0
    %1224 = vmatpush1.msra.mxu0 %v1158
    %1225 = vmatprep.subr.mxu0 0.0
    %1226 = vmatpush1.msra.mxu0 %v1159
    %1227 = vmatprep.subr.mxu0 0.0
    %1228 = vmatpush1.msra.mxu0 0.0
    %1229 = vmatprep.subr.mxu0 0.0
    %1230 = vmatpush1.msra.mxu0 0.0
    %1231 = vmatprep.subr.mxu0 0.0
    %1232 = vmatpush1.msra.mxu0 0.0
    %1233 = vmatprep.subr.mxu0 0.0
    %1234 = vmatpush1.msra.mxu0 0.0
    %1235 = vmatprep.subr.mxu0 0.0
    %1236 = vmatpush1.msra.mxu0 0.0
    %1237 = vmatprep.subr.mxu0 0.0
    %1238 = vmatpush1.msra.mxu0 0.0
    %1239 = vmatprep.subr.mxu0 0.0
    %1240 = vmatpush1.msra.mxu0 0.0
    %1241 = vmatprep.subr.mxu0 0.0
    %1242 = vmatpush1.msra.mxu0 0.0
    %1243 = vmatprep.mubr.f32.mxu0 %v1168
    %1244 = vmatmul.mubr.f32.gmra.mrb[0].mxu0 %v1128
    %v1245 = vpop.f32.mrb[0].mxu0
    %v1246 = vadd.f32 %v1165, %v1245
    %v1247 = vpop.f32.mrb[0].mxu0
    %1248 = vmatprep.mubr.f32.mxu0 %v1171
    %1249 = vmatmul.mubr.f32.gmra.mrb[0].mxu0 %v1130
    %v1250 = vpop.f32.mrb[0].mxu0
    %v1251 = vadd.f32 %v1165, %v1250
    %v1252 = vpop.f32.mrb[0].mxu0
    %1253 = vmatprep.mubr.f32.mxu0 %v1174
    %1254 = vmatmul.mubr.f32.gmra.mrb[0].mxu0 %v1132
    %v1255 = vpop.f32.mrb[0].mxu0
    %v1256 = vadd.f32 %v1165, %v1255
    %v1257 = vpop.f32.mrb[0].mxu0
    %1258 = vmatprep.mubr.f32.mxu0 %v1177
    %1259 = vmatmul.mubr.f32.gmra.mrb[0].mxu0 %v1134
    %v1260 = vpop.f32.mrb[0].mxu0
    %v1261 = vadd.f32 %v1165, %v1260
    %v1262 = vpop.f32.mrb[0].mxu0
    %1263 = vdwg.mxu0
    %v1264 = vlaneseq
    %v1265 = vand.u32 %v1264, 127
    %vm1266 = vcmp.lt.s32.totalorder %v1265, 0
    %v1267 = vsub.s32 0, %v1265
    %v1268 = vsel %vm1266, %v1267, %v1265
    %v1269 = vshrl.u32 %v1268, 5
    %v1270 = vand.u32 %v1268, 31
    %v1271 = vsub.s32 0, %v1270
    %v1272 = vsel %vm1266, %v1271, %v1270
    %vm1273 = vcmp.ne.s32.totalorder %v1272, 0
    %vm1274 = vcmp.lt.s32.totalorder %v1272, 0
    %vm1275 = vmand %vm1274, %vm1273
    %v1276 = vadd.s32 %v1272, 32
    %v1277 = vsel %vm1275, %v1276, %v1272
    %vm1278 = vcmp.lt.s32.totalorder %v1277, 16
    %v1279 = vand.u32 2147483647, %v1246
    %v1280 = vand.u32 2147483647, %v1251
    %v1281 = vand.u32 2147483647, %v1256
    %v1282 = vand.u32 2147483647, %v1261
    %v1283 = vsel %vm1278, %v1279, %v1246
    %v1284 = vsel %vm1278, %v1280, %v1251
    %v1285 = vsel %vm1278, %v1281, %v1256
    %v1286 = vsel %vm1278, %v1282, %v1261
    %v1287 = vld [vmem:[%s3] sm:$0xff]
    %v1288 = vld [vmem:[%s3 + $0x8] sm:$0xff]
    %v1289 = vld [vmem:[%s3 + $0x10] sm:$0xff]
    %v1290 = vld [vmem:[%s3 + $0x18] sm:$0xff]
    %v1291 = vld [vmem:[#allocation2] sm:$0xff]
    %v1292 = vld [vmem:[#allocation2 + $0x10] sm:$0xff]
    %vm1293 = vcmask 130048
    %v1295 = vsel %vm1293, %v1287, 0
    %1297 = vmatprep.subr.mxu0 0.0
    %1298 = vmatpush1.msra.mxu0 %v1291
    %1299 = vmatprep.subr.mxu0 0.0
    %1300 = vmatpush1.msra.mxu0 %v1292
    %1301 = vmatprep.subr.mxu0 0.0
    %1302 = vmatpush1.msra.mxu0 0.0
    %1303 = vmatprep.subr.mxu0 0.0
    %1304 = vmatpush1.msra.mxu0 0.0
    %1305 = vmatprep.subr.mxu0 0.0
    %1306 = vmatpush1.msra.mxu0 0.0
    %1307 = vmatprep.subr.mxu0 0.0
    %1308 = vmatpush1.msra.mxu0 0.0
    %1309 = vmatprep.subr.mxu0 0.0
    %1310 = vmatpush1.msra.mxu0 0.0
    %1311 = vmatprep.subr.mxu0 0.0
    %1312 = vmatpush1.msra.mxu0 0.0
    %1313 = vmatprep.subr.mxu0 0.0
    %1314 = vmatpush1.msra.mxu0 0.0
    %1315 = vmatprep.subr.mxu0 0.0
    %1316 = vmatpush1.msra.mxu0 0.0
    %1317 = vmatprep.subr.mxu0 0.0
    %1318 = vmatpush1.msra.mxu0 0.0
    %1319 = vmatprep.subr.mxu0 0.0
    %1320 = vmatpush1.msra.mxu0 0.0
    %1321 = vmatprep.subr.mxu0 0.0
    %1322 = vmatpush1.msra.mxu0 0.0
    %1323 = vmatprep.subr.mxu0 0.0
    %1324 = vmatpush1.msra.mxu0 0.0
    %1325 = vmatprep.subr.mxu0 0.0
    %1326 = vmatpush1.msra.mxu0 0.0
    %1327 = vmatprep.subr.mxu0 0.0
    %1328 = vmatpush1.msra.mxu0 0.0
    %1329 = vmatprep.subr.mxu0 0.0
    %1330 = vmatpush1.msra.mxu0 0.0
    %1331 = vmatprep.subr.mxu0 0.0
    %1332 = vmatpush1.msra.mxu0 0.0
    %1333 = vmatprep.subr.mxu0 0.0
    %1334 = vmatpush1.msra.mxu0 0.0
    %1335 = vmatprep.subr.mxu0 0.0
    %1336 = vmatpush1.msra.mxu0 0.0
    %1337 = vmatprep.subr.mxu0 0.0
    %1338 = vmatpush1.msra.mxu0 0.0
    %1339 = vmatprep.subr.mxu0 0.0
    %1340 = vmatpush1.msra.mxu0 0.0
    %1341 = vmatprep.subr.mxu0 0.0
    %1342 = vmatpush1.msra.mxu0 0.0
    %1343 = vmatprep.subr.mxu0 0.0
    %1344 = vmatpush1.msra.mxu0 0.0
    %1345 = vmatprep.subr.mxu0 0.0
    %1346 = vmatpush1.msra.mxu0 0.0
    %1347 = vmatprep.subr.mxu0 0.0
    %1348 = vmatpush1.msra.mxu0 0.0
    %1349 = vmatprep.subr.mxu0 0.0
    %1350 = vmatpush1.msra.mxu0 0.0
    %1351 = vmatprep.subr.mxu0 0.0
    %1352 = vmatpush1.msra.mxu0 0.0
    %1353 = vmatprep.subr.mxu0 0.0
    %1354 = vmatpush1.msra.mxu0 0.0
    %1355 = vmatprep.subr.mxu0 0.0
    %1356 = vmatpush1.msra.mxu0 0.0
    %1357 = vmatprep.subr.mxu0 0.0
    %1358 = vmatpush1.msra.mxu0 0.0
    %1359 = vmatprep.subr.mxu0 0.0
    %1360 = vmatpush1.msra.mxu0 0.0
    %1361 = vmatprep.mubr.f32.mxu0 0.0
    %1362 = vmatmul.mubr.f32.gmra.mrb[0].mxu0 %v1295
    %v1363 = vpop.f32.mrb[0].mxu0
    %v1364 = vadd.f32 0.0, %v1363
    %v1365 = vpop.f32.mrb[0].mxu0
    %1366 = vdwg.mxu0
    %1369 = vrot.lane.b32.xlu0 %v1291, 64
    %v1370 = vpop.permute.xlu0 %1369
    %1371 = vrot.lane.b32.xlu0 %v1292, 64
    %v1372 = vpop.permute.xlu0 %1371
    %v1376 = vsel %vm1293, %v1288, 0
    %1378 = vmatprep.subr.mxu0 0.0
    %1379 = vmatpush1.msra.mxu0 %v1370
    %1380 = vmatprep.subr.mxu0 0.0
    %1381 = vmatpush1.msra.mxu0 %v1372
    %1382 = vmatprep.subr.mxu0 0.0
    %1383 = vmatpush1.msra.mxu0 0.0
    %1384 = vmatprep.subr.mxu0 0.0
    %1385 = vmatpush1.msra.mxu0 0.0
    %1386 = vmatprep.subr.mxu0 0.0
    %1387 = vmatpush1.msra.mxu0 0.0
    %1388 = vmatprep.subr.mxu0 0.0
    %1389 = vmatpush1.msra.mxu0 0.0
    %1390 = vmatprep.subr.mxu0 0.0
    %1391 = vmatpush1.msra.mxu0 0.0
    %1392 = vmatprep.subr.mxu0 0.0
    %1393 = vmatpush1.msra.mxu0 0.0
    %1394 = vmatprep.subr.mxu0 0.0
    %1395 = vmatpush1.msra.mxu0 0.0
    %1396 = vmatprep.subr.mxu0 0.0
    %1397 = vmatpush1.msra.mxu0 0.0
    %1398 = vmatprep.subr.mxu0 0.0
    %1399 = vmatpush1.msra.mxu0 0.0
    %1400 = vmatprep.subr.mxu0 0.0
    %1401 = vmatpush1.msra.mxu0 0.0
    %1402 = vmatprep.subr.mxu0 0.0
    %1403 = vmatpush1.msra.mxu0 0.0
    %1404 = vmatprep.subr.mxu0 0.0
    %1405 = vmatpush1.msra.mxu0 0.0
    %1406 = vmatprep.subr.mxu0 0.0
    %1407 = vmatpush1.msra.mxu0 0.0
    %1408 = vmatprep.subr.mxu0 0.0
    %1409 = vmatpush1.msra.mxu0 0.0
    %1410 = vmatprep.subr.mxu0 0.0
    %1411 = vmatpush1.msra.mxu0 0.0
    %1412 = vmatprep.subr.mxu0 0.0
    %1413 = vmatpush1.msra.mxu0 0.0
    %1414 = vmatprep.subr.mxu0 0.0
    %1415 = vmatpush1.msra.mxu0 0.0
    %1416 = vmatprep.subr.mxu0 0.0
    %1417 = vmatpush1.msra.mxu0 0.0
    %1418 = vmatprep.subr.mxu0 0.0
    %1419 = vmatpush1.msra.mxu0 0.0
    %1420 = vmatprep.subr.mxu0 0.0
    %1421 = vmatpush1.msra.mxu0 0.0
    %1422 = vmatprep.subr.mxu0 0.0
    %1423 = vmatpush1.msra.mxu0 0.0
    %1424 = vmatprep.subr.mxu0 0.0
    %1425 = vmatpush1.msra.mxu0 0.0
    %1426 = vmatprep.subr.mxu0 0.0
    %1427 = vmatpush1.msra.mxu0 0.0
    %1428 = vmatprep.subr.mxu0 0.0
    %1429 = vmatpush1.msra.mxu0 0.0
    %1430 = vmatprep.subr.mxu0 0.0
    %1431 = vmatpush1.msra.mxu0 0.0
    %1432 = vmatprep.subr.mxu0 0.0
    %1433 = vmatpush1.msra.mxu0 0.0
    %1434 = vmatprep.subr.mxu0 0.0
    %1435 = vmatpush1.msra.mxu0 0.0
    %1436 = vmatprep.subr.mxu0 0.0
    %1437 = vmatpush1.msra.mxu0 0.0
    %1438 = vmatprep.subr.mxu0 0.0
    %1439 = vmatpush1.msra.mxu0 0.0
    %1440 = vmatprep.subr.mxu0 0.0
    %1441 = vmatpush1.msra.mxu0 0.0
    %1442 = vmatprep.mubr.f32.mxu0 0.0
    %1443 = vmatmul.mubr.f32.gmra.mrb[0].mxu0 %v1376
    %v1444 = vpop.f32.mrb[0].mxu0
    %v1445 = vadd.f32 0.0, %v1444
    %v1446 = vpop.f32.mrb[0].mxu0
    %1447 = vdwg.mxu0
    %v1448 = vld [vmem:[#allocation2 + $0x8] sm:$0xff]
    %v1449 = vld [vmem:[#allocation2 + $0x18] sm:$0xff]
    %v1451 = vsel %vm1293, %v1289, 0
    %1453 = vmatprep.subr.mxu0 0.0
    %1454 = vmatpush1.msra.mxu0 %v1448
    %1455 = vmatprep.subr.mxu0 0.0
    %1456 = vmatpush1.msra.mxu0 %v1449
    %1457 = vmatprep.subr.mxu0 0.0
    %1458 = vmatpush1.msra.mxu0 0.0
    %1459 = vmatprep.subr.mxu0 0.0
    %1460 = vmatpush1.msra.mxu0 0.0
    %1461 = vmatprep.subr.mxu0 0.0
    %1462 = vmatpush1.msra.mxu0 0.0
    %1463 = vmatprep.subr.mxu0 0.0
    %1464 = vmatpush1.msra.mxu0 0.0
    %1465 = vmatprep.subr.mxu0 0.0
    %1466 = vmatpush1.msra.mxu0 0.0
    %1467 = vmatprep.subr.mxu0 0.0
    %1468 = vmatpush1.msra.mxu0 0.0
    %1469 = vmatprep.subr.mxu0 0.0
    %1470 = vmatpush1.msra.mxu0 0.0
    %1471 = vmatprep.subr.mxu0 0.0
    %1472 = vmatpush1.msra.mxu0 0.0
    %1473 = vmatprep.subr.mxu0 0.0
    %1474 = vmatpush1.msra.mxu0 0.0
    %1475 = vmatprep.subr.mxu0 0.0
    %1476 = vmatpush1.msra.mxu0 0.0
    %1477 = vmatprep.subr.mxu0 0.0
    %1478 = vmatpush1.msra.mxu0 0.0
    %1479 = vmatprep.subr.mxu0 0.0
    %1480 = vmatpush1.msra.mxu0 0.0
    %1481 = vmatprep.subr.mxu0 0.0
    %1482 = vmatpush1.msra.mxu0 0.0
    %1483 = vmatprep.subr.mxu0 0.0
    %1484 = vmatpush1.msra.mxu0 0.0
    %1485 = vmatprep.subr.mxu0 0.0
    %1486 = vmatpush1.msra.mxu0 0.0
    %1487 = vmatprep.subr.mxu0 0.0
    %1488 = vmatpush1.msra.mxu0 0.0
    %1489 = vmatprep.subr.mxu0 0.0
    %1490 = vmatpush1.msra.mxu0 0.0
    %1491 = vmatprep.subr.mxu0 0.0
    %1492 = vmatpush1.msra.mxu0 0.0
    %1493 = vmatprep.subr.mxu0 0.0
    %1494 = vmatpush1.msra.mxu0 0.0
    %1495 = vmatprep.subr.mxu0 0.0
    %1496 = vmatpush1.msra.mxu0 0.0
    %1497 = vmatprep.subr.mxu0 0.0
    %1498 = vmatpush1.msra.mxu0 0.0
    %1499 = vmatprep.subr.mxu0 0.0
    %1500 = vmatpush1.msra.mxu0 0.0
    %1501 = vmatprep.subr.mxu0 0.0
    %1502 = vmatpush1.msra.mxu0 0.0
    %1503 = vmatprep.subr.mxu0 0.0
    %1504 = vmatpush1.msra.mxu0 0.0
    %1505 = vmatprep.subr.mxu0 0.0
    %1506 = vmatpush1.msra.mxu0 0.0
    %1507 = vmatprep.subr.mxu0 0.0
    %1508 = vmatpush1.msra.mxu0 0.0
    %1509 = vmatprep.subr.mxu0 0.0
    %1510 = vmatpush1.msra.mxu0 0.0
    %1511 = vmatprep.subr.mxu0 0.0
    %1512 = vmatpush1.msra.mxu0 0.0
    %1513 = vmatprep.subr.mxu0 0.0
    %1514 = vmatpush1.msra.mxu0 0.0
    %1515 = vmatprep.subr.mxu0 0.0
    %1516 = vmatpush1.msra.mxu0 0.0
    %1517 = vmatprep.mubr.f32.mxu0 0.0
    %1518 = vmatmul.mubr.f32.gmra.mrb[0].mxu0 %v1451
    %v1519 = vpop.f32.mrb[0].mxu0
    %v1520 = vadd.f32 0.0, %v1519
    %v1521 = vpop.f32.mrb[0].mxu0
    %1522 = vdwg.mxu0
    %1525 = vrot.lane.b32.xlu0 %v1448, 64
    %v1526 = vpop.permute.xlu0 %1525
    %1527 = vrot.lane.b32.xlu0 %v1449, 64
    %v1528 = vpop.permute.xlu0 %1527
    %v1532 = vsel %vm1293, %v1290, 0
    %1534 = vmatprep.subr.mxu0 0.0
    %1535 = vmatpush1.msra.mxu0 %v1526
    %1536 = vmatprep.subr.mxu0 0.0
    %1537 = vmatpush1.msra.mxu0 %v1528
    %1538 = vmatprep.subr.mxu0 0.0
    %1539 = vmatpush1.msra.mxu0 0.0
    %1540 = vmatprep.subr.mxu0 0.0
    %1541 = vmatpush1.msra.mxu0 0.0
    %1542 = vmatprep.subr.mxu0 0.0
    %1543 = vmatpush1.msra.mxu0 0.0
    %1544 = vmatprep.subr.mxu0 0.0
    %1545 = vmatpush1.msra.mxu0 0.0
    %1546 = vmatprep.subr.mxu0 0.0
    %1547 = vmatpush1.msra.mxu0 0.0
    %1548 = vmatprep.subr.mxu0 0.0
    %1549 = vmatpush1.msra.mxu0 0.0
    %1550 = vmatprep.subr.mxu0 0.0
    %1551 = vmatpush1.msra.mxu0 0.0
    %1552 = vmatprep.subr.mxu0 0.0
    %1553 = vmatpush1.msra.mxu0 0.0
    %1554 = vmatprep.subr.mxu0 0.0
    %1555 = vmatpush1.msra.mxu0 0.0
    %1556 = vmatprep.subr.mxu0 0.0
    %1557 = vmatpush1.msra.mxu0 0.0
    %1558 = vmatprep.subr.mxu0 0.0
    %1559 = vmatpush1.msra.mxu0 0.0
    %1560 = vmatprep.subr.mxu0 0.0
    %1561 = vmatpush1.msra.mxu0 0.0
    %1562 = vmatprep.subr.mxu0 0.0
    %1563 = vmatpush1.msra.mxu0 0.0
    %1564 = vmatprep.subr.mxu0 0.0
    %1565 = vmatpush1.msra.mxu0 0.0
    %1566 = vmatprep.subr.mxu0 0.0
    %1567 = vmatpush1.msra.mxu0 0.0
    %1568 = vmatprep.subr.mxu0 0.0
    %1569 = vmatpush1.msra.mxu0 0.0
    %1570 = vmatprep.subr.mxu0 0.0
    %1571 = vmatpush1.msra.mxu0 0.0
    %1572 = vmatprep.subr.mxu0 0.0
    %1573 = vmatpush1.msra.mxu0 0.0
    %1574 = vmatprep.subr.mxu0 0.0
    %1575 = vmatpush1.msra.mxu0 0.0
    %1576 = vmatprep.subr.mxu0 0.0
    %1577 = vmatpush1.msra.mxu0 0.0
    %1578 = vmatprep.subr.mxu0 0.0
    %1579 = vmatpush1.msra.mxu0 0.0
    %1580 = vmatprep.subr.mxu0 0.0
    %1581 = vmatpush1.msra.mxu0 0.0
    %1582 = vmatprep.subr.mxu0 0.0
    %1583 = vmatpush1.msra.mxu0 0.0
    %1584 = vmatprep.subr.mxu0 0.0
    %1585 = vmatpush1.msra.mxu0 0.0
    %1586 = vmatprep.subr.mxu0 0.0
    %1587 = vmatpush1.msra.mxu0 0.0
    %1588 = vmatprep.subr.mxu0 0.0
    %1589 = vmatpush1.msra.mxu0 0.0
    %1590 = vmatprep.subr.mxu0 0.0
    %1591 = vmatpush1.msra.mxu0 0.0
    %1592 = vmatprep.subr.mxu0 0.0
    %1593 = vmatpush1.msra.mxu0 0.0
    %1594 = vmatprep.subr.mxu0 0.0
    %1595 = vmatpush1.msra.mxu0 0.0
    %1596 = vmatprep.subr.mxu0 0.0
    %1597 = vmatpush1.msra.mxu0 0.0
    %1598 = vmatprep.mubr.f32.mxu0 0.0
    %1599 = vmatmul.mubr.f32.gmra.mrb[0].mxu0 %v1532
    %v1600 = vpop.f32.mrb[0].mxu0
    %v1601 = vadd.f32 0.0, %v1600
    %v1602 = vpop.f32.mrb[0].mxu0
    %1603 = vdwg.mxu0
    %1605 = vrot.lane.b32.xlu0 %v1445, 64
    %v1606 = vpop.permute.xlu0 %1605
    %1609 = vrot.lane.b32.xlu0 %v1601, 64
    %v1610 = vpop.permute.xlu0 %1609
    %v1612 = vsel %vm513, %v1364, %v1606
    %v1613 = vsel %vm513, %v1520, %v1610
    %1614 = vst [vmem:[%s9] sm:$0xff] %v1612
    %1615 = vst [vmem:[%s9 + $0x8] sm:$0xff] %v1613
    %v1616 = vld [vmem:[#allocation2 + $0x20] sm:$0xff]
    %v1617 = vld [vmem:[#allocation2 + $0x30] sm:$0xff]
    %1618 = vmatprep.subr.mxu0 0.0
    %1619 = vmatpush1.msra.mxu0 %v1616
    %1620 = vmatprep.subr.mxu0 0.0
    %1621 = vmatpush1.msra.mxu0 %v1617
    %1622 = vmatprep.subr.mxu0 0.0
    %1623 = vmatpush1.msra.mxu0 0.0
    %1624 = vmatprep.subr.mxu0 0.0
    %1625 = vmatpush1.msra.mxu0 0.0
    %1626 = vmatprep.subr.mxu0 0.0
    %1627 = vmatpush1.msra.mxu0 0.0
    %1628 = vmatprep.subr.mxu0 0.0
    %1629 = vmatpush1.msra.mxu0 0.0
    %1630 = vmatprep.subr.mxu0 0.0
    %1631 = vmatpush1.msra.mxu0 0.0
    %1632 = vmatprep.subr.mxu0 0.0
    %1633 = vmatpush1.msra.mxu0 0.0
    %1634 = vmatprep.subr.mxu0 0.0
    %1635 = vmatpush1.msra.mxu0 0.0
    %1636 = vmatprep.subr.mxu0 0.0
    %1637 = vmatpush1.msra.mxu0 0.0
    %1638 = vmatprep.subr.mxu0 0.0
    %1639 = vmatpush1.msra.mxu0 0.0
    %1640 = vmatprep.subr.mxu0 0.0
    %1641 = vmatpush1.msra.mxu0 0.0
    %1642 = vmatprep.subr.mxu0 0.0
    %1643 = vmatpush1.msra.mxu0 0.0
    %1644 = vmatprep.subr.mxu0 0.0
    %1645 = vmatpush1.msra.mxu0 0.0
    %1646 = vmatprep.subr.mxu0 0.0
    %1647 = vmatpush1.msra.mxu0 0.0
    %1648 = vmatprep.subr.mxu0 0.0
    %1649 = vmatpush1.msra.mxu0 0.0
    %1650 = vmatprep.subr.mxu0 0.0
    %1651 = vmatpush1.msra.mxu0 0.0
    %1652 = vmatprep.subr.mxu0 0.0
    %1653 = vmatpush1.msra.mxu0 0.0
    %1654 = vmatprep.subr.mxu0 0.0
    %1655 = vmatpush1.msra.mxu0 0.0
    %1656 = vmatprep.subr.mxu0 0.0
    %1657 = vmatpush1.msra.mxu0 0.0
    %1658 = vmatprep.subr.mxu0 0.0
    %1659 = vmatpush1.msra.mxu0 0.0
    %1660 = vmatprep.subr.mxu0 0.0
    %1661 = vmatpush1.msra.mxu0 0.0
    %1662 = vmatprep.subr.mxu0 0.0
    %1663 = vmatpush1.msra.mxu0 0.0
    %1664 = vmatprep.subr.mxu0 0.0
    %1665 = vmatpush1.msra.mxu0 0.0
    %1666 = vmatprep.subr.mxu0 0.0
    %1667 = vmatpush1.msra.mxu0 0.0
    %1668 = vmatprep.subr.mxu0 0.0
    %1669 = vmatpush1.msra.mxu0 0.0
    %1670 = vmatprep.subr.mxu0 0.0
    %1671 = vmatpush1.msra.mxu0 0.0
    %1672 = vmatprep.subr.mxu0 0.0
    %1673 = vmatpush1.msra.mxu0 0.0
    %1674 = vmatprep.subr.mxu0 0.0
    %1675 = vmatpush1.msra.mxu0 0.0
    %1676 = vmatprep.subr.mxu0 0.0
    %1677 = vmatpush1.msra.mxu0 0.0
    %1678 = vmatprep.subr.mxu0 0.0
    %1679 = vmatpush1.msra.mxu0 0.0
    %1680 = vmatprep.subr.mxu0 0.0
    %1681 = vmatpush1.msra.mxu0 0.0
    %1682 = vmatprep.mubr.f32.mxu0 0.0
    %1683 = vmatmul.mubr.f32.gmra.mrb[0].mxu0 %v1295
    %v1684 = vpop.f32.mrb[0].mxu0
    %v1685 = vadd.f32 0.0, %v1684
    %v1686 = vpop.f32.mrb[0].mxu0
    %1687 = vdwg.mxu0
    %v1688 = vxor.u32 %v1685, 2147483648
    %v1689 = vmul.f32 %v1688, 1.442695
    %v1690 = vpow.pop %v1689
    %v1691 = vadd.f32 %v1690, 1.0
    %v1692 = vrcp.pop %v1691
    %v1693 = vmul.f32 1.0, %v1692
    %1694 = vxpose.xlu0.b32.start [1/16] %v1283, 128
    %1695 = vxpose.xlu0.b32.cont [2/16] 0.0, 128
    %1696 = vxpose.xlu0.b32.cont [3/16] 0.0, 128
    %1697 = vxpose.xlu0.b32.cont [4/16] 0.0, 128
    %1698 = vxpose.xlu0.b32.cont [5/16] 0.0, 128
    %1699 = vxpose.xlu0.b32.cont [6/16] 0.0, 128
    %1700 = vxpose.xlu0.b32.cont [7/16] 0.0, 128
    %1701 = vxpose.xlu0.b32.cont [8/16] 0.0, 128
    %1702 = vxpose.xlu0.b32.cont [9/16] 0.0, 128
    %1703 = vxpose.xlu0.b32.cont [10/16] 0.0, 128
    %1704 = vxpose.xlu0.b32.cont [11/16] 0.0, 128
    %1705 = vxpose.xlu0.b32.cont [12/16] 0.0, 128
    %1706 = vxpose.xlu0.b32.cont [13/16] 0.0, 128
    %1707 = vxpose.xlu0.b32.cont [14/16] 0.0, 128
    %1708 = vxpose.xlu0.b32.cont [15/16] 0.0, 128
    %1709 = vxpose.xlu0.b32.end [16/16] 0.0, 128
    %v1710 = vpop.trf.xlu0
    %v1711 = vpop.trf.xlu0
    %v1712 = vpop.trf.xlu0
    %v1713 = vpop.trf.xlu0
    %v1714 = vpop.trf.xlu0
    %v1715 = vpop.trf.xlu0
    %v1716 = vpop.trf.xlu0
    %v1717 = vpop.trf.xlu0
    %v1718 = vpop.trf.xlu0
    %v1719 = vpop.trf.xlu0
    %v1720 = vpop.trf.xlu0
    %v1721 = vpop.trf.xlu0
    %v1722 = vpop.trf.xlu0
    %v1723 = vpop.trf.xlu0
    %v1724 = vpop.trf.xlu0
    %v1725 = vpop.trf.xlu0
    %vm1726 = vcmask 64512
    %v1728 = vsel %vm1726, %v1710, 0
    %v1731 = vsel %vm1726, %v1711, 0
    %v1734 = vsel %vm1726, %v1712, 0
    %v1737 = vsel %vm1726, %v1713, 0
    %1739 = vmatprep.subr.mxu0 0.0
    %1740 = vmatpush1.msra.mxu0 %v1693
    %1741 = vmatprep.subr.mxu0 0.0
    %1742 = vmatpush1.msra.mxu0 0.0
    %1743 = vmatprep.subr.mxu0 0.0
    %1744 = vmatpush1.msra.mxu0 0.0
    %1745 = vmatprep.subr.mxu0 0.0
    %1746 = vmatpush1.msra.mxu0 0.0
    %1747 = vmatprep.subr.mxu0 0.0
    %1748 = vmatpush1.msra.mxu0 0.0
    %1749 = vmatprep.subr.mxu0 0.0
    %1750 = vmatpush1.msra.mxu0 0.0
    %1751 = vmatprep.subr.mxu0 0.0
    %1752 = vmatpush1.msra.mxu0 0.0
    %1753 = vmatprep.subr.mxu0 0.0
    %1754 = vmatpush1.msra.mxu0 0.0
    %1755 = vmatprep.subr.mxu0 0.0
    %1756 = vmatpush1.msra.mxu0 0.0
    %1757 = vmatprep.subr.mxu0 0.0
    %1758 = vmatpush1.msra.mxu0 0.0
    %1759 = vmatprep.subr.mxu0 0.0
    %1760 = vmatpush1.msra.mxu0 0.0
    %1761 = vmatprep.subr.mxu0 0.0
    %1762 = vmatpush1.msra.mxu0 0.0
    %1763 = vmatprep.subr.mxu0 0.0
    %1764 = vmatpush1.msra.mxu0 0.0
    %1765 = vmatprep.subr.mxu0 0.0
    %1766 = vmatpush1.msra.mxu0 0.0
    %1767 = vmatprep.subr.mxu0 0.0
    %1768 = vmatpush1.msra.mxu0 0.0
    %1769 = vmatprep.subr.mxu0 0.0
    %1770 = vmatpush1.msra.mxu0 0.0
    %1771 = vmatprep.subr.mxu0 0.0
    %1772 = vmatpush1.msra.mxu0 0.0
    %1773 = vmatprep.subr.mxu0 0.0
    %1774 = vmatpush1.msra.mxu0 0.0
    %1775 = vmatprep.subr.mxu0 0.0
    %1776 = vmatpush1.msra.mxu0 0.0
    %1777 = vmatprep.subr.mxu0 0.0
    %1778 = vmatpush1.msra.mxu0 0.0
    %1779 = vmatprep.subr.mxu0 0.0
    %1780 = vmatpush1.msra.mxu0 0.0
    %1781 = vmatprep.subr.mxu0 0.0
    %1782 = vmatpush1.msra.mxu0 0.0
    %1783 = vmatprep.subr.mxu0 0.0
    %1784 = vmatpush1.msra.mxu0 0.0
    %1785 = vmatprep.subr.mxu0 0.0
    %1786 = vmatpush1.msra.mxu0 0.0
    %1787 = vmatprep.subr.mxu0 0.0
    %1788 = vmatpush1.msra.mxu0 0.0
    %1789 = vmatprep.subr.mxu0 0.0
    %1790 = vmatpush1.msra.mxu0 0.0
    %1791 = vmatprep.subr.mxu0 0.0
    %1792 = vmatpush1.msra.mxu0 0.0
    %1793 = vmatprep.subr.mxu0 0.0
    %1794 = vmatpush1.msra.mxu0 0.0
    %1795 = vmatprep.subr.mxu0 0.0
    %1796 = vmatpush1.msra.mxu0 0.0
    %1797 = vmatprep.subr.mxu0 0.0
    %1798 = vmatpush1.msra.mxu0 0.0
    %1799 = vmatprep.subr.mxu0 0.0
    %1800 = vmatpush1.msra.mxu0 0.0
    %1801 = vmatprep.subr.mxu0 0.0
    %1802 = vmatpush1.msra.mxu0 0.0
    %1803 = vmatprep.mubr.f32.mxu0 0.0
    %1804 = vmatmul.mubr.f32.gmra.mrb[0].mxu0 %v1728
    %v1805 = vpop.f32.mrb[0].mxu0
    %v1806 = vadd.f32 0.0, %v1805
    %v1807 = vpop.f32.mrb[0].mxu0
    %1808 = vmatprep.mubr.f32.mxu0 0.0
    %1809 = vmatmul.mubr.f32.gmra.mrb[0].mxu0 %v1731
    %v1810 = vpop.f32.mrb[0].mxu0
    %v1811 = vadd.f32 0.0, %v1810
    %v1812 = vpop.f32.mrb[0].mxu0
    %1813 = vmatprep.mubr.f32.mxu0 0.0
    %1814 = vmatmul.mubr.f32.gmra.mrb[0].mxu0 %v1734
    %v1815 = vpop.f32.mrb[0].mxu0
    %v1816 = vadd.f32 0.0, %v1815
    %v1817 = vpop.f32.mrb[0].mxu0
    %1818 = vmatprep.mubr.f32.mxu0 0.0
    %1819 = vmatmul.mubr.f32.gmra.mrb[0].mxu0 %v1737
    %v1820 = vpop.f32.mrb[0].mxu0
    %v1821 = vadd.f32 0.0, %v1820
    %v1822 = vpop.f32.mrb[0].mxu0
    %1823 = vdwg.mxu0
    %v1824 = vld [vmem:[#allocation2 + $0x40] sm:$0xff]
    %v1825 = vld [vmem:[#allocation2 + $0x50] sm:$0xff]
    %v1826 = vmul.f32 %v1824, %v1806
    %v1827 = vmul.f32 %v1825, %v1811
    %v1828 = vadd.f32 %v1826, %v1816
    %v1829 = vadd.f32 %v1827, %v1821
    %v1830 = vmax.f32 %v1828, 0.0
    %v1831 = vmax.f32 %v1829, 0.0
    %1834 = vrot.lane.b32.xlu0 %v1616, 64
    %v1835 = vpop.permute.xlu0 %1834
    %1836 = vrot.lane.b32.xlu0 %v1617, 64
    %v1837 = vpop.permute.xlu0 %1836
    %1840 = vmatprep.subr.mxu0 0.0
    %1841 = vmatpush1.msra.mxu0 %v1835
    %1842 = vmatprep.subr.mxu0 0.0
    %1843 = vmatpush1.msra.mxu0 %v1837
    %1844 = vmatprep.subr.mxu0 0.0
    %1845 = vmatpush1.msra.mxu0 0.0
    %1846 = vmatprep.subr.mxu0 0.0
    %1847 = vmatpush1.msra.mxu0 0.0
    %1848 = vmatprep.subr.mxu0 0.0
    %1849 = vmatpush1.msra.mxu0 0.0
    %1850 = vmatprep.subr.mxu0 0.0
    %1851 = vmatpush1.msra.mxu0 0.0
    %1852 = vmatprep.subr.mxu0 0.0
    %1853 = vmatpush1.msra.mxu0 0.0
    %1854 = vmatprep.subr.mxu0 0.0
    %1855 = vmatpush1.msra.mxu0 0.0
    %1856 = vmatprep.subr.mxu0 0.0
    %1857 = vmatpush1.msra.mxu0 0.0
    %1858 = vmatprep.subr.mxu0 0.0
    %1859 = vmatpush1.msra.mxu0 0.0
    %1860 = vmatprep.subr.mxu0 0.0
    %1861 = vmatpush1.msra.mxu0 0.0
    %1862 = vmatprep.subr.mxu0 0.0
    %1863 = vmatpush1.msra.mxu0 0.0
    %1864 = vmatprep.subr.mxu0 0.0
    %1865 = vmatpush1.msra.mxu0 0.0
    %1866 = vmatprep.subr.mxu0 0.0
    %1867 = vmatpush1.msra.mxu0 0.0
    %1868 = vmatprep.subr.mxu0 0.0
    %1869 = vmatpush1.msra.mxu0 0.0
    %1870 = vmatprep.subr.mxu0 0.0
    %1871 = vmatpush1.msra.mxu0 0.0
    %1872 = vmatprep.subr.mxu0 0.0
    %1873 = vmatpush1.msra.mxu0 0.0
    %1874 = vmatprep.subr.mxu0 0.0
    %1875 = vmatpush1.msra.mxu0 0.0
    %1876 = vmatprep.subr.mxu0 0.0
    %1877 = vmatpush1.msra.mxu0 0.0
    %1878 = vmatprep.subr.mxu0 0.0
    %1879 = vmatpush1.msra.mxu0 0.0
    %1880 = vmatprep.subr.mxu0 0.0
    %1881 = vmatpush1.msra.mxu0 0.0
    %1882 = vmatprep.subr.mxu0 0.0
    %1883 = vmatpush1.msra.mxu0 0.0
    %1884 = vmatprep.subr.mxu0 0.0
    %1885 = vmatpush1.msra.mxu0 0.0
    %1886 = vmatprep.subr.mxu0 0.0
    %1887 = vmatpush1.msra.mxu0 0.0
    %1888 = vmatprep.subr.mxu0 0.0
    %1889 = vmatpush1.msra.mxu0 0.0
    %1890 = vmatprep.subr.mxu0 0.0
    %1891 = vmatpush1.msra.mxu0 0.0
    %1892 = vmatprep.subr.mxu0 0.0
    %1893 = vmatpush1.msra.mxu0 0.0
    %1894 = vmatprep.subr.mxu0 0.0
    %1895 = vmatpush1.msra.mxu0 0.0
    %1896 = vmatprep.subr.mxu0 0.0
    %1897 = vmatpush1.msra.mxu0 0.0
    %1898 = vmatprep.subr.mxu0 0.0
    %1899 = vmatpush1.msra.mxu0 0.0
    %1900 = vmatprep.subr.mxu0 0.0
    %1901 = vmatpush1.msra.mxu0 0.0
    %1902 = vmatprep.subr.mxu0 0.0
    %1903 = vmatpush1.msra.mxu0 0.0
    %1904 = vmatprep.mubr.f32.mxu0 0.0
    %1905 = vmatmul.mubr.f32.gmra.mrb[0].mxu0 %v1376
    %v1906 = vpop.f32.mrb[0].mxu0
    %v1907 = vadd.f32 0.0, %v1906
    %v1908 = vpop.f32.mrb[0].mxu0
    %1909 = vdwg.mxu0
    %v1910 = vxor.u32 %v1907, 2147483648
    %v1911 = vmul.f32 %v1910, 1.442695
    %v1912 = vpow.pop %v1911
    %v1913 = vadd.f32 %v1912, 1.0
    %v1914 = vrcp.pop %v1913
    %v1915 = vmul.f32 1.0, %v1914
    %1916 = vxpose.xlu0.b32.start [1/16] %v1284, 128
    %1917 = vxpose.xlu0.b32.cont [2/16] 0.0, 128
    %1918 = vxpose.xlu0.b32.cont [3/16] 0.0, 128
    %1919 = vxpose.xlu0.b32.cont [4/16] 0.0, 128
    %1920 = vxpose.xlu0.b32.cont [5/16] 0.0, 128
    %1921 = vxpose.xlu0.b32.cont [6/16] 0.0, 128
    %1922 = vxpose.xlu0.b32.cont [7/16] 0.0, 128
    %1923 = vxpose.xlu0.b32.cont [8/16] 0.0, 128
    %1924 = vxpose.xlu0.b32.cont [9/16] 0.0, 128
    %1925 = vxpose.xlu0.b32.cont [10/16] 0.0, 128
    %1926 = vxpose.xlu0.b32.cont [11/16] 0.0, 128
    %1927 = vxpose.xlu0.b32.cont [12/16] 0.0, 128
    %1928 = vxpose.xlu0.b32.cont [13/16] 0.0, 128
    %1929 = vxpose.xlu0.b32.cont [14/16] 0.0, 128
    %1930 = vxpose.xlu0.b32.cont [15/16] 0.0, 128
    %1931 = vxpose.xlu0.b32.end [16/16] 0.0, 128
    %v1932 = vpop.trf.xlu0
    %v1933 = vpop.trf.xlu0
    %v1934 = vpop.trf.xlu0
    %v1935 = vpop.trf.xlu0
    %v1936 = vpop.trf.xlu0
    %v1937 = vpop.trf.xlu0
    %v1938 = vpop.trf.xlu0
    %v1939 = vpop.trf.xlu0
    %v1940 = vpop.trf.xlu0
    %v1941 = vpop.trf.xlu0
    %v1942 = vpop.trf.xlu0
    %v1943 = vpop.trf.xlu0
    %v1944 = vpop.trf.xlu0
    %v1945 = vpop.trf.xlu0
    %v1946 = vpop.trf.xlu0
    %v1947 = vpop.trf.xlu0
    %v1949 = vsel %vm1726, %v1932, 0
    %v1952 = vsel %vm1726, %v1933, 0
    %v1955 = vsel %vm1726, %v1934, 0
    %v1958 = vsel %vm1726, %v1935, 0
    %1960 = vmatprep.subr.mxu0 0.0
    %1961 = vmatpush1.msra.mxu0 %v1915
    %1962 = vmatprep.subr.mxu0 0.0
    %1963 = vmatpush1.msra.mxu0 0.0
    %1964 = vmatprep.subr.mxu0 0.0
    %1965 = vmatpush1.msra.mxu0 0.0
    %1966 = vmatprep.subr.mxu0 0.0
    %1967 = vmatpush1.msra.mxu0 0.0
    %1968 = vmatprep.subr.mxu0 0.0
    %1969 = vmatpush1.msra.mxu0 0.0
    %1970 = vmatprep.subr.mxu0 0.0
    %1971 = vmatpush1.msra.mxu0 0.0
    %1972 = vmatprep.subr.mxu0 0.0
    %1973 = vmatpush1.msra.mxu0 0.0
    %1974 = vmatprep.subr.mxu0 0.0
    %1975 = vmatpush1.msra.mxu0 0.0
    %1976 = vmatprep.subr.mxu0 0.0
    %1977 = vmatpush1.msra.mxu0 0.0
    %1978 = vmatprep.subr.mxu0 0.0
    %1979 = vmatpush1.msra.mxu0 0.0
    %1980 = vmatprep.subr.mxu0 0.0
    %1981 = vmatpush1.msra.mxu0 0.0
    %1982 = vmatprep.subr.mxu0 0.0
    %1983 = vmatpush1.msra.mxu0 0.0
    %1984 = vmatprep.subr.mxu0 0.0
    %1985 = vmatpush1.msra.mxu0 0.0
    %1986 = vmatprep.subr.mxu0 0.0
    %1987 = vmatpush1.msra.mxu0 0.0
    %1988 = vmatprep.subr.mxu0 0.0
    %1989 = vmatpush1.msra.mxu0 0.0
    %1990 = vmatprep.subr.mxu0 0.0
    %1991 = vmatpush1.msra.mxu0 0.0
    %1992 = vmatprep.subr.mxu0 0.0
    %1993 = vmatpush1.msra.mxu0 0.0
    %1994 = vmatprep.subr.mxu0 0.0
    %1995 = vmatpush1.msra.mxu0 0.0
    %1996 = vmatprep.subr.mxu0 0.0
    %1997 = vmatpush1.msra.mxu0 0.0
    %1998 = vmatprep.subr.mxu0 0.0
    %1999 = vmatpush1.msra.mxu0 0.0
    %2000 = vmatprep.subr.mxu0 0.0
    %2001 = vmatpush1.msra.mxu0 0.0
    %2002 = vmatprep.subr.mxu0 0.0
    %2003 = vmatpush1.msra.mxu0 0.0
    %2004 = vmatprep.subr.mxu0 0.0
    %2005 = vmatpush1.msra.mxu0 0.0
    %2006 = vmatprep.subr.mxu0 0.0
    %2007 = vmatpush1.msra.mxu0 0.0
    %2008 = vmatprep.subr.mxu0 0.0
    %2009 = vmatpush1.msra.mxu0 0.0
    %2010 = vmatprep.subr.mxu0 0.0
    %2011 = vmatpush1.msra.mxu0 0.0
    %2012 = vmatprep.subr.mxu0 0.0
    %2013 = vmatpush1.msra.mxu0 0.0
    %2014 = vmatprep.subr.mxu0 0.0
    %2015 = vmatpush1.msra.mxu0 0.0
    %2016 = vmatprep.subr.mxu0 0.0
    %2017 = vmatpush1.msra.mxu0 0.0
    %2018 = vmatprep.subr.mxu0 0.0
    %2019 = vmatpush1.msra.mxu0 0.0
    %2020 = vmatprep.subr.mxu0 0.0
    %2021 = vmatpush1.msra.mxu0 0.0
    %2022 = vmatprep.subr.mxu0 0.0
    %2023 = vmatpush1.msra.mxu0 0.0
    %2024 = vmatprep.mubr.f32.mxu0 0.0
    %2025 = vmatmul.mubr.f32.gmra.mrb[0].mxu0 %v1949
    %v2026 = vpop.f32.mrb[0].mxu0
    %v2027 = vadd.f32 0.0, %v2026
    %v2028 = vpop.f32.mrb[0].mxu0
    %2029 = vmatprep.mubr.f32.mxu0 0.0
    %2030 = vmatmul.mubr.f32.gmra.mrb[0].mxu0 %v1952
    %v2031 = vpop.f32.mrb[0].mxu0
    %v2032 = vadd.f32 0.0, %v2031
    %v2033 = vpop.f32.mrb[0].mxu0
    %2034 = vmatprep.mubr.f32.mxu0 0.0
    %2035 = vmatmul.mubr.f32.gmra.mrb[0].mxu0 %v1955
    %v2036 = vpop.f32.mrb[0].mxu0
    %v2037 = vadd.f32 0.0, %v2036
    %v2038 = vpop.f32.mrb[0].mxu0
    %2039 = vmatprep.mubr.f32.mxu0 0.0
    %2040 = vmatmul.mubr.f32.gmra.mrb[0].mxu0 %v1958
    %v2041 = vpop.f32.mrb[0].mxu0
    %v2042 = vadd.f32 0.0, %v2041
    %v2043 = vpop.f32.mrb[0].mxu0
    %2044 = vdwg.mxu0
    %2047 = vrot.lane.b32.xlu0 %v2027, 64
    %v2048 = vpop.permute.xlu0 %2047
    %2049 = vrot.lane.b32.xlu0 %v2032, 64
    %v2050 = vpop.permute.xlu0 %2049
    %v2053 = vmul.f32 %v1824, %v2048
    %v2054 = vmul.f32 %v1825, %v2050
    %2057 = vrot.lane.b32.xlu0 %v2037, 64
    %v2058 = vpop.permute.xlu0 %2057
    %2059 = vrot.lane.b32.xlu0 %v2042, 64
    %v2060 = vpop.permute.xlu0 %2059
    %v2063 = vadd.f32 %v2053, %v2058
    %v2064 = vadd.f32 %v2054, %v2060
    %v2065 = vmax.f32 %v2063, 0.0
    %v2066 = vmax.f32 %v2064, 0.0
    %v2067 = vld [vmem:[#allocation2 + $0x28] sm:$0xff]
    %v2068 = vld [vmem:[#allocation2 + $0x38] sm:$0xff]
    %2069 = vmatprep.subr.mxu0 0.0
    %2070 = vmatpush1.msra.mxu0 %v2067
    %2071 = vmatprep.subr.mxu0 0.0
    %2072 = vmatpush1.msra.mxu0 %v2068
    %2073 = vmatprep.subr.mxu0 0.0
    %2074 = vmatpush1.msra.mxu0 0.0
    %2075 = vmatprep.subr.mxu0 0.0
    %2076 = vmatpush1.msra.mxu0 0.0
    %2077 = vmatprep.subr.mxu0 0.0
    %2078 = vmatpush1.msra.mxu0 0.0
    %2079 = vmatprep.subr.mxu0 0.0
    %2080 = vmatpush1.msra.mxu0 0.0
    %2081 = vmatprep.subr.mxu0 0.0
    %2082 = vmatpush1.msra.mxu0 0.0
    %2083 = vmatprep.subr.mxu0 0.0
    %2084 = vmatpush1.msra.mxu0 0.0
    %2085 = vmatprep.subr.mxu0 0.0
    %2086 = vmatpush1.msra.mxu0 0.0
    %2087 = vmatprep.subr.mxu0 0.0
    %2088 = vmatpush1.msra.mxu0 0.0
    %2089 = vmatprep.subr.mxu0 0.0
    %2090 = vmatpush1.msra.mxu0 0.0
    %2091 = vmatprep.subr.mxu0 0.0
    %2092 = vmatpush1.msra.mxu0 0.0
    %2093 = vmatprep.subr.mxu0 0.0
    %2094 = vmatpush1.msra.mxu0 0.0
    %2095 = vmatprep.subr.mxu0 0.0
    %2096 = vmatpush1.msra.mxu0 0.0
    %2097 = vmatprep.subr.mxu0 0.0
    %2098 = vmatpush1.msra.mxu0 0.0
    %2099 = vmatprep.subr.mxu0 0.0
    %2100 = vmatpush1.msra.mxu0 0.0
    %2101 = vmatprep.subr.mxu0 0.0
    %2102 = vmatpush1.msra.mxu0 0.0
    %2103 = vmatprep.subr.mxu0 0.0
    %2104 = vmatpush1.msra.mxu0 0.0
    %2105 = vmatprep.subr.mxu0 0.0
    %2106 = vmatpush1.msra.mxu0 0.0
    %2107 = vmatprep.subr.mxu0 0.0
    %2108 = vmatpush1.msra.mxu0 0.0
    %2109 = vmatprep.subr.mxu0 0.0
    %2110 = vmatpush1.msra.mxu0 0.0
    %2111 = vmatprep.subr.mxu0 0.0
    %2112 = vmatpush1.msra.mxu0 0.0
    %2113 = vmatprep.subr.mxu0 0.0
    %2114 = vmatpush1.msra.mxu0 0.0
    %2115 = vmatprep.subr.mxu0 0.0
    %2116 = vmatpush1.msra.mxu0 0.0
    %2117 = vmatprep.subr.mxu0 0.0
    %2118 = vmatpush1.msra.mxu0 0.0
    %2119 = vmatprep.subr.mxu0 0.0
    %2120 = vmatpush1.msra.mxu0 0.0
    %2121 = vmatprep.subr.mxu0 0.0
    %2122 = vmatpush1.msra.mxu0 0.0
    %2123 = vmatprep.subr.mxu0 0.0
    %2124 = vmatpush1.msra.mxu0 0.0
    %2125 = vmatprep.subr.mxu0 0.0
    %2126 = vmatpush1.msra.mxu0 0.0
    %2127 = vmatprep.subr.mxu0 0.0
    %2128 = vmatpush1.msra.mxu0 0.0
    %2129 = vmatprep.subr.mxu0 0.0
    %2130 = vmatpush1.msra.mxu0 0.0
    %2131 = vmatprep.subr.mxu0 0.0
    %2132 = vmatpush1.msra.mxu0 0.0
    %2133 = vmatprep.mubr.f32.mxu0 0.0
    %2134 = vmatmul.mubr.f32.gmra.mrb[0].mxu0 %v1451
    %v2135 = vpop.f32.mrb[0].mxu0
    %v2136 = vadd.f32 0.0, %v2135
    %v2137 = vpop.f32.mrb[0].mxu0
    %2138 = vdwg.mxu0
    %v2139 = vxor.u32 %v2136, 2147483648
    %v2140 = vmul.f32 %v2139, 1.442695
    %v2141 = vpow.pop %v2140
    %v2142 = vadd.f32 %v2141, 1.0
    %v2143 = vrcp.pop %v2142
    %v2144 = vmul.f32 1.0, %v2143
    %2145 = vxpose.xlu0.b32.start [1/16] %v1285, 128
    %2146 = vxpose.xlu0.b32.cont [2/16] 0.0, 128
    %2147 = vxpose.xlu0.b32.cont [3/16] 0.0, 128
    %2148 = vxpose.xlu0.b32.cont [4/16] 0.0, 128
    %2149 = vxpose.xlu0.b32.cont [5/16] 0.0, 128
    %2150 = vxpose.xlu0.b32.cont [6/16] 0.0, 128
    %2151 = vxpose.xlu0.b32.cont [7/16] 0.0, 128
    %2152 = vxpose.xlu0.b32.cont [8/16] 0.0, 128
    %2153 = vxpose.xlu0.b32.cont [9/16] 0.0, 128
    %2154 = vxpose.xlu0.b32.cont [10/16] 0.0, 128
    %2155 = vxpose.xlu0.b32.cont [11/16] 0.0, 128
    %2156 = vxpose.xlu0.b32.cont [12/16] 0.0, 128
    %2157 = vxpose.xlu0.b32.cont [13/16] 0.0, 128
    %2158 = vxpose.xlu0.b32.cont [14/16] 0.0, 128
    %2159 = vxpose.xlu0.b32.cont [15/16] 0.0, 128
    %2160 = vxpose.xlu0.b32.end [16/16] 0.0, 128
    %v2161 = vpop.trf.xlu0
    %v2162 = vpop.trf.xlu0
    %v2163 = vpop.trf.xlu0
    %v2164 = vpop.trf.xlu0
    %v2165 = vpop.trf.xlu0
    %v2166 = vpop.trf.xlu0
    %v2167 = vpop.trf.xlu0
    %v2168 = vpop.trf.xlu0
    %v2169 = vpop.trf.xlu0
    %v2170 = vpop.trf.xlu0
    %v2171 = vpop.trf.xlu0
    %v2172 = vpop.trf.xlu0
    %v2173 = vpop.trf.xlu0
    %v2174 = vpop.trf.xlu0
    %v2175 = vpop.trf.xlu0
    %v2176 = vpop.trf.xlu0
    %v2178 = vsel %vm1726, %v2161, 0
    %v2181 = vsel %vm1726, %v2162, 0
    %v2184 = vsel %vm1726, %v2163, 0
    %v2187 = vsel %vm1726, %v2164, 0
    %2189 = vmatprep.subr.mxu0 0.0
    %2190 = vmatpush1.msra.mxu0 %v2144
    %2191 = vmatprep.subr.mxu0 0.0
    %2192 = vmatpush1.msra.mxu0 0.0
    %2193 = vmatprep.subr.mxu0 0.0
    %2194 = vmatpush1.msra.mxu0 0.0
    %2195 = vmatprep.subr.mxu0 0.0
    %2196 = vmatpush1.msra.mxu0 0.0
    %2197 = vmatprep.subr.mxu0 0.0
    %2198 = vmatpush1.msra.mxu0 0.0
    %2199 = vmatprep.subr.mxu0 0.0
    %2200 = vmatpush1.msra.mxu0 0.0
    %2201 = vmatprep.subr.mxu0 0.0
    %2202 = vmatpush1.msra.mxu0 0.0
    %2203 = vmatprep.subr.mxu0 0.0
    %2204 = vmatpush1.msra.mxu0 0.0
    %2205 = vmatprep.subr.mxu0 0.0
    %2206 = vmatpush1.msra.mxu0 0.0
    %2207 = vmatprep.subr.mxu0 0.0
    %2208 = vmatpush1.msra.mxu0 0.0
    %2209 = vmatprep.subr.mxu0 0.0
    %2210 = vmatpush1.msra.mxu0 0.0
    %2211 = vmatprep.subr.mxu0 0.0
    %2212 = vmatpush1.msra.mxu0 0.0
    %2213 = vmatprep.subr.mxu0 0.0
    %2214 = vmatpush1.msra.mxu0 0.0
    %2215 = vmatprep.subr.mxu0 0.0
    %2216 = vmatpush1.msra.mxu0 0.0
    %2217 = vmatprep.subr.mxu0 0.0
    %2218 = vmatpush1.msra.mxu0 0.0
    %2219 = vmatprep.subr.mxu0 0.0
    %2220 = vmatpush1.msra.mxu0 0.0
    %2221 = vmatprep.subr.mxu0 0.0
    %2222 = vmatpush1.msra.mxu0 0.0
    %2223 = vmatprep.subr.mxu0 0.0
    %2224 = vmatpush1.msra.mxu0 0.0
    %2225 = vmatprep.subr.mxu0 0.0
    %2226 = vmatpush1.msra.mxu0 0.0
    %2227 = vmatprep.subr.mxu0 0.0
    %2228 = vmatpush1.msra.mxu0 0.0
    %2229 = vmatprep.subr.mxu0 0.0
    %2230 = vmatpush1.msra.mxu0 0.0
    %2231 = vmatprep.subr.mxu0 0.0
    %2232 = vmatpush1.msra.mxu0 0.0
    %2233 = vmatprep.subr.mxu0 0.0
    %2234 = vmatpush1.msra.mxu0 0.0
    %2235 = vmatprep.subr.mxu0 0.0
    %2236 = vmatpush1.msra.mxu0 0.0
    %2237 = vmatprep.subr.mxu0 0.0
    %2238 = vmatpush1.msra.mxu0 0.0
    %2239 = vmatprep.subr.mxu0 0.0
    %2240 = vmatpush1.msra.mxu0 0.0
    %2241 = vmatprep.subr.mxu0 0.0
    %2242 = vmatpush1.msra.mxu0 0.0
    %2243 = vmatprep.subr.mxu0 0.0
    %2244 = vmatpush1.msra.mxu0 0.0
    %2245 = vmatprep.subr.mxu0 0.0
    %2246 = vmatpush1.msra.mxu0 0.0
    %2247 = vmatprep.subr.mxu0 0.0
    %2248 = vmatpush1.msra.mxu0 0.0
    %2249 = vmatprep.subr.mxu0 0.0
    %2250 = vmatpush1.msra.mxu0 0.0
    %2251 = vmatprep.subr.mxu0 0.0
    %2252 = vmatpush1.msra.mxu0 0.0
    %2253 = vmatprep.mubr.f32.mxu0 0.0
    %2254 = vmatmul.mubr.f32.gmra.mrb[0].mxu0 %v2178
    %v2255 = vpop.f32.mrb[0].mxu0
    %v2256 = vadd.f32 0.0, %v2255
    %v2257 = vpop.f32.mrb[0].mxu0
    %2258 = vmatprep.mubr.f32.mxu0 0.0
    %2259 = vmatmul.mubr.f32.gmra.mrb[0].mxu0 %v2181
    %v2260 = vpop.f32.mrb[0].mxu0
    %v2261 = vadd.f32 0.0, %v2260
    %v2262 = vpop.f32.mrb[0].mxu0
    %2263 = vmatprep.mubr.f32.mxu0 0.0
    %2264 = vmatmul.mubr.f32.gmra.mrb[0].mxu0 %v2184
    %v2265 = vpop.f32.mrb[0].mxu0
    %v2266 = vadd.f32 0.0, %v2265
    %v2267 = vpop.f32.mrb[0].mxu0
    %2268 = vmatprep.mubr.f32.mxu0 0.0
    %2269 = vmatmul.mubr.f32.gmra.mrb[0].mxu0 %v2187
    %v2270 = vpop.f32.mrb[0].mxu0
    %v2271 = vadd.f32 0.0, %v2270
    %v2272 = vpop.f32.mrb[0].mxu0
    %2273 = vdwg.mxu0
    %v2274 = vld [vmem:[#allocation2 + $0x48] sm:$0xff]
    %v2275 = vld [vmem:[#allocation2 + $0x58] sm:$0xff]
    %v2276 = vmul.f32 %v2274, %v2256
    %v2277 = vmul.f32 %v2275, %v2261
    %v2278 = vadd.f32 %v2276, %v2266
    %v2279 = vadd.f32 %v2277, %v2271
    %v2280 = vmax.f32 %v2278, 0.0
    %v2281 = vmax.f32 %v2279, 0.0
    %2284 = vrot.lane.b32.xlu0 %v2067, 64
    %v2285 = vpop.permute.xlu0 %2284
    %2286 = vrot.lane.b32.xlu0 %v2068, 64
    %v2287 = vpop.permute.xlu0 %2286
    %2290 = vmatprep.subr.mxu0 0.0
    %2291 = vmatpush1.msra.mxu0 %v2285
    %2292 = vmatprep.subr.mxu0 0.0
    %2293 = vmatpush1.msra.mxu0 %v2287
    %2294 = vmatprep.subr.mxu0 0.0
    %2295 = vmatpush1.msra.mxu0 0.0
    %2296 = vmatprep.subr.mxu0 0.0
    %2297 = vmatpush1.msra.mxu0 0.0
    %2298 = vmatprep.subr.mxu0 0.0
    %2299 = vmatpush1.msra.mxu0 0.0
    %2300 = vmatprep.subr.mxu0 0.0
    %2301 = vmatpush1.msra.mxu0 0.0
    %2302 = vmatprep.subr.mxu0 0.0
    %2303 = vmatpush1.msra.mxu0 0.0
    %2304 = vmatprep.subr.mxu0 0.0
    %2305 = vmatpush1.msra.mxu0 0.0
    %2306 = vmatprep.subr.mxu0 0.0
    %2307 = vmatpush1.msra.mxu0 0.0
    %2308 = vmatprep.subr.mxu0 0.0
    %2309 = vmatpush1.msra.mxu0 0.0
    %2310 = vmatprep.subr.mxu0 0.0
    %2311 = vmatpush1.msra.mxu0 0.0
    %2312 = vmatprep.subr.mxu0 0.0
    %2313 = vmatpush1.msra.mxu0 0.0
    %2314 = vmatprep.subr.mxu0 0.0
    %2315 = vmatpush1.msra.mxu0 0.0
    %2316 = vmatprep.subr.mxu0 0.0
    %2317 = vmatpush1.msra.mxu0 0.0
    %2318 = vmatprep.subr.mxu0 0.0
    %2319 = vmatpush1.msra.mxu0 0.0
    %2320 = vmatprep.subr.mxu0 0.0
    %2321 = vmatpush1.msra.mxu0 0.0
    %2322 = vmatprep.subr.mxu0 0.0
    %2323 = vmatpush1.msra.mxu0 0.0
    %2324 = vmatprep.subr.mxu0 0.0
    %2325 = vmatpush1.msra.mxu0 0.0
    %2326 = vmatprep.subr.mxu0 0.0
    %2327 = vmatpush1.msra.mxu0 0.0
    %2328 = vmatprep.subr.mxu0 0.0
    %2329 = vmatpush1.msra.mxu0 0.0
    %2330 = vmatprep.subr.mxu0 0.0
    %2331 = vmatpush1.msra.mxu0 0.0
    %2332 = vmatprep.subr.mxu0 0.0
    %2333 = vmatpush1.msra.mxu0 0.0
    %2334 = vmatprep.subr.mxu0 0.0
    %2335 = vmatpush1.msra.mxu0 0.0
    %2336 = vmatprep.subr.mxu0 0.0
    %2337 = vmatpush1.msra.mxu0 0.0
    %2338 = vmatprep.subr.mxu0 0.0
    %2339 = vmatpush1.msra.mxu0 0.0
    %2340 = vmatprep.subr.mxu0 0.0
    %2341 = vmatpush1.msra.mxu0 0.0
    %2342 = vmatprep.subr.mxu0 0.0
    %2343 = vmatpush1.msra.mxu0 0.0
    %2344 = vmatprep.subr.mxu0 0.0
    %2345 = vmatpush1.msra.mxu0 0.0
    %2346 = vmatprep.subr.mxu0 0.0
    %2347 = vmatpush1.msra.mxu0 0.0
    %2348 = vmatprep.subr.mxu0 0.0
    %2349 = vmatpush1.msra.mxu0 0.0
    %2350 = vmatprep.subr.mxu0 0.0
    %2351 = vmatpush1.msra.mxu0 0.0
    %2352 = vmatprep.subr.mxu0 0.0
    %2353 = vmatpush1.msra.mxu0 0.0
    %2354 = vmatprep.mubr.f32.mxu0 0.0
    %2355 = vmatmul.mubr.f32.gmra.mrb[0].mxu0 %v1532
    %v2356 = vpop.f32.mrb[0].mxu0
    %v2357 = vadd.f32 0.0, %v2356
    %v2358 = vpop.f32.mrb[0].mxu0
    %2359 = vdwg.mxu0
    %v2360 = vxor.u32 %v2357, 2147483648
    %v2361 = vmul.f32 %v2360, 1.442695
    %v2362 = vpow.pop %v2361
    %v2363 = vadd.f32 %v2362, 1.0
    %v2364 = vrcp.pop %v2363
    %v2365 = vmul.f32 1.0, %v2364
    %2366 = vxpose.xlu0.b32.start [1/16] %v1286, 128
    %2367 = vxpose.xlu0.b32.cont [2/16] 0.0, 128
    %2368 = vxpose.xlu0.b32.cont [3/16] 0.0, 128
    %2369 = vxpose.xlu0.b32.cont [4/16] 0.0, 128
    %2370 = vxpose.xlu0.b32.cont [5/16] 0.0, 128
    %2371 = vxpose.xlu0.b32.cont [6/16] 0.0, 128
    %2372 = vxpose.xlu0.b32.cont [7/16] 0.0, 128
    %2373 = vxpose.xlu0.b32.cont [8/16] 0.0, 128
    %2374 = vxpose.xlu0.b32.cont [9/16] 0.0, 128
    %2375 = vxpose.xlu0.b32.cont [10/16] 0.0, 128
    %2376 = vxpose.xlu0.b32.cont [11/16] 0.0, 128
    %2377 = vxpose.xlu0.b32.cont [12/16] 0.0, 128
    %2378 = vxpose.xlu0.b32.cont [13/16] 0.0, 128
    %2379 = vxpose.xlu0.b32.cont [14/16] 0.0, 128
    %2380 = vxpose.xlu0.b32.cont [15/16] 0.0, 128
    %2381 = vxpose.xlu0.b32.end [16/16] 0.0, 128
    %v2382 = vpop.trf.xlu0
    %v2383 = vpop.trf.xlu0
    %v2384 = vpop.trf.xlu0
    %v2385 = vpop.trf.xlu0
    %v2386 = vpop.trf.xlu0
    %v2387 = vpop.trf.xlu0
    %v2388 = vpop.trf.xlu0
    %v2389 = vpop.trf.xlu0
    %v2390 = vpop.trf.xlu0
    %v2391 = vpop.trf.xlu0
    %v2392 = vpop.trf.xlu0
    %v2393 = vpop.trf.xlu0
    %v2394 = vpop.trf.xlu0
    %v2395 = vpop.trf.xlu0
    %v2396 = vpop.trf.xlu0
    %v2397 = vpop.trf.xlu0
    %v2399 = vsel %vm1726, %v2382, 0
    %v2402 = vsel %vm1726, %v2383, 0
    %v2405 = vsel %vm1726, %v2384, 0
    %v2408 = vsel %vm1726, %v2385, 0
    %2410 = vmatprep.subr.mxu0 0.0
    %2411 = vmatpush1.msra.mxu0 %v2365
    %2412 = vmatprep.subr.mxu0 0.0
    %2413 = vmatpush1.msra.mxu0 0.0
    %2414 = vmatprep.subr.mxu0 0.0
    %2415 = vmatpush1.msra.mxu0 0.0
    %2416 = vmatprep.subr.mxu0 0.0
    %2417 = vmatpush1.msra.mxu0 0.0
    %2418 = vmatprep.subr.mxu0 0.0
    %2419 = vmatpush1.msra.mxu0 0.0
    %2420 = vmatprep.subr.mxu0 0.0
    %2421 = vmatpush1.msra.mxu0 0.0
    %2422 = vmatprep.subr.mxu0 0.0
    %2423 = vmatpush1.msra.mxu0 0.0
    %2424 = vmatprep.subr.mxu0 0.0
    %2425 = vmatpush1.msra.mxu0 0.0
    %2426 = vmatprep.subr.mxu0 0.0
    %2427 = vmatpush1.msra.mxu0 0.0
    %2428 = vmatprep.subr.mxu0 0.0
    %2429 = vmatpush1.msra.mxu0 0.0
    %2430 = vmatprep.subr.mxu0 0.0
    %2431 = vmatpush1.msra.mxu0 0.0
    %2432 = vmatprep.subr.mxu0 0.0
    %2433 = vmatpush1.msra.mxu0 0.0
    %2434 = vmatprep.subr.mxu0 0.0
    %2435 = vmatpush1.msra.mxu0 0.0
    %2436 = vmatprep.subr.mxu0 0.0
    %2437 = vmatpush1.msra.mxu0 0.0
    %2438 = vmatprep.subr.mxu0 0.0
    %2439 = vmatpush1.msra.mxu0 0.0
    %2440 = vmatprep.subr.mxu0 0.0
    %2441 = vmatpush1.msra.mxu0 0.0
    %2442 = vmatprep.subr.mxu0 0.0
    %2443 = vmatpush1.msra.mxu0 0.0
    %2444 = vmatprep.subr.mxu0 0.0
    %2445 = vmatpush1.msra.mxu0 0.0
    %2446 = vmatprep.subr.mxu0 0.0
    %2447 = vmatpush1.msra.mxu0 0.0
    %2448 = vmatprep.subr.mxu0 0.0
    %2449 = vmatpush1.msra.mxu0 0.0
    %2450 = vmatprep.subr.mxu0 0.0
    %2451 = vmatpush1.msra.mxu0 0.0
    %2452 = vmatprep.subr.mxu0 0.0
    %2453 = vmatpush1.msra.mxu0 0.0
    %2454 = vmatprep.subr.mxu0 0.0
    %2455 = vmatpush1.msra.mxu0 0.0
    %2456 = vmatprep.subr.mxu0 0.0
    %2457 = vmatpush1.msra.mxu0 0.0
    %2458 = vmatprep.subr.mxu0 0.0
    %2459 = vmatpush1.msra.mxu0 0.0
    %2460 = vmatprep.subr.mxu0 0.0
    %2461 = vmatpush1.msra.mxu0 0.0
    %2462 = vmatprep.subr.mxu0 0.0
    %2463 = vmatpush1.msra.mxu0 0.0
    %2464 = vmatprep.subr.mxu0 0.0
    %2465 = vmatpush1.msra.mxu0 0.0
    %2466 = vmatprep.subr.mxu0 0.0
    %2467 = vmatpush1.msra.mxu0 0.0
    %2468 = vmatprep.subr.mxu0 0.0
    %2469 = vmatpush1.msra.mxu0 0.0
    %2470 = vmatprep.subr.mxu0 0.0
    %2471 = vmatpush1.msra.mxu0 0.0
    %2472 = vmatprep.subr.mxu0 0.0
    %2473 = vmatpush1.msra.mxu0 0.0
    %2474 = vmatprep.mubr.f32.mxu0 0.0
    %2475 = vmatmul.mubr.f32.gmra.mrb[0].mxu0 %v2399
    %v2476 = vpop.f32.mrb[0].mxu0
    %v2477 = vadd.f32 0.0, %v2476
    %v2478 = vpop.f32.mrb[0].mxu0
    %2479 = vmatprep.mubr.f32.mxu0 0.0
    %2480 = vmatmul.mubr.f32.gmra.mrb[0].mxu0 %v2402
    %v2481 = vpop.f32.mrb[0].mxu0
    %v2482 = vadd.f32 0.0, %v2481
    %v2483 = vpop.f32.mrb[0].mxu0
    %2484 = vmatprep.mubr.f32.mxu0 0.0
    %2485 = vmatmul.mubr.f32.gmra.mrb[0].mxu0 %v2405
    %v2486 = vpop.f32.mrb[0].mxu0
    %v2487 = vadd.f32 0.0, %v2486
    %v2488 = vpop.f32.mrb[0].mxu0
    %2489 = vmatprep.mubr.f32.mxu0 0.0
    %2490 = vmatmul.mubr.f32.gmra.mrb[0].mxu0 %v2408
    %v2491 = vpop.f32.mrb[0].mxu0
    %v2492 = vadd.f32 0.0, %v2491
    %v2493 = vpop.f32.mrb[0].mxu0
    %2494 = vdwg.mxu0
    %2497 = vrot.lane.b32.xlu0 %v2477, 64
    %v2498 = vpop.permute.xlu0 %2497
    %2499 = vrot.lane.b32.xlu0 %v2482, 64
    %v2500 = vpop.permute.xlu0 %2499
    %v2503 = vmul.f32 %v2274, %v2498
    %v2504 = vmul.f32 %v2275, %v2500
    %2507 = vrot.lane.b32.xlu0 %v2487, 64
    %v2508 = vpop.permute.xlu0 %2507
    %2509 = vrot.lane.b32.xlu0 %v2492, 64
    %v2510 = vpop.permute.xlu0 %2509
    %v2513 = vadd.f32 %v2503, %v2508
    %v2514 = vadd.f32 %v2504, %v2510
    %v2515 = vmax.f32 %v2513, 0.0
    %v2516 = vmax.f32 %v2514, 0.0
    %2518 = vrot.lane.b32.xlu0 %v1907, 64
    %v2519 = vpop.permute.xlu0 %2518
    %2522 = vrot.lane.b32.xlu0 %v2357, 64
    %v2523 = vpop.permute.xlu0 %2522
    %v2525 = vsel %vm513, %v1685, %v2519
    %v2526 = vsel %vm513, %v2136, %v2523
    %s2527 = scalar_lea.vmem %s9, 16
    %2528 = vst [vmem:[%s2527] sm:$0xff] %v2525
    %2529 = vst [vmem:[%s2527 + $0x8] sm:$0xff] %v2526
    %v2530 = vsel %vm513, %v1830, %v2065
    %v2531 = vsel %vm513, %v1831, %v2066
    %v2532 = vsel %vm513, %v2280, %v2515
    %v2533 = vsel %vm513, %v2281, %v2516
    %2534 = vst [vmem:[#allocation3] sm:$0xff] %v2530
    %2535 = vst [vmem:[#allocation3 + $0x8] sm:$0xff] %v2532
    %2536 = vst [vmem:[#allocation3 + $0x10] sm:$0xff] %v2531
    %2537 = vst [vmem:[#allocation3 + $0x18] sm:$0xff] %v2533
    %v2538 = vld [vmem:[#allocation2 + $0x60] sm:$0xff]
    %v2539 = vld [vmem:[#allocation2 + $0x70] sm:$0xff]
    %2540 = vmatprep.subr.mxu0 0.0
    %2541 = vmatpush1.msra.mxu0 %v2538
    %2542 = vmatprep.subr.mxu0 0.0
    %2543 = vmatpush1.msra.mxu0 %v2539
    %2544 = vmatprep.subr.mxu0 0.0
    %2545 = vmatpush1.msra.mxu0 0.0
    %2546 = vmatprep.subr.mxu0 0.0
    %2547 = vmatpush1.msra.mxu0 0.0
    %2548 = vmatprep.subr.mxu0 0.0
    %2549 = vmatpush1.msra.mxu0 0.0
    %2550 = vmatprep.subr.mxu0 0.0
    %2551 = vmatpush1.msra.mxu0 0.0
    %2552 = vmatprep.subr.mxu0 0.0
    %2553 = vmatpush1.msra.mxu0 0.0
    %2554 = vmatprep.subr.mxu0 0.0
    %2555 = vmatpush1.msra.mxu0 0.0
    %2556 = vmatprep.subr.mxu0 0.0
    %2557 = vmatpush1.msra.mxu0 0.0
    %2558 = vmatprep.subr.mxu0 0.0
    %2559 = vmatpush1.msra.mxu0 0.0
    %2560 = vmatprep.subr.mxu0 0.0
    %2561 = vmatpush1.msra.mxu0 0.0
    %2562 = vmatprep.subr.mxu0 0.0
    %2563 = vmatpush1.msra.mxu0 0.0
    %2564 = vmatprep.subr.mxu0 0.0
    %2565 = vmatpush1.msra.mxu0 0.0
    %2566 = vmatprep.subr.mxu0 0.0
    %2567 = vmatpush1.msra.mxu0 0.0
    %2568 = vmatprep.subr.mxu0 0.0
    %2569 = vmatpush1.msra.mxu0 0.0
    %2570 = vmatprep.subr.mxu0 0.0
    %2571 = vmatpush1.msra.mxu0 0.0
    %2572 = vmatprep.subr.mxu0 0.0
    %2573 = vmatpush1.msra.mxu0 0.0
    %2574 = vmatprep.subr.mxu0 0.0
    %2575 = vmatpush1.msra.mxu0 0.0
    %2576 = vmatprep.subr.mxu0 0.0
    %2577 = vmatpush1.msra.mxu0 0.0
    %2578 = vmatprep.subr.mxu0 0.0
    %2579 = vmatpush1.msra.mxu0 0.0
    %2580 = vmatprep.subr.mxu0 0.0
    %2581 = vmatpush1.msra.mxu0 0.0
    %2582 = vmatprep.subr.mxu0 0.0
    %2583 = vmatpush1.msra.mxu0 0.0
    %2584 = vmatprep.subr.mxu0 0.0
    %2585 = vmatpush1.msra.mxu0 0.0
    %2586 = vmatprep.subr.mxu0 0.0
    %2587 = vmatpush1.msra.mxu0 0.0
    %2588 = vmatprep.subr.mxu0 0.0
    %2589 = vmatpush1.msra.mxu0 0.0
    %2590 = vmatprep.subr.mxu0 0.0
    %2591 = vmatpush1.msra.mxu0 0.0
    %2592 = vmatprep.subr.mxu0 0.0
    %2593 = vmatpush1.msra.mxu0 0.0
    %2594 = vmatprep.subr.mxu0 0.0
    %2595 = vmatpush1.msra.mxu0 0.0
    %2596 = vmatprep.subr.mxu0 0.0
    %2597 = vmatpush1.msra.mxu0 0.0
    %2598 = vmatprep.subr.mxu0 0.0
    %2599 = vmatpush1.msra.mxu0 0.0
    %2600 = vmatprep.subr.mxu0 0.0
    %2601 = vmatpush1.msra.mxu0 0.0
    %2602 = vmatprep.subr.mxu0 0.0
    %2603 = vmatpush1.msra.mxu0 0.0
    %2604 = vmatprep.mubr.f32.mxu0 0.0
    %2605 = vmatmul.mubr.f32.gmra.mrb[0].mxu0 %v1295
    %v2606 = vpop.f32.mrb[0].mxu0
    %v2607 = vadd.f32 0.0, %v2606
    %v2608 = vpop.f32.mrb[0].mxu0
    %2609 = vdwg.mxu0
    %v2610 = vxor.u32 %v2607, 2147483648
    %v2611 = vmul.f32 %v2610, 1.442695
    %v2612 = vpow.pop %v2611
    %v2613 = vadd.f32 %v2612, 1.0
    %v2614 = vrcp.pop %v2613
    %v2615 = vmul.f32 1.0, %v2614
    %2617 = vrot.lane.b32.xlu0 %v1283, 96
    %v2618 = vpop.permute.xlu0 %2617
    %2620 = vxpose.xlu0.b32.start [1/16] %v2618, 128
    %2621 = vxpose.xlu0.b32.cont [2/16] 0.0, 128
    %2622 = vxpose.xlu0.b32.cont [3/16] 0.0, 128
    %2623 = vxpose.xlu0.b32.cont [4/16] 0.0, 128
    %2624 = vxpose.xlu0.b32.cont [5/16] 0.0, 128
    %2625 = vxpose.xlu0.b32.cont [6/16] 0.0, 128
    %2626 = vxpose.xlu0.b32.cont [7/16] 0.0, 128
    %2627 = vxpose.xlu0.b32.cont [8/16] 0.0, 128
    %2628 = vxpose.xlu0.b32.cont [9/16] 0.0, 128
    %2629 = vxpose.xlu0.b32.cont [10/16] 0.0, 128
    %2630 = vxpose.xlu0.b32.cont [11/16] 0.0, 128
    %2631 = vxpose.xlu0.b32.cont [12/16] 0.0, 128
    %2632 = vxpose.xlu0.b32.cont [13/16] 0.0, 128
    %2633 = vxpose.xlu0.b32.cont [14/16] 0.0, 128
    %2634 = vxpose.xlu0.b32.cont [15/16] 0.0, 128
    %2635 = vxpose.xlu0.b32.end [16/16] 0.0, 128
    %v2636 = vpop.trf.xlu0
    %v2637 = vpop.trf.xlu0
    %v2638 = vpop.trf.xlu0
    %v2639 = vpop.trf.xlu0
    %v2640 = vpop.trf.xlu0
    %v2641 = vpop.trf.xlu0
    %v2642 = vpop.trf.xlu0
    %v2643 = vpop.trf.xlu0
    %v2644 = vpop.trf.xlu0
    %v2645 = vpop.trf.xlu0
    %v2646 = vpop.trf.xlu0
    %v2647 = vpop.trf.xlu0
    %v2648 = vpop.trf.xlu0
    %v2649 = vpop.trf.xlu0
    %v2650 = vpop.trf.xlu0
    %v2651 = vpop.trf.xlu0
    %v2653 = vsel %vm1726, %v2636, 0
    %v2656 = vsel %vm1726, %v2637, 0
    %v2659 = vsel %vm1726, %v2638, 0
    %v2662 = vsel %vm1726, %v2639, 0
    %2664 = vmatprep.subr.mxu0 0.0
    %2665 = vmatpush1.msra.mxu0 %v2615
    %2666 = vmatprep.subr.mxu0 0.0
    %2667 = vmatpush1.msra.mxu0 0.0
    %2668 = vmatprep.subr.mxu0 0.0
    %2669 = vmatpush1.msra.mxu0 0.0
    %2670 = vmatprep.subr.mxu0 0.0
    %2671 = vmatpush1.msra.mxu0 0.0
    %2672 = vmatprep.subr.mxu0 0.0
    %2673 = vmatpush1.msra.mxu0 0.0
    %2674 = vmatprep.subr.mxu0 0.0
    %2675 = vmatpush1.msra.mxu0 0.0
    %2676 = vmatprep.subr.mxu0 0.0
    %2677 = vmatpush1.msra.mxu0 0.0
    %2678 = vmatprep.subr.mxu0 0.0
    %2679 = vmatpush1.msra.mxu0 0.0
    %2680 = vmatprep.subr.mxu0 0.0
    %2681 = vmatpush1.msra.mxu0 0.0
    %2682 = vmatprep.subr.mxu0 0.0
    %2683 = vmatpush1.msra.mxu0 0.0
    %2684 = vmatprep.subr.mxu0 0.0
    %2685 = vmatpush1.msra.mxu0 0.0
    %2686 = vmatprep.subr.mxu0 0.0
    %2687 = vmatpush1.msra.mxu0 0.0
    %2688 = vmatprep.subr.mxu0 0.0
    %2689 = vmatpush1.msra.mxu0 0.0
    %2690 = vmatprep.subr.mxu0 0.0
    %2691 = vmatpush1.msra.mxu0 0.0
    %2692 = vmatprep.subr.mxu0 0.0
    %2693 = vmatpush1.msra.mxu0 0.0
    %2694 = vmatprep.subr.mxu0 0.0
    %2695 = vmatpush1.msra.mxu0 0.0
    %2696 = vmatprep.subr.mxu0 0.0
    %2697 = vmatpush1.msra.mxu0 0.0
    %2698 = vmatprep.subr.mxu0 0.0
    %2699 = vmatpush1.msra.mxu0 0.0
    %2700 = vmatprep.subr.mxu0 0.0
    %2701 = vmatpush1.msra.mxu0 0.0
    %2702 = vmatprep.subr.mxu0 0.0
    %2703 = vmatpush1.msra.mxu0 0.0
    %2704 = vmatprep.subr.mxu0 0.0
    %2705 = vmatpush1.msra.mxu0 0.0
    %2706 = vmatprep.subr.mxu0 0.0
    %2707 = vmatpush1.msra.mxu0 0.0
    %2708 = vmatprep.subr.mxu0 0.0
    %2709 = vmatpush1.msra.mxu0 0.0
    %2710 = vmatprep.subr.mxu0 0.0
    %2711 = vmatpush1.msra.mxu0 0.0
    %2712 = vmatprep.subr.mxu0 0.0
    %2713 = vmatpush1.msra.mxu0 0.0
    %2714 = vmatprep.subr.mxu0 0.0
    %2715 = vmatpush1.msra.mxu0 0.0
    %2716 = vmatprep.subr.mxu0 0.0
    %2717 = vmatpush1.msra.mxu0 0.0
    %2718 = vmatprep.subr.mxu0 0.0
    %2719 = vmatpush1.msra.mxu0 0.0
    %2720 = vmatprep.subr.mxu0 0.0
    %2721 = vmatpush1.msra.mxu0 0.0
    %2722 = vmatprep.subr.mxu0 0.0
    %2723 = vmatpush1.msra.mxu0 0.0
    %2724 = vmatprep.subr.mxu0 0.0
    %2725 = vmatpush1.msra.mxu0 0.0
    %2726 = vmatprep.subr.mxu0 0.0
    %2727 = vmatpush1.msra.mxu0 0.0
    %2728 = vmatprep.mubr.f32.mxu0 0.0
    %2729 = vmatmul.mubr.f32.gmra.mrb[0].mxu0 %v2653
    %v2730 = vpop.f32.mrb[0].mxu0
    %v2731 = vadd.f32 0.0, %v2730
    %v2732 = vpop.f32.mrb[0].mxu0
    %2733 = vmatprep.mubr.f32.mxu0 0.0
    %2734 = vmatmul.mubr.f32.gmra.mrb[0].mxu0 %v2656
    %v2735 = vpop.f32.mrb[0].mxu0
    %v2736 = vadd.f32 0.0, %v2735
    %v2737 = vpop.f32.mrb[0].mxu0
    %2738 = vmatprep.mubr.f32.mxu0 0.0
    %2739 = vmatmul.mubr.f32.gmra.mrb[0].mxu0 %v2659
    %v2740 = vpop.f32.mrb[0].mxu0
    %v2741 = vadd.f32 0.0, %v2740
    %v2742 = vpop.f32.mrb[0].mxu0
    %2743 = vmatprep.mubr.f32.mxu0 0.0
    %2744 = vmatmul.mubr.f32.gmra.mrb[0].mxu0 %v2662
    %v2745 = vpop.f32.mrb[0].mxu0
    %v2746 = vadd.f32 0.0, %v2745
    %v2747 = vpop.f32.mrb[0].mxu0
    %2748 = vdwg.mxu0
    %v2749 = vld [vmem:[#allocation2 + $0x80] sm:$0xff]
    %v2750 = vld [vmem:[#allocation2 + $0x90] sm:$0xff]
    %v2751 = vmul.f32 %v2749, %v2731
    %v2752 = vmul.f32 %v2750, %v2736
    %v2753 = vadd.f32 %v2751, %v2741
    %v2754 = vadd.f32 %v2752, %v2746
    %v2755 = vmax.f32 %v2753, 0.0
    %v2756 = vmax.f32 %v2754, 0.0
    %2759 = vrot.lane.b32.xlu0 %v2538, 64
    %v2760 = vpop.permute.xlu0 %2759
    %2761 = vrot.lane.b32.xlu0 %v2539, 64
    %v2762 = vpop.permute.xlu0 %2761
    %2765 = vmatprep.subr.mxu0 0.0
    %2766 = vmatpush1.msra.mxu0 %v2760
    %2767 = vmatprep.subr.mxu0 0.0
    %2768 = vmatpush1.msra.mxu0 %v2762
    %2769 = vmatprep.subr.mxu0 0.0
    %2770 = vmatpush1.msra.mxu0 0.0
    %2771 = vmatprep.subr.mxu0 0.0
    %2772 = vmatpush1.msra.mxu0 0.0
    %2773 = vmatprep.subr.mxu0 0.0
    %2774 = vmatpush1.msra.mxu0 0.0
    %2775 = vmatprep.subr.mxu0 0.0
    %2776 = vmatpush1.msra.mxu0 0.0
    %2777 = vmatprep.subr.mxu0 0.0
    %2778 = vmatpush1.msra.mxu0 0.0
    %2779 = vmatprep.subr.mxu0 0.0
    %2780 = vmatpush1.msra.mxu0 0.0
    %2781 = vmatprep.subr.mxu0 0.0
    %2782 = vmatpush1.msra.mxu0 0.0
    %2783 = vmatprep.subr.mxu0 0.0
    %2784 = vmatpush1.msra.mxu0 0.0
    %2785 = vmatprep.subr.mxu0 0.0
    %2786 = vmatpush1.msra.mxu0 0.0
    %2787 = vmatprep.subr.mxu0 0.0
    %2788 = vmatpush1.msra.mxu0 0.0
    %2789 = vmatprep.subr.mxu0 0.0
    %2790 = vmatpush1.msra.mxu0 0.0
    %2791 = vmatprep.subr.mxu0 0.0
    %2792 = vmatpush1.msra.mxu0 0.0
    %2793 = vmatprep.subr.mxu0 0.0
    %2794 = vmatpush1.msra.mxu0 0.0
    %2795 = vmatprep.subr.mxu0 0.0
    %2796 = vmatpush1.msra.mxu0 0.0
    %2797 = vmatprep.subr.mxu0 0.0
    %2798 = vmatpush1.msra.mxu0 0.0
    %2799 = vmatprep.subr.mxu0 0.0
    %2800 = vmatpush1.msra.mxu0 0.0
    %2801 = vmatprep.subr.mxu0 0.0
    %2802 = vmatpush1.msra.mxu0 0.0
    %2803 = vmatprep.subr.mxu0 0.0
    %2804 = vmatpush1.msra.mxu0 0.0
    %2805 = vmatprep.subr.mxu0 0.0
    %2806 = vmatpush1.msra.mxu0 0.0
    %2807 = vmatprep.subr.mxu0 0.0
    %2808 = vmatpush1.msra.mxu0 0.0
    %2809 = vmatprep.subr.mxu0 0.0
    %2810 = vmatpush1.msra.mxu0 0.0
    %2811 = vmatprep.subr.mxu0 0.0
    %2812 = vmatpush1.msra.mxu0 0.0
    %2813 = vmatprep.subr.mxu0 0.0
    %2814 = vmatpush1.msra.mxu0 0.0
    %2815 = vmatprep.subr.mxu0 0.0
    %2816 = vmatpush1.msra.mxu0 0.0
    %2817 = vmatprep.subr.mxu0 0.0
    %2818 = vmatpush1.msra.mxu0 0.0
    %2819 = vmatprep.subr.mxu0 0.0
    %2820 = vmatpush1.msra.mxu0 0.0
    %2821 = vmatprep.subr.mxu0 0.0
    %2822 = vmatpush1.msra.mxu0 0.0
    %2823 = vmatprep.subr.mxu0 0.0
    %2824 = vmatpush1.msra.mxu0 0.0
    %2825 = vmatprep.subr.mxu0 0.0
    %2826 = vmatpush1.msra.mxu0 0.0
    %2827 = vmatprep.subr.mxu0 0.0
    %2828 = vmatpush1.msra.mxu0 0.0
    %2829 = vmatprep.mubr.f32.mxu0 0.0
    %2830 = vmatmul.mubr.f32.gmra.mrb[0].mxu0 %v1376
    %v2831 = vpop.f32.mrb[0].mxu0
    %v2832 = vadd.f32 0.0, %v2831
    %v2833 = vpop.f32.mrb[0].mxu0
    %2834 = vdwg.mxu0
    %v2835 = vxor.u32 %v2832, 2147483648
    %v2836 = vmul.f32 %v2835, 1.442695
    %v2837 = vpow.pop %v2836
    %v2838 = vadd.f32 %v2837, 1.0
    %v2839 = vrcp.pop %v2838
    %v2840 = vmul.f32 1.0, %v2839
    %2842 = vrot.lane.b32.xlu0 %v1284, 96
    %v2843 = vpop.permute.xlu0 %2842
    %2845 = vxpose.xlu0.b32.start [1/16] %v2843, 128
    %2846 = vxpose.xlu0.b32.cont [2/16] 0.0, 128
    %2847 = vxpose.xlu0.b32.cont [3/16] 0.0, 128
    %2848 = vxpose.xlu0.b32.cont [4/16] 0.0, 128
    %2849 = vxpose.xlu0.b32.cont [5/16] 0.0, 128
    %2850 = vxpose.xlu0.b32.cont [6/16] 0.0, 128
    %2851 = vxpose.xlu0.b32.cont [7/16] 0.0, 128
    %2852 = vxpose.xlu0.b32.cont [8/16] 0.0, 128
    %2853 = vxpose.xlu0.b32.cont [9/16] 0.0, 128
    %2854 = vxpose.xlu0.b32.cont [10/16] 0.0, 128
    %2855 = vxpose.xlu0.b32.cont [11/16] 0.0, 128
    %2856 = vxpose.xlu0.b32.cont [12/16] 0.0, 128
    %2857 = vxpose.xlu0.b32.cont [13/16] 0.0, 128
    %2858 = vxpose.xlu0.b32.cont [14/16] 0.0, 128
    %2859 = vxpose.xlu0.b32.cont [15/16] 0.0, 128
    %2860 = vxpose.xlu0.b32.end [16/16] 0.0, 128
    %v2861 = vpop.trf.xlu0
    %v2862 = vpop.trf.xlu0
    %v2863 = vpop.trf.xlu0
    %v2864 = vpop.trf.xlu0
    %v2865 = vpop.trf.xlu0
    %v2866 = vpop.trf.xlu0
    %v2867 = vpop.trf.xlu0
    %v2868 = vpop.trf.xlu0
    %v2869 = vpop.trf.xlu0
    %v2870 = vpop.trf.xlu0
    %v2871 = vpop.trf.xlu0
    %v2872 = vpop.trf.xlu0
    %v2873 = vpop.trf.xlu0
    %v2874 = vpop.trf.xlu0
    %v2875 = vpop.trf.xlu0
    %v2876 = vpop.trf.xlu0
    %v2878 = vsel %vm1726, %v2861, 0
    %v2881 = vsel %vm1726, %v2862, 0
    %v2884 = vsel %vm1726, %v2863, 0
    %v2887 = vsel %vm1726, %v2864, 0
    %2889 = vmatprep.subr.mxu0 0.0
    %2890 = vmatpush1.msra.mxu0 %v2840
    %2891 = vmatprep.subr.mxu0 0.0
    %2892 = vmatpush1.msra.mxu0 0.0
    %2893 = vmatprep.subr.mxu0 0.0
    %2894 = vmatpush1.msra.mxu0 0.0
    %2895 = vmatprep.subr.mxu0 0.0
    %2896 = vmatpush1.msra.mxu0 0.0
    %2897 = vmatprep.subr.mxu0 0.0
    %2898 = vmatpush1.msra.mxu0 0.0
    %2899 = vmatprep.subr.mxu0 0.0
    %2900 = vmatpush1.msra.mxu0 0.0
    %2901 = vmatprep.subr.mxu0 0.0
    %2902 = vmatpush1.msra.mxu0 0.0
    %2903 = vmatprep.subr.mxu0 0.0
    %2904 = vmatpush1.msra.mxu0 0.0
    %2905 = vmatprep.subr.mxu0 0.0
    %2906 = vmatpush1.msra.mxu0 0.0
    %2907 = vmatprep.subr.mxu0 0.0
    %2908 = vmatpush1.msra.mxu0 0.0
    %2909 = vmatprep.subr.mxu0 0.0
    %2910 = vmatpush1.msra.mxu0 0.0
    %2911 = vmatprep.subr.mxu0 0.0
    %2912 = vmatpush1.msra.mxu0 0.0
    %2913 = vmatprep.subr.mxu0 0.0
    %2914 = vmatpush1.msra.mxu0 0.0
    %2915 = vmatprep.subr.mxu0 0.0
    %2916 = vmatpush1.msra.mxu0 0.0
    %2917 = vmatprep.subr.mxu0 0.0
    %2918 = vmatpush1.msra.mxu0 0.0
    %2919 = vmatprep.subr.mxu0 0.0
    %2920 = vmatpush1.msra.mxu0 0.0
    %2921 = vmatprep.subr.mxu0 0.0
    %2922 = vmatpush1.msra.mxu0 0.0
    %2923 = vmatprep.subr.mxu0 0.0
    %2924 = vmatpush1.msra.mxu0 0.0
    %2925 = vmatprep.subr.mxu0 0.0
    %2926 = vmatpush1.msra.mxu0 0.0
    %2927 = vmatprep.subr.mxu0 0.0
    %2928 = vmatpush1.msra.mxu0 0.0
    %2929 = vmatprep.subr.mxu0 0.0
    %2930 = vmatpush1.msra.mxu0 0.0
    %2931 = vmatprep.subr.mxu0 0.0
    %2932 = vmatpush1.msra.mxu0 0.0
    %2933 = vmatprep.subr.mxu0 0.0
    %2934 = vmatpush1.msra.mxu0 0.0
    %2935 = vmatprep.subr.mxu0 0.0
    %2936 = vmatpush1.msra.mxu0 0.0
    %2937 = vmatprep.subr.mxu0 0.0
    %2938 = vmatpush1.msra.mxu0 0.0
    %2939 = vmatprep.subr.mxu0 0.0
    %2940 = vmatpush1.msra.mxu0 0.0
    %2941 = vmatprep.subr.mxu0 0.0
    %2942 = vmatpush1.msra.mxu0 0.0
    %2943 = vmatprep.subr.mxu0 0.0
    %2944 = vmatpush1.msra.mxu0 0.0
    %2945 = vmatprep.subr.mxu0 0.0
    %2946 = vmatpush1.msra.mxu0 0.0
    %2947 = vmatprep.subr.mxu0 0.0
    %2948 = vmatpush1.msra.mxu0 0.0
    %2949 = vmatprep.subr.mxu0 0.0
    %2950 = vmatpush1.msra.mxu0 0.0
    %2951 = vmatprep.subr.mxu0 0.0
    %2952 = vmatpush1.msra.mxu0 0.0
    %2953 = vmatprep.mubr.f32.mxu0 0.0
    %2954 = vmatmul.mubr.f32.gmra.mrb[0].mxu0 %v2878
    %v2955 = vpop.f32.mrb[0].mxu0
    %v2956 = vadd.f32 0.0, %v2955
    %v2957 = vpop.f32.mrb[0].mxu0
    %2958 = vmatprep.mubr.f32.mxu0 0.0
    %2959 = vmatmul.mubr.f32.gmra.mrb[0].mxu0 %v2881
    %v2960 = vpop.f32.mrb[0].mxu0
    %v2961 = vadd.f32 0.0, %v2960
    %v2962 = vpop.f32.mrb[0].mxu0
    %2963 = vmatprep.mubr.f32.mxu0 0.0
    %2964 = vmatmul.mubr.f32.gmra.mrb[0].mxu0 %v2884
    %v2965 = vpop.f32.mrb[0].mxu0
    %v2966 = vadd.f32 0.0, %v2965
    %v2967 = vpop.f32.mrb[0].mxu0
    %2968 = vmatprep.mubr.f32.mxu0 0.0
    %2969 = vmatmul.mubr.f32.gmra.mrb[0].mxu0 %v2887
    %v2970 = vpop.f32.mrb[0].mxu0
    %v2971 = vadd.f32 0.0, %v2970
    %v2972 = vpop.f32.mrb[0].mxu0
    %2973 = vdwg.mxu0
    %2976 = vrot.lane.b32.xlu0 %v2956, 64
    %v2977 = vpop.permute.xlu0 %2976
    %2978 = vrot.lane.b32.xlu0 %v2961, 64
    %v2979 = vpop.permute.xlu0 %2978
    %v2982 = vmul.f32 %v2749, %v2977
    %v2983 = vmul.f32 %v2750, %v2979
    %2986 = vrot.lane.b32.xlu0 %v2966, 64
    %v2987 = vpop.permute.xlu0 %2986
    %2988 = vrot.lane.b32.xlu0 %v2971, 64
    %v2989 = vpop.permute.xlu0 %2988
    %v2992 = vadd.f32 %v2982, %v2987
    %v2993 = vadd.f32 %v2983, %v2989
    %v2994 = vmax.f32 %v2992, 0.0
    %v2995 = vmax.f32 %v2993, 0.0
    %v2996 = vld [vmem:[#allocation2 + $0x68] sm:$0xff]
    %v2997 = vld [vmem:[#allocation2 + $0x78] sm:$0xff]
    %2998 = vmatprep.subr.mxu0 0.0
    %2999 = vmatpush1.msra.mxu0 %v2996
    %3000 = vmatprep.subr.mxu0 0.0
    %3001 = vmatpush1.msra.mxu0 %v2997
    %3002 = vmatprep.subr.mxu0 0.0
    %3003 = vmatpush1.msra.mxu0 0.0
    %3004 = vmatprep.subr.mxu0 0.0
    %3005 = vmatpush1.msra.mxu0 0.0
    %3006 = vmatprep.subr.mxu0 0.0
    %3007 = vmatpush1.msra.mxu0 0.0
    %3008 = vmatprep.subr.mxu0 0.0
    %3009 = vmatpush1.msra.mxu0 0.0
    %3010 = vmatprep.subr.mxu0 0.0
    %3011 = vmatpush1.msra.mxu0 0.0
    %3012 = vmatprep.subr.mxu0 0.0
    %3013 = vmatpush1.msra.mxu0 0.0
    %3014 = vmatprep.subr.mxu0 0.0
    %3015 = vmatpush1.msra.mxu0 0.0
    %3016 = vmatprep.subr.mxu0 0.0
    %3017 = vmatpush1.msra.mxu0 0.0
    %3018 = vmatprep.subr.mxu0 0.0
    %3019 = vmatpush1.msra.mxu0 0.0
    %3020 = vmatprep.subr.mxu0 0.0
    %3021 = vmatpush1.msra.mxu0 0.0
    %3022 = vmatprep.subr.mxu0 0.0
    %3023 = vmatpush1.msra.mxu0 0.0
    %3024 = vmatprep.subr.mxu0 0.0
    %3025 = vmatpush1.msra.mxu0 0.0
    %3026 = vmatprep.subr.mxu0 0.0
    %3027 = vmatpush1.msra.mxu0 0.0
    %3028 = vmatprep.subr.mxu0 0.0
    %3029 = vmatpush1.msra.mxu0 0.0
    %3030 = vmatprep.subr.mxu0 0.0
    %3031 = vmatpush1.msra.mxu0 0.0
    %3032 = vmatprep.subr.mxu0 0.0
    %3033 = vmatpush1.msra.mxu0 0.0
    %3034 = vmatprep.subr.mxu0 0.0
    %3035 = vmatpush1.msra.mxu0 0.0
    %3036 = vmatprep.subr.mxu0 0.0
    %3037 = vmatpush1.msra.mxu0 0.0
    %3038 = vmatprep.subr.mxu0 0.0
    %3039 = vmatpush1.msra.mxu0 0.0
    %3040 = vmatprep.subr.mxu0 0.0
    %3041 = vmatpush1.msra.mxu0 0.0
    %3042 = vmatprep.subr.mxu0 0.0
    %3043 = vmatpush1.msra.mxu0 0.0
    %3044 = vmatprep.subr.mxu0 0.0
    %3045 = vmatpush1.msra.mxu0 0.0
    %3046 = vmatprep.subr.mxu0 0.0
    %3047 = vmatpush1.msra.mxu0 0.0
    %3048 = vmatprep.subr.mxu0 0.0
    %3049 = vmatpush1.msra.mxu0 0.0
    %3050 = vmatprep.subr.mxu0 0.0
    %3051 = vmatpush1.msra.mxu0 0.0
    %3052 = vmatprep.subr.mxu0 0.0
    %3053 = vmatpush1.msra.mxu0 0.0
    %3054 = vmatprep.subr.mxu0 0.0
    %3055 = vmatpush1.msra.mxu0 0.0
    %3056 = vmatprep.subr.mxu0 0.0
    %3057 = vmatpush1.msra.mxu0 0.0
    %3058 = vmatprep.subr.mxu0 0.0
    %3059 = vmatpush1.msra.mxu0 0.0
    %3060 = vmatprep.subr.mxu0 0.0
    %3061 = vmatpush1.msra.mxu0 0.0
    %3062 = vmatprep.mubr.f32.mxu0 0.0
    %3063 = vmatmul.mubr.f32.gmra.mrb[0].mxu0 %v1451
    %v3064 = vpop.f32.mrb[0].mxu0
    %v3065 = vadd.f32 0.0, %v3064
    %v3066 = vpop.f32.mrb[0].mxu0
    %3067 = vdwg.mxu0
    %v3068 = vxor.u32 %v3065, 2147483648
    %v3069 = vmul.f32 %v3068, 1.442695
    %v3070 = vpow.pop %v3069
    %v3071 = vadd.f32 %v3070, 1.0
    %v3072 = vrcp.pop %v3071
    %v3073 = vmul.f32 1.0, %v3072
    %3075 = vrot.lane.b32.xlu0 %v1285, 96
    %v3076 = vpop.permute.xlu0 %3075
    %3078 = vxpose.xlu0.b32.start [1/16] %v3076, 128
    %3079 = vxpose.xlu0.b32.cont [2/16] 0.0, 128
    %3080 = vxpose.xlu0.b32.cont [3/16] 0.0, 128
    %3081 = vxpose.xlu0.b32.cont [4/16] 0.0, 128
    %3082 = vxpose.xlu0.b32.cont [5/16] 0.0, 128
    %3083 = vxpose.xlu0.b32.cont [6/16] 0.0, 128
    %3084 = vxpose.xlu0.b32.cont [7/16] 0.0, 128
    %3085 = vxpose.xlu0.b32.cont [8/16] 0.0, 128
    %3086 = vxpose.xlu0.b32.cont [9/16] 0.0, 128
    %3087 = vxpose.xlu0.b32.cont [10/16] 0.0, 128
    %3088 = vxpose.xlu0.b32.cont [11/16] 0.0, 128
    %3089 = vxpose.xlu0.b32.cont [12/16] 0.0, 128
    %3090 = vxpose.xlu0.b32.cont [13/16] 0.0, 128
    %3091 = vxpose.xlu0.b32.cont [14/16] 0.0, 128
    %3092 = vxpose.xlu0.b32.cont [15/16] 0.0, 128
    %3093 = vxpose.xlu0.b32.end [16/16] 0.0, 128
    %v3094 = vpop.trf.xlu0
    %v3095 = vpop.trf.xlu0
    %v3096 = vpop.trf.xlu0
    %v3097 = vpop.trf.xlu0
    %v3098 = vpop.trf.xlu0
    %v3099 = vpop.trf.xlu0
    %v3100 = vpop.trf.xlu0
    %v3101 = vpop.trf.xlu0
    %v3102 = vpop.trf.xlu0
    %v3103 = vpop.trf.xlu0
    %v3104 = vpop.trf.xlu0
    %v3105 = vpop.trf.xlu0
    %v3106 = vpop.trf.xlu0
    %v3107 = vpop.trf.xlu0
    %v3108 = vpop.trf.xlu0
    %v3109 = vpop.trf.xlu0
    %v3111 = vsel %vm1726, %v3094, 0
    %v3114 = vsel %vm1726, %v3095, 0
    %v3117 = vsel %vm1726, %v3096, 0
    %v3120 = vsel %vm1726, %v3097, 0
    %3122 = vmatprep.subr.mxu0 0.0
    %3123 = vmatpush1.msra.mxu0 %v3073
    %3124 = vmatprep.subr.mxu0 0.0
    %3125 = vmatpush1.msra.mxu0 0.0
    %3126 = vmatprep.subr.mxu0 0.0
    %3127 = vmatpush1.msra.mxu0 0.0
    %3128 = vmatprep.subr.mxu0 0.0
    %3129 = vmatpush1.msra.mxu0 0.0
    %3130 = vmatprep.subr.mxu0 0.0
    %3131 = vmatpush1.msra.mxu0 0.0
    %3132 = vmatprep.subr.mxu0 0.0
    %3133 = vmatpush1.msra.mxu0 0.0
    %3134 = vmatprep.subr.mxu0 0.0
    %3135 = vmatpush1.msra.mxu0 0.0
    %3136 = vmatprep.subr.mxu0 0.0
    %3137 = vmatpush1.msra.mxu0 0.0
    %3138 = vmatprep.subr.mxu0 0.0
    %3139 = vmatpush1.msra.mxu0 0.0
    %3140 = vmatprep.subr.mxu0 0.0
    %3141 = vmatpush1.msra.mxu0 0.0
    %3142 = vmatprep.subr.mxu0 0.0
    %3143 = vmatpush1.msra.mxu0 0.0
    %3144 = vmatprep.subr.mxu0 0.0
    %3145 = vmatpush1.msra.mxu0 0.0
    %3146 = vmatprep.subr.mxu0 0.0
    %3147 = vmatpush1.msra.mxu0 0.0
    %3148 = vmatprep.subr.mxu0 0.0
    %3149 = vmatpush1.msra.mxu0 0.0
    %3150 = vmatprep.subr.mxu0 0.0
    %3151 = vmatpush1.msra.mxu0 0.0
    %3152 = vmatprep.subr.mxu0 0.0
    %3153 = vmatpush1.msra.mxu0 0.0
    %3154 = vmatprep.subr.mxu0 0.0
    %3155 = vmatpush1.msra.mxu0 0.0
    %3156 = vmatprep.subr.mxu0 0.0
    %3157 = vmatpush1.msra.mxu0 0.0
    %3158 = vmatprep.subr.mxu0 0.0
    %3159 = vmatpush1.msra.mxu0 0.0
    %3160 = vmatprep.subr.mxu0 0.0
    %3161 = vmatpush1.msra.mxu0 0.0
    %3162 = vmatprep.subr.mxu0 0.0
    %3163 = vmatpush1.msra.mxu0 0.0
    %3164 = vmatprep.subr.mxu0 0.0
    %3165 = vmatpush1.msra.mxu0 0.0
    %3166 = vmatprep.subr.mxu0 0.0
    %3167 = vmatpush1.msra.mxu0 0.0
    %3168 = vmatprep.subr.mxu0 0.0
    %3169 = vmatpush1.msra.mxu0 0.0
    %3170 = vmatprep.subr.mxu0 0.0
    %3171 = vmatpush1.msra.mxu0 0.0
    %3172 = vmatprep.subr.mxu0 0.0
    %3173 = vmatpush1.msra.mxu0 0.0
    %3174 = vmatprep.subr.mxu0 0.0
    %3175 = vmatpush1.msra.mxu0 0.0
    %3176 = vmatprep.subr.mxu0 0.0
    %3177 = vmatpush1.msra.mxu0 0.0
    %3178 = vmatprep.subr.mxu0 0.0
    %3179 = vmatpush1.msra.mxu0 0.0
    %3180 = vmatprep.subr.mxu0 0.0
    %3181 = vmatpush1.msra.mxu0 0.0
    %3182 = vmatprep.subr.mxu0 0.0
    %3183 = vmatpush1.msra.mxu0 0.0
    %3184 = vmatprep.subr.mxu0 0.0
    %3185 = vmatpush1.msra.mxu0 0.0
    %3186 = vmatprep.mubr.f32.mxu0 0.0
    %3187 = vmatmul.mubr.f32.gmra.mrb[0].mxu0 %v3111
    %v3188 = vpop.f32.mrb[0].mxu0
    %v3189 = vadd.f32 0.0, %v3188
    %v3190 = vpop.f32.mrb[0].mxu0
    %3191 = vmatprep.mubr.f32.mxu0 0.0
    %3192 = vmatmul.mubr.f32.gmra.mrb[0].mxu0 %v3114
    %v3193 = vpop.f32.mrb[0].mxu0
    %v3194 = vadd.f32 0.0, %v3193
    %v3195 = vpop.f32.mrb[0].mxu0
    %3196 = vmatprep.mubr.f32.mxu0 0.0
    %3197 = vmatmul.mubr.f32.gmra.mrb[0].mxu0 %v3117
    %v3198 = vpop.f32.mrb[0].mxu0
    %v3199 = vadd.f32 0.0, %v3198
    %v3200 = vpop.f32.mrb[0].mxu0
    %3201 = vmatprep.mubr.f32.mxu0 0.0
    %3202 = vmatmul.mubr.f32.gmra.mrb[0].mxu0 %v3120
    %v3203 = vpop.f32.mrb[0].mxu0
    %v3204 = vadd.f32 0.0, %v3203
    %v3205 = vpop.f32.mrb[0].mxu0
    %3206 = vdwg.mxu0
    %v3207 = vld [vmem:[#allocation2 + $0x88] sm:$0xff]
    %v3208 = vld [vmem:[#allocation2 + $0x98] sm:$0xff]
    %v3209 = vmul.f32 %v3207, %v3189
    %v3210 = vmul.f32 %v3208, %v3194
    %v3211 = vadd.f32 %v3209, %v3199
    %v3212 = vadd.f32 %v3210, %v3204
    %v3213 = vmax.f32 %v3211, 0.0
    %v3214 = vmax.f32 %v3212, 0.0
    %3217 = vrot.lane.b32.xlu0 %v2996, 64
    %v3218 = vpop.permute.xlu0 %3217
    %3219 = vrot.lane.b32.xlu0 %v2997, 64
    %v3220 = vpop.permute.xlu0 %3219
    %3223 = vmatprep.subr.mxu0 0.0
    %3224 = vmatpush1.msra.mxu0 %v3218
    %3225 = vmatprep.subr.mxu0 0.0
    %3226 = vmatpush1.msra.mxu0 %v3220
    %3227 = vmatprep.subr.mxu0 0.0
    %3228 = vmatpush1.msra.mxu0 0.0
    %3229 = vmatprep.subr.mxu0 0.0
    %3230 = vmatpush1.msra.mxu0 0.0
    %3231 = vmatprep.subr.mxu0 0.0
    %3232 = vmatpush1.msra.mxu0 0.0
    %3233 = vmatprep.subr.mxu0 0.0
    %3234 = vmatpush1.msra.mxu0 0.0
    %3235 = vmatprep.subr.mxu0 0.0
    %3236 = vmatpush1.msra.mxu0 0.0
    %3237 = vmatprep.subr.mxu0 0.0
    %3238 = vmatpush1.msra.mxu0 0.0
    %3239 = vmatprep.subr.mxu0 0.0
    %3240 = vmatpush1.msra.mxu0 0.0
    %3241 = vmatprep.subr.mxu0 0.0
    %3242 = vmatpush1.msra.mxu0 0.0
    %3243 = vmatprep.subr.mxu0 0.0
    %3244 = vmatpush1.msra.mxu0 0.0
    %3245 = vmatprep.subr.mxu0 0.0
    %3246 = vmatpush1.msra.mxu0 0.0
    %3247 = vmatprep.subr.mxu0 0.0
    %3248 = vmatpush1.msra.mxu0 0.0
    %3249 = vmatprep.subr.mxu0 0.0
    %3250 = vmatpush1.msra.mxu0 0.0
    %3251 = vmatprep.subr.mxu0 0.0
    %3252 = vmatpush1.msra.mxu0 0.0
    %3253 = vmatprep.subr.mxu0 0.0
    %3254 = vmatpush1.msra.mxu0 0.0
    %3255 = vmatprep.subr.mxu0 0.0
    %3256 = vmatpush1.msra.mxu0 0.0
    %3257 = vmatprep.subr.mxu0 0.0
    %3258 = vmatpush1.msra.mxu0 0.0
    %3259 = vmatprep.subr.mxu0 0.0
    %3260 = vmatpush1.msra.mxu0 0.0
    %3261 = vmatprep.subr.mxu0 0.0
    %3262 = vmatpush1.msra.mxu0 0.0
    %3263 = vmatprep.subr.mxu0 0.0
    %3264 = vmatpush1.msra.mxu0 0.0
    %3265 = vmatprep.subr.mxu0 0.0
    %3266 = vmatpush1.msra.mxu0 0.0
    %3267 = vmatprep.subr.mxu0 0.0
    %3268 = vmatpush1.msra.mxu0 0.0
    %3269 = vmatprep.subr.mxu0 0.0
    %3270 = vmatpush1.msra.mxu0 0.0
    %3271 = vmatprep.subr.mxu0 0.0
    %3272 = vmatpush1.msra.mxu0 0.0
    %3273 = vmatprep.subr.mxu0 0.0
    %3274 = vmatpush1.msra.mxu0 0.0
    %3275 = vmatprep.subr.mxu0 0.0
    %3276 = vmatpush1.msra.mxu0 0.0
    %3277 = vmatprep.subr.mxu0 0.0
    %3278 = vmatpush1.msra.mxu0 0.0
    %3279 = vmatprep.subr.mxu0 0.0
    %3280 = vmatpush1.msra.mxu0 0.0
    %3281 = vmatprep.subr.mxu0 0.0
    %3282 = vmatpush1.msra.mxu0 0.0
    %3283 = vmatprep.subr.mxu0 0.0
    %3284 = vmatpush1.msra.mxu0 0.0
    %3285 = vmatprep.subr.mxu0 0.0
    %3286 = vmatpush1.msra.mxu0 0.0
    %3287 = vmatprep.mubr.f32.mxu0 0.0
    %3288 = vmatmul.mubr.f32.gmra.mrb[0].mxu0 %v1532
    %v3289 = vpop.f32.mrb[0].mxu0
    %v3290 = vadd.f32 0.0, %v3289
    %v3291 = vpop.f32.mrb[0].mxu0
    %3292 = vdwg.mxu0
    %v3293 = vxor.u32 %v3290, 2147483648
    %v3294 = vmul.f32 %v3293, 1.442695
    %v3295 = vpow.pop %v3294
    %v3296 = vadd.f32 %v3295, 1.0
    %v3297 = vrcp.pop %v3296
    %v3298 = vmul.f32 1.0, %v3297
    %3300 = vrot.lane.b32.xlu0 %v1286, 96
    %v3301 = vpop.permute.xlu0 %3300
    %3303 = vxpose.xlu0.b32.start [1/16] %v3301, 128
    %3304 = vxpose.xlu0.b32.cont [2/16] 0.0, 128
    %3305 = vxpose.xlu0.b32.cont [3/16] 0.0, 128
    %3306 = vxpose.xlu0.b32.cont [4/16] 0.0, 128
    %3307 = vxpose.xlu0.b32.cont [5/16] 0.0, 128
    %3308 = vxpose.xlu0.b32.cont [6/16] 0.0, 128
    %3309 = vxpose.xlu0.b32.cont [7/16] 0.0, 128
    %3310 = vxpose.xlu0.b32.cont [8/16] 0.0, 128
    %3311 = vxpose.xlu0.b32.cont [9/16] 0.0, 128
    %3312 = vxpose.xlu0.b32.cont [10/16] 0.0, 128
    %3313 = vxpose.xlu0.b32.cont [11/16] 0.0, 128
    %3314 = vxpose.xlu0.b32.cont [12/16] 0.0, 128
    %3315 = vxpose.xlu0.b32.cont [13/16] 0.0, 128
    %3316 = vxpose.xlu0.b32.cont [14/16] 0.0, 128
    %3317 = vxpose.xlu0.b32.cont [15/16] 0.0, 128
    %3318 = vxpose.xlu0.b32.end [16/16] 0.0, 128
    %v3319 = vpop.trf.xlu0
    %v3320 = vpop.trf.xlu0
    %v3321 = vpop.trf.xlu0
    %v3322 = vpop.trf.xlu0
    %v3323 = vpop.trf.xlu0
    %v3324 = vpop.trf.xlu0
    %v3325 = vpop.trf.xlu0
    %v3326 = vpop.trf.xlu0
    %v3327 = vpop.trf.xlu0
    %v3328 = vpop.trf.xlu0
    %v3329 = vpop.trf.xlu0
    %v3330 = vpop.trf.xlu0
    %v3331 = vpop.trf.xlu0
    %v3332 = vpop.trf.xlu0
    %v3333 = vpop.trf.xlu0
    %v3334 = vpop.trf.xlu0
    %v3336 = vsel %vm1726, %v3319, 0
    %v3339 = vsel %vm1726, %v3320, 0
    %v3342 = vsel %vm1726, %v3321, 0
    %v3345 = vsel %vm1726, %v3322, 0
    %3347 = vmatprep.subr.mxu0 0.0
    %3348 = vmatpush1.msra.mxu0 %v3298
    %3349 = vmatprep.subr.mxu0 0.0
    %3350 = vmatpush1.msra.mxu0 0.0
    %3351 = vmatprep.subr.mxu0 0.0
    %3352 = vmatpush1.msra.mxu0 0.0
    %3353 = vmatprep.subr.mxu0 0.0
    %3354 = vmatpush1.msra.mxu0 0.0
    %3355 = vmatprep.subr.mxu0 0.0
    %3356 = vmatpush1.msra.mxu0 0.0
    %3357 = vmatprep.subr.mxu0 0.0
    %3358 = vmatpush1.msra.mxu0 0.0
    %3359 = vmatprep.subr.mxu0 0.0
    %3360 = vmatpush1.msra.mxu0 0.0
    %3361 = vmatprep.subr.mxu0 0.0
    %3362 = vmatpush1.msra.mxu0 0.0
    %3363 = vmatprep.subr.mxu0 0.0
    %3364 = vmatpush1.msra.mxu0 0.0
    %3365 = vmatprep.subr.mxu0 0.0
    %3366 = vmatpush1.msra.mxu0 0.0
    %3367 = vmatprep.subr.mxu0 0.0
    %3368 = vmatpush1.msra.mxu0 0.0
    %3369 = vmatprep.subr.mxu0 0.0
    %3370 = vmatpush1.msra.mxu0 0.0
    %3371 = vmatprep.subr.mxu0 0.0
    %3372 = vmatpush1.msra.mxu0 0.0
    %3373 = vmatprep.subr.mxu0 0.0
    %3374 = vmatpush1.msra.mxu0 0.0
    %3375 = vmatprep.subr.mxu0 0.0
    %3376 = vmatpush1.msra.mxu0 0.0
    %3377 = vmatprep.subr.mxu0 0.0
    %3378 = vmatpush1.msra.mxu0 0.0
    %3379 = vmatprep.subr.mxu0 0.0
    %3380 = vmatpush1.msra.mxu0 0.0
    %3381 = vmatprep.subr.mxu0 0.0
    %3382 = vmatpush1.msra.mxu0 0.0
    %3383 = vmatprep.subr.mxu0 0.0
    %3384 = vmatpush1.msra.mxu0 0.0
    %3385 = vmatprep.subr.mxu0 0.0
    %3386 = vmatpush1.msra.mxu0 0.0
    %3387 = vmatprep.subr.mxu0 0.0
    %3388 = vmatpush1.msra.mxu0 0.0
    %3389 = vmatprep.subr.mxu0 0.0
    %3390 = vmatpush1.msra.mxu0 0.0
    %3391 = vmatprep.subr.mxu0 0.0
    %3392 = vmatpush1.msra.mxu0 0.0
    %3393 = vmatprep.subr.mxu0 0.0
    %3394 = vmatpush1.msra.mxu0 0.0
    %3395 = vmatprep.subr.mxu0 0.0
    %3396 = vmatpush1.msra.mxu0 0.0
    %3397 = vmatprep.subr.mxu0 0.0
    %3398 = vmatpush1.msra.mxu0 0.0
    %3399 = vmatprep.subr.mxu0 0.0
    %3400 = vmatpush1.msra.mxu0 0.0
    %3401 = vmatprep.subr.mxu0 0.0
    %3402 = vmatpush1.msra.mxu0 0.0
    %3403 = vmatprep.subr.mxu0 0.0
    %3404 = vmatpush1.msra.mxu0 0.0
    %3405 = vmatprep.subr.mxu0 0.0
    %3406 = vmatpush1.msra.mxu0 0.0
    %3407 = vmatprep.subr.mxu0 0.0
    %3408 = vmatpush1.msra.mxu0 0.0
    %3409 = vmatprep.subr.mxu0 0.0
    %3410 = vmatpush1.msra.mxu0 0.0
    %3411 = vmatprep.mubr.f32.mxu0 0.0
    %3412 = vmatmul.mubr.f32.gmra.mrb[0].mxu0 %v3336
    %v3413 = vpop.f32.mrb[0].mxu0
    %v3414 = vadd.f32 0.0, %v3413
    %v3415 = vpop.f32.mrb[0].mxu0
    %3416 = vmatprep.mubr.f32.mxu0 0.0
    %3417 = vmatmul.mubr.f32.gmra.mrb[0].mxu0 %v3339
    %v3418 = vpop.f32.mrb[0].mxu0
    %v3419 = vadd.f32 0.0, %v3418
    %v3420 = vpop.f32.mrb[0].mxu0
    %3421 = vmatprep.mubr.f32.mxu0 0.0
    %3422 = vmatmul.mubr.f32.gmra.mrb[0].mxu0 %v3342
    %v3423 = vpop.f32.mrb[0].mxu0
    %v3424 = vadd.f32 0.0, %v3423
    %v3425 = vpop.f32.mrb[0].mxu0
    %3426 = vmatprep.mubr.f32.mxu0 0.0
    %3427 = vmatmul.mubr.f32.gmra.mrb[0].mxu0 %v3345
    %v3428 = vpop.f32.mrb[0].mxu0
    %v3429 = vadd.f32 0.0, %v3428
    %v3430 = vpop.f32.mrb[0].mxu0
    %3431 = vdwg.mxu0
    %3434 = vrot.lane.b32.xlu0 %v3414, 64
    %v3435 = vpop.permute.xlu0 %3434
    %3436 = vrot.lane.b32.xlu0 %v3419, 64
    %v3437 = vpop.permute.xlu0 %3436
    %v3440 = vmul.f32 %v3207, %v3435
    %v3441 = vmul.f32 %v3208, %v3437
    %3444 = vrot.lane.b32.xlu0 %v3424, 64
    %v3445 = vpop.permute.xlu0 %3444
    %3446 = vrot.lane.b32.xlu0 %v3429, 64
    %v3447 = vpop.permute.xlu0 %3446
    %v3450 = vadd.f32 %v3440, %v3445
    %v3451 = vadd.f32 %v3441, %v3447
    %v3452 = vmax.f32 %v3450, 0.0
    %v3453 = vmax.f32 %v3451, 0.0
    %3455 = vrot.lane.b32.xlu0 %v2832, 64
    %v3456 = vpop.permute.xlu0 %3455
    %3459 = vrot.lane.b32.xlu0 %v3290, 64
    %v3460 = vpop.permute.xlu0 %3459
    %v3462 = vsel %vm513, %v2607, %v3456
    %v3463 = vsel %vm513, %v3065, %v3460
    %s3464 = scalar_lea.vmem %s9, 32
    %3465 = vst [vmem:[%s3464] sm:$0xff] %v3462
    %3466 = vst [vmem:[%s3464 + $0x8] sm:$0xff] %v3463
    %v3467 = vsel %vm513, %v2755, %v2994
    %v3468 = vsel %vm513, %v2756, %v2995
    %v3469 = vsel %vm513, %v3213, %v3452
    %v3470 = vsel %vm513, %v3214, %v3453
    %s3471 = scalar_lea.vmem [#allocation3], 32
    %3472 = vst [vmem:[%s3471] sm:$0xff] %v3467
    %3473 = vst [vmem:[%s3471 + $0x8] sm:$0xff] %v3469
    %3474 = vst [vmem:[%s3471 + $0x10] sm:$0xff] %v3468
    %3475 = vst [vmem:[%s3471 + $0x18] sm:$0xff] %v3470
    %v3476 = vld [vmem:[#allocation2 + $0xa0] sm:$0xff]
    %v3477 = vld [vmem:[#allocation2 + $0xb0] sm:$0xff]
    %3478 = vmatprep.subr.mxu0 0.0
    %3479 = vmatpush1.msra.mxu0 %v3476
    %3480 = vmatprep.subr.mxu0 0.0
    %3481 = vmatpush1.msra.mxu0 %v3477
    %3482 = vmatprep.subr.mxu0 0.0
    %3483 = vmatpush1.msra.mxu0 0.0
    %3484 = vmatprep.subr.mxu0 0.0
    %3485 = vmatpush1.msra.mxu0 0.0
    %3486 = vmatprep.subr.mxu0 0.0
    %3487 = vmatpush1.msra.mxu0 0.0
    %3488 = vmatprep.subr.mxu0 0.0
    %3489 = vmatpush1.msra.mxu0 0.0
    %3490 = vmatprep.subr.mxu0 0.0
    %3491 = vmatpush1.msra.mxu0 0.0
    %3492 = vmatprep.subr.mxu0 0.0
    %3493 = vmatpush1.msra.mxu0 0.0
    %3494 = vmatprep.subr.mxu0 0.0
    %3495 = vmatpush1.msra.mxu0 0.0
    %3496 = vmatprep.subr.mxu0 0.0
    %3497 = vmatpush1.msra.mxu0 0.0
    %3498 = vmatprep.subr.mxu0 0.0
    %3499 = vmatpush1.msra.mxu0 0.0
    %3500 = vmatprep.subr.mxu0 0.0
    %3501 = vmatpush1.msra.mxu0 0.0
    %3502 = vmatprep.subr.mxu0 0.0
    %3503 = vmatpush1.msra.mxu0 0.0
    %3504 = vmatprep.subr.mxu0 0.0
    %3505 = vmatpush1.msra.mxu0 0.0
    %3506 = vmatprep.subr.mxu0 0.0
    %3507 = vmatpush1.msra.mxu0 0.0
    %3508 = vmatprep.subr.mxu0 0.0
    %3509 = vmatpush1.msra.mxu0 0.0
    %3510 = vmatprep.subr.mxu0 0.0
    %3511 = vmatpush1.msra.mxu0 0.0
    %3512 = vmatprep.subr.mxu0 0.0
    %3513 = vmatpush1.msra.mxu0 0.0
    %3514 = vmatprep.subr.mxu0 0.0
    %3515 = vmatpush1.msra.mxu0 0.0
    %3516 = vmatprep.subr.mxu0 0.0
    %3517 = vmatpush1.msra.mxu0 0.0
    %3518 = vmatprep.subr.mxu0 0.0
    %3519 = vmatpush1.msra.mxu0 0.0
    %3520 = vmatprep.subr.mxu0 0.0
    %3521 = vmatpush1.msra.mxu0 0.0
    %3522 = vmatprep.subr.mxu0 0.0
    %3523 = vmatpush1.msra.mxu0 0.0
    %3524 = vmatprep.subr.mxu0 0.0
    %3525 = vmatpush1.msra.mxu0 0.0
    %3526 = vmatprep.subr.mxu0 0.0
    %3527 = vmatpush1.msra.mxu0 0.0
    %3528 = vmatprep.subr.mxu0 0.0
    %3529 = vmatpush1.msra.mxu0 0.0
    %3530 = vmatprep.subr.mxu0 0.0
    %3531 = vmatpush1.msra.mxu0 0.0
    %3532 = vmatprep.subr.mxu0 0.0
    %3533 = vmatpush1.msra.mxu0 0.0
    %3534 = vmatprep.subr.mxu0 0.0
    %3535 = vmatpush1.msra.mxu0 0.0
    %3536 = vmatprep.subr.mxu0 0.0
    %3537 = vmatpush1.msra.mxu0 0.0
    %3538 = vmatprep.subr.mxu0 0.0
    %3539 = vmatpush1.msra.mxu0 0.0
    %3540 = vmatprep.subr.mxu0 0.0
    %3541 = vmatpush1.msra.mxu0 0.0
    %3542 = vmatprep.mubr.f32.mxu0 0.0
    %3543 = vmatmul.mubr.f32.gmra.mrb[0].mxu0 %v1295
    %v3544 = vpop.f32.mrb[0].mxu0
    %v3545 = vadd.f32 0.0, %v3544
    %v3546 = vpop.f32.mrb[0].mxu0
    %3547 = vdwg.mxu0
    %v3548 = vxor.u32 %v3545, 2147483648
    %v3549 = vmul.f32 %v3548, 1.442695
    %v3550 = vpow.pop %v3549
    %v3551 = vadd.f32 %v3550, 1.0
    %v3552 = vrcp.pop %v3551
    %v3553 = vmul.f32 1.0, %v3552
    %3554 = vrot.lane.b32.xlu0 %v1283, 64
    %v3555 = vpop.permute.xlu0 %3554
    %3557 = vxpose.xlu0.b32.start [1/16] %v3555, 128
    %3558 = vxpose.xlu0.b32.cont [2/16] 0.0, 128
    %3559 = vxpose.xlu0.b32.cont [3/16] 0.0, 128
    %3560 = vxpose.xlu0.b32.cont [4/16] 0.0, 128
    %3561 = vxpose.xlu0.b32.cont [5/16] 0.0, 128
    %3562 = vxpose.xlu0.b32.cont [6/16] 0.0, 128
    %3563 = vxpose.xlu0.b32.cont [7/16] 0.0, 128
    %3564 = vxpose.xlu0.b32.cont [8/16] 0.0, 128
    %3565 = vxpose.xlu0.b32.cont [9/16] 0.0, 128
    %3566 = vxpose.xlu0.b32.cont [10/16] 0.0, 128
    %3567 = vxpose.xlu0.b32.cont [11/16] 0.0, 128
    %3568 = vxpose.xlu0.b32.cont [12/16] 0.0, 128
    %3569 = vxpose.xlu0.b32.cont [13/16] 0.0, 128
    %3570 = vxpose.xlu0.b32.cont [14/16] 0.0, 128
    %3571 = vxpose.xlu0.b32.cont [15/16] 0.0, 128
    %3572 = vxpose.xlu0.b32.end [16/16] 0.0, 128
    %v3573 = vpop.trf.xlu0
    %v3574 = vpop.trf.xlu0
    %v3575 = vpop.trf.xlu0
    %v3576 = vpop.trf.xlu0
    %v3577 = vpop.trf.xlu0
    %v3578 = vpop.trf.xlu0
    %v3579 = vpop.trf.xlu0
    %v3580 = vpop.trf.xlu0
    %v3581 = vpop.trf.xlu0
    %v3582 = vpop.trf.xlu0
    %v3583 = vpop.trf.xlu0
    %v3584 = vpop.trf.xlu0
    %v3585 = vpop.trf.xlu0
    %v3586 = vpop.trf.xlu0
    %v3587 = vpop.trf.xlu0
    %v3588 = vpop.trf.xlu0
    %v3590 = vsel %vm1726, %v3573, 0
    %v3593 = vsel %vm1726, %v3574, 0
    %v3596 = vsel %vm1726, %v3575, 0
    %v3599 = vsel %vm1726, %v3576, 0
    %3601 = vmatprep.subr.mxu0 0.0
    %3602 = vmatpush1.msra.mxu0 %v3553
    %3603 = vmatprep.subr.mxu0 0.0
    %3604 = vmatpush1.msra.mxu0 0.0
    %3605 = vmatprep.subr.mxu0 0.0
    %3606 = vmatpush1.msra.mxu0 0.0
    %3607 = vmatprep.subr.mxu0 0.0
    %3608 = vmatpush1.msra.mxu0 0.0
    %3609 = vmatprep.subr.mxu0 0.0
    %3610 = vmatpush1.msra.mxu0 0.0
    %3611 = vmatprep.subr.mxu0 0.0
    %3612 = vmatpush1.msra.mxu0 0.0
    %3613 = vmatprep.subr.mxu0 0.0
    %3614 = vmatpush1.msra.mxu0 0.0
    %3615 = vmatprep.subr.mxu0 0.0
    %3616 = vmatpush1.msra.mxu0 0.0
    %3617 = vmatprep.subr.mxu0 0.0
    %3618 = vmatpush1.msra.mxu0 0.0
    %3619 = vmatprep.subr.mxu0 0.0
    %3620 = vmatpush1.msra.mxu0 0.0
    %3621 = vmatprep.subr.mxu0 0.0
    %3622 = vmatpush1.msra.mxu0 0.0
    %3623 = vmatprep.subr.mxu0 0.0
    %3624 = vmatpush1.msra.mxu0 0.0
    %3625 = vmatprep.subr.mxu0 0.0
    %3626 = vmatpush1.msra.mxu0 0.0
    %3627 = vmatprep.subr.mxu0 0.0
    %3628 = vmatpush1.msra.mxu0 0.0
    %3629 = vmatprep.subr.mxu0 0.0
    %3630 = vmatpush1.msra.mxu0 0.0
    %3631 = vmatprep.subr.mxu0 0.0
    %3632 = vmatpush1.msra.mxu0 0.0
    %3633 = vmatprep.subr.mxu0 0.0
    %3634 = vmatpush1.msra.mxu0 0.0
    %3635 = vmatprep.subr.mxu0 0.0
    %3636 = vmatpush1.msra.mxu0 0.0
    %3637 = vmatprep.subr.mxu0 0.0
    %3638 = vmatpush1.msra.mxu0 0.0
    %3639 = vmatprep.subr.mxu0 0.0
    %3640 = vmatpush1.msra.mxu0 0.0
    %3641 = vmatprep.subr.mxu0 0.0
    %3642 = vmatpush1.msra.mxu0 0.0
    %3643 = vmatprep.subr.mxu0 0.0
    %3644 = vmatpush1.msra.mxu0 0.0
    %3645 = vmatprep.subr.mxu0 0.0
    %3646 = vmatpush1.msra.mxu0 0.0
    %3647 = vmatprep.subr.mxu0 0.0
    %3648 = vmatpush1.msra.mxu0 0.0
    %3649 = vmatprep.subr.mxu0 0.0
    %3650 = vmatpush1.msra.mxu0 0.0
    %3651 = vmatprep.subr.mxu0 0.0
    %3652 = vmatpush1.msra.mxu0 0.0
    %3653 = vmatprep.subr.mxu0 0.0
    %3654 = vmatpush1.msra.mxu0 0.0
    %3655 = vmatprep.subr.mxu0 0.0
    %3656 = vmatpush1.msra.mxu0 0.0
    %3657 = vmatprep.subr.mxu0 0.0
    %3658 = vmatpush1.msra.mxu0 0.0
    %3659 = vmatprep.subr.mxu0 0.0
    %3660 = vmatpush1.msra.mxu0 0.0
    %3661 = vmatprep.subr.mxu0 0.0
    %3662 = vmatpush1.msra.mxu0 0.0
    %3663 = vmatprep.subr.mxu0 0.0
    %3664 = vmatpush1.msra.mxu0 0.0
    %3665 = vmatprep.mubr.f32.mxu0 0.0
    %3666 = vmatmul.mubr.f32.gmra.mrb[0].mxu0 %v3590
    %v3667 = vpop.f32.mrb[0].mxu0
    %v3668 = vadd.f32 0.0, %v3667
    %v3669 = vpop.f32.mrb[0].mxu0
    %3670 = vmatprep.mubr.f32.mxu0 0.0
    %3671 = vmatmul.mubr.f32.gmra.mrb[0].mxu0 %v3593
    %v3672 = vpop.f32.mrb[0].mxu0
    %v3673 = vadd.f32 0.0, %v3672
    %v3674 = vpop.f32.mrb[0].mxu0
    %3675 = vmatprep.mubr.f32.mxu0 0.0
    %3676 = vmatmul.mubr.f32.gmra.mrb[0].mxu0 %v3596
    %v3677 = vpop.f32.mrb[0].mxu0
    %v3678 = vadd.f32 0.0, %v3677
    %v3679 = vpop.f32.mrb[0].mxu0
    %3680 = vmatprep.mubr.f32.mxu0 0.0
    %3681 = vmatmul.mubr.f32.gmra.mrb[0].mxu0 %v3599
    %v3682 = vpop.f32.mrb[0].mxu0
    %v3683 = vadd.f32 0.0, %v3682
    %v3684 = vpop.f32.mrb[0].mxu0
    %3685 = vdwg.mxu0
    %v3686 = vld [vmem:[#allocation2 + $0xc0] sm:$0xff]
    %v3687 = vld [vmem:[#allocation2 + $0xd0] sm:$0xff]
    %v3688 = vmul.f32 %v3686, %v3668
    %v3689 = vmul.f32 %v3687, %v3673
    %v3690 = vadd.f32 %v3688, %v3678
    %v3691 = vadd.f32 %v3689, %v3683
    %v3692 = vmax.f32 %v3690, 0.0
    %v3693 = vmax.f32 %v3691, 0.0
    %3696 = vrot.lane.b32.xlu0 %v3476, 64
    %v3697 = vpop.permute.xlu0 %3696
    %3698 = vrot.lane.b32.xlu0 %v3477, 64
    %v3699 = vpop.permute.xlu0 %3698
    %3702 = vmatprep.subr.mxu0 0.0
    %3703 = vmatpush1.msra.mxu0 %v3697
    %3704 = vmatprep.subr.mxu0 0.0
    %3705 = vmatpush1.msra.mxu0 %v3699
    %3706 = vmatprep.subr.mxu0 0.0
    %3707 = vmatpush1.msra.mxu0 0.0
    %3708 = vmatprep.subr.mxu0 0.0
    %3709 = vmatpush1.msra.mxu0 0.0
    %3710 = vmatprep.subr.mxu0 0.0
    %3711 = vmatpush1.msra.mxu0 0.0
    %3712 = vmatprep.subr.mxu0 0.0
    %3713 = vmatpush1.msra.mxu0 0.0
    %3714 = vmatprep.subr.mxu0 0.0
    %3715 = vmatpush1.msra.mxu0 0.0
    %3716 = vmatprep.subr.mxu0 0.0
    %3717 = vmatpush1.msra.mxu0 0.0
    %3718 = vmatprep.subr.mxu0 0.0
    %3719 = vmatpush1.msra.mxu0 0.0
    %3720 = vmatprep.subr.mxu0 0.0
    %3721 = vmatpush1.msra.mxu0 0.0
    %3722 = vmatprep.subr.mxu0 0.0
    %3723 = vmatpush1.msra.mxu0 0.0
    %3724 = vmatprep.subr.mxu0 0.0
    %3725 = vmatpush1.msra.mxu0 0.0
    %3726 = vmatprep.subr.mxu0 0.0
    %3727 = vmatpush1.msra.mxu0 0.0
    %3728 = vmatprep.subr.mxu0 0.0
    %3729 = vmatpush1.msra.mxu0 0.0
    %3730 = vmatprep.subr.mxu0 0.0
    %3731 = vmatpush1.msra.mxu0 0.0
    %3732 = vmatprep.subr.mxu0 0.0
    %3733 = vmatpush1.msra.mxu0 0.0
    %3734 = vmatprep.subr.mxu0 0.0
    %3735 = vmatpush1.msra.mxu0 0.0
    %3736 = vmatprep.subr.mxu0 0.0
    %3737 = vmatpush1.msra.mxu0 0.0
    %3738 = vmatprep.subr.mxu0 0.0
    %3739 = vmatpush1.msra.mxu0 0.0
    %3740 = vmatprep.subr.mxu0 0.0
    %3741 = vmatpush1.msra.mxu0 0.0
    %3742 = vmatprep.subr.mxu0 0.0
    %3743 = vmatpush1.msra.mxu0 0.0
    %3744 = vmatprep.subr.mxu0 0.0
    %3745 = vmatpush1.msra.mxu0 0.0
    %3746 = vmatprep.subr.mxu0 0.0
    %3747 = vmatpush1.msra.mxu0 0.0
    %3748 = vmatprep.subr.mxu0 0.0
    %3749 = vmatpush1.msra.mxu0 0.0
    %3750 = vmatprep.subr.mxu0 0.0
    %3751 = vmatpush1.msra.mxu0 0.0
    %3752 = vmatprep.subr.mxu0 0.0
    %3753 = vmatpush1.msra.mxu0 0.0
    %3754 = vmatprep.subr.mxu0 0.0
    %3755 = vmatpush1.msra.mxu0 0.0
    %3756 = vmatprep.subr.mxu0 0.0
    %3757 = vmatpush1.msra.mxu0 0.0
    %3758 = vmatprep.subr.mxu0 0.0
    %3759 = vmatpush1.msra.mxu0 0.0
    %3760 = vmatprep.subr.mxu0 0.0
    %3761 = vmatpush1.msra.mxu0 0.0
    %3762 = vmatprep.subr.mxu0 0.0
    %3763 = vmatpush1.msra.mxu0 0.0
    %3764 = vmatprep.subr.mxu0 0.0
    %3765 = vmatpush1.msra.mxu0 0.0
    %3766 = vmatprep.mubr.f32.mxu0 0.0
    %3767 = vmatmul.mubr.f32.gmra.mrb[0].mxu0 %v1376
    %v3768 = vpop.f32.mrb[0].mxu0
    %v3769 = vadd.f32 0.0, %v3768
    %v3770 = vpop.f32.mrb[0].mxu0
    %3771 = vdwg.mxu0
    %v3772 = vxor.u32 %v3769, 2147483648
    %v3773 = vmul.f32 %v3772, 1.442695
    %v3774 = vpow.pop %v3773
    %v3775 = vadd.f32 %v3774, 1.0
    %v3776 = vrcp.pop %v3775
    %v3777 = vmul.f32 1.0, %v3776
    %3778 = vrot.lane.b32.xlu0 %v1284, 64
    %v3779 = vpop.permute.xlu0 %3778
    %3781 = vxpose.xlu0.b32.start [1/16] %v3779, 128
    %3782 = vxpose.xlu0.b32.cont [2/16] 0.0, 128
    %3783 = vxpose.xlu0.b32.cont [3/16] 0.0, 128
    %3784 = vxpose.xlu0.b32.cont [4/16] 0.0, 128
    %3785 = vxpose.xlu0.b32.cont [5/16] 0.0, 128
    %3786 = vxpose.xlu0.b32.cont [6/16] 0.0, 128
    %3787 = vxpose.xlu0.b32.cont [7/16] 0.0, 128
    %3788 = vxpose.xlu0.b32.cont [8/16] 0.0, 128
    %3789 = vxpose.xlu0.b32.cont [9/16] 0.0, 128
    %3790 = vxpose.xlu0.b32.cont [10/16] 0.0, 128
    %3791 = vxpose.xlu0.b32.cont [11/16] 0.0, 128
    %3792 = vxpose.xlu0.b32.cont [12/16] 0.0, 128
    %3793 = vxpose.xlu0.b32.cont [13/16] 0.0, 128
    %3794 = vxpose.xlu0.b32.cont [14/16] 0.0, 128
    %3795 = vxpose.xlu0.b32.cont [15/16] 0.0, 128
    %3796 = vxpose.xlu0.b32.end [16/16] 0.0, 128
    %v3797 = vpop.trf.xlu0
    %v3798 = vpop.trf.xlu0
    %v3799 = vpop.trf.xlu0
    %v3800 = vpop.trf.xlu0
    %v3801 = vpop.trf.xlu0
    %v3802 = vpop.trf.xlu0
    %v3803 = vpop.trf.xlu0
    %v3804 = vpop.trf.xlu0
    %v3805 = vpop.trf.xlu0
    %v3806 = vpop.trf.xlu0
    %v3807 = vpop.trf.xlu0
    %v3808 = vpop.trf.xlu0
    %v3809 = vpop.trf.xlu0
    %v3810 = vpop.trf.xlu0
    %v3811 = vpop.trf.xlu0
    %v3812 = vpop.trf.xlu0
    %v3814 = vsel %vm1726, %v3797, 0
    %v3817 = vsel %vm1726, %v3798, 0
    %v3820 = vsel %vm1726, %v3799, 0
    %v3823 = vsel %vm1726, %v3800, 0
    %3825 = vmatprep.subr.mxu0 0.0
    %3826 = vmatpush1.msra.mxu0 %v3777
    %3827 = vmatprep.subr.mxu0 0.0
    %3828 = vmatpush1.msra.mxu0 0.0
    %3829 = vmatprep.subr.mxu0 0.0
    %3830 = vmatpush1.msra.mxu0 0.0
    %3831 = vmatprep.subr.mxu0 0.0
    %3832 = vmatpush1.msra.mxu0 0.0
    %3833 = vmatprep.subr.mxu0 0.0
    %3834 = vmatpush1.msra.mxu0 0.0
    %3835 = vmatprep.subr.mxu0 0.0
    %3836 = vmatpush1.msra.mxu0 0.0
    %3837 = vmatprep.subr.mxu0 0.0
    %3838 = vmatpush1.msra.mxu0 0.0
    %3839 = vmatprep.subr.mxu0 0.0
    %3840 = vmatpush1.msra.mxu0 0.0
    %3841 = vmatprep.subr.mxu0 0.0
    %3842 = vmatpush1.msra.mxu0 0.0
    %3843 = vmatprep.subr.mxu0 0.0
    %3844 = vmatpush1.msra.mxu0 0.0
    %3845 = vmatprep.subr.mxu0 0.0
    %3846 = vmatpush1.msra.mxu0 0.0
    %3847 = vmatprep.subr.mxu0 0.0
    %3848 = vmatpush1.msra.mxu0 0.0
    %3849 = vmatprep.subr.mxu0 0.0
    %3850 = vmatpush1.msra.mxu0 0.0
    %3851 = vmatprep.subr.mxu0 0.0
    %3852 = vmatpush1.msra.mxu0 0.0
    %3853 = vmatprep.subr.mxu0 0.0
    %3854 = vmatpush1.msra.mxu0 0.0
    %3855 = vmatprep.subr.mxu0 0.0
    %3856 = vmatpush1.msra.mxu0 0.0
    %3857 = vmatprep.subr.mxu0 0.0
    %3858 = vmatpush1.msra.mxu0 0.0
    %3859 = vmatprep.subr.mxu0 0.0
    %3860 = vmatpush1.msra.mxu0 0.0
    %3861 = vmatprep.subr.mxu0 0.0
    %3862 = vmatpush1.msra.mxu0 0.0
    %3863 = vmatprep.subr.mxu0 0.0
    %3864 = vmatpush1.msra.mxu0 0.0
    %3865 = vmatprep.subr.mxu0 0.0
    %3866 = vmatpush1.msra.mxu0 0.0
    %3867 = vmatprep.subr.mxu0 0.0
    %3868 = vmatpush1.msra.mxu0 0.0
    %3869 = vmatprep.subr.mxu0 0.0
    %3870 = vmatpush1.msra.mxu0 0.0
    %3871 = vmatprep.subr.mxu0 0.0
    %3872 = vmatpush1.msra.mxu0 0.0
    %3873 = vmatprep.subr.mxu0 0.0
    %3874 = vmatpush1.msra.mxu0 0.0
    %3875 = vmatprep.subr.mxu0 0.0
    %3876 = vmatpush1.msra.mxu0 0.0
    %3877 = vmatprep.subr.mxu0 0.0
    %3878 = vmatpush1.msra.mxu0 0.0
    %3879 = vmatprep.subr.mxu0 0.0
    %3880 = vmatpush1.msra.mxu0 0.0
    %3881 = vmatprep.subr.mxu0 0.0
    %3882 = vmatpush1.msra.mxu0 0.0
    %3883 = vmatprep.subr.mxu0 0.0
    %3884 = vmatpush1.msra.mxu0 0.0
    %3885 = vmatprep.subr.mxu0 0.0
    %3886 = vmatpush1.msra.mxu0 0.0
    %3887 = vmatprep.subr.mxu0 0.0
    %3888 = vmatpush1.msra.mxu0 0.0
    %3889 = vmatprep.mubr.f32.mxu0 0.0
    %3890 = vmatmul.mubr.f32.gmra.mrb[0].mxu0 %v3814
    %v3891 = vpop.f32.mrb[0].mxu0
    %v3892 = vadd.f32 0.0, %v3891
    %v3893 = vpop.f32.mrb[0].mxu0
    %3894 = vmatprep.mubr.f32.mxu0 0.0
    %3895 = vmatmul.mubr.f32.gmra.mrb[0].mxu0 %v3817
    %v3896 = vpop.f32.mrb[0].mxu0
    %v3897 = vadd.f32 0.0, %v3896
    %v3898 = vpop.f32.mrb[0].mxu0
    %3899 = vmatprep.mubr.f32.mxu0 0.0
    %3900 = vmatmul.mubr.f32.gmra.mrb[0].mxu0 %v3820
    %v3901 = vpop.f32.mrb[0].mxu0
    %v3902 = vadd.f32 0.0, %v3901
    %v3903 = vpop.f32.mrb[0].mxu0
    %3904 = vmatprep.mubr.f32.mxu0 0.0
    %3905 = vmatmul.mubr.f32.gmra.mrb[0].mxu0 %v3823
    %v3906 = vpop.f32.mrb[0].mxu0
    %v3907 = vadd.f32 0.0, %v3906
    %v3908 = vpop.f32.mrb[0].mxu0
    %3909 = vdwg.mxu0
    %3912 = vrot.lane.b32.xlu0 %v3892, 64
    %v3913 = vpop.permute.xlu0 %3912
    %3914 = vrot.lane.b32.xlu0 %v3897, 64
    %v3915 = vpop.permute.xlu0 %3914
    %v3918 = vmul.f32 %v3686, %v3913
    %v3919 = vmul.f32 %v3687, %v3915
    %3922 = vrot.lane.b32.xlu0 %v3902, 64
    %v3923 = vpop.permute.xlu0 %3922
    %3924 = vrot.lane.b32.xlu0 %v3907, 64
    %v3925 = vpop.permute.xlu0 %3924
    %v3928 = vadd.f32 %v3918, %v3923
    %v3929 = vadd.f32 %v3919, %v3925
    %v3930 = vmax.f32 %v3928, 0.0
    %v3931 = vmax.f32 %v3929, 0.0
    %v3932 = vld [vmem:[#allocation2 + $0xa8] sm:$0xff]
    %v3933 = vld [vmem:[#allocation2 + $0xb8] sm:$0xff]
    %3934 = vmatprep.subr.mxu0 0.0
    %3935 = vmatpush1.msra.mxu0 %v3932
    %3936 = vmatprep.subr.mxu0 0.0
    %3937 = vmatpush1.msra.mxu0 %v3933
    %3938 = vmatprep.subr.mxu0 0.0
    %3939 = vmatpush1.msra.mxu0 0.0
    %3940 = vmatprep.subr.mxu0 0.0
    %3941 = vmatpush1.msra.mxu0 0.0
    %3942 = vmatprep.subr.mxu0 0.0
    %3943 = vmatpush1.msra.mxu0 0.0
    %3944 = vmatprep.subr.mxu0 0.0
    %3945 = vmatpush1.msra.mxu0 0.0
    %3946 = vmatprep.subr.mxu0 0.0
    %3947 = vmatpush1.msra.mxu0 0.0
    %3948 = vmatprep.subr.mxu0 0.0
    %3949 = vmatpush1.msra.mxu0 0.0
    %3950 = vmatprep.subr.mxu0 0.0
    %3951 = vmatpush1.msra.mxu0 0.0
    %3952 = vmatprep.subr.mxu0 0.0
    %3953 = vmatpush1.msra.mxu0 0.0
    %3954 = vmatprep.subr.mxu0 0.0
    %3955 = vmatpush1.msra.mxu0 0.0
    %3956 = vmatprep.subr.mxu0 0.0
    %3957 = vmatpush1.msra.mxu0 0.0
    %3958 = vmatprep.subr.mxu0 0.0
    %3959 = vmatpush1.msra.mxu0 0.0
    %3960 = vmatprep.subr.mxu0 0.0
    %3961 = vmatpush1.msra.mxu0 0.0
    %3962 = vmatprep.subr.mxu0 0.0
    %3963 = vmatpush1.msra.mxu0 0.0
    %3964 = vmatprep.subr.mxu0 0.0
    %3965 = vmatpush1.msra.mxu0 0.0
    %3966 = vmatprep.subr.mxu0 0.0
    %3967 = vmatpush1.msra.mxu0 0.0
    %3968 = vmatprep.subr.mxu0 0.0
    %3969 = vmatpush1.msra.mxu0 0.0
    %3970 = vmatprep.subr.mxu0 0.0
    %3971 = vmatpush1.msra.mxu0 0.0
    %3972 = vmatprep.subr.mxu0 0.0
    %3973 = vmatpush1.msra.mxu0 0.0
    %3974 = vmatprep.subr.mxu0 0.0
    %3975 = vmatpush1.msra.mxu0 0.0
    %3976 = vmatprep.subr.mxu0 0.0
    %3977 = vmatpush1.msra.mxu0 0.0
    %3978 = vmatprep.subr.mxu0 0.0
    %3979 = vmatpush1.msra.mxu0 0.0
    %3980 = vmatprep.subr.mxu0 0.0
    %3981 = vmatpush1.msra.mxu0 0.0
    %3982 = vmatprep.subr.mxu0 0.0
    %3983 = vmatpush1.msra.mxu0 0.0
    %3984 = vmatprep.subr.mxu0 0.0
    %3985 = vmatpush1.msra.mxu0 0.0
    %3986 = vmatprep.subr.mxu0 0.0
    %3987 = vmatpush1.msra.mxu0 0.0
    %3988 = vmatprep.subr.mxu0 0.0
    %3989 = vmatpush1.msra.mxu0 0.0
    %3990 = vmatprep.subr.mxu0 0.0
    %3991 = vmatpush1.msra.mxu0 0.0
    %3992 = vmatprep.subr.mxu0 0.0
    %3993 = vmatpush1.msra.mxu0 0.0
    %3994 = vmatprep.subr.mxu0 0.0
    %3995 = vmatpush1.msra.mxu0 0.0
    %3996 = vmatprep.subr.mxu0 0.0
    %3997 = vmatpush1.msra.mxu0 0.0
    %3998 = vmatprep.mubr.f32.mxu0 0.0
    %3999 = vmatmul.mubr.f32.gmra.mrb[0].mxu0 %v1451
    %v4000 = vpop.f32.mrb[0].mxu0
    %v4001 = vadd.f32 0.0, %v4000
    %v4002 = vpop.f32.mrb[0].mxu0
    %4003 = vdwg.mxu0
    %v4004 = vxor.u32 %v4001, 2147483648
    %v4005 = vmul.f32 %v4004, 1.442695
    %v4006 = vpow.pop %v4005
    %v4007 = vadd.f32 %v4006, 1.0
    %v4008 = vrcp.pop %v4007
    %v4009 = vmul.f32 1.0, %v4008
    %4010 = vrot.lane.b32.xlu0 %v1285, 64
    %v4011 = vpop.permute.xlu0 %4010
    %4013 = vxpose.xlu0.b32.start [1/16] %v4011, 128
    %4014 = vxpose.xlu0.b32.cont [2/16] 0.0, 128
    %4015 = vxpose.xlu0.b32.cont [3/16] 0.0, 128
    %4016 = vxpose.xlu0.b32.cont [4/16] 0.0, 128
    %4017 = vxpose.xlu0.b32.cont [5/16] 0.0, 128
    %4018 = vxpose.xlu0.b32.cont [6/16] 0.0, 128
    %4019 = vxpose.xlu0.b32.cont [7/16] 0.0, 128
    %4020 = vxpose.xlu0.b32.cont [8/16] 0.0, 128
    %4021 = vxpose.xlu0.b32.cont [9/16] 0.0, 128
    %4022 = vxpose.xlu0.b32.cont [10/16] 0.0, 128
    %4023 = vxpose.xlu0.b32.cont [11/16] 0.0, 128
    %4024 = vxpose.xlu0.b32.cont [12/16] 0.0, 128
    %4025 = vxpose.xlu0.b32.cont [13/16] 0.0, 128
    %4026 = vxpose.xlu0.b32.cont [14/16] 0.0, 128
    %4027 = vxpose.xlu0.b32.cont [15/16] 0.0, 128
    %4028 = vxpose.xlu0.b32.end [16/16] 0.0, 128
    %v4029 = vpop.trf.xlu0
    %v4030 = vpop.trf.xlu0
    %v4031 = vpop.trf.xlu0
    %v4032 = vpop.trf.xlu0
    %v4033 = vpop.trf.xlu0
    %v4034 = vpop.trf.xlu0
    %v4035 = vpop.trf.xlu0
    %v4036 = vpop.trf.xlu0
    %v4037 = vpop.trf.xlu0
    %v4038 = vpop.trf.xlu0
    %v4039 = vpop.trf.xlu0
    %v4040 = vpop.trf.xlu0
    %v4041 = vpop.trf.xlu0
    %v4042 = vpop.trf.xlu0
    %v4043 = vpop.trf.xlu0
    %v4044 = vpop.trf.xlu0
    %v4046 = vsel %vm1726, %v4029, 0
    %v4049 = vsel %vm1726, %v4030, 0
    %v4052 = vsel %vm1726, %v4031, 0
    %v4055 = vsel %vm1726, %v4032, 0
    %4057 = vmatprep.subr.mxu0 0.0
    %4058 = vmatpush1.msra.mxu0 %v4009
    %4059 = vmatprep.subr.mxu0 0.0
    %4060 = vmatpush1.msra.mxu0 0.0
    %4061 = vmatprep.subr.mxu0 0.0
    %4062 = vmatpush1.msra.mxu0 0.0
    %4063 = vmatprep.subr.mxu0 0.0
    %4064 = vmatpush1.msra.mxu0 0.0
    %4065 = vmatprep.subr.mxu0 0.0
    %4066 = vmatpush1.msra.mxu0 0.0
    %4067 = vmatprep.subr.mxu0 0.0
    %4068 = vmatpush1.msra.mxu0 0.0
    %4069 = vmatprep.subr.mxu0 0.0
    %4070 = vmatpush1.msra.mxu0 0.0
    %4071 = vmatprep.subr.mxu0 0.0
    %4072 = vmatpush1.msra.mxu0 0.0
    %4073 = vmatprep.subr.mxu0 0.0
    %4074 = vmatpush1.msra.mxu0 0.0
    %4075 = vmatprep.subr.mxu0 0.0
    %4076 = vmatpush1.msra.mxu0 0.0
    %4077 = vmatprep.subr.mxu0 0.0
    %4078 = vmatpush1.msra.mxu0 0.0
    %4079 = vmatprep.subr.mxu0 0.0
    %4080 = vmatpush1.msra.mxu0 0.0
    %4081 = vmatprep.subr.mxu0 0.0
    %4082 = vmatpush1.msra.mxu0 0.0
    %4083 = vmatprep.subr.mxu0 0.0
    %4084 = vmatpush1.msra.mxu0 0.0
    %4085 = vmatprep.subr.mxu0 0.0
    %4086 = vmatpush1.msra.mxu0 0.0
    %4087 = vmatprep.subr.mxu0 0.0
    %4088 = vmatpush1.msra.mxu0 0.0
    %4089 = vmatprep.subr.mxu0 0.0
    %4090 = vmatpush1.msra.mxu0 0.0
    %4091 = vmatprep.subr.mxu0 0.0
    %4092 = vmatpush1.msra.mxu0 0.0
    %4093 = vmatprep.subr.mxu0 0.0
    %4094 = vmatpush1.msra.mxu0 0.0
    %4095 = vmatprep.subr.mxu0 0.0
    %4096 = vmatpush1.msra.mxu0 0.0
    %4097 = vmatprep.subr.mxu0 0.0
    %4098 = vmatpush1.msra.mxu0 0.0
    %4099 = vmatprep.subr.mxu0 0.0
    %4100 = vmatpush1.msra.mxu0 0.0
    %4101 = vmatprep.subr.mxu0 0.0
    %4102 = vmatpush1.msra.mxu0 0.0
    %4103 = vmatprep.subr.mxu0 0.0
    %4104 = vmatpush1.msra.mxu0 0.0
    %4105 = vmatprep.subr.mxu0 0.0
    %4106 = vmatpush1.msra.mxu0 0.0
    %4107 = vmatprep.subr.mxu0 0.0
    %4108 = vmatpush1.msra.mxu0 0.0
    %4109 = vmatprep.subr.mxu0 0.0
    %4110 = vmatpush1.msra.mxu0 0.0
    %4111 = vmatprep.subr.mxu0 0.0
    %4112 = vmatpush1.msra.mxu0 0.0
    %4113 = vmatprep.subr.mxu0 0.0
    %4114 = vmatpush1.msra.mxu0 0.0
    %4115 = vmatprep.subr.mxu0 0.0
    %4116 = vmatpush1.msra.mxu0 0.0
    %4117 = vmatprep.subr.mxu0 0.0
    %4118 = vmatpush1.msra.mxu0 0.0
    %4119 = vmatprep.subr.mxu0 0.0
    %4120 = vmatpush1.msra.mxu0 0.0
    %4121 = vmatprep.mubr.f32.mxu0 0.0
    %4122 = vmatmul.mubr.f32.gmra.mrb[0].mxu0 %v4046
    %v4123 = vpop.f32.mrb[0].mxu0
    %v4124 = vadd.f32 0.0, %v4123
    %v4125 = vpop.f32.mrb[0].mxu0
    %4126 = vmatprep.mubr.f32.mxu0 0.0
    %4127 = vmatmul.mubr.f32.gmra.mrb[0].mxu0 %v4049
    %v4128 = vpop.f32.mrb[0].mxu0
    %v4129 = vadd.f32 0.0, %v4128
    %v4130 = vpop.f32.mrb[0].mxu0
    %4131 = vmatprep.mubr.f32.mxu0 0.0
    %4132 = vmatmul.mubr.f32.gmra.mrb[0].mxu0 %v4052
    %v4133 = vpop.f32.mrb[0].mxu0
    %v4134 = vadd.f32 0.0, %v4133
    %v4135 = vpop.f32.mrb[0].mxu0
    %4136 = vmatprep.mubr.f32.mxu0 0.0
    %4137 = vmatmul.mubr.f32.gmra.mrb[0].mxu0 %v4055
    %v4138 = vpop.f32.mrb[0].mxu0
    %v4139 = vadd.f32 0.0, %v4138
    %v4140 = vpop.f32.mrb[0].mxu0
    %4141 = vdwg.mxu0
    %v4142 = vld [vmem:[#allocation2 + $0xc8] sm:$0xff]
    %v4143 = vld [vmem:[#allocation2 + $0xd8] sm:$0xff]
    %v4144 = vmul.f32 %v4142, %v4124
    %v4145 = vmul.f32 %v4143, %v4129
    %v4146 = vadd.f32 %v4144, %v4134
    %v4147 = vadd.f32 %v4145, %v4139
    %v4148 = vmax.f32 %v4146, 0.0
    %v4149 = vmax.f32 %v4147, 0.0
    %4152 = vrot.lane.b32.xlu0 %v3932, 64
    %v4153 = vpop.permute.xlu0 %4152
    %4154 = vrot.lane.b32.xlu0 %v3933, 64
    %v4155 = vpop.permute.xlu0 %4154
    %4158 = vmatprep.subr.mxu0 0.0
    %4159 = vmatpush1.msra.mxu0 %v4153
    %4160 = vmatprep.subr.mxu0 0.0
    %4161 = vmatpush1.msra.mxu0 %v4155
    %4162 = vmatprep.subr.mxu0 0.0
    %4163 = vmatpush1.msra.mxu0 0.0
    %4164 = vmatprep.subr.mxu0 0.0
    %4165 = vmatpush1.msra.mxu0 0.0
    %4166 = vmatprep.subr.mxu0 0.0
    %4167 = vmatpush1.msra.mxu0 0.0
    %4168 = vmatprep.subr.mxu0 0.0
    %4169 = vmatpush1.msra.mxu0 0.0
    %4170 = vmatprep.subr.mxu0 0.0
    %4171 = vmatpush1.msra.mxu0 0.0
    %4172 = vmatprep.subr.mxu0 0.0
    %4173 = vmatpush1.msra.mxu0 0.0
    %4174 = vmatprep.subr.mxu0 0.0
    %4175 = vmatpush1.msra.mxu0 0.0
    %4176 = vmatprep.subr.mxu0 0.0
    %4177 = vmatpush1.msra.mxu0 0.0
    %4178 = vmatprep.subr.mxu0 0.0
    %4179 = vmatpush1.msra.mxu0 0.0
    %4180 = vmatprep.subr.mxu0 0.0
    %4181 = vmatpush1.msra.mxu0 0.0
    %4182 = vmatprep.subr.mxu0 0.0
    %4183 = vmatpush1.msra.mxu0 0.0
    %4184 = vmatprep.subr.mxu0 0.0
    %4185 = vmatpush1.msra.mxu0 0.0
    %4186 = vmatprep.subr.mxu0 0.0
    %4187 = vmatpush1.msra.mxu0 0.0
    %4188 = vmatprep.subr.mxu0 0.0
    %4189 = vmatpush1.msra.mxu0 0.0
    %4190 = vmatprep.subr.mxu0 0.0
    %4191 = vmatpush1.msra.mxu0 0.0
    %4192 = vmatprep.subr.mxu0 0.0
    %4193 = vmatpush1.msra.mxu0 0.0
    %4194 = vmatprep.subr.mxu0 0.0
    %4195 = vmatpush1.msra.mxu0 0.0
    %4196 = vmatprep.subr.mxu0 0.0
    %4197 = vmatpush1.msra.mxu0 0.0
    %4198 = vmatprep.subr.mxu0 0.0
    %4199 = vmatpush1.msra.mxu0 0.0
    %4200 = vmatprep.subr.mxu0 0.0
    %4201 = vmatpush1.msra.mxu0 0.0
    %4202 = vmatprep.subr.mxu0 0.0
    %4203 = vmatpush1.msra.mxu0 0.0
    %4204 = vmatprep.subr.mxu0 0.0
    %4205 = vmatpush1.msra.mxu0 0.0
    %4206 = vmatprep.subr.mxu0 0.0
    %4207 = vmatpush1.msra.mxu0 0.0
    %4208 = vmatprep.subr.mxu0 0.0
    %4209 = vmatpush1.msra.mxu0 0.0
    %4210 = vmatprep.subr.mxu0 0.0
    %4211 = vmatpush1.msra.mxu0 0.0
    %4212 = vmatprep.subr.mxu0 0.0
    %4213 = vmatpush1.msra.mxu0 0.0
    %4214 = vmatprep.subr.mxu0 0.0
    %4215 = vmatpush1.msra.mxu0 0.0
    %4216 = vmatprep.subr.mxu0 0.0
    %4217 = vmatpush1.msra.mxu0 0.0
    %4218 = vmatprep.subr.mxu0 0.0
    %4219 = vmatpush1.msra.mxu0 0.0
    %4220 = vmatprep.subr.mxu0 0.0
    %4221 = vmatpush1.msra.mxu0 0.0
    %4222 = vmatprep.mubr.f32.mxu0 0.0
    %4223 = vmatmul.mubr.f32.gmra.mrb[0].mxu0 %v1532
    %v4224 = vpop.f32.mrb[0].mxu0
    %v4225 = vadd.f32 0.0, %v4224
    %v4226 = vpop.f32.mrb[0].mxu0
    %4227 = vdwg.mxu0
    %v4228 = vxor.u32 %v4225, 2147483648
    %v4229 = vmul.f32 %v4228, 1.442695
    %v4230 = vpow.pop %v4229
    %v4231 = vadd.f32 %v4230, 1.0
    %v4232 = vrcp.pop %v4231
    %v4233 = vmul.f32 1.0, %v4232
    %4234 = vrot.lane.b32.xlu0 %v1286, 64
    %v4235 = vpop.permute.xlu0 %4234
    %4237 = vxpose.xlu0.b32.start [1/16] %v4235, 128
    %4238 = vxpose.xlu0.b32.cont [2/16] 0.0, 128
    %4239 = vxpose.xlu0.b32.cont [3/16] 0.0, 128
    %4240 = vxpose.xlu0.b32.cont [4/16] 0.0, 128
    %4241 = vxpose.xlu0.b32.cont [5/16] 0.0, 128
    %4242 = vxpose.xlu0.b32.cont [6/16] 0.0, 128
    %4243 = vxpose.xlu0.b32.cont [7/16] 0.0, 128
    %4244 = vxpose.xlu0.b32.cont [8/16] 0.0, 128
    %4245 = vxpose.xlu0.b32.cont [9/16] 0.0, 128
    %4246 = vxpose.xlu0.b32.cont [10/16] 0.0, 128
    %4247 = vxpose.xlu0.b32.cont [11/16] 0.0, 128
    %4248 = vxpose.xlu0.b32.cont [12/16] 0.0, 128
    %4249 = vxpose.xlu0.b32.cont [13/16] 0.0, 128
    %4250 = vxpose.xlu0.b32.cont [14/16] 0.0, 128
    %4251 = vxpose.xlu0.b32.cont [15/16] 0.0, 128
    %4252 = vxpose.xlu0.b32.end [16/16] 0.0, 128
    %v4253 = vpop.trf.xlu0
    %v4254 = vpop.trf.xlu0
    %v4255 = vpop.trf.xlu0
    %v4256 = vpop.trf.xlu0
    %v4257 = vpop.trf.xlu0
    %v4258 = vpop.trf.xlu0
    %v4259 = vpop.trf.xlu0
    %v4260 = vpop.trf.xlu0
    %v4261 = vpop.trf.xlu0
    %v4262 = vpop.trf.xlu0
    %v4263 = vpop.trf.xlu0
    %v4264 = vpop.trf.xlu0
    %v4265 = vpop.trf.xlu0
    %v4266 = vpop.trf.xlu0
    %v4267 = vpop.trf.xlu0
    %v4268 = vpop.trf.xlu0
    %v4270 = vsel %vm1726, %v4253, 0
    %v4273 = vsel %vm1726, %v4254, 0
    %v4276 = vsel %vm1726, %v4255, 0
    %v4279 = vsel %vm1726, %v4256, 0
    %4281 = vmatprep.subr.mxu0 0.0
    %4282 = vmatpush1.msra.mxu0 %v4233
    %4283 = vmatprep.subr.mxu0 0.0
    %4284 = vmatpush1.msra.mxu0 0.0
    %4285 = vmatprep.subr.mxu0 0.0
    %4286 = vmatpush1.msra.mxu0 0.0
    %4287 = vmatprep.subr.mxu0 0.0
    %4288 = vmatpush1.msra.mxu0 0.0
    %4289 = vmatprep.subr.mxu0 0.0
    %4290 = vmatpush1.msra.mxu0 0.0
    %4291 = vmatprep.subr.mxu0 0.0
    %4292 = vmatpush1.msra.mxu0 0.0
    %4293 = vmatprep.subr.mxu0 0.0
    %4294 = vmatpush1.msra.mxu0 0.0
    %4295 = vmatprep.subr.mxu0 0.0
    %4296 = vmatpush1.msra.mxu0 0.0
    %4297 = vmatprep.subr.mxu0 0.0
    %4298 = vmatpush1.msra.mxu0 0.0
    %4299 = vmatprep.subr.mxu0 0.0
    %4300 = vmatpush1.msra.mxu0 0.0
    %4301 = vmatprep.subr.mxu0 0.0
    %4302 = vmatpush1.msra.mxu0 0.0
    %4303 = vmatprep.subr.mxu0 0.0
    %4304 = vmatpush1.msra.mxu0 0.0
    %4305 = vmatprep.subr.mxu0 0.0
    %4306 = vmatpush1.msra.mxu0 0.0
    %4307 = vmatprep.subr.mxu0 0.0
    %4308 = vmatpush1.msra.mxu0 0.0
    %4309 = vmatprep.subr.mxu0 0.0
    %4310 = vmatpush1.msra.mxu0 0.0
    %4311 = vmatprep.subr.mxu0 0.0
    %4312 = vmatpush1.msra.mxu0 0.0
    %4313 = vmatprep.subr.mxu0 0.0
    %4314 = vmatpush1.msra.mxu0 0.0
    %4315 = vmatprep.subr.mxu0 0.0
    %4316 = vmatpush1.msra.mxu0 0.0
    %4317 = vmatprep.subr.mxu0 0.0
    %4318 = vmatpush1.msra.mxu0 0.0
    %4319 = vmatprep.subr.mxu0 0.0
    %4320 = vmatpush1.msra.mxu0 0.0
    %4321 = vmatprep.subr.mxu0 0.0
    %4322 = vmatpush1.msra.mxu0 0.0
    %4323 = vmatprep.subr.mxu0 0.0
    %4324 = vmatpush1.msra.mxu0 0.0
    %4325 = vmatprep.subr.mxu0 0.0
    %4326 = vmatpush1.msra.mxu0 0.0
    %4327 = vmatprep.subr.mxu0 0.0
    %4328 = vmatpush1.msra.mxu0 0.0
    %4329 = vmatprep.subr.mxu0 0.0
    %4330 = vmatpush1.msra.mxu0 0.0
    %4331 = vmatprep.subr.mxu0 0.0
    %4332 = vmatpush1.msra.mxu0 0.0
    %4333 = vmatprep.subr.mxu0 0.0
    %4334 = vmatpush1.msra.mxu0 0.0
    %4335 = vmatprep.subr.mxu0 0.0
    %4336 = vmatpush1.msra.mxu0 0.0
    %4337 = vmatprep.subr.mxu0 0.0
    %4338 = vmatpush1.msra.mxu0 0.0
    %4339 = vmatprep.subr.mxu0 0.0
    %4340 = vmatpush1.msra.mxu0 0.0
    %4341 = vmatprep.subr.mxu0 0.0
    %4342 = vmatpush1.msra.mxu0 0.0
    %4343 = vmatprep.subr.mxu0 0.0
    %4344 = vmatpush1.msra.mxu0 0.0
    %4345 = vmatprep.mubr.f32.mxu0 0.0
    %4346 = vmatmul.mubr.f32.gmra.mrb[0].mxu0 %v4270
    %v4347 = vpop.f32.mrb[0].mxu0
    %v4348 = vadd.f32 0.0, %v4347
    %v4349 = vpop.f32.mrb[0].mxu0
    %4350 = vmatprep.mubr.f32.mxu0 0.0
    %4351 = vmatmul.mubr.f32.gmra.mrb[0].mxu0 %v4273
    %v4352 = vpop.f32.mrb[0].mxu0
    %v4353 = vadd.f32 0.0, %v4352
    %v4354 = vpop.f32.mrb[0].mxu0
    %4355 = vmatprep.mubr.f32.mxu0 0.0
    %4356 = vmatmul.mubr.f32.gmra.mrb[0].mxu0 %v4276
    %v4357 = vpop.f32.mrb[0].mxu0
    %v4358 = vadd.f32 0.0, %v4357
    %v4359 = vpop.f32.mrb[0].mxu0
    %4360 = vmatprep.mubr.f32.mxu0 0.0
    %4361 = vmatmul.mubr.f32.gmra.mrb[0].mxu0 %v4279
    %v4362 = vpop.f32.mrb[0].mxu0
    %v4363 = vadd.f32 0.0, %v4362
    %v4364 = vpop.f32.mrb[0].mxu0
    %4365 = vdwg.mxu0
    %4368 = vrot.lane.b32.xlu0 %v4348, 64
    %v4369 = vpop.permute.xlu0 %4368
    %4370 = vrot.lane.b32.xlu0 %v4353, 64
    %v4371 = vpop.permute.xlu0 %4370
    %v4374 = vmul.f32 %v4142, %v4369
    %v4375 = vmul.f32 %v4143, %v4371
    %4378 = vrot.lane.b32.xlu0 %v4358, 64
    %v4379 = vpop.permute.xlu0 %4378
    %4380 = vrot.lane.b32.xlu0 %v4363, 64
    %v4381 = vpop.permute.xlu0 %4380
    %v4384 = vadd.f32 %v4374, %v4379
    %v4385 = vadd.f32 %v4375, %v4381
    %v4386 = vmax.f32 %v4384, 0.0
    %v4387 = vmax.f32 %v4385, 0.0
    %4389 = vrot.lane.b32.xlu0 %v3769, 64
    %v4390 = vpop.permute.xlu0 %4389
    %4393 = vrot.lane.b32.xlu0 %v4225, 64
    %v4394 = vpop.permute.xlu0 %4393
    %v4396 = vsel %vm513, %v3545, %v4390
    %v4397 = vsel %vm513, %v4001, %v4394
    %s4398 = scalar_lea.vmem %s9, 48
    %4399 = vst [vmem:[%s4398] sm:$0xff] %v4396
    %4400 = vst [vmem:[%s4398 + $0x8] sm:$0xff] %v4397
    %v4401 = vsel %vm513, %v3692, %v3930
    %v4402 = vsel %vm513, %v3693, %v3931
    %v4403 = vsel %vm513, %v4148, %v4386
    %v4404 = vsel %vm513, %v4149, %v4387
    %s4405 = scalar_lea.vmem [#allocation3], 64
    %4406 = vst [vmem:[%s4405] sm:$0xff] %v4401
    %4407 = vst [vmem:[%s4405 + $0x8] sm:$0xff] %v4403
    %4408 = vst [vmem:[%s4405 + $0x10] sm:$0xff] %v4402
    %4409 = vst [vmem:[%s4405 + $0x18] sm:$0xff] %v4404
    %v4410 = vld [vmem:[#allocation2 + $0xe0] sm:$0xff]
    %v4411 = vld [vmem:[#allocation2 + $0xf0] sm:$0xff]
    %4412 = vmatprep.subr.mxu0 0.0
    %4413 = vmatpush1.msra.mxu0 %v4410
    %4414 = vmatprep.subr.mxu0 0.0
    %4415 = vmatpush1.msra.mxu0 %v4411
    %4416 = vmatprep.subr.mxu0 0.0
    %4417 = vmatpush1.msra.mxu0 0.0
    %4418 = vmatprep.subr.mxu0 0.0
    %4419 = vmatpush1.msra.mxu0 0.0
    %4420 = vmatprep.subr.mxu0 0.0
    %4421 = vmatpush1.msra.mxu0 0.0
    %4422 = vmatprep.subr.mxu0 0.0
    %4423 = vmatpush1.msra.mxu0 0.0
    %4424 = vmatprep.subr.mxu0 0.0
    %4425 = vmatpush1.msra.mxu0 0.0
    %4426 = vmatprep.subr.mxu0 0.0
    %4427 = vmatpush1.msra.mxu0 0.0
    %4428 = vmatprep.subr.mxu0 0.0
    %4429 = vmatpush1.msra.mxu0 0.0
    %4430 = vmatprep.subr.mxu0 0.0
    %4431 = vmatpush1.msra.mxu0 0.0
    %4432 = vmatprep.subr.mxu0 0.0
    %4433 = vmatpush1.msra.mxu0 0.0
    %4434 = vmatprep.subr.mxu0 0.0
    %4435 = vmatpush1.msra.mxu0 0.0
    %4436 = vmatprep.subr.mxu0 0.0
    %4437 = vmatpush1.msra.mxu0 0.0
    %4438 = vmatprep.subr.mxu0 0.0
    %4439 = vmatpush1.msra.mxu0 0.0
    %4440 = vmatprep.subr.mxu0 0.0
    %4441 = vmatpush1.msra.mxu0 0.0
    %4442 = vmatprep.subr.mxu0 0.0
    %4443 = vmatpush1.msra.mxu0 0.0
    %4444 = vmatprep.subr.mxu0 0.0
    %4445 = vmatpush1.msra.mxu0 0.0
    %4446 = vmatprep.subr.mxu0 0.0
    %4447 = vmatpush1.msra.mxu0 0.0
    %4448 = vmatprep.subr.mxu0 0.0
    %4449 = vmatpush1.msra.mxu0 0.0
    %4450 = vmatprep.subr.mxu0 0.0
    %4451 = vmatpush1.msra.mxu0 0.0
    %4452 = vmatprep.subr.mxu0 0.0
    %4453 = vmatpush1.msra.mxu0 0.0
    %4454 = vmatprep.subr.mxu0 0.0
    %4455 = vmatpush1.msra.mxu0 0.0
    %4456 = vmatprep.subr.mxu0 0.0
    %4457 = vmatpush1.msra.mxu0 0.0
    %4458 = vmatprep.subr.mxu0 0.0
    %4459 = vmatpush1.msra.mxu0 0.0
    %4460 = vmatprep.subr.mxu0 0.0
    %4461 = vmatpush1.msra.mxu0 0.0
    %4462 = vmatprep.subr.mxu0 0.0
    %4463 = vmatpush1.msra.mxu0 0.0
    %4464 = vmatprep.subr.mxu0 0.0
    %4465 = vmatpush1.msra.mxu0 0.0
    %4466 = vmatprep.subr.mxu0 0.0
    %4467 = vmatpush1.msra.mxu0 0.0
    %4468 = vmatprep.subr.mxu0 0.0
    %4469 = vmatpush1.msra.mxu0 0.0
    %4470 = vmatprep.subr.mxu0 0.0
    %4471 = vmatpush1.msra.mxu0 0.0
    %4472 = vmatprep.subr.mxu0 0.0
    %4473 = vmatpush1.msra.mxu0 0.0
    %4474 = vmatprep.subr.mxu0 0.0
    %4475 = vmatpush1.msra.mxu0 0.0
    %4476 = vmatprep.mubr.f32.mxu0 0.0
    %4477 = vmatmul.mubr.f32.gmra.mrb[0].mxu0 %v1295
    %v4478 = vpop.f32.mrb[0].mxu0
    %v4479 = vadd.f32 0.0, %v4478
    %v4480 = vpop.f32.mrb[0].mxu0
    %4481 = vdwg.mxu0
    %4484 = vrot.lane.b32.xlu0 %v4410, 64
    %v4485 = vpop.permute.xlu0 %4484
    %4486 = vrot.lane.b32.xlu0 %v4411, 64
    %v4487 = vpop.permute.xlu0 %4486
    %4490 = vmatprep.subr.mxu0 0.0
    %4491 = vmatpush1.msra.mxu0 %v4485
    %4492 = vmatprep.subr.mxu0 0.0
    %4493 = vmatpush1.msra.mxu0 %v4487
    %4494 = vmatprep.subr.mxu0 0.0
    %4495 = vmatpush1.msra.mxu0 0.0
    %4496 = vmatprep.subr.mxu0 0.0
    %4497 = vmatpush1.msra.mxu0 0.0
    %4498 = vmatprep.subr.mxu0 0.0
    %4499 = vmatpush1.msra.mxu0 0.0
    %4500 = vmatprep.subr.mxu0 0.0
    %4501 = vmatpush1.msra.mxu0 0.0
    %4502 = vmatprep.subr.mxu0 0.0
    %4503 = vmatpush1.msra.mxu0 0.0
    %4504 = vmatprep.subr.mxu0 0.0
    %4505 = vmatpush1.msra.mxu0 0.0
    %4506 = vmatprep.subr.mxu0 0.0
    %4507 = vmatpush1.msra.mxu0 0.0
    %4508 = vmatprep.subr.mxu0 0.0
    %4509 = vmatpush1.msra.mxu0 0.0
    %4510 = vmatprep.subr.mxu0 0.0
    %4511 = vmatpush1.msra.mxu0 0.0
    %4512 = vmatprep.subr.mxu0 0.0
    %4513 = vmatpush1.msra.mxu0 0.0
    %4514 = vmatprep.subr.mxu0 0.0
    %4515 = vmatpush1.msra.mxu0 0.0
    %4516 = vmatprep.subr.mxu0 0.0
    %4517 = vmatpush1.msra.mxu0 0.0
    %4518 = vmatprep.subr.mxu0 0.0
    %4519 = vmatpush1.msra.mxu0 0.0
    %4520 = vmatprep.subr.mxu0 0.0
    %4521 = vmatpush1.msra.mxu0 0.0
    %4522 = vmatprep.subr.mxu0 0.0
    %4523 = vmatpush1.msra.mxu0 0.0
    %4524 = vmatprep.subr.mxu0 0.0
    %4525 = vmatpush1.msra.mxu0 0.0
    %4526 = vmatprep.subr.mxu0 0.0
    %4527 = vmatpush1.msra.mxu0 0.0
    %4528 = vmatprep.subr.mxu0 0.0
    %4529 = vmatpush1.msra.mxu0 0.0
    %4530 = vmatprep.subr.mxu0 0.0
    %4531 = vmatpush1.msra.mxu0 0.0
    %4532 = vmatprep.subr.mxu0 0.0
    %4533 = vmatpush1.msra.mxu0 0.0
    %4534 = vmatprep.subr.mxu0 0.0
    %4535 = vmatpush1.msra.mxu0 0.0
    %4536 = vmatprep.subr.mxu0 0.0
    %4537 = vmatpush1.msra.mxu0 0.0
    %4538 = vmatprep.subr.mxu0 0.0
    %4539 = vmatpush1.msra.mxu0 0.0
    %4540 = vmatprep.subr.mxu0 0.0
    %4541 = vmatpush1.msra.mxu0 0.0
    %4542 = vmatprep.subr.mxu0 0.0
    %4543 = vmatpush1.msra.mxu0 0.0
    %4544 = vmatprep.subr.mxu0 0.0
    %4545 = vmatpush1.msra.mxu0 0.0
    %4546 = vmatprep.subr.mxu0 0.0
    %4547 = vmatpush1.msra.mxu0 0.0
    %4548 = vmatprep.subr.mxu0 0.0
    %4549 = vmatpush1.msra.mxu0 0.0
    %4550 = vmatprep.subr.mxu0 0.0
    %4551 = vmatpush1.msra.mxu0 0.0
    %4552 = vmatprep.subr.mxu0 0.0
    %4553 = vmatpush1.msra.mxu0 0.0
    %4554 = vmatprep.mubr.f32.mxu0 0.0
    %4555 = vmatmul.mubr.f32.gmra.mrb[0].mxu0 %v1376
    %v4556 = vpop.f32.mrb[0].mxu0
    %v4557 = vadd.f32 0.0, %v4556
    %v4558 = vpop.f32.mrb[0].mxu0
    %4559 = vdwg.mxu0
    %v4560 = vld [vmem:[#allocation2 + $0xe8] sm:$0xff]
    %v4561 = vld [vmem:[#allocation2 + $0xf8] sm:$0xff]
    %4562 = vmatprep.subr.mxu0 0.0
    %4563 = vmatpush1.msra.mxu0 %v4560
    %4564 = vmatprep.subr.mxu0 0.0
    %4565 = vmatpush1.msra.mxu0 %v4561
    %4566 = vmatprep.subr.mxu0 0.0
    %4567 = vmatpush1.msra.mxu0 0.0
    %4568 = vmatprep.subr.mxu0 0.0
    %4569 = vmatpush1.msra.mxu0 0.0
    %4570 = vmatprep.subr.mxu0 0.0
    %4571 = vmatpush1.msra.mxu0 0.0
    %4572 = vmatprep.subr.mxu0 0.0
    %4573 = vmatpush1.msra.mxu0 0.0
    %4574 = vmatprep.subr.mxu0 0.0
    %4575 = vmatpush1.msra.mxu0 0.0
    %4576 = vmatprep.subr.mxu0 0.0
    %4577 = vmatpush1.msra.mxu0 0.0
    %4578 = vmatprep.subr.mxu0 0.0
    %4579 = vmatpush1.msra.mxu0 0.0
    %4580 = vmatprep.subr.mxu0 0.0
    %4581 = vmatpush1.msra.mxu0 0.0
    %4582 = vmatprep.subr.mxu0 0.0
    %4583 = vmatpush1.msra.mxu0 0.0
    %4584 = vmatprep.subr.mxu0 0.0
    %4585 = vmatpush1.msra.mxu0 0.0
    %4586 = vmatprep.subr.mxu0 0.0
    %4587 = vmatpush1.msra.mxu0 0.0
    %4588 = vmatprep.subr.mxu0 0.0
    %4589 = vmatpush1.msra.mxu0 0.0
    %4590 = vmatprep.subr.mxu0 0.0
    %4591 = vmatpush1.msra.mxu0 0.0
    %4592 = vmatprep.subr.mxu0 0.0
    %4593 = vmatpush1.msra.mxu0 0.0
    %4594 = vmatprep.subr.mxu0 0.0
    %4595 = vmatpush1.msra.mxu0 0.0
    %4596 = vmatprep.subr.mxu0 0.0
    %4597 = vmatpush1.msra.mxu0 0.0
    %4598 = vmatprep.subr.mxu0 0.0
    %4599 = vmatpush1.msra.mxu0 0.0
    %4600 = vmatprep.subr.mxu0 0.0
    %4601 = vmatpush1.msra.mxu0 0.0
    %4602 = vmatprep.subr.mxu0 0.0
    %4603 = vmatpush1.msra.mxu0 0.0
    %4604 = vmatprep.subr.mxu0 0.0
    %4605 = vmatpush1.msra.mxu0 0.0
    %4606 = vmatprep.subr.mxu0 0.0
    %4607 = vmatpush1.msra.mxu0 0.0
    %4608 = vmatprep.subr.mxu0 0.0
    %4609 = vmatpush1.msra.mxu0 0.0
    %4610 = vmatprep.subr.mxu0 0.0
    %4611 = vmatpush1.msra.mxu0 0.0
    %4612 = vmatprep.subr.mxu0 0.0
    %4613 = vmatpush1.msra.mxu0 0.0
    %4614 = vmatprep.subr.mxu0 0.0
    %4615 = vmatpush1.msra.mxu0 0.0
    %4616 = vmatprep.subr.mxu0 0.0
    %4617 = vmatpush1.msra.mxu0 0.0
    %4618 = vmatprep.subr.mxu0 0.0
    %4619 = vmatpush1.msra.mxu0 0.0
    %4620 = vmatprep.subr.mxu0 0.0
    %4621 = vmatpush1.msra.mxu0 0.0
    %4622 = vmatprep.subr.mxu0 0.0
    %4623 = vmatpush1.msra.mxu0 0.0
    %4624 = vmatprep.subr.mxu0 0.0
    %4625 = vmatpush1.msra.mxu0 0.0
    %4626 = vmatprep.mubr.f32.mxu0 0.0
    %4627 = vmatmul.mubr.f32.gmra.mrb[0].mxu0 %v1451
    %v4628 = vpop.f32.mrb[0].mxu0
    %v4629 = vadd.f32 0.0, %v4628
    %v4630 = vpop.f32.mrb[0].mxu0
    %4631 = vdwg.mxu0
    %4634 = vrot.lane.b32.xlu0 %v4560, 64
    %v4635 = vpop.permute.xlu0 %4634
    %4636 = vrot.lane.b32.xlu0 %v4561, 64
    %v4637 = vpop.permute.xlu0 %4636
    %4640 = vmatprep.subr.mxu0 0.0
    %4641 = vmatpush1.msra.mxu0 %v4635
    %4642 = vmatprep.subr.mxu0 0.0
    %4643 = vmatpush1.msra.mxu0 %v4637
    %4644 = vmatprep.subr.mxu0 0.0
    %4645 = vmatpush1.msra.mxu0 0.0
    %4646 = vmatprep.subr.mxu0 0.0
    %4647 = vmatpush1.msra.mxu0 0.0
    %4648 = vmatprep.subr.mxu0 0.0
    %4649 = vmatpush1.msra.mxu0 0.0
    %4650 = vmatprep.subr.mxu0 0.0
    %4651 = vmatpush1.msra.mxu0 0.0
    %4652 = vmatprep.subr.mxu0 0.0
    %4653 = vmatpush1.msra.mxu0 0.0
    %4654 = vmatprep.subr.mxu0 0.0
    %4655 = vmatpush1.msra.mxu0 0.0
    %4656 = vmatprep.subr.mxu0 0.0
    %4657 = vmatpush1.msra.mxu0 0.0
    %4658 = vmatprep.subr.mxu0 0.0
    %4659 = vmatpush1.msra.mxu0 0.0
    %4660 = vmatprep.subr.mxu0 0.0
    %4661 = vmatpush1.msra.mxu0 0.0
    %4662 = vmatprep.subr.mxu0 0.0
    %4663 = vmatpush1.msra.mxu0 0.0
    %4664 = vmatprep.subr.mxu0 0.0
    %4665 = vmatpush1.msra.mxu0 0.0
    %4666 = vmatprep.subr.mxu0 0.0
    %4667 = vmatpush1.msra.mxu0 0.0
    %4668 = vmatprep.subr.mxu0 0.0
    %4669 = vmatpush1.msra.mxu0 0.0
    %4670 = vmatprep.subr.mxu0 0.0
    %4671 = vmatpush1.msra.mxu0 0.0
    %4672 = vmatprep.subr.mxu0 0.0
    %4673 = vmatpush1.msra.mxu0 0.0
    %4674 = vmatprep.subr.mxu0 0.0
    %4675 = vmatpush1.msra.mxu0 0.0
    %4676 = vmatprep.subr.mxu0 0.0
    %4677 = vmatpush1.msra.mxu0 0.0
    %4678 = vmatprep.subr.mxu0 0.0
    %4679 = vmatpush1.msra.mxu0 0.0
    %4680 = vmatprep.subr.mxu0 0.0
    %4681 = vmatpush1.msra.mxu0 0.0
    %4682 = vmatprep.subr.mxu0 0.0
    %4683 = vmatpush1.msra.mxu0 0.0
    %4684 = vmatprep.subr.mxu0 0.0
    %4685 = vmatpush1.msra.mxu0 0.0
    %4686 = vmatprep.subr.mxu0 0.0
    %4687 = vmatpush1.msra.mxu0 0.0
    %4688 = vmatprep.subr.mxu0 0.0
    %4689 = vmatpush1.msra.mxu0 0.0
    %4690 = vmatprep.subr.mxu0 0.0
    %4691 = vmatpush1.msra.mxu0 0.0
    %4692 = vmatprep.subr.mxu0 0.0
    %4693 = vmatpush1.msra.mxu0 0.0
    %4694 = vmatprep.subr.mxu0 0.0
    %4695 = vmatpush1.msra.mxu0 0.0
    %4696 = vmatprep.subr.mxu0 0.0
    %4697 = vmatpush1.msra.mxu0 0.0
    %4698 = vmatprep.subr.mxu0 0.0
    %4699 = vmatpush1.msra.mxu0 0.0
    %4700 = vmatprep.subr.mxu0 0.0
    %4701 = vmatpush1.msra.mxu0 0.0
    %4702 = vmatprep.subr.mxu0 0.0
    %4703 = vmatpush1.msra.mxu0 0.0
    %4704 = vmatprep.mubr.f32.mxu0 0.0
    %4705 = vmatmul.mubr.f32.gmra.mrb[0].mxu0 %v1532
    %v4706 = vpop.f32.mrb[0].mxu0
    %v4707 = vadd.f32 0.0, %v4706
    %v4708 = vpop.f32.mrb[0].mxu0
    %4709 = vdwg.mxu0
    %4711 = vrot.lane.b32.xlu0 %v4557, 64
    %v4712 = vpop.permute.xlu0 %4711
    %4715 = vrot.lane.b32.xlu0 %v4707, 64
    %v4716 = vpop.permute.xlu0 %4715
    %v4718 = vsel %vm513, %v4479, %v4712
    %v4719 = vsel %vm513, %v4629, %v4716
    %s4720 = scalar_lea.vmem %s9, 64
    %4721 = vst [vmem:[%s4720] sm:$0xff] %v4718
    %4722 = vst [vmem:[%s4720 + $0x8] sm:$0xff] %v4719
    // Predicated region
    $region38: #{semaffinet_core_forward.2} parent=1 // pred_check
      _
    $region39: #{semaffinet_core_forward.2} parent=1 // pred_check_branch
      %4724 = sbr.rel (0) target = $region41
    $region40: #{semaffinet_core_forward.2} parent=1 // pred_region
      _
    $region41: #{semaffinet_core_forward.2} parent=1 // pred_fallthru
      _
    // Predicated region
    $region42: #{semaffinet_core_forward.2} parent=1 // pred_check
      _
    $region43: #{semaffinet_core_forward.2} parent=1 // pred_check_branch
      %4726 = sbr.rel (0) target = $region45
    $region44: #{semaffinet_core_forward.2} parent=1 // pred_region
      %s4728 = ssub.s32 1536, 1536
      %4729 = vsyncadd [#allocation4], %s4728
      %s4730 = sshll.u32 [#allocation3], 4
      %s4731 = int_to_ptr.vmem [resolvable:$true] %s4730
      %4736 = dma.vmem_to_hbm [thread:$0]  %s4731, 1536, %s10, [#allocation4], 256, 256, 16
    $region45: #{semaffinet_core_forward.2} parent=1 // pred_fallthru
      _
    // Predicated region
    $region46: #{semaffinet_core_forward.2} parent=1 // pred_check
      _
    $region47: #{semaffinet_core_forward.2} parent=1 // pred_check_branch
      %4738 = sbr.rel (0) target = $region49
    $region48: #{semaffinet_core_forward.2} parent=1 // pred_region
      _
    $region49: #{semaffinet_core_forward.2} parent=1 // pred_fallthru
      _
    // Predicated region
    $region50: #{semaffinet_core_forward.2} parent=1 // pred_check
      _
    $region51: #{semaffinet_core_forward.2} parent=1 // pred_check_branch
      %4740 = sbr.rel (0) target = $region53
    $region52: #{semaffinet_core_forward.2} parent=1 // pred_region
      %4741 = dma.done [#allocation4], 1536
    $region53: #{semaffinet_core_forward.2} parent=1 // pred_fallthru
      _
    %4742 = vsyncpa [#allocation4], 1

</llo_original>
